<compile_context>
chip_gen: v7x
topology: tpu7x:2x2x1
jax: 0.10.0
libtpu: 0.0.40
codegen_flags: <defaults>
</compile_context>

<pallas_src>
import functools
import math

import jax
import jax.numpy as jnp
from jax.experimental import pallas as pl
from jax.experimental.pallas import tpu as pltpu

NUM_GROUPS = 32
GN_EPS = 1e-6
MXU_DTYPE = jnp.bfloat16      # matmul-operand dtype (accumulation is always f32)
ACT_DTYPE = jnp.bfloat16      # inter-layer activation storage dtype (HBM traffic)
HALO = 16                     # halo-block rows (bf16 sublane packing granularity)


def _tpu_vmem_capacity_bytes():
    try:
        return int(pltpu.get_tpu_info().vmem_capacity_bytes)
    except Exception:
        return 64 * 1024 * 1024          # conservative (v7x-sized) fallback


_VMEM_CAP = _tpu_vmem_capacity_bytes()
# ~20% headroom for Mosaic scratch / double buffers:
#   v7x (64 MiB) -> ~51 MiB ; v5e/v6e (128 MiB) -> ~102 MiB
VMEM_LIMIT = int(_VMEM_CAP * 0.8)
MAX_L_TILE = 256 if _VMEM_CAP <= 64 * 1024 * 1024 else 512


def _choose_tile(L, max_tile=None):
    """Largest multiple-of-16 tile <= max_tile that divides L; else L (single tile)."""
    if max_tile is None:
        max_tile = MAX_L_TILE
    if L <= max_tile:
        return L
    t = (max_tile // 16) * 16
    while t >= 16:
        if L % t == 0:
            return t
        t -= 16
    # TODO(synk): replace this fallback with a cdiv grid + masked remainder tile so a
    # prime-ish long L never produces one giant block (v7x VMEM risk).
    return L


# ----------------------------------------------------------------------------
# Pallas kernels
# ----------------------------------------------------------------------------
def _matmul_bias_kernel(x_ref, w_ref, b_ref, *rest, has_residual):
    # x_ref: (1, TL, Cin) bf16; w_ref: (Cin, Cout) bf16; b_ref: (1, Cout) f32
    if has_residual:
        r_ref, o_ref = rest
    else:
        (o_ref,) = rest
    y = jnp.dot(x_ref[0], w_ref[...], preferred_element_type=jnp.float32) + b_ref[...]
    if has_residual:
        y = y + r_ref[0].astype(jnp.float32)
    o_ref[0] = y.astype(o_ref.dtype)


def _conv3_kernel(*refs, has_residual, has_halo, lt):
    # Halo-tiled Conv1d k=3 / s=1 / p=1.
    #   center x_ref: (1, TL, Cin); optional prev/next halo blocks: (1, HALO, Cin);
    #   w_ref: (3, Cin, Cout) bf16; b_ref: (1, Cout) f32; optional residual; output.
    it = iter(refs)
    x_ref = next(it)
    prev_ref = next(it) if has_halo else None
    next_ref = next(it) if has_halo else None
    w_ref = next(it)
    b_ref = next(it)
    r_ref = next(it) if has_residual else None
    o_ref = next(it)

    xc = x_ref[0]                                        # (TL, Cin) activation dtype
    cin = xc.shape[1]
    zero_row = jnp.zeros((1, cin), xc.dtype)

    if has_halo:
        j = pl.program_id(1)
        nj = pl.num_programs(1)
        hb = prev_ref.shape[1]
        prev_row = jnp.where(j == 0, zero_row, prev_ref[0, hb - 1:hb, :])
        next_row = jnp.where(j == nj - 1, zero_row, next_ref[0, 0:1, :])
    else:                                                # single tile covers all of L
        prev_row = zero_row
        next_row = zero_row

    # Shifted views built from the single resident center tile (one static slice each),
    # boundary rows patched in -- no padded HBM copy, no misaligned per-tap loads.
    x0 = jnp.concatenate([prev_row, xc[:lt - 1, :]], axis=0)   # rows i-1
    x2 = jnp.concatenate([xc[1:, :], next_row], axis=0)        # rows i+1

    acc = jnp.dot(xc, w_ref[1], preferred_element_type=jnp.float32)
    acc = acc + jnp.dot(x0, w_ref[0], preferred_element_type=jnp.float32)
    acc = acc + jnp.dot(x2, w_ref[2], preferred_element_type=jnp.float32)
    y = acc + b_ref[...]
    if has_residual:
        y = y + r_ref[0].astype(jnp.float32)
    o_ref[0] = y.astype(o_ref.dtype)


def _gn_stats_kernel(x_ref, m_ref, o_ref, sum_sc, sq_sc, *, inv_count, eps):
    # Pass 1 of GroupNorm: accumulate per-channel sum / sumsq over L tiles (f32),
    # reduce within groups via the hoisted membership matrix on the last tile and
    # emit per-channel mean / inv-std as a (1, 2, C) block.
    j = pl.program_id(1)

    @pl.when(j == 0)
    def _():
        sum_sc[...] = jnp.zeros_like(sum_sc)
        sq_sc[...] = jnp.zeros_like(sq_sc)

    x = x_ref[0].astype(jnp.float32)                     # (TL, C)
    sum_sc[...] += jnp.sum(x, axis=0, keepdims=True)
    sq_sc[...] += jnp.sum(x * x, axis=0, keepdims=True)

    @pl.when(j == pl.num_programs(1) - 1)
    def _():
        m = m_ref[...]                                   # (C, C) group membership, f32
        mean = jnp.dot(sum_sc[...], m, preferred_element_type=jnp.float32) * inv_count
        ex2 = jnp.dot(sq_sc[...], m, preferred_element_type=jnp.float32) * inv_count
        var = jnp.maximum(ex2 - mean * mean, 0.0)        # clamp f32 cancellation
        o_ref[0, 0:1, :] = mean
        o_ref[0, 1:2, :] = jax.lax.rsqrt(var + eps)


def _gn_apply_kernel(x_ref, s_ref, g_ref, b_ref, o_ref, *, apply_swish):
    # Pass 2 of GroupNorm: normalize an L tile (+ optional fused swish).
    x = x_ref[0].astype(jnp.float32)                     # (TL, C)
    mean = s_ref[0, 0:1, :]
    inv = s_ref[0, 1:2, :]
    y = (x - mean) * (inv * g_ref[...]) + b_ref[...]
    if apply_swish:
        y = y * jax.nn.sigmoid(y)
    o_ref[0] = y.astype(o_ref.dtype)


def _qkv_proj_kernel(x_ref, wq_ref, wk_ref, wv_ref, bq_ref, bk_ref, bv_ref,
                     q_ref, k_ref, v_ref):
    # Fused q/k/v 1x1 convs: x is read from HBM once; scale is pre-folded into wq/bq.
    x = x_ref[0]                                         # (TL, C) bf16
    q_ref[0] = (jnp.dot(x, wq_ref[...], preferred_element_type=jnp.float32)
                + bq_ref[...]).astype(q_ref.dtype)
    k_ref[0] = (jnp.dot(x, wk_ref[...], preferred_element_type=jnp.float32)
                + bk_ref[...]).astype(k_ref.dtype)
    v_ref[0] = (jnp.dot(x, wv_ref[...], preferred_element_type=jnp.float32)
                + bv_ref[...]).astype(v_ref.dtype)


def _flash_attn_kernel(q_ref, k_ref, v_ref, o_ref, m_sc, l_sc, acc_sc):
    # Online-softmax attention over KV tiles; q/k/v are separate C-wide streams.
    ki = pl.program_id(2)

    @pl.when(ki == 0)
    def _():
        m_sc[...] = jnp.full_like(m_sc, -jnp.inf)
        l_sc[...] = jnp.zeros_like(l_sc)
        acc_sc[...] = jnp.zeros_like(acc_sc)

    q = q_ref[0]                                         # (TQ, C) bf16, pre-scaled
    k = k_ref[0]                                         # (TKV, C) bf16
    v = v_ref[0]                                         # (TKV, C) bf16
    s = jax.lax.dot_general(q, k, (((1,), (1,)), ((), ())),
                            preferred_element_type=jnp.float32)     # (TQ, TKV)

    m_prev = m_sc[...]
    m_new = jnp.maximum(m_prev, jnp.max(s, axis=-1, keepdims=True))
    alpha = jnp.exp(m_prev - m_new)
    p = jnp.exp(s - m_new)
    l_sc[...] = alpha * l_sc[...] + jnp.sum(p, axis=-1, keepdims=True)
    acc_sc[...] = alpha * acc_sc[...] + jnp.dot(p.astype(v.dtype), v,
                                                preferred_element_type=jnp.float32)
    m_sc[...] = m_new

    @pl.when(ki == pl.num_programs(2) - 1)
    def _():
        o_ref[0] = (acc_sc[...] * pl.reciprocal(l_sc[...], approx=True)
                    ).astype(o_ref.dtype)


# ----------------------------------------------------------------------------
# Pallas-call wrappers
# ----------------------------------------------------------------------------
def _cparams(sem):
    return pltpu.CompilerParams(dimension_semantics=sem, vmem_limit_bytes=VMEM_LIMIT)


def matmul_bias(x, w, b, residual=None):
    # x: [B, L, Cin]; w: [Cin, Cout]; b: [Cout]; optional residual: [B, L, Cout]
    B, L, Cin = x.shape
    Cout = w.shape[-1]
    TL = _choose_tile(L)
    n_lt = L // TL
    wbf = w.astype(MXU_DTYPE)                      # cast once in the wrapper
    b2 = b.reshape(1, Cout).astype(jnp.float32)

    in_specs = [pl.BlockSpec((1, TL, Cin), lambda bi, j: (bi, j, 0)),
                pl.BlockSpec((Cin, Cout), lambda bi, j: (0, 0)),
                pl.BlockSpec((1, Cout), lambda bi, j: (0, 0))]
    args = [x, wbf, b2]
    if residual is not None:
        in_specs.append(pl.BlockSpec((1, TL, Cout), lambda bi, j: (bi, j, 0)))
        args.append(residual)

    return pl.pallas_call(
        functools.partial(_matmul_bias_kernel, has_residual=residual is not None),
        out_shape=jax.ShapeDtypeStruct((B, L, Cout), ACT_DTYPE),
        grid=(B, n_lt),
        in_specs=in_specs,
        out_specs=pl.BlockSpec((1, TL, Cout), lambda bi, j: (bi, j, 0)),
        compiler_params=_cparams(("parallel", "parallel")),
    )(*args)


def conv3_s1(x, w, b, residual=None):
    """Conv1d k=3 / stride=1 / padding=1 over [B, L, Cin]; halo-tiled, no padded copy."""
    B, L, Cin = x.shape
    Cout = w.shape[2]
    TL = _choose_tile(L)
    n_lt = L // TL
    has_halo = n_lt > 1                              # single tile => boundaries are zeros

    wbf = w.astype(MXU_DTYPE)
    b2 = b.reshape(1, Cout).astype(jnp.float32)

    in_specs = [pl.BlockSpec((1, TL, Cin), lambda bi, j: (bi, j, 0))]
    args = [x]
    if has_halo:
        tlh = TL // HALO
        nhb = L // HALO
        prev_map = lambda bi, j: (bi, jnp.maximum(j * tlh - 1, 0), 0)
        next_map = lambda bi, j: (bi, jnp.minimum((j + 1) * tlh, nhb - 1), 0)
        in_specs.append(pl.BlockSpec((1, HALO, Cin), prev_map))
        in_specs.append(pl.BlockSpec((1, HALO, Cin), next_map))
        args += [x, x]
    in_specs += [pl.BlockSpec((3, Cin, Cout), lambda bi, j: (0, 0, 0)),
                 pl.BlockSpec((1, Cout), lambda bi, j: (0, 0))]
    args += [wbf, b2]
    if residual is not None:
        in_specs.append(pl.BlockSpec((1, TL, Cout), lambda bi, j: (bi, j, 0)))
        args.append(residual)

    kern = functools.partial(_conv3_kernel, has_residual=residual is not None,
                             has_halo=has_halo, lt=TL)
    return pl.pallas_call(
        kern,
        out_shape=jax.ShapeDtypeStruct((B, L, Cout), ACT_DTYPE),
        grid=(B, n_lt),
        in_specs=in_specs,
        out_specs=pl.BlockSpec((1, TL, Cout), lambda bi, j: (bi, j, 0)),
        compiler_params=_cparams(("parallel", "parallel")),
    )(*args)


def conv3_s2_downsample(x, w, b):
    """DownSample: F.pad(x, (0, 1)) then Conv1d(k=3, stride=2, padding=0).

    Adjacent rows are paired with a single reshape ([B,L,C] -> [B,L/2,2C]); the
    stride-2 conv then becomes the same halo-tiled conv kernel with a zero leading
    tap -- no 3x-wide im2col round trip through HBM.
    """
    B, L, Cin = x.shape
    Cout = w.shape[2]
    Lo = (L - 2) // 2 + 1                              # PyTorch output length
    if L % 2 == 1:                                     # make pairing possible
        x = jnp.pad(x, ((0, 0), (0, 1), (0, 0)))
        L = L + 1
    xr = x.reshape(B, L // 2, 2 * Cin)                 # xr[:, i] = [x[2i], x[2i+1]]
    # out[i] = x[2i] W0 + x[2i+1] W1 + x[2i+2] W2  =  xr[i] @ [W0;W1] + xr[i+1] @ [W2;0]
    w01 = jnp.concatenate([w[0], w[1]], axis=0)        # (2Cin, Cout)
    w2e = jnp.concatenate([w[2], jnp.zeros_like(w[1])], axis=0)
    wz = jnp.zeros_like(w01)
    w3 = jnp.stack([wz, w01, w2e], axis=0)             # (3, 2Cin, Cout)
    y = conv3_s1(xr, w3, b)                            # (B, L//2, Cout)
    return y[:, :Lo, :]


def groupnorm(x, gamma, beta, *, apply_swish):
    # Two-pass, L-tiled GroupNorm: stats reduction + normalize(+swish).
    B, L, C = x.shape
    cs = C // NUM_GROUPS
    g2 = gamma.reshape(1, C).astype(jnp.float32)
    b2 = beta.reshape(1, C).astype(jnp.float32)
    gid = jnp.arange(C, dtype=jnp.int32) // cs
    m = (gid[:, None] == gid[None, :]).astype(jnp.float32)      # (C, C) membership

    TL = _choose_tile(L)
    n_lt = L // TL

    stats = pl.pallas_call(
        functools.partial(_gn_stats_kernel, inv_count=1.0 / float(L * cs), eps=GN_EPS),
        out_shape=jax.ShapeDtypeStruct((B, 2, C), jnp.float32),
        grid=(B, n_lt),
        in_specs=[pl.BlockSpec((1, TL, C), lambda bi, j: (bi, j, 0)),
                  pl.BlockSpec((C, C), lambda bi, j: (0, 0))],
        out_specs=pl.BlockSpec((1, 2, C), lambda bi, j: (bi, 0, 0)),
        scratch_shapes=[pltpu.VMEM((1, C), jnp.float32),
                        pltpu.VMEM((1, C), jnp.float32)],
        compiler_params=_cparams(("parallel", "arbitrary")),
    )(x, m)

    return pl.pallas_call(
        functools.partial(_gn_apply_kernel, apply_swish=apply_swish),
        out_shape=jax.ShapeDtypeStruct((B, L, C), ACT_DTYPE),
        grid=(B, n_lt),
        in_specs=[pl.BlockSpec((1, TL, C), lambda bi, j: (bi, j, 0)),
                  pl.BlockSpec((1, 2, C), lambda bi, j: (bi, 0, 0)),
                  pl.BlockSpec((1, C), lambda bi, j: (0, 0)),
                  pl.BlockSpec((1, C), lambda bi, j: (0, 0))],
        out_specs=pl.BlockSpec((1, TL, C), lambda bi, j: (bi, j, 0)),
        compiler_params=_cparams(("parallel", "parallel")),
    )(x, stats, g2, b2)


def qkv_projection(x, wq, bq, wk, bk, wv, bv, *, scale):
    # x: [B, L, C] -> (q, k, v), each [B, L, C]; attention scale folded into q.
    B, L, C = x.shape
    TL = _choose_tile(L)
    n_lt = L // TL
    wq_s = (wq * scale).astype(MXU_DTYPE)
    bq_s = (bq * scale).reshape(1, C).astype(jnp.float32)
    wk_b = wk.astype(MXU_DTYPE)
    wv_b = wv.astype(MXU_DTYPE)
    bk2 = bk.reshape(1, C).astype(jnp.float32)
    bv2 = bv.reshape(1, C).astype(jnp.float32)

    act = pl.BlockSpec((1, TL, C), lambda bi, j: (bi, j, 0))
    wsp = pl.BlockSpec((C, C), lambda bi, j: (0, 0))
    bsp = pl.BlockSpec((1, C), lambda bi, j: (0, 0))
    out = jax.ShapeDtypeStruct((B, L, C), ACT_DTYPE)

    return pl.pallas_call(
        _qkv_proj_kernel,
        out_shape=(out, out, out),
        grid=(B, n_lt),
        in_specs=[act, wsp, wsp, wsp, bsp, bsp, bsp],
        out_specs=(act, act, act),
        compiler_params=_cparams(("parallel", "parallel")),
    )(x, wq_s, wk_b, wv_b, bq_s, bk2, bv2)


def flash_attn(q, k, v):
    # q/k/v: [B, L, C] (scale already folded into q); returns [B, L, C].
    B, L, C = q.shape
    TQ = _choose_tile(L)
    TKV = _choose_tile(L)
    nQ = L // TQ
    nKV = L // TKV
    # TODO(synk): on v5e, if profiling shows exposed KV DMA, add
    # pipeline_mode=pl.Buffered(3) to the k/v BlockSpecs (128 MiB VMEM has room).
    return pl.pallas_call(
        _flash_attn_kernel,
        out_shape=jax.ShapeDtypeStruct((B, L, C), ACT_DTYPE),
        grid=(B, nQ, nKV),
        in_specs=[pl.BlockSpec((1, TQ, C), lambda b, qi, ki: (b, qi, 0)),
                  pl.BlockSpec((1, TKV, C), lambda b, qi, ki: (b, ki, 0)),
                  pl.BlockSpec((1, TKV, C), lambda b, qi, ki: (b, ki, 0))],
        out_specs=pl.BlockSpec((1, TQ, C), lambda b, qi, ki: (b, qi, 0)),
        scratch_shapes=[pltpu.VMEM((TQ, 1), jnp.float32),    # running max
                        pltpu.VMEM((TQ, 1), jnp.float32),    # running denominator
                        pltpu.VMEM((TQ, C), jnp.float32)],   # output accumulator
        compiler_params=_cparams(("parallel", "parallel", "arbitrary")),
    )(q, k, v)


# ----------------------------------------------------------------------------
# Parameter initialization (deterministic, synthetic)
# ----------------------------------------------------------------------------
def _init_conv(key, k, cin, cout):
    kw, kb = jax.random.split(key)
    fan_in = k * cin
    w = jax.random.normal(kw, (k, cin, cout), jnp.float32) / math.sqrt(fan_in)
    b = 0.01 * jax.random.normal(kb, (cout,), jnp.float32)
    return w, b


def _init_gn(key, c):
    kg, kb = jax.random.split(key)
    gamma = 1.0 + 0.05 * jax.random.normal(kg, (c,), jnp.float32)
    beta = 0.05 * jax.random.normal(kb, (c,), jnp.float32)
    return gamma, beta


def _init_resnet(key, cin, cout):
    ks = jax.random.split(key, 5)
    p = {
        "norm1": _init_gn(ks[0], cin),
        "conv1": _init_conv(ks[1], 3, cin, cout),
        "norm2": _init_gn(ks[2], cout),
        "conv2": _init_conv(ks[3], 3, cout, cout),
    }
    if cin != cout:
        p["nin_shortcut"] = _init_conv(ks[4], 1, cin, cout)
    return p


def _init_attn(key, c):
    ks = jax.random.split(key, 5)
    return {
        "norm": _init_gn(ks[0], c),
        "q": _init_conv(ks[1], 1, c, c),
        "k": _init_conv(ks[2], 1, c, c),
        "v": _init_conv(ks[3], 1, c, c),
        "proj_out": _init_conv(ks[4], 1, c, c),
        "channels": c,
    }


def init_encoder_params(key, *, channels, channel_multipliers, n_resnet_blocks,
                        in_channels, z_channels):
    keys = iter(jax.random.split(key, 128))
    nk = lambda: next(keys)

    params = {"conv_in": _init_conv(nk(), 3, in_channels, channels)}
    channels_list = [m * channels for m in [1] + list(channel_multipliers)]
    n_resolutions = len(channel_multipliers)

    ch = channels
    down = []
    for i in range(n_resolutions):
        blocks = []
        for _ in range(n_resnet_blocks):
            blocks.append(_init_resnet(nk(), ch, channels_list[i + 1]))
            ch = channels_list[i + 1]
        d = {"blocks": blocks}
        if i != n_resolutions - 1:
            d["downsample"] = _init_conv(nk(), 3, ch, ch)
        down.append(d)
    params["down"] = down

    params["mid_block_1"] = _init_resnet(nk(), ch, ch)
    params["mid_attn_1"] = _init_attn(nk(), ch)
    params["mid_block_2"] = _init_resnet(nk(), ch, ch)
    params["norm_out"] = _init_gn(nk(), ch)
    params["conv_out"] = _init_conv(nk(), 3, ch, z_channels)
    return params


# ----------------------------------------------------------------------------
# Forward pass (composition of Pallas kernels)
# ----------------------------------------------------------------------------
def resnet_block(x, p):
    h = groupnorm(x, *p["norm1"], apply_swish=True)
    h = conv3_s1(h, *p["conv1"])
    h = groupnorm(h, *p["norm2"], apply_swish=True)
    if "nin_shortcut" in p:
        w_sc, b_sc = p["nin_shortcut"]
        shortcut = matmul_bias(x, w_sc[0], b_sc)
    else:
        shortcut = x
    # residual add fused into the conv2 kernel epilogue
    return conv3_s1(h, *p["conv2"], residual=shortcut)


def attn_block(x, p):
    c = p["channels"]
    xn = groupnorm(x, *p["norm"], apply_swish=False)
    wq, bq = p["q"]
    wk, bk = p["k"]
    wv, bv = p["v"]
    q, k, v = qkv_projection(xn, wq[0], bq, wk[0], bk, wv[0], bv, scale=c ** (-0.5))
    out = flash_attn(q, k, v)
    wp, bpj = p["proj_out"]
    # residual add fused into the proj_out matmul epilogue
    return matmul_bias(out, wp[0], bpj, residual=x)


def encoder_forward(params, inputs_ncl):
    # inputs_ncl: [B, C_in, L] (PyTorch layout)
    out_dtype = inputs_ncl.dtype
    x = jnp.transpose(inputs_ncl, (0, 2, 1)).astype(ACT_DTYPE)   # NCL -> NLC, bf16
    x = conv3_s1(x, *params["conv_in"])
    for d in params["down"]:
        for bp in d["blocks"]:
            x = resnet_block(x, bp)
        if "downsample" in d:
            x = conv3_s2_downsample(x, *d["downsample"])
    x = resnet_block(x, params["mid_block_1"])
    x = attn_block(x, params["mid_attn_1"])
    x = resnet_block(x, params["mid_block_2"])
    x = groupnorm(x, *params["norm_out"], apply_swish=True)
    x = conv3_s1(x, *params["conv_out"])
    return jnp.transpose(x, (0, 2, 1)).astype(out_dtype)          # NLC -> NCL


# ----------------------------------------------------------------------------
if __name__ == "__main__":
    # Small but GroupNorm-consistent config (channel counts must be multiples of 32):
    #   channels=32, channel_multipliers=[1, 2], n_resnet_blocks=1,
    #   in_channels=4, z_channels=8, input length 16.
    key = jax.random.PRNGKey(0)
    k_params, k_input = jax.random.split(key)

    params = init_encoder_params(
        k_params,
        channels=32,
        channel_multipliers=[1, 2],
        n_resnet_blocks=1,
        in_channels=4,
        z_channels=8,
    )

    # PyTorch-layout input [batch, in_channels, length]
    x = jax.random.normal(k_input, (2, 4, 16), jnp.float32)

    fwd = jax.jit(encoder_forward)
    out = fwd(params, x)
    out = jax.block_until_ready(out)

    assert out.shape == (2, 8, 8), out.shape
    assert bool(jnp.all(jnp.isfinite(out)))
    print("KERNEL_OK")
</pallas_src>

<mosaic_0001>
module attributes {stable_mosaic.version = 11 : i64} {
  func.func @_conv3_kernel(%arg0: i32, %arg1: i32, %arg2: memref<1x16x4xbf16, #tpu.memory_space<vmem>>, %arg3: memref<3x4x32xbf16, #tpu.memory_space<vmem>>, %arg4: memref<1x32xf32, #tpu.memory_space<vmem>>, %arg5: memref<1x16x32xbf16, #tpu.memory_space<vmem>>) attributes {dimension_semantics = [#tpu.dimension_semantics<parallel>, #tpu.dimension_semantics<parallel>], iteration_bounds = array<i64: 2, 1>, scalar_prefetch = 0 : i64, scratch_operands = 0 : i64, tpu.core_type = #tpu.core_type<tc>, window_params = [{transform_indices = @transform_0, window_bounds = array<i64: 1, 16, 4>}, {pipeline_mode = #tpu.pipeline_mode<synchronous>, transform_indices = @transform_1, window_bounds = array<i64: 3, 4, 32>}, {pipeline_mode = #tpu.pipeline_mode<synchronous>, transform_indices = @transform_2, window_bounds = array<i64: 1, 32>}, {transform_indices = @transform_3, window_bounds = array<i64: 1, 16, 32>}]} {
    %c0 = arith.constant 0 : index
    %c0_0 = arith.constant 0 : index
    %c0_1 = arith.constant 0 : index
    %0 = vector.load %arg2[%c0, %c0_0, %c0_1] : memref<1x16x4xbf16, #tpu.memory_space<vmem>>, vector<1x16x4xbf16>
    %1 = vector.shape_cast %0 : vector<1x16x4xbf16> to vector<16x4xbf16>
    %cst = arith.constant 0.000000e+00 : bf16
    %2 = vector.broadcast %cst : bf16 to vector<1x4xbf16>
    %3 = vector.extract_strided_slice %1 {offsets = [0, 0], sizes = [15, 4], strides = [1, 1]} : vector<16x4xbf16> to vector<15x4xbf16>
    %4 = tpu.concatenate %2, %3 in 0 : vector<1x4xbf16>, vector<15x4xbf16> -> vector<16x4xbf16>
    %5 = vector.extract_strided_slice %1 {offsets = [1, 0], sizes = [15, 4], strides = [1, 1]} : vector<16x4xbf16> to vector<15x4xbf16>
    %6 = tpu.concatenate %5, %2 in 0 : vector<15x4xbf16>, vector<1x4xbf16> -> vector<16x4xbf16>
    %c1 = arith.constant 1 : index
    %c0_2 = arith.constant 0 : index
    %c0_3 = arith.constant 0 : index
    %7 = vector.load %arg3[%c1, %c0_2, %c0_3] : memref<3x4x32xbf16, #tpu.memory_space<vmem>>, vector<1x4x32xbf16>
    %8 = vector.shape_cast %7 : vector<1x4x32xbf16> to vector<4x32xbf16>
    %cst_4 = arith.constant dense<0.000000e+00> : vector<16x32xf32>
    %9 = tpu.matmul %1, %8, %cst_4 {dimension_numbers = #tpu.dot_dimension_numbers<[1], [0], [0], [1], [0, 0, 1, 1], [], []>} : vector<16x4xbf16>, vector<4x32xbf16>, vector<16x32xf32> -> vector<16x32xf32>
    %c0_5 = arith.constant 0 : index
    %c0_6 = arith.constant 0 : index
    %c0_7 = arith.constant 0 : index
    %10 = vector.load %arg3[%c0_5, %c0_6, %c0_7] : memref<3x4x32xbf16, #tpu.memory_space<vmem>>, vector<1x4x32xbf16>
    %11 = vector.shape_cast %10 : vector<1x4x32xbf16> to vector<4x32xbf16>
    %cst_8 = arith.constant dense<0.000000e+00> : vector<16x32xf32>
    %12 = tpu.matmul %4, %11, %cst_8 {dimension_numbers = #tpu.dot_dimension_numbers<[1], [0], [0], [1], [0, 0, 1, 1], [], []>} : vector<16x4xbf16>, vector<4x32xbf16>, vector<16x32xf32> -> vector<16x32xf32>
    %13 = arith.addf %9, %12 : vector<16x32xf32>
    %c2 = arith.constant 2 : index
    %c0_9 = arith.constant 0 : index
    %c0_10 = arith.constant 0 : index
    %14 = vector.load %arg3[%c2, %c0_9, %c0_10] : memref<3x4x32xbf16, #tpu.memory_space<vmem>>, vector<1x4x32xbf16>
    %15 = vector.shape_cast %14 : vector<1x4x32xbf16> to vector<4x32xbf16>
    %cst_11 = arith.constant dense<0.000000e+00> : vector<16x32xf32>
    %16 = tpu.matmul %6, %15, %cst_11 {dimension_numbers = #tpu.dot_dimension_numbers<[1], [0], [0], [1], [0, 0, 1, 1], [], []>} : vector<16x4xbf16>, vector<4x32xbf16>, vector<16x32xf32> -> vector<16x32xf32>
    %17 = arith.addf %13, %16 : vector<16x32xf32>
    %c0_12 = arith.constant 0 : index
    %c0_13 = arith.constant 0 : index
    %18 = vector.load %arg4[%c0_12, %c0_13] : memref<1x32xf32, #tpu.memory_space<vmem>>, vector<1x32xf32>
    %19 = vector.broadcast %18 : vector<1x32xf32> to vector<16x32xf32>
    %20 = arith.addf %17, %19 : vector<16x32xf32>
    %21 = arith.truncf %20 : vector<16x32xf32> to vector<16x32xbf16>
    %c0_14 = arith.constant 0 : index
    %c0_15 = arith.constant 0 : index
    %c0_16 = arith.constant 0 : index
    %22 = vector.load %arg5[%c0_14, %c0_15, %c0_16] : memref<1x16x32xbf16, #tpu.memory_space<vmem>>, vector<1x16x32xbf16>
    %23 = vector.shape_cast %22 : vector<1x16x32xbf16> to vector<16x32xbf16>
    %24 = vector.shape_cast %21 : vector<16x32xbf16> to vector<1x16x32xbf16>
    tpu.vector_store %arg5[%c0_14, %c0_15, %c0_16], %24 {strides = array<i32>} : memref<1x16x32xbf16, #tpu.memory_space<vmem>>, vector<1x16x32xbf16>,
    return
  }
  func.func @transform_0(%arg0: i32, %arg1: i32) -> (i32, i32, i32) {
    %c0_i32 = arith.constant 0 : i32
    %c0_i32_0 = arith.constant 0 : i32
    return %arg0, %arg1, %c0_i32 : i32, i32, i32
  }
  func.func @transform_1(%arg0: i32, %arg1: i32) -> (i32, i32, i32) {
    %c0_i32 = arith.constant 0 : i32
    %c0_i32_0 = arith.constant 0 : i32
    %c0_i32_1 = arith.constant 0 : i32
    %c0_i32_2 = arith.constant 0 : i32
    return %c0_i32, %c0_i32_0, %c0_i32_1 : i32, i32, i32
  }
  func.func @transform_2(%arg0: i32, %arg1: i32) -> (i32, i32) {
    %c0_i32 = arith.constant 0 : i32
    %c0_i32_0 = arith.constant 0 : i32
    %c0_i32_1 = arith.constant 0 : i32
    return %c0_i32, %c0_i32_0 : i32, i32
  }
  func.func @transform_3(%arg0: i32, %arg1: i32) -> (i32, i32, i32) {
    %c0_i32 = arith.constant 0 : i32
    %c0_i32_0 = arith.constant 0 : i32
    return %arg0, %arg1, %c0_i32 : i32, i32, i32
  }
}

module attributes {stable_mosaic.version = 11 : i64} {
  func.func @_gn_apply_kernel(%arg0: i32, %arg1: i32, %arg2: memref<1x16x32xbf16, #tpu.memory_space<vmem>>, %arg3: memref<1x2x32xf32, #tpu.memory_space<vmem>>, %arg4: memref<1x32xf32, #tpu.memory_space<vmem>>, %arg5: memref<1x32xf32, #tpu.memory_space<vmem>>, %arg6: memref<1x16x32xbf16, #tpu.memory_space<vmem>>) attributes {dimension_semantics = [#tpu.dimension_semantics<parallel>, #tpu.dimension_semantics<parallel>], iteration_bounds = array<i64: 2, 1>, scalar_prefetch = 0 : i64, scratch_operands = 0 : i64, tpu.core_type = #tpu.core_type<tc>, window_params = [{transform_indices = @transform_0, window_bounds = array<i64: 1, 16, 32>}, {transform_indices = @transform_1, window_bounds = array<i64: 1, 2, 32>}, {pipeline_mode = #tpu.pipeline_mode<synchronous>, transform_indices = @transform_2, window_bounds = array<i64: 1, 32>}, {pipeline_mode = #tpu.pipeline_mode<synchronous>, transform_indices = @transform_3, window_bounds = array<i64: 1, 32>}, {transform_indices = @transform_4, window_bounds = array<i64: 1, 16, 32>}]} {
    %c0 = arith.constant 0 : index
    %c0_0 = arith.constant 0 : index
    %c0_1 = arith.constant 0 : index
    %0 = vector.load %arg2[%c0, %c0_0, %c0_1] : memref<1x16x32xbf16, #tpu.memory_space<vmem>>, vector<1x16x32xbf16>
    %1 = vector.shape_cast %0 : vector<1x16x32xbf16> to vector<16x32xbf16>
    %2 = arith.extf %1 : vector<16x32xbf16> to vector<16x32xf32>
    %c0_2 = arith.constant 0 : index
    %c0_3 = arith.constant 0 : index
    %c0_4 = arith.constant 0 : index
    %3 = vector.load %arg3[%c0_2, %c0_3, %c0_4] : memref<1x2x32xf32, #tpu.memory_space<vmem>>, vector<1x1x32xf32>
    %4 = vector.shape_cast %3 : vector<1x1x32xf32> to vector<1x32xf32>
    %c0_5 = arith.constant 0 : index
    %c1 = arith.constant 1 : index
    %c0_6 = arith.constant 0 : index
    %5 = vector.load %arg3[%c0_5, %c1, %c0_6] : memref<1x2x32xf32, #tpu.memory_space<vmem>>, vector<1x1x32xf32>
    %6 = vector.shape_cast %5 : vector<1x1x32xf32> to vector<1x32xf32>
    %7 = vector.broadcast %4 : vector<1x32xf32> to vector<16x32xf32>
    %8 = arith.subf %2, %7 : vector<16x32xf32>
    %c0_7 = arith.constant 0 : index
    %c0_8 = arith.constant 0 : index
    %9 = vector.load %arg4[%c0_7, %c0_8] : memref<1x32xf32, #tpu.memory_space<vmem>>, vector<1x32xf32>
    %10 = arith.mulf %6, %9 : vector<1x32xf32>
    %11 = vector.broadcast %10 : vector<1x32xf32> to vector<16x32xf32>
    %12 = arith.mulf %8, %11 : vector<16x32xf32>
    %c0_9 = arith.constant 0 : index
    %c0_10 = arith.constant 0 : index
    %13 = vector.load %arg5[%c0_9, %c0_10] : memref<1x32xf32, #tpu.memory_space<vmem>>, vector<1x32xf32>
    %14 = vector.broadcast %13 : vector<1x32xf32> to vector<16x32xf32>
    %15 = arith.addf %12, %14 : vector<16x32xf32>
    %16 = arith.negf %15 : vector<16x32xf32>
    %17 = math.exp %16 : vector<16x32xf32>
    %cst = arith.constant 1.000000e+00 : f32
    %18 = vector.broadcast %cst : f32 to vector<16x32xf32>
    %19 = arith.addf %18, %17 : vector<16x32xf32>
    %20 = arith.divf %18, %19 : vector<16x32xf32>
    %21 = arith.mulf %15, %20 : vector<16x32xf32>
    %22 = arith.truncf %21 : vector<16x32xf32> to vector<16x32xbf16>
    %c0_11 = arith.constant 0 : index
    %c0_12 = arith.constant 0 : index
    %c0_13 = arith.constant 0 : index
    %23 = vector.load %arg6[%c0_11, %c0_12, %c0_13] : memref<1x16x32xbf16, #tpu.memory_space<vmem>>, vector<1x16x32xbf16>
    %24 = vector.shape_cast %23 : vector<1x16x32xbf16> to vector<16x32xbf16>
    %25 = vector.shape_cast %22 : vector<16x32xbf16> to vector<1x16x32xbf16>
    tpu.vector_store %arg6[%c0_11, %c0_12, %c0_13], %25 {strides = array<i32>} : memref<1x16x32xbf16, #tpu.memory_space<vmem>>, vector<1x16x32xbf16>,
    return
  }
  func.func @transform_0(%arg0: i32, %arg1: i32) -> (i32, i32, i32) {
    %c0_i32 = arith.constant 0 : i32
    %c0_i32_0 = arith.constant 0 : i32
    return %arg0, %arg1, %c0_i32 : i32, i32, i32
  }
  func.func @transform_1(%arg0: i32, %arg1: i32) -> (i32, i32, i32) {
    %c0_i32 = arith.constant 0 : i32
    %c0_i32_0 = arith.constant 0 : i32
    %c0_i32_1 = arith.constant 0 : i32
    return %arg0, %c0_i32, %c0_i32_0 : i32, i32, i32
  }
  func.func @transform_2(%arg0: i32, %arg1: i32) -> (i32, i32) {
    %c0_i32 = arith.constant 0 : i32
    %c0_i32_0 = arith.constant 0 : i32
    %c0_i32_1 = arith.constant 0 : i32
    return %c0_i32, %c0_i32_0 : i32, i32
  }
  func.func @transform_3(%arg0: i32, %arg1: i32) -> (i32, i32) {
    %c0_i32 = arith.constant 0 : i32
    %c0_i32_0 = arith.constant 0 : i32
    %c0_i32_1 = arith.constant 0 : i32
    return %c0_i32, %c0_i32_0 : i32, i32
  }
  func.func @transform_4(%arg0: i32, %arg1: i32) -> (i32, i32, i32) {
    %c0_i32 = arith.constant 0 : i32
    %c0_i32_0 = arith.constant 0 : i32
    return %arg0, %arg1, %c0_i32 : i32, i32, i32
  }
}

module attributes {stable_mosaic.version = 11 : i64} {
  func.func @_gn_stats_kernel(%arg0: i32, %arg1: i32, %arg2: memref<1x16x32xbf16, #tpu.memory_space<vmem>>, %arg3: memref<32x32xf32, #tpu.memory_space<vmem>>, %arg4: memref<1x2x32xf32, #tpu.memory_space<vmem>>, %arg5: memref<1x32xf32, #tpu.memory_space<vmem>>, %arg6: memref<1x32xf32, #tpu.memory_space<vmem>>) attributes {dimension_semantics = [#tpu.dimension_semantics<parallel>, #tpu.dimension_semantics<arbitrary>], iteration_bounds = array<i64: 2, 1>, scalar_prefetch = 0 : i64, scratch_operands = 2 : i64, tpu.core_type = #tpu.core_type<tc>, window_params = [{transform_indices = @transform_0, window_bounds = array<i64: 1, 16, 32>}, {pipeline_mode = #tpu.pipeline_mode<synchronous>, transform_indices = @transform_1, window_bounds = array<i64: 32, 32>}, {transform_indices = @transform_2, window_bounds = array<i64: 1, 2, 32>}]} {
    %c0_i32 = arith.constant 0 : i32
    %0 = arith.cmpi eq, %arg1, %c0_i32 : i32
    %1 = arith.extui %0 : i1 to i32
    %c0_i32_0 = arith.constant 0 : i32
    %2 = arith.cmpi ne, %1, %c0_i32_0 : i32
    scf.if %2 {
      %cst_14 = arith.constant 0.000000e+00 : f32
      %20 = vector.broadcast %cst_14 : f32 to vector<1x32xf32>
      %c0_15 = arith.constant 0 : index
      %c0_16 = arith.constant 0 : index
      %21 = vector.load %arg5[%c0_15, %c0_16] : memref<1x32xf32, #tpu.memory_space<vmem>>, vector<1x32xf32>
      tpu.vector_store %arg5[%c0_15, %c0_16], %20 {strides = array<i32>} : memref<1x32xf32, #tpu.memory_space<vmem>>, vector<1x32xf32>,
      %cst_17 = arith.constant 0.000000e+00 : f32
      %22 = vector.broadcast %cst_17 : f32 to vector<1x32xf32>
      %c0_18 = arith.constant 0 : index
      %c0_19 = arith.constant 0 : index
      %23 = vector.load %arg6[%c0_18, %c0_19] : memref<1x32xf32, #tpu.memory_space<vmem>>, vector<1x32xf32>
      tpu.vector_store %arg6[%c0_18, %c0_19], %22 {strides = array<i32>} : memref<1x32xf32, #tpu.memory_space<vmem>>, vector<1x32xf32>,
    } else {
    }
    %c0 = arith.constant 0 : index
    %c0_1 = arith.constant 0 : index
    %c0_2 = arith.constant 0 : index
    %3 = vector.load %arg2[%c0, %c0_1, %c0_2] : memref<1x16x32xbf16, #tpu.memory_space<vmem>>, vector<1x16x32xbf16>
    %4 = vector.shape_cast %3 : vector<1x16x32xbf16> to vector<16x32xbf16>
    %5 = arith.extf %4 : vector<16x32xbf16> to vector<16x32xf32>
    %c0_3 = arith.constant 0 : index
    %c0_4 = arith.constant 0 : index
    %6 = vector.load %arg5[%c0_3, %c0_4] : memref<1x32xf32, #tpu.memory_space<vmem>>, vector<1x32xf32>
    %cst = arith.constant dense<0.000000e+00> : vector<32xf32>
    %7 = vector.multi_reduction <add>, %5, %cst [0] : vector<16x32xf32> to vector<32xf32>
    %8 = vector.shape_cast %7 : vector<32xf32> to vector<1x32xf32>
    %9 = arith.addf %6, %8 : vector<1x32xf32>
    %c0_5 = arith.constant 0 : index
    %c0_6 = arith.constant 0 : index
    %10 = vector.load %arg5[%c0_5, %c0_6] : memref<1x32xf32, #tpu.memory_space<vmem>>, vector<1x32xf32>
    tpu.vector_store %arg5[%c0_5, %c0_6], %9 {strides = array<i32>} : memref<1x32xf32, #tpu.memory_space<vmem>>, vector<1x32xf32>,
    %c0_7 = arith.constant 0 : index
    %c0_8 = arith.constant 0 : index
    %11 = vector.load %arg6[%c0_7, %c0_8] : memref<1x32xf32, #tpu.memory_space<vmem>>, vector<1x32xf32>
    %12 = arith.mulf %5, %5 : vector<16x32xf32>
    %cst_9 = arith.constant dense<0.000000e+00> : vector<32xf32>
    %13 = vector.multi_reduction <add>, %12, %cst_9 [0] : vector<16x32xf32> to vector<32xf32>
    %14 = vector.shape_cast %13 : vector<32xf32> to vector<1x32xf32>
    %15 = arith.addf %11, %14 : vector<1x32xf32>
    %c0_10 = arith.constant 0 : index
    %c0_11 = arith.constant 0 : index
    %16 = vector.load %arg6[%c0_10, %c0_11] : memref<1x32xf32, #tpu.memory_space<vmem>>, vector<1x32xf32>
    tpu.vector_store %arg6[%c0_10, %c0_11], %15 {strides = array<i32>} : memref<1x32xf32, #tpu.memory_space<vmem>>, vector<1x32xf32>,
    %c0_i32_12 = arith.constant 0 : i32
    %17 = arith.cmpi eq, %arg1, %c0_i32_12 : i32
    %18 = arith.extui %17 : i1 to i32
    %c0_i32_13 = arith.constant 0 : i32
    %19 = arith.cmpi ne, %18, %c0_i32_13 : i32
    scf.if %19 {
      %c0_14 = arith.constant 0 : index
      %c0_15 = arith.constant 0 : index
      %20 = vector.load %arg3[%c0_14, %c0_15] : memref<32x32xf32, #tpu.memory_space<vmem>>, vector<32x32xf32>
      %c0_16 = arith.constant 0 : index
      %c0_17 = arith.constant 0 : index
      %21 = vector.load %arg5[%c0_16, %c0_17] : memref<1x32xf32, #tpu.memory_space<vmem>>, vector<1x32xf32>
      %cst_18 = arith.constant dense<0.000000e+00> : vector<1x32xf32>
      %22 = tpu.matmul %21, %20, %cst_18 {dimension_numbers = #tpu.dot_dimension_numbers<[1], [0], [0], [1], [0, 0, 1, 1], [], []>} : vector<1x32xf32>, vector<32x32xf32>, vector<1x32xf32> -> vector<1x32xf32>
      %cst_19 = arith.constant 6.250000e-02 : f32
      %23 = vector.broadcast %cst_19 : f32 to vector<1x32xf32>
      %24 = arith.mulf %22, %23 : vector<1x32xf32>
      %c0_20 = arith.constant 0 : index
      %c0_21 = arith.constant 0 : index
      %25 = vector.load %arg6[%c0_20, %c0_21] : memref<1x32xf32, #tpu.memory_space<vmem>>, vector<1x32xf32>
      %cst_22 = arith.constant dense<0.000000e+00> : vector<1x32xf32>
      %26 = tpu.matmul %25, %20, %cst_22 {dimension_numbers = #tpu.dot_dimension_numbers<[1], [0], [0], [1], [0, 0, 1, 1], [], []>} : vector<1x32xf32>, vector<32x32xf32>, vector<1x32xf32> -> vector<1x32xf32>
      %cst_23 = arith.constant 6.250000e-02 : f32
      %27 = vector.broadcast %cst_23 : f32 to vector<1x32xf32>
      %28 = arith.mulf %26, %27 : vector<1x32xf32>
      %29 = arith.mulf %24, %24 : vector<1x32xf32>
      %30 = arith.subf %28, %29 : vector<1x32xf32>
      %cst_24 = arith.constant 0.000000e+00 : f32
      %31 = vector.broadcast %cst_24 : f32 to vector<1x32xf32>
      %32 = arith.maximumf %30, %31 : vector<1x32xf32>
      %c0_25 = arith.constant 0 : index
      %c0_26 = arith.constant 0 : index
      %c0_27 = arith.constant 0 : index
      %33 = vector.load %arg4[%c0_25, %c0_26, %c0_27] : memref<1x2x32xf32, #tpu.memory_space<vmem>>, vector<1x1x32xf32>
      %34 = vector.shape_cast %33 : vector<1x1x32xf32> to vector<1x32xf32>
      %35 = vector.shape_cast %24 : vector<1x32xf32> to vector<1x1x32xf32>
      tpu.vector_store %arg4[%c0_25, %c0_26, %c0_27], %35 {strides = array<i32>} : memref<1x2x32xf32, #tpu.memory_space<vmem>>, vector<1x1x32xf32>,
      %cst_28 = arith.constant 9.99999997E-7 : f32
      %36 = vector.broadcast %cst_28 : f32 to vector<1x32xf32>
      %37 = arith.addf %32, %36 : vector<1x32xf32>
      %38 = math.rsqrt %37 : vector<1x32xf32>
      %c0_29 = arith.constant 0 : index
      %c1 = arith.constant 1 : index
      %c0_30 = arith.constant 0 : index
      %39 = vector.load %arg4[%c0_29, %c1, %c0_30] : memref<1x2x32xf32, #tpu.memory_space<vmem>>, vector<1x1x32xf32>
      %40 = vector.shape_cast %39 : vector<1x1x32xf32> to vector<1x32xf32>
      %41 = vector.shape_cast %38 : vector<1x32xf32> to vector<1x1x32xf32>
      tpu.vector_store %arg4[%c0_29, %c1, %c0_30], %41 {strides = array<i32>} : memref<1x2x32xf32, #tpu.memory_space<vmem>>, vector<1x1x32xf32>,
    } else {
    }
    return
  }
  func.func @transform_0(%arg0: i32, %arg1: i32) -> (i32, i32, i32) {
    %c0_i32 = arith.constant 0 : i32
    %c0_i32_0 = arith.constant 0 : i32
    return %arg0, %arg1, %c0_i32 : i32, i32, i32
  }
  func.func @transform_1(%arg0: i32, %arg1: i32) -> (i32, i32) {
    %c0_i32 = arith.constant 0 : i32
    %c0_i32_0 = arith.constant 0 : i32
    %c0_i32_1 = arith.constant 0 : i32
    return %c0_i32, %c0_i32_0 : i32, i32
  }
  func.func @transform_2(%arg0: i32, %arg1: i32) -> (i32, i32, i32) {
    %c0_i32 = arith.constant 0 : i32
    %c0_i32_0 = arith.constant 0 : i32
    %c0_i32_1 = arith.constant 0 : i32
    return %arg0, %c0_i32, %c0_i32_0 : i32, i32, i32
  }
}

module attributes {stable_mosaic.version = 11 : i64} {
  func.func @_conv3_kernel(%arg0: i32, %arg1: i32, %arg2: memref<1x16x32xbf16, #tpu.memory_space<vmem>>, %arg3: memref<3x32x32xbf16, #tpu.memory_space<vmem>>, %arg4: memref<1x32xf32, #tpu.memory_space<vmem>>, %arg5: memref<1x16x32xbf16, #tpu.memory_space<vmem>>) attributes {dimension_semantics = [#tpu.dimension_semantics<parallel>, #tpu.dimension_semantics<parallel>], iteration_bounds = array<i64: 2, 1>, scalar_prefetch = 0 : i64, scratch_operands = 0 : i64, tpu.core_type = #tpu.core_type<tc>, window_params = [{transform_indices = @transform_0, window_bounds = array<i64: 1, 16, 32>}, {pipeline_mode = #tpu.pipeline_mode<synchronous>, transform_indices = @transform_1, window_bounds = array<i64: 3, 32, 32>}, {pipeline_mode = #tpu.pipeline_mode<synchronous>, transform_indices = @transform_2, window_bounds = array<i64: 1, 32>}, {transform_indices = @transform_3, window_bounds = array<i64: 1, 16, 32>}]} {
    %c0 = arith.constant 0 : index
    %c0_0 = arith.constant 0 : index
    %c0_1 = arith.constant 0 : index
    %0 = vector.load %arg2[%c0, %c0_0, %c0_1] : memref<1x16x32xbf16, #tpu.memory_space<vmem>>, vector<1x16x32xbf16>
    %1 = vector.shape_cast %0 : vector<1x16x32xbf16> to vector<16x32xbf16>
    %cst = arith.constant 0.000000e+00 : bf16
    %2 = vector.broadcast %cst : bf16 to vector<1x32xbf16>
    %3 = vector.extract_strided_slice %1 {offsets = [0, 0], sizes = [15, 32], strides = [1, 1]} : vector<16x32xbf16> to vector<15x32xbf16>
    %4 = tpu.concatenate %2, %3 in 0 : vector<1x32xbf16>, vector<15x32xbf16> -> vector<16x32xbf16>
    %5 = vector.extract_strided_slice %1 {offsets = [1, 0], sizes = [15, 32], strides = [1, 1]} : vector<16x32xbf16> to vector<15x32xbf16>
    %6 = tpu.concatenate %5, %2 in 0 : vector<15x32xbf16>, vector<1x32xbf16> -> vector<16x32xbf16>
    %c1 = arith.constant 1 : index
    %c0_2 = arith.constant 0 : index
    %c0_3 = arith.constant 0 : index
    %7 = vector.load %arg3[%c1, %c0_2, %c0_3] : memref<3x32x32xbf16, #tpu.memory_space<vmem>>, vector<1x32x32xbf16>
    %8 = vector.shape_cast %7 : vector<1x32x32xbf16> to vector<32x32xbf16>
    %cst_4 = arith.constant dense<0.000000e+00> : vector<16x32xf32>
    %9 = tpu.matmul %1, %8, %cst_4 {dimension_numbers = #tpu.dot_dimension_numbers<[1], [0], [0], [1], [0, 0, 1, 1], [], []>} : vector<16x32xbf16>, vector<32x32xbf16>, vector<16x32xf32> -> vector<16x32xf32>
    %c0_5 = arith.constant 0 : index
    %c0_6 = arith.constant 0 : index
    %c0_7 = arith.constant 0 : index
    %10 = vector.load %arg3[%c0_5, %c0_6, %c0_7] : memref<3x32x32xbf16, #tpu.memory_space<vmem>>, vector<1x32x32xbf16>
    %11 = vector.shape_cast %10 : vector<1x32x32xbf16> to vector<32x32xbf16>
    %cst_8 = arith.constant dense<0.000000e+00> : vector<16x32xf32>
    %12 = tpu.matmul %4, %11, %cst_8 {dimension_numbers = #tpu.dot_dimension_numbers<[1], [0], [0], [1], [0, 0, 1, 1], [], []>} : vector<16x32xbf16>, vector<32x32xbf16>, vector<16x32xf32> -> vector<16x32xf32>
    %13 = arith.addf %9, %12 : vector<16x32xf32>
    %c2 = arith.constant 2 : index
    %c0_9 = arith.constant 0 : index
    %c0_10 = arith.constant 0 : index
    %14 = vector.load %arg3[%c2, %c0_9, %c0_10] : memref<3x32x32xbf16, #tpu.memory_space<vmem>>, vector<1x32x32xbf16>
    %15 = vector.shape_cast %14 : vector<1x32x32xbf16> to vector<32x32xbf16>
    %cst_11 = arith.constant dense<0.000000e+00> : vector<16x32xf32>
    %16 = tpu.matmul %6, %15, %cst_11 {dimension_numbers = #tpu.dot_dimension_numbers<[1], [0], [0], [1], [0, 0, 1, 1], [], []>} : vector<16x32xbf16>, vector<32x32xbf16>, vector<16x32xf32> -> vector<16x32xf32>
    %17 = arith.addf %13, %16 : vector<16x32xf32>
    %c0_12 = arith.constant 0 : index
    %c0_13 = arith.constant 0 : index
    %18 = vector.load %arg4[%c0_12, %c0_13] : memref<1x32xf32, #tpu.memory_space<vmem>>, vector<1x32xf32>
    %19 = vector.broadcast %18 : vector<1x32xf32> to vector<16x32xf32>
    %20 = arith.addf %17, %19 : vector<16x32xf32>
    %21 = arith.truncf %20 : vector<16x32xf32> to vector<16x32xbf16>
    %c0_14 = arith.constant 0 : index
    %c0_15 = arith.constant 0 : index
    %c0_16 = arith.constant 0 : index
    %22 = vector.load %arg5[%c0_14, %c0_15, %c0_16] : memref<1x16x32xbf16, #tpu.memory_space<vmem>>, vector<1x16x32xbf16>
    %23 = vector.shape_cast %22 : vector<1x16x32xbf16> to vector<16x32xbf16>
    %24 = vector.shape_cast %21 : vector<16x32xbf16> to vector<1x16x32xbf16>
    tpu.vector_store %arg5[%c0_14, %c0_15, %c0_16], %24 {strides = array<i32>} : memref<1x16x32xbf16, #tpu.memory_space<vmem>>, vector<1x16x32xbf16>,
    return
  }
  func.func @transform_0(%arg0: i32, %arg1: i32) -> (i32, i32, i32) {
    %c0_i32 = arith.constant 0 : i32
    %c0_i32_0 = arith.constant 0 : i32
    return %arg0, %arg1, %c0_i32 : i32, i32, i32
  }
  func.func @transform_1(%arg0: i32, %arg1: i32) -> (i32, i32, i32) {
    %c0_i32 = arith.constant 0 : i32
    %c0_i32_0 = arith.constant 0 : i32
    %c0_i32_1 = arith.constant 0 : i32
    %c0_i32_2 = arith.constant 0 : i32
    return %c0_i32, %c0_i32_0, %c0_i32_1 : i32, i32, i32
  }
  func.func @transform_2(%arg0: i32, %arg1: i32) -> (i32, i32) {
    %c0_i32 = arith.constant 0 : i32
    %c0_i32_0 = arith.constant 0 : i32
    %c0_i32_1 = arith.constant 0 : i32
    return %c0_i32, %c0_i32_0 : i32, i32
  }
  func.func @transform_3(%arg0: i32, %arg1: i32) -> (i32, i32, i32) {
    %c0_i32 = arith.constant 0 : i32
    %c0_i32_0 = arith.constant 0 : i32
    return %arg0, %arg1, %c0_i32 : i32, i32, i32
  }
}

module attributes {stable_mosaic.version = 11 : i64} {
  func.func @_conv3_kernel(%arg0: i32, %arg1: i32, %arg2: memref<1x16x32xbf16, #tpu.memory_space<vmem>>, %arg3: memref<3x32x32xbf16, #tpu.memory_space<vmem>>, %arg4: memref<1x32xf32, #tpu.memory_space<vmem>>, %arg5: memref<1x16x32xbf16, #tpu.memory_space<vmem>>, %arg6: memref<1x16x32xbf16, #tpu.memory_space<vmem>>) attributes {dimension_semantics = [#tpu.dimension_semantics<parallel>, #tpu.dimension_semantics<parallel>], iteration_bounds = array<i64: 2, 1>, scalar_prefetch = 0 : i64, scratch_operands = 0 : i64, tpu.core_type = #tpu.core_type<tc>, window_params = [{transform_indices = @transform_0, window_bounds = array<i64: 1, 16, 32>}, {pipeline_mode = #tpu.pipeline_mode<synchronous>, transform_indices = @transform_1, window_bounds = array<i64: 3, 32, 32>}, {pipeline_mode = #tpu.pipeline_mode<synchronous>, transform_indices = @transform_2, window_bounds = array<i64: 1, 32>}, {transform_indices = @transform_3, window_bounds = array<i64: 1, 16, 32>}, {transform_indices = @transform_4, window_bounds = array<i64: 1, 16, 32>}]} {
    %c0 = arith.constant 0 : index
    %c0_0 = arith.constant 0 : index
    %c0_1 = arith.constant 0 : index
    %0 = vector.load %arg2[%c0, %c0_0, %c0_1] : memref<1x16x32xbf16, #tpu.memory_space<vmem>>, vector<1x16x32xbf16>
    %1 = vector.shape_cast %0 : vector<1x16x32xbf16> to vector<16x32xbf16>
    %cst = arith.constant 0.000000e+00 : bf16
    %2 = vector.broadcast %cst : bf16 to vector<1x32xbf16>
    %3 = vector.extract_strided_slice %1 {offsets = [0, 0], sizes = [15, 32], strides = [1, 1]} : vector<16x32xbf16> to vector<15x32xbf16>
    %4 = tpu.concatenate %2, %3 in 0 : vector<1x32xbf16>, vector<15x32xbf16> -> vector<16x32xbf16>
    %5 = vector.extract_strided_slice %1 {offsets = [1, 0], sizes = [15, 32], strides = [1, 1]} : vector<16x32xbf16> to vector<15x32xbf16>
    %6 = tpu.concatenate %5, %2 in 0 : vector<15x32xbf16>, vector<1x32xbf16> -> vector<16x32xbf16>
    %c1 = arith.constant 1 : index
    %c0_2 = arith.constant 0 : index
    %c0_3 = arith.constant 0 : index
    %7 = vector.load %arg3[%c1, %c0_2, %c0_3] : memref<3x32x32xbf16, #tpu.memory_space<vmem>>, vector<1x32x32xbf16>
    %8 = vector.shape_cast %7 : vector<1x32x32xbf16> to vector<32x32xbf16>
    %cst_4 = arith.constant dense<0.000000e+00> : vector<16x32xf32>
    %9 = tpu.matmul %1, %8, %cst_4 {dimension_numbers = #tpu.dot_dimension_numbers<[1], [0], [0], [1], [0, 0, 1, 1], [], []>} : vector<16x32xbf16>, vector<32x32xbf16>, vector<16x32xf32> -> vector<16x32xf32>
    %c0_5 = arith.constant 0 : index
    %c0_6 = arith.constant 0 : index
    %c0_7 = arith.constant 0 : index
    %10 = vector.load %arg3[%c0_5, %c0_6, %c0_7] : memref<3x32x32xbf16, #tpu.memory_space<vmem>>, vector<1x32x32xbf16>
    %11 = vector.shape_cast %10 : vector<1x32x32xbf16> to vector<32x32xbf16>
    %cst_8 = arith.constant dense<0.000000e+00> : vector<16x32xf32>
    %12 = tpu.matmul %4, %11, %cst_8 {dimension_numbers = #tpu.dot_dimension_numbers<[1], [0], [0], [1], [0, 0, 1, 1], [], []>} : vector<16x32xbf16>, vector<32x32xbf16>, vector<16x32xf32> -> vector<16x32xf32>
    %13 = arith.addf %9, %12 : vector<16x32xf32>
    %c2 = arith.constant 2 : index
    %c0_9 = arith.constant 0 : index
    %c0_10 = arith.constant 0 : index
    %14 = vector.load %arg3[%c2, %c0_9, %c0_10] : memref<3x32x32xbf16, #tpu.memory_space<vmem>>, vector<1x32x32xbf16>
    %15 = vector.shape_cast %14 : vector<1x32x32xbf16> to vector<32x32xbf16>
    %cst_11 = arith.constant dense<0.000000e+00> : vector<16x32xf32>
    %16 = tpu.matmul %6, %15, %cst_11 {dimension_numbers = #tpu.dot_dimension_numbers<[1], [0], [0], [1], [0, 0, 1, 1], [], []>} : vector<16x32xbf16>, vector<32x32xbf16>, vector<16x32xf32> -> vector<16x32xf32>
    %17 = arith.addf %13, %16 : vector<16x32xf32>
    %c0_12 = arith.constant 0 : index
    %c0_13 = arith.constant 0 : index
    %18 = vector.load %arg4[%c0_12, %c0_13] : memref<1x32xf32, #tpu.memory_space<vmem>>, vector<1x32xf32>
    %19 = vector.broadcast %18 : vector<1x32xf32> to vector<16x32xf32>
    %20 = arith.addf %17, %19 : vector<16x32xf32>
    %c0_14 = arith.constant 0 : index
    %c0_15 = arith.constant 0 : index
    %c0_16 = arith.constant 0 : index
    %21 = vector.load %arg5[%c0_14, %c0_15, %c0_16] : memref<1x16x32xbf16, #tpu.memory_space<vmem>>, vector<1x16x32xbf16>
    %22 = vector.shape_cast %21 : vector<1x16x32xbf16> to vector<16x32xbf16>
    %23 = arith.extf %22 : vector<16x32xbf16> to vector<16x32xf32>
    %24 = arith.addf %20, %23 : vector<16x32xf32>
    %25 = arith.truncf %24 : vector<16x32xf32> to vector<16x32xbf16>
    %c0_17 = arith.constant 0 : index
    %c0_18 = arith.constant 0 : index
    %c0_19 = arith.constant 0 : index
    %26 = vector.load %arg6[%c0_17, %c0_18, %c0_19] : memref<1x16x32xbf16, #tpu.memory_space<vmem>>, vector<1x16x32xbf16>
    %27 = vector.shape_cast %26 : vector<1x16x32xbf16> to vector<16x32xbf16>
    %28 = vector.shape_cast %25 : vector<16x32xbf16> to vector<1x16x32xbf16>
    tpu.vector_store %arg6[%c0_17, %c0_18, %c0_19], %28 {strides = array<i32>} : memref<1x16x32xbf16, #tpu.memory_space<vmem>>, vector<1x16x32xbf16>,
    return
  }
  func.func @transform_0(%arg0: i32, %arg1: i32) -> (i32, i32, i32) {
    %c0_i32 = arith.constant 0 : i32
    %c0_i32_0 = arith.constant 0 : i32
    return %arg0, %arg1, %c0_i32 : i32, i32, i32
  }
  func.func @transform_1(%arg0: i32, %arg1: i32) -> (i32, i32, i32) {
    %c0_i32 = arith.constant 0 : i32
    %c0_i32_0 = arith.constant 0 : i32
    %c0_i32_1 = arith.constant 0 : i32
    %c0_i32_2 = arith.constant 0 : i32
    return %c0_i32, %c0_i32_0, %c0_i32_1 : i32, i32, i32
  }
  func.func @transform_2(%arg0: i32, %arg1: i32) -> (i32, i32) {
    %c0_i32 = arith.constant 0 : i32
    %c0_i32_0 = arith.constant 0 : i32
    %c0_i32_1 = arith.constant 0 : i32
    return %c0_i32, %c0_i32_0 : i32, i32
  }
  func.func @transform_3(%arg0: i32, %arg1: i32) -> (i32, i32, i32) {
    %c0_i32 = arith.constant 0 : i32
    %c0_i32_0 = arith.constant 0 : i32
    return %arg0, %arg1, %c0_i32 : i32, i32, i32
  }
  func.func @transform_4(%arg0: i32, %arg1: i32) -> (i32, i32, i32) {
    %c0_i32 = arith.constant 0 : i32
    %c0_i32_0 = arith.constant 0 : i32
    return %arg0, %arg1, %c0_i32 : i32, i32, i32
  }
}

module attributes {stable_mosaic.version = 11 : i64} {
  func.func @_conv3_kernel(%arg0: i32, %arg1: i32, %arg2: memref<1x8x64xbf16, #tpu.memory_space<vmem>>, %arg3: memref<3x64x32xbf16, #tpu.memory_space<vmem>>, %arg4: memref<1x32xf32, #tpu.memory_space<vmem>>, %arg5: memref<1x8x32xbf16, #tpu.memory_space<vmem>>) attributes {dimension_semantics = [#tpu.dimension_semantics<parallel>, #tpu.dimension_semantics<parallel>], iteration_bounds = array<i64: 2, 1>, scalar_prefetch = 0 : i64, scratch_operands = 0 : i64, tpu.core_type = #tpu.core_type<tc>, window_params = [{transform_indices = @transform_0, window_bounds = array<i64: 1, 8, 64>}, {pipeline_mode = #tpu.pipeline_mode<synchronous>, transform_indices = @transform_1, window_bounds = array<i64: 3, 64, 32>}, {pipeline_mode = #tpu.pipeline_mode<synchronous>, transform_indices = @transform_2, window_bounds = array<i64: 1, 32>}, {transform_indices = @transform_3, window_bounds = array<i64: 1, 8, 32>}]} {
    %c0 = arith.constant 0 : index
    %c0_0 = arith.constant 0 : index
    %c0_1 = arith.constant 0 : index
    %0 = vector.load %arg2[%c0, %c0_0, %c0_1] : memref<1x8x64xbf16, #tpu.memory_space<vmem>>, vector<1x8x64xbf16>
    %1 = vector.shape_cast %0 : vector<1x8x64xbf16> to vector<8x64xbf16>
    %cst = arith.constant 0.000000e+00 : bf16
    %2 = vector.broadcast %cst : bf16 to vector<1x64xbf16>
    %3 = vector.extract_strided_slice %1 {offsets = [0, 0], sizes = [7, 64], strides = [1, 1]} : vector<8x64xbf16> to vector<7x64xbf16>
    %4 = tpu.concatenate %2, %3 in 0 : vector<1x64xbf16>, vector<7x64xbf16> -> vector<8x64xbf16>
    %5 = vector.extract_strided_slice %1 {offsets = [1, 0], sizes = [7, 64], strides = [1, 1]} : vector<8x64xbf16> to vector<7x64xbf16>
    %6 = tpu.concatenate %5, %2 in 0 : vector<7x64xbf16>, vector<1x64xbf16> -> vector<8x64xbf16>
    %c1 = arith.constant 1 : index
    %c0_2 = arith.constant 0 : index
    %c0_3 = arith.constant 0 : index
    %7 = vector.load %arg3[%c1, %c0_2, %c0_3] : memref<3x64x32xbf16, #tpu.memory_space<vmem>>, vector<1x64x32xbf16>
    %8 = vector.shape_cast %7 : vector<1x64x32xbf16> to vector<64x32xbf16>
    %cst_4 = arith.constant dense<0.000000e+00> : vector<8x32xf32>
    %9 = tpu.matmul %1, %8, %cst_4 {dimension_numbers = #tpu.dot_dimension_numbers<[1], [0], [0], [1], [0, 0, 1, 1], [], []>} : vector<8x64xbf16>, vector<64x32xbf16>, vector<8x32xf32> -> vector<8x32xf32>
    %c0_5 = arith.constant 0 : index
    %c0_6 = arith.constant 0 : index
    %c0_7 = arith.constant 0 : index
    %10 = vector.load %arg3[%c0_5, %c0_6, %c0_7] : memref<3x64x32xbf16, #tpu.memory_space<vmem>>, vector<1x64x32xbf16>
    %11 = vector.shape_cast %10 : vector<1x64x32xbf16> to vector<64x32xbf16>
    %cst_8 = arith.constant dense<0.000000e+00> : vector<8x32xf32>
    %12 = tpu.matmul %4, %11, %cst_8 {dimension_numbers = #tpu.dot_dimension_numbers<[1], [0], [0], [1], [0, 0, 1, 1], [], []>} : vector<8x64xbf16>, vector<64x32xbf16>, vector<8x32xf32> -> vector<8x32xf32>
    %13 = arith.addf %9, %12 : vector<8x32xf32>
    %c2 = arith.constant 2 : index
    %c0_9 = arith.constant 0 : index
    %c0_10 = arith.constant 0 : index
    %14 = vector.load %arg3[%c2, %c0_9, %c0_10] : memref<3x64x32xbf16, #tpu.memory_space<vmem>>, vector<1x64x32xbf16>
    %15 = vector.shape_cast %14 : vector<1x64x32xbf16> to vector<64x32xbf16>
    %cst_11 = arith.constant dense<0.000000e+00> : vector<8x32xf32>
    %16 = tpu.matmul %6, %15, %cst_11 {dimension_numbers = #tpu.dot_dimension_numbers<[1], [0], [0], [1], [0, 0, 1, 1], [], []>} : vector<8x64xbf16>, vector<64x32xbf16>, vector<8x32xf32> -> vector<8x32xf32>
    %17 = arith.addf %13, %16 : vector<8x32xf32>
    %c0_12 = arith.constant 0 : index
    %c0_13 = arith.constant 0 : index
    %18 = vector.load %arg4[%c0_12, %c0_13] : memref<1x32xf32, #tpu.memory_space<vmem>>, vector<1x32xf32>
    %19 = vector.broadcast %18 : vector<1x32xf32> to vector<8x32xf32>
    %20 = arith.addf %17, %19 : vector<8x32xf32>
    %21 = arith.truncf %20 : vector<8x32xf32> to vector<8x32xbf16>
    %c0_14 = arith.constant 0 : index
    %c0_15 = arith.constant 0 : index
    %c0_16 = arith.constant 0 : index
    %22 = vector.load %arg5[%c0_14, %c0_15, %c0_16] : memref<1x8x32xbf16, #tpu.memory_space<vmem>>, vector<1x8x32xbf16>
    %23 = vector.shape_cast %22 : vector<1x8x32xbf16> to vector<8x32xbf16>
    %24 = vector.shape_cast %21 : vector<8x32xbf16> to vector<1x8x32xbf16>
    tpu.vector_store %arg5[%c0_14, %c0_15, %c0_16], %24 {strides = array<i32>} : memref<1x8x32xbf16, #tpu.memory_space<vmem>>, vector<1x8x32xbf16>,
    return
  }
  func.func @transform_0(%arg0: i32, %arg1: i32) -> (i32, i32, i32) {
    %c0_i32 = arith.constant 0 : i32
    %c0_i32_0 = arith.constant 0 : i32
    return %arg0, %arg1, %c0_i32 : i32, i32, i32
  }
  func.func @transform_1(%arg0: i32, %arg1: i32) -> (i32, i32, i32) {
    %c0_i32 = arith.constant 0 : i32
    %c0_i32_0 = arith.constant 0 : i32
    %c0_i32_1 = arith.constant 0 : i32
    %c0_i32_2 = arith.constant 0 : i32
    return %c0_i32, %c0_i32_0, %c0_i32_1 : i32, i32, i32
  }
  func.func @transform_2(%arg0: i32, %arg1: i32) -> (i32, i32) {
    %c0_i32 = arith.constant 0 : i32
    %c0_i32_0 = arith.constant 0 : i32
    %c0_i32_1 = arith.constant 0 : i32
    return %c0_i32, %c0_i32_0 : i32, i32
  }
  func.func @transform_3(%arg0: i32, %arg1: i32) -> (i32, i32, i32) {
    %c0_i32 = arith.constant 0 : i32
    %c0_i32_0 = arith.constant 0 : i32
    return %arg0, %arg1, %c0_i32 : i32, i32, i32
  }
}

module attributes {stable_mosaic.version = 11 : i64} {
  func.func @_gn_stats_kernel(%arg0: i32, %arg1: i32, %arg2: memref<1x8x32xbf16, #tpu.memory_space<vmem>>, %arg3: memref<32x32xf32, #tpu.memory_space<vmem>>, %arg4: memref<1x2x32xf32, #tpu.memory_space<vmem>>, %arg5: memref<1x32xf32, #tpu.memory_space<vmem>>, %arg6: memref<1x32xf32, #tpu.memory_space<vmem>>) attributes {dimension_semantics = [#tpu.dimension_semantics<parallel>, #tpu.dimension_semantics<arbitrary>], iteration_bounds = array<i64: 2, 1>, scalar_prefetch = 0 : i64, scratch_operands = 2 : i64, tpu.core_type = #tpu.core_type<tc>, window_params = [{transform_indices = @transform_0, window_bounds = array<i64: 1, 8, 32>}, {pipeline_mode = #tpu.pipeline_mode<synchronous>, transform_indices = @transform_1, window_bounds = array<i64: 32, 32>}, {transform_indices = @transform_2, window_bounds = array<i64: 1, 2, 32>}]} {
    %c0_i32 = arith.constant 0 : i32
    %0 = arith.cmpi eq, %arg1, %c0_i32 : i32
    %1 = arith.extui %0 : i1 to i32
    %c0_i32_0 = arith.constant 0 : i32
    %2 = arith.cmpi ne, %1, %c0_i32_0 : i32
    scf.if %2 {
      %cst_14 = arith.constant 0.000000e+00 : f32
      %20 = vector.broadcast %cst_14 : f32 to vector<1x32xf32>
      %c0_15 = arith.constant 0 : index
      %c0_16 = arith.constant 0 : index
      %21 = vector.load %arg5[%c0_15, %c0_16] : memref<1x32xf32, #tpu.memory_space<vmem>>, vector<1x32xf32>
      tpu.vector_store %arg5[%c0_15, %c0_16], %20 {strides = array<i32>} : memref<1x32xf32, #tpu.memory_space<vmem>>, vector<1x32xf32>,
      %cst_17 = arith.constant 0.000000e+00 : f32
      %22 = vector.broadcast %cst_17 : f32 to vector<1x32xf32>
      %c0_18 = arith.constant 0 : index
      %c0_19 = arith.constant 0 : index
      %23 = vector.load %arg6[%c0_18, %c0_19] : memref<1x32xf32, #tpu.memory_space<vmem>>, vector<1x32xf32>
      tpu.vector_store %arg6[%c0_18, %c0_19], %22 {strides = array<i32>} : memref<1x32xf32, #tpu.memory_space<vmem>>, vector<1x32xf32>,
    } else {
    }
    %c0 = arith.constant 0 : index
    %c0_1 = arith.constant 0 : index
    %c0_2 = arith.constant 0 : index
    %3 = vector.load %arg2[%c0, %c0_1, %c0_2] : memref<1x8x32xbf16, #tpu.memory_space<vmem>>, vector<1x8x32xbf16>
    %4 = vector.shape_cast %3 : vector<1x8x32xbf16> to vector<8x32xbf16>
    %5 = arith.extf %4 : vector<8x32xbf16> to vector<8x32xf32>
    %c0_3 = arith.constant 0 : index
    %c0_4 = arith.constant 0 : index
    %6 = vector.load %arg5[%c0_3, %c0_4] : memref<1x32xf32, #tpu.memory_space<vmem>>, vector<1x32xf32>
    %cst = arith.constant dense<0.000000e+00> : vector<32xf32>
    %7 = vector.multi_reduction <add>, %5, %cst [0] : vector<8x32xf32> to vector<32xf32>
    %8 = vector.shape_cast %7 : vector<32xf32> to vector<1x32xf32>
    %9 = arith.addf %6, %8 : vector<1x32xf32>
    %c0_5 = arith.constant 0 : index
    %c0_6 = arith.constant 0 : index
    %10 = vector.load %arg5[%c0_5, %c0_6] : memref<1x32xf32, #tpu.memory_space<vmem>>, vector<1x32xf32>
    tpu.vector_store %arg5[%c0_5, %c0_6], %9 {strides = array<i32>} : memref<1x32xf32, #tpu.memory_space<vmem>>, vector<1x32xf32>,
    %c0_7 = arith.constant 0 : index
    %c0_8 = arith.constant 0 : index
    %11 = vector.load %arg6[%c0_7, %c0_8] : memref<1x32xf32, #tpu.memory_space<vmem>>, vector<1x32xf32>
    %12 = arith.mulf %5, %5 : vector<8x32xf32>
    %cst_9 = arith.constant dense<0.000000e+00> : vector<32xf32>
    %13 = vector.multi_reduction <add>, %12, %cst_9 [0] : vector<8x32xf32> to vector<32xf32>
    %14 = vector.shape_cast %13 : vector<32xf32> to vector<1x32xf32>
    %15 = arith.addf %11, %14 : vector<1x32xf32>
    %c0_10 = arith.constant 0 : index
    %c0_11 = arith.constant 0 : index
    %16 = vector.load %arg6[%c0_10, %c0_11] : memref<1x32xf32, #tpu.memory_space<vmem>>, vector<1x32xf32>
    tpu.vector_store %arg6[%c0_10, %c0_11], %15 {strides = array<i32>} : memref<1x32xf32, #tpu.memory_space<vmem>>, vector<1x32xf32>,
    %c0_i32_12 = arith.constant 0 : i32
    %17 = arith.cmpi eq, %arg1, %c0_i32_12 : i32
    %18 = arith.extui %17 : i1 to i32
    %c0_i32_13 = arith.constant 0 : i32
    %19 = arith.cmpi ne, %18, %c0_i32_13 : i32
    scf.if %19 {
      %c0_14 = arith.constant 0 : index
      %c0_15 = arith.constant 0 : index
      %20 = vector.load %arg3[%c0_14, %c0_15] : memref<32x32xf32, #tpu.memory_space<vmem>>, vector<32x32xf32>
      %c0_16 = arith.constant 0 : index
      %c0_17 = arith.constant 0 : index
      %21 = vector.load %arg5[%c0_16, %c0_17] : memref<1x32xf32, #tpu.memory_space<vmem>>, vector<1x32xf32>
      %cst_18 = arith.constant dense<0.000000e+00> : vector<1x32xf32>
      %22 = tpu.matmul %21, %20, %cst_18 {dimension_numbers = #tpu.dot_dimension_numbers<[1], [0], [0], [1], [0, 0, 1, 1], [], []>} : vector<1x32xf32>, vector<32x32xf32>, vector<1x32xf32> -> vector<1x32xf32>
      %cst_19 = arith.constant 1.250000e-01 : f32
      %23 = vector.broadcast %cst_19 : f32 to vector<1x32xf32>
      %24 = arith.mulf %22, %23 : vector<1x32xf32>
      %c0_20 = arith.constant 0 : index
      %c0_21 = arith.constant 0 : index
      %25 = vector.load %arg6[%c0_20, %c0_21] : memref<1x32xf32, #tpu.memory_space<vmem>>, vector<1x32xf32>
      %cst_22 = arith.constant dense<0.000000e+00> : vector<1x32xf32>
      %26 = tpu.matmul %25, %20, %cst_22 {dimension_numbers = #tpu.dot_dimension_numbers<[1], [0], [0], [1], [0, 0, 1, 1], [], []>} : vector<1x32xf32>, vector<32x32xf32>, vector<1x32xf32> -> vector<1x32xf32>
      %cst_23 = arith.constant 1.250000e-01 : f32
      %27 = vector.broadcast %cst_23 : f32 to vector<1x32xf32>
      %28 = arith.mulf %26, %27 : vector<1x32xf32>
      %29 = arith.mulf %24, %24 : vector<1x32xf32>
      %30 = arith.subf %28, %29 : vector<1x32xf32>
      %cst_24 = arith.constant 0.000000e+00 : f32
      %31 = vector.broadcast %cst_24 : f32 to vector<1x32xf32>
      %32 = arith.maximumf %30, %31 : vector<1x32xf32>
      %c0_25 = arith.constant 0 : index
      %c0_26 = arith.constant 0 : index
      %c0_27 = arith.constant 0 : index
      %33 = vector.load %arg4[%c0_25, %c0_26, %c0_27] : memref<1x2x32xf32, #tpu.memory_space<vmem>>, vector<1x1x32xf32>
      %34 = vector.shape_cast %33 : vector<1x1x32xf32> to vector<1x32xf32>
      %35 = vector.shape_cast %24 : vector<1x32xf32> to vector<1x1x32xf32>
      tpu.vector_store %arg4[%c0_25, %c0_26, %c0_27], %35 {strides = array<i32>} : memref<1x2x32xf32, #tpu.memory_space<vmem>>, vector<1x1x32xf32>,
      %cst_28 = arith.constant 9.99999997E-7 : f32
      %36 = vector.broadcast %cst_28 : f32 to vector<1x32xf32>
      %37 = arith.addf %32, %36 : vector<1x32xf32>
      %38 = math.rsqrt %37 : vector<1x32xf32>
      %c0_29 = arith.constant 0 : index
      %c1 = arith.constant 1 : index
      %c0_30 = arith.constant 0 : index
      %39 = vector.load %arg4[%c0_29, %c1, %c0_30] : memref<1x2x32xf32, #tpu.memory_space<vmem>>, vector<1x1x32xf32>
      %40 = vector.shape_cast %39 : vector<1x1x32xf32> to vector<1x32xf32>
      %41 = vector.shape_cast %38 : vector<1x32xf32> to vector<1x1x32xf32>
      tpu.vector_store %arg4[%c0_29, %c1, %c0_30], %41 {strides = array<i32>} : memref<1x2x32xf32, #tpu.memory_space<vmem>>, vector<1x1x32xf32>,
    } else {
    }
    return
  }
  func.func @transform_0(%arg0: i32, %arg1: i32) -> (i32, i32, i32) {
    %c0_i32 = arith.constant 0 : i32
    %c0_i32_0 = arith.constant 0 : i32
    return %arg0, %arg1, %c0_i32 : i32, i32, i32
  }
  func.func @transform_1(%arg0: i32, %arg1: i32) -> (i32, i32) {
    %c0_i32 = arith.constant 0 : i32
    %c0_i32_0 = arith.constant 0 : i32
    %c0_i32_1 = arith.constant 0 : i32
    return %c0_i32, %c0_i32_0 : i32, i32
  }
  func.func @transform_2(%arg0: i32, %arg1: i32) -> (i32, i32, i32) {
    %c0_i32 = arith.constant 0 : i32
    %c0_i32_0 = arith.constant 0 : i32
    %c0_i32_1 = arith.constant 0 : i32
    return %arg0, %c0_i32, %c0_i32_0 : i32, i32, i32
  }
}

module attributes {stable_mosaic.version = 11 : i64} {
  func.func @_gn_apply_kernel(%arg0: i32, %arg1: i32, %arg2: memref<1x8x32xbf16, #tpu.memory_space<vmem>>, %arg3: memref<1x2x32xf32, #tpu.memory_space<vmem>>, %arg4: memref<1x32xf32, #tpu.memory_space<vmem>>, %arg5: memref<1x32xf32, #tpu.memory_space<vmem>>, %arg6: memref<1x8x32xbf16, #tpu.memory_space<vmem>>) attributes {dimension_semantics = [#tpu.dimension_semantics<parallel>, #tpu.dimension_semantics<parallel>], iteration_bounds = array<i64: 2, 1>, scalar_prefetch = 0 : i64, scratch_operands = 0 : i64, tpu.core_type = #tpu.core_type<tc>, window_params = [{transform_indices = @transform_0, window_bounds = array<i64: 1, 8, 32>}, {transform_indices = @transform_1, window_bounds = array<i64: 1, 2, 32>}, {pipeline_mode = #tpu.pipeline_mode<synchronous>, transform_indices = @transform_2, window_bounds = array<i64: 1, 32>}, {pipeline_mode = #tpu.pipeline_mode<synchronous>, transform_indices = @transform_3, window_bounds = array<i64: 1, 32>}, {transform_indices = @transform_4, window_bounds = array<i64: 1, 8, 32>}]} {
    %c0 = arith.constant 0 : index
    %c0_0 = arith.constant 0 : index
    %c0_1 = arith.constant 0 : index
    %0 = vector.load %arg2[%c0, %c0_0, %c0_1] : memref<1x8x32xbf16, #tpu.memory_space<vmem>>, vector<1x8x32xbf16>
    %1 = vector.shape_cast %0 : vector<1x8x32xbf16> to vector<8x32xbf16>
    %2 = arith.extf %1 : vector<8x32xbf16> to vector<8x32xf32>
    %c0_2 = arith.constant 0 : index
    %c0_3 = arith.constant 0 : index
    %c0_4 = arith.constant 0 : index
    %3 = vector.load %arg3[%c0_2, %c0_3, %c0_4] : memref<1x2x32xf32, #tpu.memory_space<vmem>>, vector<1x1x32xf32>
    %4 = vector.shape_cast %3 : vector<1x1x32xf32> to vector<1x32xf32>
    %c0_5 = arith.constant 0 : index
    %c1 = arith.constant 1 : index
    %c0_6 = arith.constant 0 : index
    %5 = vector.load %arg3[%c0_5, %c1, %c0_6] : memref<1x2x32xf32, #tpu.memory_space<vmem>>, vector<1x1x32xf32>
    %6 = vector.shape_cast %5 : vector<1x1x32xf32> to vector<1x32xf32>
    %7 = vector.broadcast %4 : vector<1x32xf32> to vector<8x32xf32>
    %8 = arith.subf %2, %7 : vector<8x32xf32>
    %c0_7 = arith.constant 0 : index
    %c0_8 = arith.constant 0 : index
    %9 = vector.load %arg4[%c0_7, %c0_8] : memref<1x32xf32, #tpu.memory_space<vmem>>, vector<1x32xf32>
    %10 = arith.mulf %6, %9 : vector<1x32xf32>
    %11 = vector.broadcast %10 : vector<1x32xf32> to vector<8x32xf32>
    %12 = arith.mulf %8, %11 : vector<8x32xf32>
    %c0_9 = arith.constant 0 : index
    %c0_10 = arith.constant 0 : index
    %13 = vector.load %arg5[%c0_9, %c0_10] : memref<1x32xf32, #tpu.memory_space<vmem>>, vector<1x32xf32>
    %14 = vector.broadcast %13 : vector<1x32xf32> to vector<8x32xf32>
    %15 = arith.addf %12, %14 : vector<8x32xf32>
    %16 = arith.negf %15 : vector<8x32xf32>
    %17 = math.exp %16 : vector<8x32xf32>
    %cst = arith.constant 1.000000e+00 : f32
    %18 = vector.broadcast %cst : f32 to vector<8x32xf32>
    %19 = arith.addf %18, %17 : vector<8x32xf32>
    %20 = arith.divf %18, %19 : vector<8x32xf32>
    %21 = arith.mulf %15, %20 : vector<8x32xf32>
    %22 = arith.truncf %21 : vector<8x32xf32> to vector<8x32xbf16>
    %c0_11 = arith.constant 0 : index
    %c0_12 = arith.constant 0 : index
    %c0_13 = arith.constant 0 : index
    %23 = vector.load %arg6[%c0_11, %c0_12, %c0_13] : memref<1x8x32xbf16, #tpu.memory_space<vmem>>, vector<1x8x32xbf16>
    %24 = vector.shape_cast %23 : vector<1x8x32xbf16> to vector<8x32xbf16>
    %25 = vector.shape_cast %22 : vector<8x32xbf16> to vector<1x8x32xbf16>
    tpu.vector_store %arg6[%c0_11, %c0_12, %c0_13], %25 {strides = array<i32>} : memref<1x8x32xbf16, #tpu.memory_space<vmem>>, vector<1x8x32xbf16>,
    return
  }
  func.func @transform_0(%arg0: i32, %arg1: i32) -> (i32, i32, i32) {
    %c0_i32 = arith.constant 0 : i32
    %c0_i32_0 = arith.constant 0 : i32
    return %arg0, %arg1, %c0_i32 : i32, i32, i32
  }
  func.func @transform_1(%arg0: i32, %arg1: i32) -> (i32, i32, i32) {
    %c0_i32 = arith.constant 0 : i32
    %c0_i32_0 = arith.constant 0 : i32
    %c0_i32_1 = arith.constant 0 : i32
    return %arg0, %c0_i32, %c0_i32_0 : i32, i32, i32
  }
  func.func @transform_2(%arg0: i32, %arg1: i32) -> (i32, i32) {
    %c0_i32 = arith.constant 0 : i32
    %c0_i32_0 = arith.constant 0 : i32
    %c0_i32_1 = arith.constant 0 : i32
    return %c0_i32, %c0_i32_0 : i32, i32
  }
  func.func @transform_3(%arg0: i32, %arg1: i32) -> (i32, i32) {
    %c0_i32 = arith.constant 0 : i32
    %c0_i32_0 = arith.constant 0 : i32
    %c0_i32_1 = arith.constant 0 : i32
    return %c0_i32, %c0_i32_0 : i32, i32
  }
  func.func @transform_4(%arg0: i32, %arg1: i32) -> (i32, i32, i32) {
    %c0_i32 = arith.constant 0 : i32
    %c0_i32_0 = arith.constant 0 : i32
    return %arg0, %arg1, %c0_i32 : i32, i32, i32
  }
}

module attributes {stable_mosaic.version = 11 : i64} {
  func.func @_conv3_kernel(%arg0: i32, %arg1: i32, %arg2: memref<1x8x32xbf16, #tpu.memory_space<vmem>>, %arg3: memref<3x32x64xbf16, #tpu.memory_space<vmem>>, %arg4: memref<1x64xf32, #tpu.memory_space<vmem>>, %arg5: memref<1x8x64xbf16, #tpu.memory_space<vmem>>) attributes {dimension_semantics = [#tpu.dimension_semantics<parallel>, #tpu.dimension_semantics<parallel>], iteration_bounds = array<i64: 2, 1>, scalar_prefetch = 0 : i64, scratch_operands = 0 : i64, tpu.core_type = #tpu.core_type<tc>, window_params = [{transform_indices = @transform_0, window_bounds = array<i64: 1, 8, 32>}, {pipeline_mode = #tpu.pipeline_mode<synchronous>, transform_indices = @transform_1, window_bounds = array<i64: 3, 32, 64>}, {pipeline_mode = #tpu.pipeline_mode<synchronous>, transform_indices = @transform_2, window_bounds = array<i64: 1, 64>}, {transform_indices = @transform_3, window_bounds = array<i64: 1, 8, 64>}]} {
    %c0 = arith.constant 0 : index
    %c0_0 = arith.constant 0 : index
    %c0_1 = arith.constant 0 : index
    %0 = vector.load %arg2[%c0, %c0_0, %c0_1] : memref<1x8x32xbf16, #tpu.memory_space<vmem>>, vector<1x8x32xbf16>
    %1 = vector.shape_cast %0 : vector<1x8x32xbf16> to vector<8x32xbf16>
    %cst = arith.constant 0.000000e+00 : bf16
    %2 = vector.broadcast %cst : bf16 to vector<1x32xbf16>
    %3 = vector.extract_strided_slice %1 {offsets = [0, 0], sizes = [7, 32], strides = [1, 1]} : vector<8x32xbf16> to vector<7x32xbf16>
    %4 = tpu.concatenate %2, %3 in 0 : vector<1x32xbf16>, vector<7x32xbf16> -> vector<8x32xbf16>
    %5 = vector.extract_strided_slice %1 {offsets = [1, 0], sizes = [7, 32], strides = [1, 1]} : vector<8x32xbf16> to vector<7x32xbf16>
    %6 = tpu.concatenate %5, %2 in 0 : vector<7x32xbf16>, vector<1x32xbf16> -> vector<8x32xbf16>
    %c1 = arith.constant 1 : index
    %c0_2 = arith.constant 0 : index
    %c0_3 = arith.constant 0 : index
    %7 = vector.load %arg3[%c1, %c0_2, %c0_3] : memref<3x32x64xbf16, #tpu.memory_space<vmem>>, vector<1x32x64xbf16>
    %8 = vector.shape_cast %7 : vector<1x32x64xbf16> to vector<32x64xbf16>
    %cst_4 = arith.constant dense<0.000000e+00> : vector<8x64xf32>
    %9 = tpu.matmul %1, %8, %cst_4 {dimension_numbers = #tpu.dot_dimension_numbers<[1], [0], [0], [1], [0, 0, 1, 1], [], []>} : vector<8x32xbf16>, vector<32x64xbf16>, vector<8x64xf32> -> vector<8x64xf32>
    %c0_5 = arith.constant 0 : index
    %c0_6 = arith.constant 0 : index
    %c0_7 = arith.constant 0 : index
    %10 = vector.load %arg3[%c0_5, %c0_6, %c0_7] : memref<3x32x64xbf16, #tpu.memory_space<vmem>>, vector<1x32x64xbf16>
    %11 = vector.shape_cast %10 : vector<1x32x64xbf16> to vector<32x64xbf16>
    %cst_8 = arith.constant dense<0.000000e+00> : vector<8x64xf32>
    %12 = tpu.matmul %4, %11, %cst_8 {dimension_numbers = #tpu.dot_dimension_numbers<[1], [0], [0], [1], [0, 0, 1, 1], [], []>} : vector<8x32xbf16>, vector<32x64xbf16>, vector<8x64xf32> -> vector<8x64xf32>
    %13 = arith.addf %9, %12 : vector<8x64xf32>
    %c2 = arith.constant 2 : index
    %c0_9 = arith.constant 0 : index
    %c0_10 = arith.constant 0 : index
    %14 = vector.load %arg3[%c2, %c0_9, %c0_10] : memref<3x32x64xbf16, #tpu.memory_space<vmem>>, vector<1x32x64xbf16>
    %15 = vector.shape_cast %14 : vector<1x32x64xbf16> to vector<32x64xbf16>
    %cst_11 = arith.constant dense<0.000000e+00> : vector<8x64xf32>
    %16 = tpu.matmul %6, %15, %cst_11 {dimension_numbers = #tpu.dot_dimension_numbers<[1], [0], [0], [1], [0, 0, 1, 1], [], []>} : vector<8x32xbf16>, vector<32x64xbf16>, vector<8x64xf32> -> vector<8x64xf32>
    %17 = arith.addf %13, %16 : vector<8x64xf32>
    %c0_12 = arith.constant 0 : index
    %c0_13 = arith.constant 0 : index
    %18 = vector.load %arg4[%c0_12, %c0_13] : memref<1x64xf32, #tpu.memory_space<vmem>>, vector<1x64xf32>
    %19 = vector.broadcast %18 : vector<1x64xf32> to vector<8x64xf32>
    %20 = arith.addf %17, %19 : vector<8x64xf32>
    %21 = arith.truncf %20 : vector<8x64xf32> to vector<8x64xbf16>
    %c0_14 = arith.constant 0 : index
    %c0_15 = arith.constant 0 : index
    %c0_16 = arith.constant 0 : index
    %22 = vector.load %arg5[%c0_14, %c0_15, %c0_16] : memref<1x8x64xbf16, #tpu.memory_space<vmem>>, vector<1x8x64xbf16>
    %23 = vector.shape_cast %22 : vector<1x8x64xbf16> to vector<8x64xbf16>
    %24 = vector.shape_cast %21 : vector<8x64xbf16> to vector<1x8x64xbf16>
    tpu.vector_store %arg5[%c0_14, %c0_15, %c0_16], %24 {strides = array<i32>} : memref<1x8x64xbf16, #tpu.memory_space<vmem>>, vector<1x8x64xbf16>,
    return
  }
  func.func @transform_0(%arg0: i32, %arg1: i32) -> (i32, i32, i32) {
    %c0_i32 = arith.constant 0 : i32
    %c0_i32_0 = arith.constant 0 : i32
    return %arg0, %arg1, %c0_i32 : i32, i32, i32
  }
  func.func @transform_1(%arg0: i32, %arg1: i32) -> (i32, i32, i32) {
    %c0_i32 = arith.constant 0 : i32
    %c0_i32_0 = arith.constant 0 : i32
    %c0_i32_1 = arith.constant 0 : i32
    %c0_i32_2 = arith.constant 0 : i32
    return %c0_i32, %c0_i32_0, %c0_i32_1 : i32, i32, i32
  }
  func.func @transform_2(%arg0: i32, %arg1: i32) -> (i32, i32) {
    %c0_i32 = arith.constant 0 : i32
    %c0_i32_0 = arith.constant 0 : i32
    %c0_i32_1 = arith.constant 0 : i32
    return %c0_i32, %c0_i32_0 : i32, i32
  }
  func.func @transform_3(%arg0: i32, %arg1: i32) -> (i32, i32, i32) {
    %c0_i32 = arith.constant 0 : i32
    %c0_i32_0 = arith.constant 0 : i32
    return %arg0, %arg1, %c0_i32 : i32, i32, i32
  }
}

module attributes {stable_mosaic.version = 11 : i64} {
  func.func @_gn_stats_kernel(%arg0: i32, %arg1: i32, %arg2: memref<1x8x64xbf16, #tpu.memory_space<vmem>>, %arg3: memref<64x64xf32, #tpu.memory_space<vmem>>, %arg4: memref<1x2x64xf32, #tpu.memory_space<vmem>>, %arg5: memref<1x64xf32, #tpu.memory_space<vmem>>, %arg6: memref<1x64xf32, #tpu.memory_space<vmem>>) attributes {dimension_semantics = [#tpu.dimension_semantics<parallel>, #tpu.dimension_semantics<arbitrary>], iteration_bounds = array<i64: 2, 1>, scalar_prefetch = 0 : i64, scratch_operands = 2 : i64, tpu.core_type = #tpu.core_type<tc>, window_params = [{transform_indices = @transform_0, window_bounds = array<i64: 1, 8, 64>}, {pipeline_mode = #tpu.pipeline_mode<synchronous>, transform_indices = @transform_1, window_bounds = array<i64: 64, 64>}, {transform_indices = @transform_2, window_bounds = array<i64: 1, 2, 64>}]} {
    %c0_i32 = arith.constant 0 : i32
    %0 = arith.cmpi eq, %arg1, %c0_i32 : i32
    %1 = arith.extui %0 : i1 to i32
    %c0_i32_0 = arith.constant 0 : i32
    %2 = arith.cmpi ne, %1, %c0_i32_0 : i32
    scf.if %2 {
      %cst_14 = arith.constant 0.000000e+00 : f32
      %20 = vector.broadcast %cst_14 : f32 to vector<1x64xf32>
      %c0_15 = arith.constant 0 : index
      %c0_16 = arith.constant 0 : index
      %21 = vector.load %arg5[%c0_15, %c0_16] : memref<1x64xf32, #tpu.memory_space<vmem>>, vector<1x64xf32>
      tpu.vector_store %arg5[%c0_15, %c0_16], %20 {strides = array<i32>} : memref<1x64xf32, #tpu.memory_space<vmem>>, vector<1x64xf32>,
      %cst_17 = arith.constant 0.000000e+00 : f32
      %22 = vector.broadcast %cst_17 : f32 to vector<1x64xf32>
      %c0_18 = arith.constant 0 : index
      %c0_19 = arith.constant 0 : index
      %23 = vector.load %arg6[%c0_18, %c0_19] : memref<1x64xf32, #tpu.memory_space<vmem>>, vector<1x64xf32>
      tpu.vector_store %arg6[%c0_18, %c0_19], %22 {strides = array<i32>} : memref<1x64xf32, #tpu.memory_space<vmem>>, vector<1x64xf32>,
    } else {
    }
    %c0 = arith.constant 0 : index
    %c0_1 = arith.constant 0 : index
    %c0_2 = arith.constant 0 : index
    %3 = vector.load %arg2[%c0, %c0_1, %c0_2] : memref<1x8x64xbf16, #tpu.memory_space<vmem>>, vector<1x8x64xbf16>
    %4 = vector.shape_cast %3 : vector<1x8x64xbf16> to vector<8x64xbf16>
    %5 = arith.extf %4 : vector<8x64xbf16> to vector<8x64xf32>
    %c0_3 = arith.constant 0 : index
    %c0_4 = arith.constant 0 : index
    %6 = vector.load %arg5[%c0_3, %c0_4] : memref<1x64xf32, #tpu.memory_space<vmem>>, vector<1x64xf32>
    %cst = arith.constant dense<0.000000e+00> : vector<64xf32>
    %7 = vector.multi_reduction <add>, %5, %cst [0] : vector<8x64xf32> to vector<64xf32>
    %8 = vector.shape_cast %7 : vector<64xf32> to vector<1x64xf32>
    %9 = arith.addf %6, %8 : vector<1x64xf32>
    %c0_5 = arith.constant 0 : index
    %c0_6 = arith.constant 0 : index
    %10 = vector.load %arg5[%c0_5, %c0_6] : memref<1x64xf32, #tpu.memory_space<vmem>>, vector<1x64xf32>
    tpu.vector_store %arg5[%c0_5, %c0_6], %9 {strides = array<i32>} : memref<1x64xf32, #tpu.memory_space<vmem>>, vector<1x64xf32>,
    %c0_7 = arith.constant 0 : index
    %c0_8 = arith.constant 0 : index
    %11 = vector.load %arg6[%c0_7, %c0_8] : memref<1x64xf32, #tpu.memory_space<vmem>>, vector<1x64xf32>
    %12 = arith.mulf %5, %5 : vector<8x64xf32>
    %cst_9 = arith.constant dense<0.000000e+00> : vector<64xf32>
    %13 = vector.multi_reduction <add>, %12, %cst_9 [0] : vector<8x64xf32> to vector<64xf32>
    %14 = vector.shape_cast %13 : vector<64xf32> to vector<1x64xf32>
    %15 = arith.addf %11, %14 : vector<1x64xf32>
    %c0_10 = arith.constant 0 : index
    %c0_11 = arith.constant 0 : index
    %16 = vector.load %arg6[%c0_10, %c0_11] : memref<1x64xf32, #tpu.memory_space<vmem>>, vector<1x64xf32>
    tpu.vector_store %arg6[%c0_10, %c0_11], %15 {strides = array<i32>} : memref<1x64xf32, #tpu.memory_space<vmem>>, vector<1x64xf32>,
    %c0_i32_12 = arith.constant 0 : i32
    %17 = arith.cmpi eq, %arg1, %c0_i32_12 : i32
    %18 = arith.extui %17 : i1 to i32
    %c0_i32_13 = arith.constant 0 : i32
    %19 = arith.cmpi ne, %18, %c0_i32_13 : i32
    scf.if %19 {
      %c0_14 = arith.constant 0 : index
      %c0_15 = arith.constant 0 : index
      %20 = vector.load %arg3[%c0_14, %c0_15] : memref<64x64xf32, #tpu.memory_space<vmem>>, vector<64x64xf32>
      %c0_16 = arith.constant 0 : index
      %c0_17 = arith.constant 0 : index
      %21 = vector.load %arg5[%c0_16, %c0_17] : memref<1x64xf32, #tpu.memory_space<vmem>>, vector<1x64xf32>
      %cst_18 = arith.constant dense<0.000000e+00> : vector<1x64xf32>
      %22 = tpu.matmul %21, %20, %cst_18 {dimension_numbers = #tpu.dot_dimension_numbers<[1], [0], [0], [1], [0, 0, 1, 1], [], []>} : vector<1x64xf32>, vector<64x64xf32>, vector<1x64xf32> -> vector<1x64xf32>
      %cst_19 = arith.constant 6.250000e-02 : f32
      %23 = vector.broadcast %cst_19 : f32 to vector<1x64xf32>
      %24 = arith.mulf %22, %23 : vector<1x64xf32>
      %c0_20 = arith.constant 0 : index
      %c0_21 = arith.constant 0 : index
      %25 = vector.load %arg6[%c0_20, %c0_21] : memref<1x64xf32, #tpu.memory_space<vmem>>, vector<1x64xf32>
      %cst_22 = arith.constant dense<0.000000e+00> : vector<1x64xf32>
      %26 = tpu.matmul %25, %20, %cst_22 {dimension_numbers = #tpu.dot_dimension_numbers<[1], [0], [0], [1], [0, 0, 1, 1], [], []>} : vector<1x64xf32>, vector<64x64xf32>, vector<1x64xf32> -> vector<1x64xf32>
      %cst_23 = arith.constant 6.250000e-02 : f32
      %27 = vector.broadcast %cst_23 : f32 to vector<1x64xf32>
      %28 = arith.mulf %26, %27 : vector<1x64xf32>
      %29 = arith.mulf %24, %24 : vector<1x64xf32>
      %30 = arith.subf %28, %29 : vector<1x64xf32>
      %cst_24 = arith.constant 0.000000e+00 : f32
      %31 = vector.broadcast %cst_24 : f32 to vector<1x64xf32>
      %32 = arith.maximumf %30, %31 : vector<1x64xf32>
      %c0_25 = arith.constant 0 : index
      %c0_26 = arith.constant 0 : index
      %c0_27 = arith.constant 0 : index
      %33 = vector.load %arg4[%c0_25, %c0_26, %c0_27] : memref<1x2x64xf32, #tpu.memory_space<vmem>>, vector<1x1x64xf32>
      %34 = vector.shape_cast %33 : vector<1x1x64xf32> to vector<1x64xf32>
      %35 = vector.shape_cast %24 : vector<1x64xf32> to vector<1x1x64xf32>
      tpu.vector_store %arg4[%c0_25, %c0_26, %c0_27], %35 {strides = array<i32>} : memref<1x2x64xf32, #tpu.memory_space<vmem>>, vector<1x1x64xf32>,
      %cst_28 = arith.constant 9.99999997E-7 : f32
      %36 = vector.broadcast %cst_28 : f32 to vector<1x64xf32>
      %37 = arith.addf %32, %36 : vector<1x64xf32>
      %38 = math.rsqrt %37 : vector<1x64xf32>
      %c0_29 = arith.constant 0 : index
      %c1 = arith.constant 1 : index
      %c0_30 = arith.constant 0 : index
      %39 = vector.load %arg4[%c0_29, %c1, %c0_30] : memref<1x2x64xf32, #tpu.memory_space<vmem>>, vector<1x1x64xf32>
      %40 = vector.shape_cast %39 : vector<1x1x64xf32> to vector<1x64xf32>
      %41 = vector.shape_cast %38 : vector<1x64xf32> to vector<1x1x64xf32>
      tpu.vector_store %arg4[%c0_29, %c1, %c0_30], %41 {strides = array<i32>} : memref<1x2x64xf32, #tpu.memory_space<vmem>>, vector<1x1x64xf32>,
    } else {
    }
    return
  }
  func.func @transform_0(%arg0: i32, %arg1: i32) -> (i32, i32, i32) {
    %c0_i32 = arith.constant 0 : i32
    %c0_i32_0 = arith.constant 0 : i32
    return %arg0, %arg1, %c0_i32 : i32, i32, i32
  }
  func.func @transform_1(%arg0: i32, %arg1: i32) -> (i32, i32) {
    %c0_i32 = arith.constant 0 : i32
    %c0_i32_0 = arith.constant 0 : i32
    %c0_i32_1 = arith.constant 0 : i32
    return %c0_i32, %c0_i32_0 : i32, i32
  }
  func.func @transform_2(%arg0: i32, %arg1: i32) -> (i32, i32, i32) {
    %c0_i32 = arith.constant 0 : i32
    %c0_i32_0 = arith.constant 0 : i32
    %c0_i32_1 = arith.constant 0 : i32
    return %arg0, %c0_i32, %c0_i32_0 : i32, i32, i32
  }
}

module attributes {stable_mosaic.version = 11 : i64} {
  func.func @_gn_apply_kernel(%arg0: i32, %arg1: i32, %arg2: memref<1x8x64xbf16, #tpu.memory_space<vmem>>, %arg3: memref<1x2x64xf32, #tpu.memory_space<vmem>>, %arg4: memref<1x64xf32, #tpu.memory_space<vmem>>, %arg5: memref<1x64xf32, #tpu.memory_space<vmem>>, %arg6: memref<1x8x64xbf16, #tpu.memory_space<vmem>>) attributes {dimension_semantics = [#tpu.dimension_semantics<parallel>, #tpu.dimension_semantics<parallel>], iteration_bounds = array<i64: 2, 1>, scalar_prefetch = 0 : i64, scratch_operands = 0 : i64, tpu.core_type = #tpu.core_type<tc>, window_params = [{transform_indices = @transform_0, window_bounds = array<i64: 1, 8, 64>}, {transform_indices = @transform_1, window_bounds = array<i64: 1, 2, 64>}, {pipeline_mode = #tpu.pipeline_mode<synchronous>, transform_indices = @transform_2, window_bounds = array<i64: 1, 64>}, {pipeline_mode = #tpu.pipeline_mode<synchronous>, transform_indices = @transform_3, window_bounds = array<i64: 1, 64>}, {transform_indices = @transform_4, window_bounds = array<i64: 1, 8, 64>}]} {
    %c0 = arith.constant 0 : index
    %c0_0 = arith.constant 0 : index
    %c0_1 = arith.constant 0 : index
    %0 = vector.load %arg2[%c0, %c0_0, %c0_1] : memref<1x8x64xbf16, #tpu.memory_space<vmem>>, vector<1x8x64xbf16>
    %1 = vector.shape_cast %0 : vector<1x8x64xbf16> to vector<8x64xbf16>
    %2 = arith.extf %1 : vector<8x64xbf16> to vector<8x64xf32>
    %c0_2 = arith.constant 0 : index
    %c0_3 = arith.constant 0 : index
    %c0_4 = arith.constant 0 : index
    %3 = vector.load %arg3[%c0_2, %c0_3, %c0_4] : memref<1x2x64xf32, #tpu.memory_space<vmem>>, vector<1x1x64xf32>
    %4 = vector.shape_cast %3 : vector<1x1x64xf32> to vector<1x64xf32>
    %c0_5 = arith.constant 0 : index
    %c1 = arith.constant 1 : index
    %c0_6 = arith.constant 0 : index
    %5 = vector.load %arg3[%c0_5, %c1, %c0_6] : memref<1x2x64xf32, #tpu.memory_space<vmem>>, vector<1x1x64xf32>
    %6 = vector.shape_cast %5 : vector<1x1x64xf32> to vector<1x64xf32>
    %7 = vector.broadcast %4 : vector<1x64xf32> to vector<8x64xf32>
    %8 = arith.subf %2, %7 : vector<8x64xf32>
    %c0_7 = arith.constant 0 : index
    %c0_8 = arith.constant 0 : index
    %9 = vector.load %arg4[%c0_7, %c0_8] : memref<1x64xf32, #tpu.memory_space<vmem>>, vector<1x64xf32>
    %10 = arith.mulf %6, %9 : vector<1x64xf32>
    %11 = vector.broadcast %10 : vector<1x64xf32> to vector<8x64xf32>
    %12 = arith.mulf %8, %11 : vector<8x64xf32>
    %c0_9 = arith.constant 0 : index
    %c0_10 = arith.constant 0 : index
    %13 = vector.load %arg5[%c0_9, %c0_10] : memref<1x64xf32, #tpu.memory_space<vmem>>, vector<1x64xf32>
    %14 = vector.broadcast %13 : vector<1x64xf32> to vector<8x64xf32>
    %15 = arith.addf %12, %14 : vector<8x64xf32>
    %16 = arith.negf %15 : vector<8x64xf32>
    %17 = math.exp %16 : vector<8x64xf32>
    %cst = arith.constant 1.000000e+00 : f32
    %18 = vector.broadcast %cst : f32 to vector<8x64xf32>
    %19 = arith.addf %18, %17 : vector<8x64xf32>
    %20 = arith.divf %18, %19 : vector<8x64xf32>
    %21 = arith.mulf %15, %20 : vector<8x64xf32>
    %22 = arith.truncf %21 : vector<8x64xf32> to vector<8x64xbf16>
    %c0_11 = arith.constant 0 : index
    %c0_12 = arith.constant 0 : index
    %c0_13 = arith.constant 0 : index
    %23 = vector.load %arg6[%c0_11, %c0_12, %c0_13] : memref<1x8x64xbf16, #tpu.memory_space<vmem>>, vector<1x8x64xbf16>
    %24 = vector.shape_cast %23 : vector<1x8x64xbf16> to vector<8x64xbf16>
    %25 = vector.shape_cast %22 : vector<8x64xbf16> to vector<1x8x64xbf16>
    tpu.vector_store %arg6[%c0_11, %c0_12, %c0_13], %25 {strides = array<i32>} : memref<1x8x64xbf16, #tpu.memory_space<vmem>>, vector<1x8x64xbf16>,
    return
  }
  func.func @transform_0(%arg0: i32, %arg1: i32) -> (i32, i32, i32) {
    %c0_i32 = arith.constant 0 : i32
    %c0_i32_0 = arith.constant 0 : i32
    return %arg0, %arg1, %c0_i32 : i32, i32, i32
  }
  func.func @transform_1(%arg0: i32, %arg1: i32) -> (i32, i32, i32) {
    %c0_i32 = arith.constant 0 : i32
    %c0_i32_0 = arith.constant 0 : i32
    %c0_i32_1 = arith.constant 0 : i32
    return %arg0, %c0_i32, %c0_i32_0 : i32, i32, i32
  }
  func.func @transform_2(%arg0: i32, %arg1: i32) -> (i32, i32) {
    %c0_i32 = arith.constant 0 : i32
    %c0_i32_0 = arith.constant 0 : i32
    %c0_i32_1 = arith.constant 0 : i32
    return %c0_i32, %c0_i32_0 : i32, i32
  }
  func.func @transform_3(%arg0: i32, %arg1: i32) -> (i32, i32) {
    %c0_i32 = arith.constant 0 : i32
    %c0_i32_0 = arith.constant 0 : i32
    %c0_i32_1 = arith.constant 0 : i32
    return %c0_i32, %c0_i32_0 : i32, i32
  }
  func.func @transform_4(%arg0: i32, %arg1: i32) -> (i32, i32, i32) {
    %c0_i32 = arith.constant 0 : i32
    %c0_i32_0 = arith.constant 0 : i32
    return %arg0, %arg1, %c0_i32 : i32, i32, i32
  }
}

module attributes {stable_mosaic.version = 11 : i64} {
  func.func @_matmul_bias_kernel(%arg0: i32, %arg1: i32, %arg2: memref<1x8x32xbf16, #tpu.memory_space<vmem>>, %arg3: memref<32x64xbf16, #tpu.memory_space<vmem>>, %arg4: memref<1x64xf32, #tpu.memory_space<vmem>>, %arg5: memref<1x8x64xbf16, #tpu.memory_space<vmem>>) attributes {dimension_semantics = [#tpu.dimension_semantics<parallel>, #tpu.dimension_semantics<parallel>], iteration_bounds = array<i64: 2, 1>, scalar_prefetch = 0 : i64, scratch_operands = 0 : i64, tpu.core_type = #tpu.core_type<tc>, window_params = [{transform_indices = @transform_0, window_bounds = array<i64: 1, 8, 32>}, {pipeline_mode = #tpu.pipeline_mode<synchronous>, transform_indices = @transform_1, window_bounds = array<i64: 32, 64>}, {pipeline_mode = #tpu.pipeline_mode<synchronous>, transform_indices = @transform_2, window_bounds = array<i64: 1, 64>}, {transform_indices = @transform_3, window_bounds = array<i64: 1, 8, 64>}]} {
    %c0 = arith.constant 0 : index
    %c0_0 = arith.constant 0 : index
    %c0_1 = arith.constant 0 : index
    %0 = vector.load %arg2[%c0, %c0_0, %c0_1] : memref<1x8x32xbf16, #tpu.memory_space<vmem>>, vector<1x8x32xbf16>
    %1 = vector.shape_cast %0 : vector<1x8x32xbf16> to vector<8x32xbf16>
    %c0_2 = arith.constant 0 : index
    %c0_3 = arith.constant 0 : index
    %2 = vector.load %arg3[%c0_2, %c0_3] : memref<32x64xbf16, #tpu.memory_space<vmem>>, vector<32x64xbf16>
    %cst = arith.constant dense<0.000000e+00> : vector<8x64xf32>
    %3 = tpu.matmul %1, %2, %cst {dimension_numbers = #tpu.dot_dimension_numbers<[1], [0], [0], [1], [0, 0, 1, 1], [], []>} : vector<8x32xbf16>, vector<32x64xbf16>, vector<8x64xf32> -> vector<8x64xf32>
    %c0_4 = arith.constant 0 : index
    %c0_5 = arith.constant 0 : index
    %4 = vector.load %arg4[%c0_4, %c0_5] : memref<1x64xf32, #tpu.memory_space<vmem>>, vector<1x64xf32>
    %5 = vector.broadcast %4 : vector<1x64xf32> to vector<8x64xf32>
    %6 = arith.addf %3, %5 : vector<8x64xf32>
    %7 = arith.truncf %6 : vector<8x64xf32> to vector<8x64xbf16>
    %c0_6 = arith.constant 0 : index
    %c0_7 = arith.constant 0 : index
    %c0_8 = arith.constant 0 : index
    %8 = vector.load %arg5[%c0_6, %c0_7, %c0_8] : memref<1x8x64xbf16, #tpu.memory_space<vmem>>, vector<1x8x64xbf16>
    %9 = vector.shape_cast %8 : vector<1x8x64xbf16> to vector<8x64xbf16>
    %10 = vector.shape_cast %7 : vector<8x64xbf16> to vector<1x8x64xbf16>
    tpu.vector_store %arg5[%c0_6, %c0_7, %c0_8], %10 {strides = array<i32>} : memref<1x8x64xbf16, #tpu.memory_space<vmem>>, vector<1x8x64xbf16>,
    return
  }
  func.func @transform_0(%arg0: i32, %arg1: i32) -> (i32, i32, i32) {
    %c0_i32 = arith.constant 0 : i32
    %c0_i32_0 = arith.constant 0 : i32
    return %arg0, %arg1, %c0_i32 : i32, i32, i32
  }
  func.func @transform_1(%arg0: i32, %arg1: i32) -> (i32, i32) {
    %c0_i32 = arith.constant 0 : i32
    %c0_i32_0 = arith.constant 0 : i32
    %c0_i32_1 = arith.constant 0 : i32
    return %c0_i32, %c0_i32_0 : i32, i32
  }
  func.func @transform_2(%arg0: i32, %arg1: i32) -> (i32, i32) {
    %c0_i32 = arith.constant 0 : i32
    %c0_i32_0 = arith.constant 0 : i32
    %c0_i32_1 = arith.constant 0 : i32
    return %c0_i32, %c0_i32_0 : i32, i32
  }
  func.func @transform_3(%arg0: i32, %arg1: i32) -> (i32, i32, i32) {
    %c0_i32 = arith.constant 0 : i32
    %c0_i32_0 = arith.constant 0 : i32
    return %arg0, %arg1, %c0_i32 : i32, i32, i32
  }
}

module attributes {stable_mosaic.version = 11 : i64} {
  func.func @_conv3_kernel(%arg0: i32, %arg1: i32, %arg2: memref<1x8x64xbf16, #tpu.memory_space<vmem>>, %arg3: memref<3x64x64xbf16, #tpu.memory_space<vmem>>, %arg4: memref<1x64xf32, #tpu.memory_space<vmem>>, %arg5: memref<1x8x64xbf16, #tpu.memory_space<vmem>>, %arg6: memref<1x8x64xbf16, #tpu.memory_space<vmem>>) attributes {dimension_semantics = [#tpu.dimension_semantics<parallel>, #tpu.dimension_semantics<parallel>], iteration_bounds = array<i64: 2, 1>, scalar_prefetch = 0 : i64, scratch_operands = 0 : i64, tpu.core_type = #tpu.core_type<tc>, window_params = [{transform_indices = @transform_0, window_bounds = array<i64: 1, 8, 64>}, {pipeline_mode = #tpu.pipeline_mode<synchronous>, transform_indices = @transform_1, window_bounds = array<i64: 3, 64, 64>}, {pipeline_mode = #tpu.pipeline_mode<synchronous>, transform_indices = @transform_2, window_bounds = array<i64: 1, 64>}, {transform_indices = @transform_3, window_bounds = array<i64: 1, 8, 64>}, {transform_indices = @transform_4, window_bounds = array<i64: 1, 8, 64>}]} {
    %c0 = arith.constant 0 : index
    %c0_0 = arith.constant 0 : index
    %c0_1 = arith.constant 0 : index
    %0 = vector.load %arg2[%c0, %c0_0, %c0_1] : memref<1x8x64xbf16, #tpu.memory_space<vmem>>, vector<1x8x64xbf16>
    %1 = vector.shape_cast %0 : vector<1x8x64xbf16> to vector<8x64xbf16>
    %cst = arith.constant 0.000000e+00 : bf16
    %2 = vector.broadcast %cst : bf16 to vector<1x64xbf16>
    %3 = vector.extract_strided_slice %1 {offsets = [0, 0], sizes = [7, 64], strides = [1, 1]} : vector<8x64xbf16> to vector<7x64xbf16>
    %4 = tpu.concatenate %2, %3 in 0 : vector<1x64xbf16>, vector<7x64xbf16> -> vector<8x64xbf16>
    %5 = vector.extract_strided_slice %1 {offsets = [1, 0], sizes = [7, 64], strides = [1, 1]} : vector<8x64xbf16> to vector<7x64xbf16>
    %6 = tpu.concatenate %5, %2 in 0 : vector<7x64xbf16>, vector<1x64xbf16> -> vector<8x64xbf16>
    %c1 = arith.constant 1 : index
    %c0_2 = arith.constant 0 : index
    %c0_3 = arith.constant 0 : index
    %7 = vector.load %arg3[%c1, %c0_2, %c0_3] : memref<3x64x64xbf16, #tpu.memory_space<vmem>>, vector<1x64x64xbf16>
    %8 = vector.shape_cast %7 : vector<1x64x64xbf16> to vector<64x64xbf16>
    %cst_4 = arith.constant dense<0.000000e+00> : vector<8x64xf32>
    %9 = tpu.matmul %1, %8, %cst_4 {dimension_numbers = #tpu.dot_dimension_numbers<[1], [0], [0], [1], [0, 0, 1, 1], [], []>} : vector<8x64xbf16>, vector<64x64xbf16>, vector<8x64xf32> -> vector<8x64xf32>
    %c0_5 = arith.constant 0 : index
    %c0_6 = arith.constant 0 : index
    %c0_7 = arith.constant 0 : index
    %10 = vector.load %arg3[%c0_5, %c0_6, %c0_7] : memref<3x64x64xbf16, #tpu.memory_space<vmem>>, vector<1x64x64xbf16>
    %11 = vector.shape_cast %10 : vector<1x64x64xbf16> to vector<64x64xbf16>
    %cst_8 = arith.constant dense<0.000000e+00> : vector<8x64xf32>
    %12 = tpu.matmul %4, %11, %cst_8 {dimension_numbers = #tpu.dot_dimension_numbers<[1], [0], [0], [1], [0, 0, 1, 1], [], []>} : vector<8x64xbf16>, vector<64x64xbf16>, vector<8x64xf32> -> vector<8x64xf32>
    %13 = arith.addf %9, %12 : vector<8x64xf32>
    %c2 = arith.constant 2 : index
    %c0_9 = arith.constant 0 : index
    %c0_10 = arith.constant 0 : index
    %14 = vector.load %arg3[%c2, %c0_9, %c0_10] : memref<3x64x64xbf16, #tpu.memory_space<vmem>>, vector<1x64x64xbf16>
    %15 = vector.shape_cast %14 : vector<1x64x64xbf16> to vector<64x64xbf16>
    %cst_11 = arith.constant dense<0.000000e+00> : vector<8x64xf32>
    %16 = tpu.matmul %6, %15, %cst_11 {dimension_numbers = #tpu.dot_dimension_numbers<[1], [0], [0], [1], [0, 0, 1, 1], [], []>} : vector<8x64xbf16>, vector<64x64xbf16>, vector<8x64xf32> -> vector<8x64xf32>
    %17 = arith.addf %13, %16 : vector<8x64xf32>
    %c0_12 = arith.constant 0 : index
    %c0_13 = arith.constant 0 : index
    %18 = vector.load %arg4[%c0_12, %c0_13] : memref<1x64xf32, #tpu.memory_space<vmem>>, vector<1x64xf32>
    %19 = vector.broadcast %18 : vector<1x64xf32> to vector<8x64xf32>
    %20 = arith.addf %17, %19 : vector<8x64xf32>
    %c0_14 = arith.constant 0 : index
    %c0_15 = arith.constant 0 : index
    %c0_16 = arith.constant 0 : index
    %21 = vector.load %arg5[%c0_14, %c0_15, %c0_16] : memref<1x8x64xbf16, #tpu.memory_space<vmem>>, vector<1x8x64xbf16>
    %22 = vector.shape_cast %21 : vector<1x8x64xbf16> to vector<8x64xbf16>
    %23 = arith.extf %22 : vector<8x64xbf16> to vector<8x64xf32>
    %24 = arith.addf %20, %23 : vector<8x64xf32>
    %25 = arith.truncf %24 : vector<8x64xf32> to vector<8x64xbf16>
    %c0_17 = arith.constant 0 : index
    %c0_18 = arith.constant 0 : index
    %c0_19 = arith.constant 0 : index
    %26 = vector.load %arg6[%c0_17, %c0_18, %c0_19] : memref<1x8x64xbf16, #tpu.memory_space<vmem>>, vector<1x8x64xbf16>
    %27 = vector.shape_cast %26 : vector<1x8x64xbf16> to vector<8x64xbf16>
    %28 = vector.shape_cast %25 : vector<8x64xbf16> to vector<1x8x64xbf16>
    tpu.vector_store %arg6[%c0_17, %c0_18, %c0_19], %28 {strides = array<i32>} : memref<1x8x64xbf16, #tpu.memory_space<vmem>>, vector<1x8x64xbf16>,
    return
  }
  func.func @transform_0(%arg0: i32, %arg1: i32) -> (i32, i32, i32) {
    %c0_i32 = arith.constant 0 : i32
    %c0_i32_0 = arith.constant 0 : i32
    return %arg0, %arg1, %c0_i32 : i32, i32, i32
  }
  func.func @transform_1(%arg0: i32, %arg1: i32) -> (i32, i32, i32) {
    %c0_i32 = arith.constant 0 : i32
    %c0_i32_0 = arith.constant 0 : i32
    %c0_i32_1 = arith.constant 0 : i32
    %c0_i32_2 = arith.constant 0 : i32
    return %c0_i32, %c0_i32_0, %c0_i32_1 : i32, i32, i32
  }
  func.func @transform_2(%arg0: i32, %arg1: i32) -> (i32, i32) {
    %c0_i32 = arith.constant 0 : i32
    %c0_i32_0 = arith.constant 0 : i32
    %c0_i32_1 = arith.constant 0 : i32
    return %c0_i32, %c0_i32_0 : i32, i32
  }
  func.func @transform_3(%arg0: i32, %arg1: i32) -> (i32, i32, i32) {
    %c0_i32 = arith.constant 0 : i32
    %c0_i32_0 = arith.constant 0 : i32
    return %arg0, %arg1, %c0_i32 : i32, i32, i32
  }
  func.func @transform_4(%arg0: i32, %arg1: i32) -> (i32, i32, i32) {
    %c0_i32 = arith.constant 0 : i32
    %c0_i32_0 = arith.constant 0 : i32
    return %arg0, %arg1, %c0_i32 : i32, i32, i32
  }
}

module attributes {stable_mosaic.version = 11 : i64} {
  func.func @_conv3_kernel(%arg0: i32, %arg1: i32, %arg2: memref<1x8x64xbf16, #tpu.memory_space<vmem>>, %arg3: memref<3x64x64xbf16, #tpu.memory_space<vmem>>, %arg4: memref<1x64xf32, #tpu.memory_space<vmem>>, %arg5: memref<1x8x64xbf16, #tpu.memory_space<vmem>>) attributes {dimension_semantics = [#tpu.dimension_semantics<parallel>, #tpu.dimension_semantics<parallel>], iteration_bounds = array<i64: 2, 1>, scalar_prefetch = 0 : i64, scratch_operands = 0 : i64, tpu.core_type = #tpu.core_type<tc>, window_params = [{transform_indices = @transform_0, window_bounds = array<i64: 1, 8, 64>}, {pipeline_mode = #tpu.pipeline_mode<synchronous>, transform_indices = @transform_1, window_bounds = array<i64: 3, 64, 64>}, {pipeline_mode = #tpu.pipeline_mode<synchronous>, transform_indices = @transform_2, window_bounds = array<i64: 1, 64>}, {transform_indices = @transform_3, window_bounds = array<i64: 1, 8, 64>}]} {
    %c0 = arith.constant 0 : index
    %c0_0 = arith.constant 0 : index
    %c0_1 = arith.constant 0 : index
    %0 = vector.load %arg2[%c0, %c0_0, %c0_1] : memref<1x8x64xbf16, #tpu.memory_space<vmem>>, vector<1x8x64xbf16>
    %1 = vector.shape_cast %0 : vector<1x8x64xbf16> to vector<8x64xbf16>
    %cst = arith.constant 0.000000e+00 : bf16
    %2 = vector.broadcast %cst : bf16 to vector<1x64xbf16>
    %3 = vector.extract_strided_slice %1 {offsets = [0, 0], sizes = [7, 64], strides = [1, 1]} : vector<8x64xbf16> to vector<7x64xbf16>
    %4 = tpu.concatenate %2, %3 in 0 : vector<1x64xbf16>, vector<7x64xbf16> -> vector<8x64xbf16>
    %5 = vector.extract_strided_slice %1 {offsets = [1, 0], sizes = [7, 64], strides = [1, 1]} : vector<8x64xbf16> to vector<7x64xbf16>
    %6 = tpu.concatenate %5, %2 in 0 : vector<7x64xbf16>, vector<1x64xbf16> -> vector<8x64xbf16>
    %c1 = arith.constant 1 : index
    %c0_2 = arith.constant 0 : index
    %c0_3 = arith.constant 0 : index
    %7 = vector.load %arg3[%c1, %c0_2, %c0_3] : memref<3x64x64xbf16, #tpu.memory_space<vmem>>, vector<1x64x64xbf16>
    %8 = vector.shape_cast %7 : vector<1x64x64xbf16> to vector<64x64xbf16>
    %cst_4 = arith.constant dense<0.000000e+00> : vector<8x64xf32>
    %9 = tpu.matmul %1, %8, %cst_4 {dimension_numbers = #tpu.dot_dimension_numbers<[1], [0], [0], [1], [0, 0, 1, 1], [], []>} : vector<8x64xbf16>, vector<64x64xbf16>, vector<8x64xf32> -> vector<8x64xf32>
    %c0_5 = arith.constant 0 : index
    %c0_6 = arith.constant 0 : index
    %c0_7 = arith.constant 0 : index
    %10 = vector.load %arg3[%c0_5, %c0_6, %c0_7] : memref<3x64x64xbf16, #tpu.memory_space<vmem>>, vector<1x64x64xbf16>
    %11 = vector.shape_cast %10 : vector<1x64x64xbf16> to vector<64x64xbf16>
    %cst_8 = arith.constant dense<0.000000e+00> : vector<8x64xf32>
    %12 = tpu.matmul %4, %11, %cst_8 {dimension_numbers = #tpu.dot_dimension_numbers<[1], [0], [0], [1], [0, 0, 1, 1], [], []>} : vector<8x64xbf16>, vector<64x64xbf16>, vector<8x64xf32> -> vector<8x64xf32>
    %13 = arith.addf %9, %12 : vector<8x64xf32>
    %c2 = arith.constant 2 : index
    %c0_9 = arith.constant 0 : index
    %c0_10 = arith.constant 0 : index
    %14 = vector.load %arg3[%c2, %c0_9, %c0_10] : memref<3x64x64xbf16, #tpu.memory_space<vmem>>, vector<1x64x64xbf16>
    %15 = vector.shape_cast %14 : vector<1x64x64xbf16> to vector<64x64xbf16>
    %cst_11 = arith.constant dense<0.000000e+00> : vector<8x64xf32>
    %16 = tpu.matmul %6, %15, %cst_11 {dimension_numbers = #tpu.dot_dimension_numbers<[1], [0], [0], [1], [0, 0, 1, 1], [], []>} : vector<8x64xbf16>, vector<64x64xbf16>, vector<8x64xf32> -> vector<8x64xf32>
    %17 = arith.addf %13, %16 : vector<8x64xf32>
    %c0_12 = arith.constant 0 : index
    %c0_13 = arith.constant 0 : index
    %18 = vector.load %arg4[%c0_12, %c0_13] : memref<1x64xf32, #tpu.memory_space<vmem>>, vector<1x64xf32>
    %19 = vector.broadcast %18 : vector<1x64xf32> to vector<8x64xf32>
    %20 = arith.addf %17, %19 : vector<8x64xf32>
    %21 = arith.truncf %20 : vector<8x64xf32> to vector<8x64xbf16>
    %c0_14 = arith.constant 0 : index
    %c0_15 = arith.constant 0 : index
    %c0_16 = arith.constant 0 : index
    %22 = vector.load %arg5[%c0_14, %c0_15, %c0_16] : memref<1x8x64xbf16, #tpu.memory_space<vmem>>, vector<1x8x64xbf16>
    %23 = vector.shape_cast %22 : vector<1x8x64xbf16> to vector<8x64xbf16>
    %24 = vector.shape_cast %21 : vector<8x64xbf16> to vector<1x8x64xbf16>
    tpu.vector_store %arg5[%c0_14, %c0_15, %c0_16], %24 {strides = array<i32>} : memref<1x8x64xbf16, #tpu.memory_space<vmem>>, vector<1x8x64xbf16>,
    return
  }
  func.func @transform_0(%arg0: i32, %arg1: i32) -> (i32, i32, i32) {
    %c0_i32 = arith.constant 0 : i32
    %c0_i32_0 = arith.constant 0 : i32
    return %arg0, %arg1, %c0_i32 : i32, i32, i32
  }
  func.func @transform_1(%arg0: i32, %arg1: i32) -> (i32, i32, i32) {
    %c0_i32 = arith.constant 0 : i32
    %c0_i32_0 = arith.constant 0 : i32
    %c0_i32_1 = arith.constant 0 : i32
    %c0_i32_2 = arith.constant 0 : i32
    return %c0_i32, %c0_i32_0, %c0_i32_1 : i32, i32, i32
  }
  func.func @transform_2(%arg0: i32, %arg1: i32) -> (i32, i32) {
    %c0_i32 = arith.constant 0 : i32
    %c0_i32_0 = arith.constant 0 : i32
    %c0_i32_1 = arith.constant 0 : i32
    return %c0_i32, %c0_i32_0 : i32, i32
  }
  func.func @transform_3(%arg0: i32, %arg1: i32) -> (i32, i32, i32) {
    %c0_i32 = arith.constant 0 : i32
    %c0_i32_0 = arith.constant 0 : i32
    return %arg0, %arg1, %c0_i32 : i32, i32, i32
  }
}

module attributes {stable_mosaic.version = 11 : i64} {
  func.func @_gn_apply_kernel(%arg0: i32, %arg1: i32, %arg2: memref<1x8x64xbf16, #tpu.memory_space<vmem>>, %arg3: memref<1x2x64xf32, #tpu.memory_space<vmem>>, %arg4: memref<1x64xf32, #tpu.memory_space<vmem>>, %arg5: memref<1x64xf32, #tpu.memory_space<vmem>>, %arg6: memref<1x8x64xbf16, #tpu.memory_space<vmem>>) attributes {dimension_semantics = [#tpu.dimension_semantics<parallel>, #tpu.dimension_semantics<parallel>], iteration_bounds = array<i64: 2, 1>, scalar_prefetch = 0 : i64, scratch_operands = 0 : i64, tpu.core_type = #tpu.core_type<tc>, window_params = [{transform_indices = @transform_0, window_bounds = array<i64: 1, 8, 64>}, {transform_indices = @transform_1, window_bounds = array<i64: 1, 2, 64>}, {pipeline_mode = #tpu.pipeline_mode<synchronous>, transform_indices = @transform_2, window_bounds = array<i64: 1, 64>}, {pipeline_mode = #tpu.pipeline_mode<synchronous>, transform_indices = @transform_3, window_bounds = array<i64: 1, 64>}, {transform_indices = @transform_4, window_bounds = array<i64: 1, 8, 64>}]} {
    %c0 = arith.constant 0 : index
    %c0_0 = arith.constant 0 : index
    %c0_1 = arith.constant 0 : index
    %0 = vector.load %arg2[%c0, %c0_0, %c0_1] : memref<1x8x64xbf16, #tpu.memory_space<vmem>>, vector<1x8x64xbf16>
    %1 = vector.shape_cast %0 : vector<1x8x64xbf16> to vector<8x64xbf16>
    %2 = arith.extf %1 : vector<8x64xbf16> to vector<8x64xf32>
    %c0_2 = arith.constant 0 : index
    %c0_3 = arith.constant 0 : index
    %c0_4 = arith.constant 0 : index
    %3 = vector.load %arg3[%c0_2, %c0_3, %c0_4] : memref<1x2x64xf32, #tpu.memory_space<vmem>>, vector<1x1x64xf32>
    %4 = vector.shape_cast %3 : vector<1x1x64xf32> to vector<1x64xf32>
    %c0_5 = arith.constant 0 : index
    %c1 = arith.constant 1 : index
    %c0_6 = arith.constant 0 : index
    %5 = vector.load %arg3[%c0_5, %c1, %c0_6] : memref<1x2x64xf32, #tpu.memory_space<vmem>>, vector<1x1x64xf32>
    %6 = vector.shape_cast %5 : vector<1x1x64xf32> to vector<1x64xf32>
    %7 = vector.broadcast %4 : vector<1x64xf32> to vector<8x64xf32>
    %8 = arith.subf %2, %7 : vector<8x64xf32>
    %c0_7 = arith.constant 0 : index
    %c0_8 = arith.constant 0 : index
    %9 = vector.load %arg4[%c0_7, %c0_8] : memref<1x64xf32, #tpu.memory_space<vmem>>, vector<1x64xf32>
    %10 = arith.mulf %6, %9 : vector<1x64xf32>
    %11 = vector.broadcast %10 : vector<1x64xf32> to vector<8x64xf32>
    %12 = arith.mulf %8, %11 : vector<8x64xf32>
    %c0_9 = arith.constant 0 : index
    %c0_10 = arith.constant 0 : index
    %13 = vector.load %arg5[%c0_9, %c0_10] : memref<1x64xf32, #tpu.memory_space<vmem>>, vector<1x64xf32>
    %14 = vector.broadcast %13 : vector<1x64xf32> to vector<8x64xf32>
    %15 = arith.addf %12, %14 : vector<8x64xf32>
    %16 = arith.truncf %15 : vector<8x64xf32> to vector<8x64xbf16>
    %c0_11 = arith.constant 0 : index
    %c0_12 = arith.constant 0 : index
    %c0_13 = arith.constant 0 : index
    %17 = vector.load %arg6[%c0_11, %c0_12, %c0_13] : memref<1x8x64xbf16, #tpu.memory_space<vmem>>, vector<1x8x64xbf16>
    %18 = vector.shape_cast %17 : vector<1x8x64xbf16> to vector<8x64xbf16>
    %19 = vector.shape_cast %16 : vector<8x64xbf16> to vector<1x8x64xbf16>
    tpu.vector_store %arg6[%c0_11, %c0_12, %c0_13], %19 {strides = array<i32>} : memref<1x8x64xbf16, #tpu.memory_space<vmem>>, vector<1x8x64xbf16>,
    return
  }
  func.func @transform_0(%arg0: i32, %arg1: i32) -> (i32, i32, i32) {
    %c0_i32 = arith.constant 0 : i32
    %c0_i32_0 = arith.constant 0 : i32
    return %arg0, %arg1, %c0_i32 : i32, i32, i32
  }
  func.func @transform_1(%arg0: i32, %arg1: i32) -> (i32, i32, i32) {
    %c0_i32 = arith.constant 0 : i32
    %c0_i32_0 = arith.constant 0 : i32
    %c0_i32_1 = arith.constant 0 : i32
    return %arg0, %c0_i32, %c0_i32_0 : i32, i32, i32
  }
  func.func @transform_2(%arg0: i32, %arg1: i32) -> (i32, i32) {
    %c0_i32 = arith.constant 0 : i32
    %c0_i32_0 = arith.constant 0 : i32
    %c0_i32_1 = arith.constant 0 : i32
    return %c0_i32, %c0_i32_0 : i32, i32
  }
  func.func @transform_3(%arg0: i32, %arg1: i32) -> (i32, i32) {
    %c0_i32 = arith.constant 0 : i32
    %c0_i32_0 = arith.constant 0 : i32
    %c0_i32_1 = arith.constant 0 : i32
    return %c0_i32, %c0_i32_0 : i32, i32
  }
  func.func @transform_4(%arg0: i32, %arg1: i32) -> (i32, i32, i32) {
    %c0_i32 = arith.constant 0 : i32
    %c0_i32_0 = arith.constant 0 : i32
    return %arg0, %arg1, %c0_i32 : i32, i32, i32
  }
}

module attributes {stable_mosaic.version = 11 : i64} {
  func.func @_qkv_proj_kernel(%arg0: i32, %arg1: i32, %arg2: memref<1x8x64xbf16, #tpu.memory_space<vmem>>, %arg3: memref<64x64xbf16, #tpu.memory_space<vmem>>, %arg4: memref<64x64xbf16, #tpu.memory_space<vmem>>, %arg5: memref<64x64xbf16, #tpu.memory_space<vmem>>, %arg6: memref<1x64xf32, #tpu.memory_space<vmem>>, %arg7: memref<1x64xf32, #tpu.memory_space<vmem>>, %arg8: memref<1x64xf32, #tpu.memory_space<vmem>>, %arg9: memref<1x8x64xbf16, #tpu.memory_space<vmem>>, %arg10: memref<1x8x64xbf16, #tpu.memory_space<vmem>>, %arg11: memref<1x8x64xbf16, #tpu.memory_space<vmem>>) attributes {dimension_semantics = [#tpu.dimension_semantics<parallel>, #tpu.dimension_semantics<parallel>], iteration_bounds = array<i64: 2, 1>, scalar_prefetch = 0 : i64, scratch_operands = 0 : i64, tpu.core_type = #tpu.core_type<tc>, window_params = [{transform_indices = @transform_0, window_bounds = array<i64: 1, 8, 64>}, {pipeline_mode = #tpu.pipeline_mode<synchronous>, transform_indices = @transform_1, window_bounds = array<i64: 64, 64>}, {pipeline_mode = #tpu.pipeline_mode<synchronous>, transform_indices = @transform_2, window_bounds = array<i64: 64, 64>}, {pipeline_mode = #tpu.pipeline_mode<synchronous>, transform_indices = @transform_3, window_bounds = array<i64: 64, 64>}, {pipeline_mode = #tpu.pipeline_mode<synchronous>, transform_indices = @transform_4, window_bounds = array<i64: 1, 64>}, {pipeline_mode = #tpu.pipeline_mode<synchronous>, transform_indices = @transform_5, window_bounds = array<i64: 1, 64>}, {pipeline_mode = #tpu.pipeline_mode<synchronous>, transform_indices = @transform_6, window_bounds = array<i64: 1, 64>}, {transform_indices = @transform_7, window_bounds = array<i64: 1, 8, 64>}, {transform_indices = @transform_8, window_bounds = array<i64: 1, 8, 64>}, {transform_indices = @transform_9, window_bounds = array<i64: 1, 8, 64>}]} {
    %c0 = arith.constant 0 : index
    %c0_0 = arith.constant 0 : index
    %c0_1 = arith.constant 0 : index
    %0 = vector.load %arg2[%c0, %c0_0, %c0_1] : memref<1x8x64xbf16, #tpu.memory_space<vmem>>, vector<1x8x64xbf16>
    %1 = vector.shape_cast %0 : vector<1x8x64xbf16> to vector<8x64xbf16>
    %c0_2 = arith.constant 0 : index
    %c0_3 = arith.constant 0 : index
    %2 = vector.load %arg3[%c0_2, %c0_3] : memref<64x64xbf16, #tpu.memory_space<vmem>>, vector<64x64xbf16>
    %cst = arith.constant dense<0.000000e+00> : vector<8x64xf32>
    %3 = tpu.matmul %1, %2, %cst {dimension_numbers = #tpu.dot_dimension_numbers<[1], [0], [0], [1], [0, 0, 1, 1], [], []>} : vector<8x64xbf16>, vector<64x64xbf16>, vector<8x64xf32> -> vector<8x64xf32>
    %c0_4 = arith.constant 0 : index
    %c0_5 = arith.constant 0 : index
    %4 = vector.load %arg6[%c0_4, %c0_5] : memref<1x64xf32, #tpu.memory_space<vmem>>, vector<1x64xf32>
    %5 = vector.broadcast %4 : vector<1x64xf32> to vector<8x64xf32>
    %6 = arith.addf %3, %5 : vector<8x64xf32>
    %7 = arith.truncf %6 : vector<8x64xf32> to vector<8x64xbf16>
    %c0_6 = arith.constant 0 : index
    %c0_7 = arith.constant 0 : index
    %c0_8 = arith.constant 0 : index
    %8 = vector.load %arg9[%c0_6, %c0_7, %c0_8] : memref<1x8x64xbf16, #tpu.memory_space<vmem>>, vector<1x8x64xbf16>
    %9 = vector.shape_cast %8 : vector<1x8x64xbf16> to vector<8x64xbf16>
    %10 = vector.shape_cast %7 : vector<8x64xbf16> to vector<1x8x64xbf16>
    tpu.vector_store %arg9[%c0_6, %c0_7, %c0_8], %10 {strides = array<i32>} : memref<1x8x64xbf16, #tpu.memory_space<vmem>>, vector<1x8x64xbf16>,
    %c0_9 = arith.constant 0 : index
    %c0_10 = arith.constant 0 : index
    %11 = vector.load %arg4[%c0_9, %c0_10] : memref<64x64xbf16, #tpu.memory_space<vmem>>, vector<64x64xbf16>
    %cst_11 = arith.constant dense<0.000000e+00> : vector<8x64xf32>
    %12 = tpu.matmul %1, %11, %cst_11 {dimension_numbers = #tpu.dot_dimension_numbers<[1], [0], [0], [1], [0, 0, 1, 1], [], []>} : vector<8x64xbf16>, vector<64x64xbf16>, vector<8x64xf32> -> vector<8x64xf32>
    %c0_12 = arith.constant 0 : index
    %c0_13 = arith.constant 0 : index
    %13 = vector.load %arg7[%c0_12, %c0_13] : memref<1x64xf32, #tpu.memory_space<vmem>>, vector<1x64xf32>
    %14 = vector.broadcast %13 : vector<1x64xf32> to vector<8x64xf32>
    %15 = arith.addf %12, %14 : vector<8x64xf32>
    %16 = arith.truncf %15 : vector<8x64xf32> to vector<8x64xbf16>
    %c0_14 = arith.constant 0 : index
    %c0_15 = arith.constant 0 : index
    %c0_16 = arith.constant 0 : index
    %17 = vector.load %arg10[%c0_14, %c0_15, %c0_16] : memref<1x8x64xbf16, #tpu.memory_space<vmem>>, vector<1x8x64xbf16>
    %18 = vector.shape_cast %17 : vector<1x8x64xbf16> to vector<8x64xbf16>
    %19 = vector.shape_cast %16 : vector<8x64xbf16> to vector<1x8x64xbf16>
    tpu.vector_store %arg10[%c0_14, %c0_15, %c0_16], %19 {strides = array<i32>} : memref<1x8x64xbf16, #tpu.memory_space<vmem>>, vector<1x8x64xbf16>,
    %c0_17 = arith.constant 0 : index
    %c0_18 = arith.constant 0 : index
    %20 = vector.load %arg5[%c0_17, %c0_18] : memref<64x64xbf16, #tpu.memory_space<vmem>>, vector<64x64xbf16>
    %cst_19 = arith.constant dense<0.000000e+00> : vector<8x64xf32>
    %21 = tpu.matmul %1, %20, %cst_19 {dimension_numbers = #tpu.dot_dimension_numbers<[1], [0], [0], [1], [0, 0, 1, 1], [], []>} : vector<8x64xbf16>, vector<64x64xbf16>, vector<8x64xf32> -> vector<8x64xf32>
    %c0_20 = arith.constant 0 : index
    %c0_21 = arith.constant 0 : index
    %22 = vector.load %arg8[%c0_20, %c0_21] : memref<1x64xf32, #tpu.memory_space<vmem>>, vector<1x64xf32>
    %23 = vector.broadcast %22 : vector<1x64xf32> to vector<8x64xf32>
    %24 = arith.addf %21, %23 : vector<8x64xf32>
    %25 = arith.truncf %24 : vector<8x64xf32> to vector<8x64xbf16>
    %c0_22 = arith.constant 0 : index
    %c0_23 = arith.constant 0 : index
    %c0_24 = arith.constant 0 : index
    %26 = vector.load %arg11[%c0_22, %c0_23, %c0_24] : memref<1x8x64xbf16, #tpu.memory_space<vmem>>, vector<1x8x64xbf16>
    %27 = vector.shape_cast %26 : vector<1x8x64xbf16> to vector<8x64xbf16>
    %28 = vector.shape_cast %25 : vector<8x64xbf16> to vector<1x8x64xbf16>
    tpu.vector_store %arg11[%c0_22, %c0_23, %c0_24], %28 {strides = array<i32>} : memref<1x8x64xbf16, #tpu.memory_space<vmem>>, vector<1x8x64xbf16>,
    return
  }
  func.func @transform_0(%arg0: i32, %arg1: i32) -> (i32, i32, i32) {
    %c0_i32 = arith.constant 0 : i32
    %c0_i32_0 = arith.constant 0 : i32
    return %arg0, %arg1, %c0_i32 : i32, i32, i32
  }
  func.func @transform_1(%arg0: i32, %arg1: i32) -> (i32, i32) {
    %c0_i32 = arith.constant 0 : i32
    %c0_i32_0 = arith.constant 0 : i32
    %c0_i32_1 = arith.constant 0 : i32
    return %c0_i32, %c0_i32_0 : i32, i32
  }
  func.func @transform_2(%arg0: i32, %arg1: i32) -> (i32, i32) {
    %c0_i32 = arith.constant 0 : i32
    %c0_i32_0 = arith.constant 0 : i32
    %c0_i32_1 = arith.constant 0 : i32
    return %c0_i32, %c0_i32_0 : i32, i32
  }
  func.func @transform_3(%arg0: i32, %arg1: i32) -> (i32, i32) {
    %c0_i32 = arith.constant 0 : i32
    %c0_i32_0 = arith.constant 0 : i32
    %c0_i32_1 = arith.constant 0 : i32
    return %c0_i32, %c0_i32_0 : i32, i32
  }
  func.func @transform_4(%arg0: i32, %arg1: i32) -> (i32, i32) {
    %c0_i32 = arith.constant 0 : i32
    %c0_i32_0 = arith.constant 0 : i32
    %c0_i32_1 = arith.constant 0 : i32
    return %c0_i32, %c0_i32_0 : i32, i32
  }
  func.func @transform_5(%arg0: i32, %arg1: i32) -> (i32, i32) {
    %c0_i32 = arith.constant 0 : i32
    %c0_i32_0 = arith.constant 0 : i32
    %c0_i32_1 = arith.constant 0 : i32
    return %c0_i32, %c0_i32_0 : i32, i32
  }
  func.func @transform_6(%arg0: i32, %arg1: i32) -> (i32, i32) {
    %c0_i32 = arith.constant 0 : i32
    %c0_i32_0 = arith.constant 0 : i32
    %c0_i32_1 = arith.constant 0 : i32
    return %c0_i32, %c0_i32_0 : i32, i32
  }
  func.func @transform_7(%arg0: i32, %arg1: i32) -> (i32, i32, i32) {
    %c0_i32 = arith.constant 0 : i32
    %c0_i32_0 = arith.constant 0 : i32
    return %arg0, %arg1, %c0_i32 : i32, i32, i32
  }
  func.func @transform_8(%arg0: i32, %arg1: i32) -> (i32, i32, i32) {
    %c0_i32 = arith.constant 0 : i32
    %c0_i32_0 = arith.constant 0 : i32
    return %arg0, %arg1, %c0_i32 : i32, i32, i32
  }
  func.func @transform_9(%arg0: i32, %arg1: i32) -> (i32, i32, i32) {
    %c0_i32 = arith.constant 0 : i32
    %c0_i32_0 = arith.constant 0 : i32
    return %arg0, %arg1, %c0_i32 : i32, i32, i32
  }
}

module attributes {stable_mosaic.version = 11 : i64} {
  func.func @_flash_attn_kernel(%arg0: i32, %arg1: i32, %arg2: i32, %arg3: memref<1x8x64xbf16, #tpu.memory_space<vmem>>, %arg4: memref<1x8x64xbf16, #tpu.memory_space<vmem>>, %arg5: memref<1x8x64xbf16, #tpu.memory_space<vmem>>, %arg6: memref<1x8x64xbf16, #tpu.memory_space<vmem>>, %arg7: memref<8x1xf32, #tpu.memory_space<vmem>>, %arg8: memref<8x1xf32, #tpu.memory_space<vmem>>, %arg9: memref<8x64xf32, #tpu.memory_space<vmem>>) attributes {dimension_semantics = [#tpu.dimension_semantics<parallel>, #tpu.dimension_semantics<parallel>, #tpu.dimension_semantics<arbitrary>], iteration_bounds = array<i64: 2, 1, 1>, scalar_prefetch = 0 : i64, scratch_operands = 3 : i64, tpu.core_type = #tpu.core_type<tc>, window_params = [{transform_indices = @transform_0, window_bounds = array<i64: 1, 8, 64>}, {transform_indices = @transform_1, window_bounds = array<i64: 1, 8, 64>}, {transform_indices = @transform_2, window_bounds = array<i64: 1, 8, 64>}, {transform_indices = @transform_3, window_bounds = array<i64: 1, 8, 64>}]} {
    %c0_i32 = arith.constant 0 : i32
    %0 = arith.cmpi eq, %arg2, %c0_i32 : i32
    %1 = arith.extui %0 : i1 to i32
    %c0_i32_0 = arith.constant 0 : i32
    %2 = arith.cmpi ne, %1, %c0_i32_0 : i32
    scf.if %2 {
      %cst_26 = arith.constant 0xFF800000 : f32
      %36 = vector.broadcast %cst_26 : f32 to vector<8x1xf32>
      %c0_27 = arith.constant 0 : index
      %c0_28 = arith.constant 0 : index
      %37 = vector.load %arg7[%c0_27, %c0_28] : memref<8x1xf32, #tpu.memory_space<vmem>>, vector<8x1xf32>
      tpu.vector_store %arg7[%c0_27, %c0_28], %36 {strides = array<i32>} : memref<8x1xf32, #tpu.memory_space<vmem>>, vector<8x1xf32>,
      %cst_29 = arith.constant 0.000000e+00 : f32
      %38 = vector.broadcast %cst_29 : f32 to vector<8x1xf32>
      %c0_30 = arith.constant 0 : index
      %c0_31 = arith.constant 0 : index
      %39 = vector.load %arg8[%c0_30, %c0_31] : memref<8x1xf32, #tpu.memory_space<vmem>>, vector<8x1xf32>
      tpu.vector_store %arg8[%c0_30, %c0_31], %38 {strides = array<i32>} : memref<8x1xf32, #tpu.memory_space<vmem>>, vector<8x1xf32>,
      %cst_32 = arith.constant 0.000000e+00 : f32
      %40 = vector.broadcast %cst_32 : f32 to vector<8x64xf32>
      %c0_33 = arith.constant 0 : index
      %c0_34 = arith.constant 0 : index
      %41 = vector.load %arg9[%c0_33, %c0_34] : memref<8x64xf32, #tpu.memory_space<vmem>>, vector<8x64xf32>
      tpu.vector_store %arg9[%c0_33, %c0_34], %40 {strides = array<i32>} : memref<8x64xf32, #tpu.memory_space<vmem>>, vector<8x64xf32>,
    } else {
    }
    %c0 = arith.constant 0 : index
    %c0_1 = arith.constant 0 : index
    %c0_2 = arith.constant 0 : index
    %3 = vector.load %arg3[%c0, %c0_1, %c0_2] : memref<1x8x64xbf16, #tpu.memory_space<vmem>>, vector<1x8x64xbf16>
    %4 = vector.shape_cast %3 : vector<1x8x64xbf16> to vector<8x64xbf16>
    %c0_3 = arith.constant 0 : index
    %c0_4 = arith.constant 0 : index
    %c0_5 = arith.constant 0 : index
    %5 = vector.load %arg4[%c0_3, %c0_4, %c0_5] : memref<1x8x64xbf16, #tpu.memory_space<vmem>>, vector<1x8x64xbf16>
    %6 = vector.shape_cast %5 : vector<1x8x64xbf16> to vector<8x64xbf16>
    %c0_6 = arith.constant 0 : index
    %c0_7 = arith.constant 0 : index
    %c0_8 = arith.constant 0 : index
    %7 = vector.load %arg5[%c0_6, %c0_7, %c0_8] : memref<1x8x64xbf16, #tpu.memory_space<vmem>>, vector<1x8x64xbf16>
    %8 = vector.shape_cast %7 : vector<1x8x64xbf16> to vector<8x64xbf16>
    %cst = arith.constant dense<0.000000e+00> : vector<8x8xf32>
    %9 = tpu.matmul %4, %6, %cst {dimension_numbers = #tpu.dot_dimension_numbers<[1], [1], [0], [0], [0, 0, 1, 0], [], []>} : vector<8x64xbf16>, vector<8x64xbf16>, vector<8x8xf32> -> vector<8x8xf32>
    %c0_9 = arith.constant 0 : index
    %c0_10 = arith.constant 0 : index
    %10 = vector.load %arg7[%c0_9, %c0_10] : memref<8x1xf32, #tpu.memory_space<vmem>>, vector<8x1xf32>
    %cst_11 = arith.constant dense<0xFF800000> : vector<8xf32>
    %11 = vector.multi_reduction <maximumf>, %9, %cst_11 [1] : vector<8x8xf32> to vector<8xf32>
    %12 = vector.shape_cast %11 : vector<8xf32> to vector<8x1xf32>
    %13 = arith.maximumf %10, %12 : vector<8x1xf32>
    %14 = arith.subf %10, %13 : vector<8x1xf32>
    %15 = math.exp %14 : vector<8x1xf32>
    %16 = vector.broadcast %13 : vector<8x1xf32> to vector<8x8xf32>
    %17 = arith.subf %9, %16 : vector<8x8xf32>
    %18 = math.exp %17 : vector<8x8xf32>
    %c0_12 = arith.constant 0 : index
    %c0_13 = arith.constant 0 : index
    %19 = vector.load %arg8[%c0_12, %c0_13] : memref<8x1xf32, #tpu.memory_space<vmem>>, vector<8x1xf32>
    %20 = arith.mulf %15, %19 : vector<8x1xf32>
    %cst_14 = arith.constant dense<0.000000e+00> : vector<8xf32>
    %21 = vector.multi_reduction <add>, %18, %cst_14 [1] : vector<8x8xf32> to vector<8xf32>
    %22 = vector.shape_cast %21 : vector<8xf32> to vector<8x1xf32>
    %23 = arith.addf %20, %22 : vector<8x1xf32>
    %c0_15 = arith.constant 0 : index
    %c0_16 = arith.constant 0 : index
    %24 = vector.load %arg8[%c0_15, %c0_16] : memref<8x1xf32, #tpu.memory_space<vmem>>, vector<8x1xf32>
    tpu.vector_store %arg8[%c0_15, %c0_16], %23 {strides = array<i32>} : memref<8x1xf32, #tpu.memory_space<vmem>>, vector<8x1xf32>,
    %c0_17 = arith.constant 0 : index
    %c0_18 = arith.constant 0 : index
    %25 = vector.load %arg9[%c0_17, %c0_18] : memref<8x64xf32, #tpu.memory_space<vmem>>, vector<8x64xf32>
    %26 = vector.broadcast %15 : vector<8x1xf32> to vector<8x64xf32>
    %27 = arith.mulf %26, %25 : vector<8x64xf32>
    %28 = arith.truncf %18 : vector<8x8xf32> to vector<8x8xbf16>
    %cst_19 = arith.constant dense<0.000000e+00> : vector<8x64xf32>
    %29 = tpu.matmul %28, %8, %cst_19 {dimension_numbers = #tpu.dot_dimension_numbers<[1], [0], [0], [1], [0, 0, 1, 1], [], []>} : vector<8x8xbf16>, vector<8x64xbf16>, vector<8x64xf32> -> vector<8x64xf32>
    %30 = arith.addf %27, %29 : vector<8x64xf32>
    %c0_20 = arith.constant 0 : index
    %c0_21 = arith.constant 0 : index
    %31 = vector.load %arg9[%c0_20, %c0_21] : memref<8x64xf32, #tpu.memory_space<vmem>>, vector<8x64xf32>
    tpu.vector_store %arg9[%c0_20, %c0_21], %30 {strides = array<i32>} : memref<8x64xf32, #tpu.memory_space<vmem>>, vector<8x64xf32>,
    %c0_22 = arith.constant 0 : index
    %c0_23 = arith.constant 0 : index
    %32 = vector.load %arg7[%c0_22, %c0_23] : memref<8x1xf32, #tpu.memory_space<vmem>>, vector<8x1xf32>
    tpu.vector_store %arg7[%c0_22, %c0_23], %13 {strides = array<i32>} : memref<8x1xf32, #tpu.memory_space<vmem>>, vector<8x1xf32>,
    %c0_i32_24 = arith.constant 0 : i32
    %33 = arith.cmpi eq, %arg2, %c0_i32_24 : i32
    %34 = arith.extui %33 : i1 to i32
    %c0_i32_25 = arith.constant 0 : i32
    %35 = arith.cmpi ne, %34, %c0_i32_25 : i32
    scf.if %35 {
      %c0_26 = arith.constant 0 : index
      %c0_27 = arith.constant 0 : index
      %36 = vector.load %arg9[%c0_26, %c0_27] : memref<8x64xf32, #tpu.memory_space<vmem>>, vector<8x64xf32>
      %c0_28 = arith.constant 0 : index
      %c0_29 = arith.constant 0 : index
      %37 = vector.load %arg8[%c0_28, %c0_29] : memref<8x1xf32, #tpu.memory_space<vmem>>, vector<8x1xf32>
      %38 = tpu.reciprocal %37 {approx = true} : vector<8x1xf32> -> vector<8x1xf32>
      %39 = vector.broadcast %38 : vector<8x1xf32> to vector<8x64xf32>
      %40 = arith.mulf %36, %39 : vector<8x64xf32>
      %41 = arith.truncf %40 : vector<8x64xf32> to vector<8x64xbf16>
      %c0_30 = arith.constant 0 : index
      %c0_31 = arith.constant 0 : index
      %c0_32 = arith.constant 0 : index
      %42 = vector.load %arg6[%c0_30, %c0_31, %c0_32] : memref<1x8x64xbf16, #tpu.memory_space<vmem>>, vector<1x8x64xbf16>
      %43 = vector.shape_cast %42 : vector<1x8x64xbf16> to vector<8x64xbf16>
      %44 = vector.shape_cast %41 : vector<8x64xbf16> to vector<1x8x64xbf16>
      tpu.vector_store %arg6[%c0_30, %c0_31, %c0_32], %44 {strides = array<i32>} : memref<1x8x64xbf16, #tpu.memory_space<vmem>>, vector<1x8x64xbf16>,
    } else {
    }
    return
  }
  func.func @transform_0(%arg0: i32, %arg1: i32, %arg2: i32) -> (i32, i32, i32) {
    %c0_i32 = arith.constant 0 : i32
    %c0_i32_0 = arith.constant 0 : i32
    return %arg0, %arg1, %c0_i32 : i32, i32, i32
  }
  func.func @transform_1(%arg0: i32, %arg1: i32, %arg2: i32) -> (i32, i32, i32) {
    %c0_i32 = arith.constant 0 : i32
    %c0_i32_0 = arith.constant 0 : i32
    return %arg0, %arg2, %c0_i32 : i32, i32, i32
  }
  func.func @transform_2(%arg0: i32, %arg1: i32, %arg2: i32) -> (i32, i32, i32) {
    %c0_i32 = arith.constant 0 : i32
    %c0_i32_0 = arith.constant 0 : i32
    return %arg0, %arg2, %c0_i32 : i32, i32, i32
  }
  func.func @transform_3(%arg0: i32, %arg1: i32, %arg2: i32) -> (i32, i32, i32) {
    %c0_i32 = arith.constant 0 : i32
    %c0_i32_0 = arith.constant 0 : i32
    return %arg0, %arg1, %c0_i32 : i32, i32, i32
  }
}

module attributes {stable_mosaic.version = 11 : i64} {
  func.func @_matmul_bias_kernel(%arg0: i32, %arg1: i32, %arg2: memref<1x8x64xbf16, #tpu.memory_space<vmem>>, %arg3: memref<64x64xbf16, #tpu.memory_space<vmem>>, %arg4: memref<1x64xf32, #tpu.memory_space<vmem>>, %arg5: memref<1x8x64xbf16, #tpu.memory_space<vmem>>, %arg6: memref<1x8x64xbf16, #tpu.memory_space<vmem>>) attributes {dimension_semantics = [#tpu.dimension_semantics<parallel>, #tpu.dimension_semantics<parallel>], iteration_bounds = array<i64: 2, 1>, scalar_prefetch = 0 : i64, scratch_operands = 0 : i64, tpu.core_type = #tpu.core_type<tc>, window_params = [{transform_indices = @transform_0, window_bounds = array<i64: 1, 8, 64>}, {pipeline_mode = #tpu.pipeline_mode<synchronous>, transform_indices = @transform_1, window_bounds = array<i64: 64, 64>}, {pipeline_mode = #tpu.pipeline_mode<synchronous>, transform_indices = @transform_2, window_bounds = array<i64: 1, 64>}, {transform_indices = @transform_3, window_bounds = array<i64: 1, 8, 64>}, {transform_indices = @transform_4, window_bounds = array<i64: 1, 8, 64>}]} {
    %c0 = arith.constant 0 : index
    %c0_0 = arith.constant 0 : index
    %c0_1 = arith.constant 0 : index
    %0 = vector.load %arg2[%c0, %c0_0, %c0_1] : memref<1x8x64xbf16, #tpu.memory_space<vmem>>, vector<1x8x64xbf16>
    %1 = vector.shape_cast %0 : vector<1x8x64xbf16> to vector<8x64xbf16>
    %c0_2 = arith.constant 0 : index
    %c0_3 = arith.constant 0 : index
    %2 = vector.load %arg3[%c0_2, %c0_3] : memref<64x64xbf16, #tpu.memory_space<vmem>>, vector<64x64xbf16>
    %cst = arith.constant dense<0.000000e+00> : vector<8x64xf32>
    %3 = tpu.matmul %1, %2, %cst {dimension_numbers = #tpu.dot_dimension_numbers<[1], [0], [0], [1], [0, 0, 1, 1], [], []>} : vector<8x64xbf16>, vector<64x64xbf16>, vector<8x64xf32> -> vector<8x64xf32>
    %c0_4 = arith.constant 0 : index
    %c0_5 = arith.constant 0 : index
    %4 = vector.load %arg4[%c0_4, %c0_5] : memref<1x64xf32, #tpu.memory_space<vmem>>, vector<1x64xf32>
    %5 = vector.broadcast %4 : vector<1x64xf32> to vector<8x64xf32>
    %6 = arith.addf %3, %5 : vector<8x64xf32>
    %c0_6 = arith.constant 0 : index
    %c0_7 = arith.constant 0 : index
    %c0_8 = arith.constant 0 : index
    %7 = vector.load %arg5[%c0_6, %c0_7, %c0_8] : memref<1x8x64xbf16, #tpu.memory_space<vmem>>, vector<1x8x64xbf16>
    %8 = vector.shape_cast %7 : vector<1x8x64xbf16> to vector<8x64xbf16>
    %9 = arith.extf %8 : vector<8x64xbf16> to vector<8x64xf32>
    %10 = arith.addf %6, %9 : vector<8x64xf32>
    %11 = arith.truncf %10 : vector<8x64xf32> to vector<8x64xbf16>
    %c0_9 = arith.constant 0 : index
    %c0_10 = arith.constant 0 : index
    %c0_11 = arith.constant 0 : index
    %12 = vector.load %arg6[%c0_9, %c0_10, %c0_11] : memref<1x8x64xbf16, #tpu.memory_space<vmem>>, vector<1x8x64xbf16>
    %13 = vector.shape_cast %12 : vector<1x8x64xbf16> to vector<8x64xbf16>
    %14 = vector.shape_cast %11 : vector<8x64xbf16> to vector<1x8x64xbf16>
    tpu.vector_store %arg6[%c0_9, %c0_10, %c0_11], %14 {strides = array<i32>} : memref<1x8x64xbf16, #tpu.memory_space<vmem>>, vector<1x8x64xbf16>,
    return
  }
  func.func @transform_0(%arg0: i32, %arg1: i32) -> (i32, i32, i32) {
    %c0_i32 = arith.constant 0 : i32
    %c0_i32_0 = arith.constant 0 : i32
    return %arg0, %arg1, %c0_i32 : i32, i32, i32
  }
  func.func @transform_1(%arg0: i32, %arg1: i32) -> (i32, i32) {
    %c0_i32 = arith.constant 0 : i32
    %c0_i32_0 = arith.constant 0 : i32
    %c0_i32_1 = arith.constant 0 : i32
    return %c0_i32, %c0_i32_0 : i32, i32
  }
  func.func @transform_2(%arg0: i32, %arg1: i32) -> (i32, i32) {
    %c0_i32 = arith.constant 0 : i32
    %c0_i32_0 = arith.constant 0 : i32
    %c0_i32_1 = arith.constant 0 : i32
    return %c0_i32, %c0_i32_0 : i32, i32
  }
  func.func @transform_3(%arg0: i32, %arg1: i32) -> (i32, i32, i32) {
    %c0_i32 = arith.constant 0 : i32
    %c0_i32_0 = arith.constant 0 : i32
    return %arg0, %arg1, %c0_i32 : i32, i32, i32
  }
  func.func @transform_4(%arg0: i32, %arg1: i32) -> (i32, i32, i32) {
    %c0_i32 = arith.constant 0 : i32
    %c0_i32_0 = arith.constant 0 : i32
    return %arg0, %arg1, %c0_i32 : i32, i32, i32
  }
}

module attributes {stable_mosaic.version = 11 : i64} {
  func.func @_conv3_kernel(%arg0: i32, %arg1: i32, %arg2: memref<1x8x64xbf16, #tpu.memory_space<vmem>>, %arg3: memref<3x64x8xbf16, #tpu.memory_space<vmem>>, %arg4: memref<1x8xf32, #tpu.memory_space<vmem>>, %arg5: memref<1x8x8xbf16, #tpu.memory_space<vmem>>) attributes {dimension_semantics = [#tpu.dimension_semantics<parallel>, #tpu.dimension_semantics<parallel>], iteration_bounds = array<i64: 2, 1>, scalar_prefetch = 0 : i64, scratch_operands = 0 : i64, tpu.core_type = #tpu.core_type<tc>, window_params = [{transform_indices = @transform_0, window_bounds = array<i64: 1, 8, 64>}, {pipeline_mode = #tpu.pipeline_mode<synchronous>, transform_indices = @transform_1, window_bounds = array<i64: 3, 64, 8>}, {pipeline_mode = #tpu.pipeline_mode<synchronous>, transform_indices = @transform_2, window_bounds = array<i64: 1, 8>}, {transform_indices = @transform_3, window_bounds = array<i64: 1, 8, 8>}]} {
    %c0 = arith.constant 0 : index
    %c0_0 = arith.constant 0 : index
    %c0_1 = arith.constant 0 : index
    %0 = vector.load %arg2[%c0, %c0_0, %c0_1] : memref<1x8x64xbf16, #tpu.memory_space<vmem>>, vector<1x8x64xbf16>
    %1 = vector.shape_cast %0 : vector<1x8x64xbf16> to vector<8x64xbf16>
    %cst = arith.constant 0.000000e+00 : bf16
    %2 = vector.broadcast %cst : bf16 to vector<1x64xbf16>
    %3 = vector.extract_strided_slice %1 {offsets = [0, 0], sizes = [7, 64], strides = [1, 1]} : vector<8x64xbf16> to vector<7x64xbf16>
    %4 = tpu.concatenate %2, %3 in 0 : vector<1x64xbf16>, vector<7x64xbf16> -> vector<8x64xbf16>
    %5 = vector.extract_strided_slice %1 {offsets = [1, 0], sizes = [7, 64], strides = [1, 1]} : vector<8x64xbf16> to vector<7x64xbf16>
    %6 = tpu.concatenate %5, %2 in 0 : vector<7x64xbf16>, vector<1x64xbf16> -> vector<8x64xbf16>
    %c1 = arith.constant 1 : index
    %c0_2 = arith.constant 0 : index
    %c0_3 = arith.constant 0 : index
    %7 = vector.load %arg3[%c1, %c0_2, %c0_3] : memref<3x64x8xbf16, #tpu.memory_space<vmem>>, vector<1x64x8xbf16>
    %8 = vector.shape_cast %7 : vector<1x64x8xbf16> to vector<64x8xbf16>
    %cst_4 = arith.constant dense<0.000000e+00> : vector<8x8xf32>
    %9 = tpu.matmul %1, %8, %cst_4 {dimension_numbers = #tpu.dot_dimension_numbers<[1], [0], [0], [1], [0, 0, 1, 1], [], []>} : vector<8x64xbf16>, vector<64x8xbf16>, vector<8x8xf32> -> vector<8x8xf32>
    %c0_5 = arith.constant 0 : index
    %c0_6 = arith.constant 0 : index
    %c0_7 = arith.constant 0 : index
    %10 = vector.load %arg3[%c0_5, %c0_6, %c0_7] : memref<3x64x8xbf16, #tpu.memory_space<vmem>>, vector<1x64x8xbf16>
    %11 = vector.shape_cast %10 : vector<1x64x8xbf16> to vector<64x8xbf16>
    %cst_8 = arith.constant dense<0.000000e+00> : vector<8x8xf32>
    %12 = tpu.matmul %4, %11, %cst_8 {dimension_numbers = #tpu.dot_dimension_numbers<[1], [0], [0], [1], [0, 0, 1, 1], [], []>} : vector<8x64xbf16>, vector<64x8xbf16>, vector<8x8xf32> -> vector<8x8xf32>
    %13 = arith.addf %9, %12 : vector<8x8xf32>
    %c2 = arith.constant 2 : index
    %c0_9 = arith.constant 0 : index
    %c0_10 = arith.constant 0 : index
    %14 = vector.load %arg3[%c2, %c0_9, %c0_10] : memref<3x64x8xbf16, #tpu.memory_space<vmem>>, vector<1x64x8xbf16>
    %15 = vector.shape_cast %14 : vector<1x64x8xbf16> to vector<64x8xbf16>
    %cst_11 = arith.constant dense<0.000000e+00> : vector<8x8xf32>
    %16 = tpu.matmul %6, %15, %cst_11 {dimension_numbers = #tpu.dot_dimension_numbers<[1], [0], [0], [1], [0, 0, 1, 1], [], []>} : vector<8x64xbf16>, vector<64x8xbf16>, vector<8x8xf32> -> vector<8x8xf32>
    %17 = arith.addf %13, %16 : vector<8x8xf32>
    %c0_12 = arith.constant 0 : index
    %c0_13 = arith.constant 0 : index
    %18 = vector.load %arg4[%c0_12, %c0_13] : memref<1x8xf32, #tpu.memory_space<vmem>>, vector<1x8xf32>
    %19 = vector.broadcast %18 : vector<1x8xf32> to vector<8x8xf32>
    %20 = arith.addf %17, %19 : vector<8x8xf32>
    %21 = arith.truncf %20 : vector<8x8xf32> to vector<8x8xbf16>
    %c0_14 = arith.constant 0 : index
    %c0_15 = arith.constant 0 : index
    %c0_16 = arith.constant 0 : index
    %22 = vector.load %arg5[%c0_14, %c0_15, %c0_16] : memref<1x8x8xbf16, #tpu.memory_space<vmem>>, vector<1x8x8xbf16>
    %23 = vector.shape_cast %22 : vector<1x8x8xbf16> to vector<8x8xbf16>
    %24 = vector.shape_cast %21 : vector<8x8xbf16> to vector<1x8x8xbf16>
    tpu.vector_store %arg5[%c0_14, %c0_15, %c0_16], %24 {strides = array<i32>} : memref<1x8x8xbf16, #tpu.memory_space<vmem>>, vector<1x8x8xbf16>,
    return
  }
  func.func @transform_0(%arg0: i32, %arg1: i32) -> (i32, i32, i32) {
    %c0_i32 = arith.constant 0 : i32
    %c0_i32_0 = arith.constant 0 : i32
    return %arg0, %arg1, %c0_i32 : i32, i32, i32
  }
  func.func @transform_1(%arg0: i32, %arg1: i32) -> (i32, i32, i32) {
    %c0_i32 = arith.constant 0 : i32
    %c0_i32_0 = arith.constant 0 : i32
    %c0_i32_1 = arith.constant 0 : i32
    %c0_i32_2 = arith.constant 0 : i32
    return %c0_i32, %c0_i32_0, %c0_i32_1 : i32, i32, i32
  }
  func.func @transform_2(%arg0: i32, %arg1: i32) -> (i32, i32) {
    %c0_i32 = arith.constant 0 : i32
    %c0_i32_0 = arith.constant 0 : i32
    %c0_i32_1 = arith.constant 0 : i32
    return %c0_i32, %c0_i32_0 : i32, i32
  }
  func.func @transform_3(%arg0: i32, %arg1: i32) -> (i32, i32, i32) {
    %c0_i32 = arith.constant 0 : i32
    %c0_i32_0 = arith.constant 0 : i32
    return %arg0, %arg1, %c0_i32 : i32, i32, i32
  }
}

</mosaic_0001>

<llo_original>
// kernel: encoder_forward.37
$region0: #{encoder_forward.37}
  #allocation0 [shape = 'u32[]', space=smem, size = 0x4, offset = 0x4, fixed_abs, tag = 'smem constant byte address 0x4 - core index']
  #allocation1 [shape = 'u32[144,128]{1,0:T(1,128)}', space=vmem, size = 0x12000, scoped, tag = 'internal scratch']
  %s0 = inlined_call_operand.vmem [shape: bf16[2,16,32], index: 0, kind: input, shape index: {}]
  %s1 = inlined_call_operand.vmem [shape: f32[2,2,32], index: 1, kind: input, shape index: {}]
  %s2 = inlined_call_operand.vmem [shape: f32[1,32], index: 2, kind: input, shape index: {}]
  %s3 = inlined_call_operand.vmem [shape: f32[1,32], index: 3, kind: input, shape index: {}]
  %s4 = inlined_call_operand.vmem [shape: bf16[2,16,32], index: 4, kind: output, shape index: {}]
  %s5 = sld [smem:[#allocation0]]
  $region49: #{encoder_forward.37} parent=0
    _
  %s7 = ssub.s32 1, %s5
  %s8 = scalar_select 0, %s7, %s5
  loop: start=0, step=1, limit=4
  $region2: #{encoder_forward.37} parent=0 // loop_pre_header
    _
  $region3: #{encoder_forward.37} parent=0 // loop_header
    %s10 = sphi 0, %s14
    %p11 = scmp.ge.s32.totalorder %s10, 4
    %s17 = sphi 0, %s29
    %s18 = sphi 0, %s25
    %s19 = sphi 0, %s17
    %s20 = sphi 0, %s18
    %s21 = sphi 0, %s19
    %s22 = sphi 0, %s20
    %s34 = sphi 0, %s36
    %s37 = sphi 0, %s34
    %s38 = sphi 0, %s37
    %s54 = sphi 0, %s38
    %s60 = sphi 0, %s62
    %s63 = sphi 0, %s60
    %s64 = sphi 0, %s63
    %s80 = sphi 0, %s64
    %s84 = sphi 0, %s84
    %s86 = sphi 0, %s84
    %s87 = sphi 0, %s86
    %s101 = sphi 0, %s87
    %s105 = sphi 0, %s105
    %s107 = sphi 0, %s105
    %s108 = sphi 0, %s107
    %s122 = sphi 0, %s108
    %s130 = sphi 0, %s132
    %s133 = sphi 0, %s130
    %s134 = sphi 0, %s133
    %s150 = sphi 0, %s134
  $region4: #{encoder_forward.37} parent=0 // loop_header_branch
    %13 = sbr.rel (%p11) target = $region8
  $region5: #{encoder_forward.37} parent=0 // loop_body
    %s15 = ssub.s32 %s10, 1
    %s16 = ssub.s32 %s10, 2
    %s23 = sadd.s32 1, %s18
    %p24 = scmp.ge.s32.totalorder %s23, 1
    %s25 = scalar_select %p24, 0, %s23
    %s26 = sadd.s32 1, %s17
    %s27 = scalar_select %p24, %s26, %s17
    %p28 = scmp.ge.s32.totalorder %s27, 2
    %s29 = scalar_select %p28, 0, %s27
    %s30 = ssub.s32 %s17, %s29
    %s31 = ssub.s32 %s18, %s25
    %s32 = sor.u32 %s30, %s31
    %p33 = scmp.eq.s32.totalorder %s32, 0
    %s35 = sadd.s32 %s34, 1
    %s36 = scalar_select %p33, %s34, %s35
    %p39 = pneg %p33
    %p40 = scmp.eq.s32.totalorder %s10, 1
    %p41 = por %p39, %p40
    %p42 = scmp.ne.s32.totalorder %s34, %s37
    %p43 = scmp.eq.s32.totalorder %s10, 0
    %p44 = por %p42, %p43
    %p45 = scmp.ne.s32.totalorder %s34, %s37
    %p46 = scmp.eq.s32.totalorder %s15, 1
    %p47 = por %p45, %p46
    %p48 = scmp.ne.s32.totalorder %s37, %s38
    %p49 = scmp.eq.s32.totalorder %s15, 0
    %p50 = por %p48, %p49
    %p51 = scmp.ne.s32.totalorder %s37, %s38
    %p52 = scmp.eq.s32.totalorder %s16, 1
    %p53 = por %p51, %p52
    %p55 = scmp.ne.s32.totalorder %s38, %s54
    %p56 = scmp.eq.s32.totalorder %s16, 0
    %p57 = por %p55, %p56
    %s58 = ssub.s32 %s17, %s29
    %p59 = scmp.eq.s32.totalorder %s58, 0
    %s61 = sadd.s32 %s60, 1
    %s62 = scalar_select %p59, %s60, %s61
    %p65 = pneg %p59
    %p66 = scmp.eq.s32.totalorder %s10, 1
    %p67 = por %p65, %p66
    %p68 = scmp.ne.s32.totalorder %s60, %s63
    %p69 = scmp.eq.s32.totalorder %s10, 0
    %p70 = por %p68, %p69
    %p71 = scmp.ne.s32.totalorder %s60, %s63
    %p72 = scmp.eq.s32.totalorder %s15, 1
    %p73 = por %p71, %p72
    %p74 = scmp.ne.s32.totalorder %s63, %s64
    %p75 = scmp.eq.s32.totalorder %s15, 0
    %p76 = por %p74, %p75
    %p77 = scmp.ne.s32.totalorder %s63, %s64
    %p78 = scmp.eq.s32.totalorder %s16, 1
    %p79 = por %p77, %p78
    %p81 = scmp.ne.s32.totalorder %s64, %s80
    %p82 = scmp.eq.s32.totalorder %s16, 0
    %p83 = por %p81, %p82
    %s85 = sadd.s32 %s84, 1
    %p88 = scmp.eq.s32.totalorder %s10, 1
    %p89 = scmp.ne.s32.totalorder %s84, %s86
    %p90 = scmp.eq.s32.totalorder %s10, 0
    %p91 = por %p89, %p90
    %p92 = scmp.ne.s32.totalorder %s84, %s86
    %p93 = scmp.eq.s32.totalorder %s15, 1
    %p94 = por %p92, %p93
    %p95 = scmp.ne.s32.totalorder %s86, %s87
    %p96 = scmp.eq.s32.totalorder %s15, 0
    %p97 = por %p95, %p96
    %p98 = scmp.ne.s32.totalorder %s86, %s87
    %p99 = scmp.eq.s32.totalorder %s16, 1
    %p100 = por %p98, %p99
    %p102 = scmp.ne.s32.totalorder %s87, %s101
    %p103 = scmp.eq.s32.totalorder %s16, 0
    %p104 = por %p102, %p103
    %s106 = sadd.s32 %s105, 1
    %p109 = scmp.eq.s32.totalorder %s10, 1
    %p110 = scmp.ne.s32.totalorder %s105, %s107
    %p111 = scmp.eq.s32.totalorder %s10, 0
    %p112 = por %p110, %p111
    %p113 = scmp.ne.s32.totalorder %s105, %s107
    %p114 = scmp.eq.s32.totalorder %s15, 1
    %p115 = por %p113, %p114
    %p116 = scmp.ne.s32.totalorder %s107, %s108
    %p117 = scmp.eq.s32.totalorder %s15, 0
    %p118 = por %p116, %p117
    %p119 = scmp.ne.s32.totalorder %s107, %s108
    %p120 = scmp.eq.s32.totalorder %s16, 1
    %p121 = por %p119, %p120
    %p123 = scmp.ne.s32.totalorder %s108, %s122
    %p124 = scmp.eq.s32.totalorder %s16, 0
    %p125 = por %p123, %p124
    %s126 = ssub.s32 %s17, %s29
    %s127 = ssub.s32 %s18, %s25
    %s128 = sor.u32 %s126, %s127
    %p129 = scmp.eq.s32.totalorder %s128, 0
    %s131 = sadd.s32 %s130, 1
    %s132 = scalar_select %p129, %s130, %s131
    %p135 = pneg %p129
    %p136 = scmp.eq.s32.totalorder %s10, 1
    %p137 = por %p135, %p136
    %p138 = scmp.ne.s32.totalorder %s130, %s133
    %p139 = scmp.eq.s32.totalorder %s10, 0
    %p140 = por %p138, %p139
    %p141 = scmp.ne.s32.totalorder %s130, %s133
    %p142 = scmp.eq.s32.totalorder %s15, 1
    %p143 = por %p141, %p142
    %p144 = scmp.ne.s32.totalorder %s133, %s134
    %p145 = scmp.eq.s32.totalorder %s15, 0
    %p146 = por %p144, %p145
    %p147 = scmp.ne.s32.totalorder %s133, %s134
    %p148 = scmp.eq.s32.totalorder %s16, 1
    %p149 = por %p147, %p148
    %p151 = scmp.ne.s32.totalorder %s134, %s150
    %p152 = scmp.eq.s32.totalorder %s16, 0
    %p153 = por %p151, %p152
    %p154 = scmp.le.s32.totalorder 1, %s10
    %p155 = scmp.lt.s32.totalorder %s10, 3
    %p156 = pnand %p154, %p155
    %p157 = pneg %p156
    // Predicated region
    $region9: #{encoder_forward.37} parent=5 // pred_check
      _
    $region10: #{encoder_forward.37} parent=5 // pred_check_branch
      %159 = sbr.rel (%p156) target = $region12
    $region11: #{encoder_forward.37} parent=5 // pred_region
      %s160 = ssub.s32 %s10, 1
      // Predicated region
      $region13: #{encoder_forward.37} parent=11 // pred_check
        %p161 = pneg %p97
      $region14: #{encoder_forward.37} parent=11 // pred_check_branch
        %163 = sbr.rel (%p161) target = $region16
      $region15: #{encoder_forward.37} parent=11 // pred_region
        _
      $region16: #{encoder_forward.37} parent=11 // pred_fallthru
        _
      // Predicated region
      $region17: #{encoder_forward.37} parent=11 // pred_check
        %p164 = pneg %p118
      $region18: #{encoder_forward.37} parent=11 // pred_check_branch
        %166 = sbr.rel (%p164) target = $region20
      $region19: #{encoder_forward.37} parent=11 // pred_region
        _
      $region20: #{encoder_forward.37} parent=11 // pred_fallthru
        _
    $region12: #{encoder_forward.37} parent=5 // pred_fallthru
      _
    %p167 = scmp.lt.s32.totalorder %s10, 2
    // Predicated region
    $region21: #{encoder_forward.37} parent=5 // pred_check
      %p168 = pneg %p167
    $region22: #{encoder_forward.37} parent=5 // pred_check_branch
      %170 = sbr.rel (%p168) target = $region24
    $region23: #{encoder_forward.37} parent=5 // pred_region
      // Predicated region
      $region25: #{encoder_forward.37} parent=23 // pred_check
        %p171 = pneg %p44
      $region26: #{encoder_forward.37} parent=23 // pred_check_branch
        %173 = sbr.rel (%p171) target = $region28
      $region27: #{encoder_forward.37} parent=23 // pred_region
        %s174 = smul.u32 2, %s18
        %p175 = scmp.lt.s32.totalorder %s17, 1
        %s176 = scalar_select %p175, %s17, 1
        %p177 = scmp.lt.s32.totalorder %s174, 1
        %s178 = scalar_select %p177, %s174, 1
        %s179 = smul.addr %s176, 2
        %s180 = sadd.s32 %s178, %s179
        %s181 = smul.addr %s180, 4
        %s182 = scalar_lea.vmem %s0, %s181
        %s183 = smul.u32 2, %s18
      $region28: #{encoder_forward.37} parent=23 // pred_fallthru
        _
      // Predicated region
      $region29: #{encoder_forward.37} parent=23 // pred_check
        %p184 = pneg %p70
      $region30: #{encoder_forward.37} parent=23 // pred_check_branch
        %186 = sbr.rel (%p184) target = $region32
      $region31: #{encoder_forward.37} parent=23 // pred_region
        %p187 = scmp.lt.s32.totalorder %s17, 1
        %s188 = scalar_select %p187, %s17, 1
        %s189 = smul.addr %s188, 2
        %s190 = scalar_lea.vmem %s1, %s189
      $region32: #{encoder_forward.37} parent=23 // pred_fallthru
        _
    $region24: #{encoder_forward.37} parent=5 // pred_fallthru
      _
    %p191 = scmp.le.s32.totalorder 1, %s10
    %p192 = scmp.lt.s32.totalorder %s10, 3
    %p193 = pnand %p191, %p192
    %p194 = pneg %p193
    // Predicated region
    $region33: #{encoder_forward.37} parent=5 // pred_check
      _
    $region34: #{encoder_forward.37} parent=5 // pred_check_branch
      %196 = sbr.rel (%p193) target = $region36
    $region35: #{encoder_forward.37} parent=5 // pred_region
      %s197 = ssub.s32 %s10, 1
      %s198 = smul.u32 2, %s20
      %p199 = scmp.lt.s32.totalorder %s19, 1
      %s200 = scalar_select %p199, %s19, 1
      %p201 = scmp.lt.s32.totalorder %s198, 1
      %s202 = scalar_select %p201, %s198, 1
      %s203 = smul.addr %s200, 2
      %s204 = sadd.s32 %s202, %s203
      %s205 = smul.addr %s204, 4
      %s206 = scalar_lea.vmem %s0, %s205
      %p207 = pneg %p50
      %p208 = pneg %p47
      %p209 = scmp.lt.s32.totalorder %s19, 1
      %s210 = scalar_select %p209, %s19, 1
      %s211 = smul.addr %s210, 2
      %s212 = scalar_lea.vmem %s1, %s211
      %p213 = pneg %p76
      %p214 = pneg %p73
      %p215 = pneg %p97
      %p216 = pneg %p94
      %p217 = pneg %p118
      %p218 = pneg %p115
      %p219 = pneg %p146
      %p220 = pneg %p143
      %s221 = smul.u32 2, %s20
      %p222 = scmp.lt.s32.totalorder %s19, 1
      %s223 = scalar_select %p222, %s19, 1
      %p224 = scmp.lt.s32.totalorder %s221, 1
      %s225 = scalar_select %p224, %s221, 1
      %s226 = smul.addr %s223, 2
      %s227 = sadd.s32 %s225, %s226
      %s228 = smul.addr %s227, 4
      %s229 = scalar_lea.vmem %s4, %s228
      %s230 = smul.u32 2, %s20
      %p231 = scmp.lt.s32.totalorder %s19, 1
      %s232 = scalar_select %p231, %s19, 1
      %p233 = scmp.lt.s32.totalorder %s230, 1
      %s234 = scalar_select %p233, %s230, 1
      %s235 = smul.addr %s232, 2
      %s236 = sadd.s32 %s234, %s235
      %s237 = smul.addr %s236, 4
      %s238 = scalar_lea.vmem %s0, %s237
      %s239 = smul.u32 2, %s20
      %p240 = scmp.lt.s32.totalorder %s19, 1
      %s241 = scalar_select %p240, %s19, 1
      %s242 = smul.addr %s241, 2
      %s243 = scalar_lea.vmem %s1, %s242
      %s244 = smul.u32 2, %s20
      %p245 = scmp.lt.s32.totalorder %s19, 1
      %s246 = scalar_select %p245, %s19, 1
      %p247 = scmp.lt.s32.totalorder %s244, 1
      %s248 = scalar_select %p247, %s244, 1
      %s249 = smul.addr %s246, 2
      %s250 = sadd.s32 %s248, %s249
      %s251 = smul.addr %s250, 4
      %s252 = scalar_lea.vmem %s4, %s251
      %s253 = smul.u32 2, %s20
      %v254 = vld [vmem:[%s238] sm:$0xf]
      %v255 = vld [vmem:[%s238 + $0x4] sm:$0xf]
      %v256 = vunpack.c.l.bf16 %v254
      %v257 = vunpack.c.l.bf16 %v255
      %v258 = vld [vmem:[%s243] sm:$0x1]
      %v259 = vld [vmem:[%s243 + $0x1] sm:$0x1]
      %v260 = vlaneseq
      %v261 = vshrl.u32 %v260, 7
      %v262 = vsub.s32 0, %v261
      %v263 = vrot.slane %v258, %v262
      %v264 = vsub.f32 %v256, %v263
      %v265 = vsub.f32 %v257, %v263
      %v266 = vld [vmem:[%s2] sm:$0x1]
      %v267 = vmul.f32 %v259, %v266
      %v268 = vlaneseq
      %v269 = vshrl.u32 %v268, 7
      %v270 = vsub.s32 0, %v269
      %v271 = vrot.slane %v267, %v270
      %v272 = vmul.f32 %v264, %v271
      %v273 = vmul.f32 %v265, %v271
      %v274 = vld [vmem:[%s3] sm:$0x1]
      %v276 = vlaneseq
      %v277 = vshrl.u32 %v276, 7
      %v278 = vsub.s32 0, %v277
      %v279 = vrot.slane %v274, %v278
      %v281 = vadd.f32 %v272, %v279
      %v282 = vadd.f32 %v273, %v279
      %v283 = vxor.u32 %v281, 2147483648
      %v284 = vxor.u32 %v282, 2147483648
      %v285 = vmul.f32 %v283, 1.442695
      %v286 = vpow.pop %v285
      %v287 = vmul.f32 %v284, 1.442695
      %v288 = vpow.pop %v287
      %v289 = vadd.f32 %v286, 1.0
      %v290 = vadd.f32 %v288, 1.0
      %v291 = vrcp.pop %v289
      %v292 = vmul.f32 1.0, %v291
      %v293 = vrcp.pop %v290
      %v294 = vmul.f32 1.0, %v293
      %v295 = vmul.f32 %v281, %v292
      %v296 = vmul.f32 %v282, %v294
      %v297 = vpack.c.bf16 %v296, %v295
      %v299 = vunpack.c.l.b16 %v297
      %v300 = vunpack.c.h.b16 %v297
      %v301 = vpack.c.b16 %v299, %v299
      %v302 = vpack.c.b16 %v300, %v300
      %vm305 = vcmask 257024
      %306 = vst.msk [vmem:[%s252] sm:$0xf] %vm305, %v301
      %307 = vst.msk [vmem:[%s252 + $0x4] sm:$0xf] %vm305, %v302
      %s308 = smul.u32 2, %s20
      %p309 = scmp.lt.s32.totalorder %s19, 1
      %s310 = scalar_select %p309, %s19, 1
      %p311 = scmp.lt.s32.totalorder %s308, 1
      %s312 = scalar_select %p311, %s308, 1
      %s313 = smul.addr %s310, 2
      %s314 = sadd.s32 %s312, %s313
      %s315 = smul.addr %s314, 4
      %s316 = scalar_lea.vmem %s4, %s315
      // Predicated region
      $region37: #{encoder_forward.37} parent=35 // pred_check
        %p317 = pneg %p143
      $region38: #{encoder_forward.37} parent=35 // pred_check_branch
        %319 = sbr.rel (%p317) target = $region40
      $region39: #{encoder_forward.37} parent=35 // pred_region
        %s320 = smul.u32 2, %s20
      $region40: #{encoder_forward.37} parent=35 // pred_fallthru
        _
    $region36: #{encoder_forward.37} parent=5 // pred_fallthru
      _
    %p321 = scmp.le.s32.totalorder 2, %s10
    // Predicated region
    $region41: #{encoder_forward.37} parent=5 // pred_check
      %p322 = pneg %p321
    $region42: #{encoder_forward.37} parent=5 // pred_check_branch
      %324 = sbr.rel (%p322) target = $region44
    $region43: #{encoder_forward.37} parent=5 // pred_region
      %s325 = ssub.s32 %s10, 2
      // Predicated region
      $region45: #{encoder_forward.37} parent=43 // pred_check
        %p326 = pneg %p149
      $region46: #{encoder_forward.37} parent=43 // pred_check_branch
        %328 = sbr.rel (%p326) target = $region48
      $region47: #{encoder_forward.37} parent=43 // pred_region
        %s329 = smul.u32 2, %s22
        %p330 = scmp.lt.s32.totalorder %s21, 1
        %s331 = scalar_select %p330, %s21, 1
        %p332 = scmp.lt.s32.totalorder %s329, 1
        %s333 = scalar_select %p332, %s329, 1
        %s334 = smul.addr %s331, 2
        %s335 = sadd.s32 %s333, %s334
        %s336 = smul.addr %s335, 4
        %s337 = scalar_lea.vmem %s4, %s336
      $region48: #{encoder_forward.37} parent=43 // pred_fallthru
        _
    $region44: #{encoder_forward.37} parent=5 // pred_fallthru
      _
  $region6: #{encoder_forward.37} parent=0 // loop_footer
    %s14 = sadd.s32 1, %s10
  $region7: #{encoder_forward.37} parent=0 // loop_footer_branch
    %9 = sbr.rel target = $region3
  $region8: #{encoder_forward.37} parent=0 // loop_exit
    _

// kernel: encoder_forward.36
$region0: #{encoder_forward.36}
  #allocation0 [shape = 'u32[]', space=smem, size = 0x4, offset = 0x4, fixed_abs, tag = 'smem constant byte address 0x4 - core index']
  #allocation1 [shape = 'u32[144,128]{1,0:T(1,128)}', space=vmem, size = 0x12000, scoped, tag = 'internal scratch']
  #allocation2 [shape = 'f32[1,32]{1,0:T(1,128)}', space=vmem, size = 0x200, scoped, tag = 'scratch operand']
  #allocation3 [shape = 'f32[1,32]{1,0:T(1,128)}', space=vmem, size = 0x200, scoped, tag = 'scratch operand']
  %s0 = inlined_call_operand.vmem [shape: bf16[2,16,32], index: 0, kind: input, shape index: {}]
  %s1 = inlined_call_operand.vmem [shape: f32[32,32], index: 1, kind: input, shape index: {}]
  %s2 = inlined_call_operand.vmem [shape: f32[2,2,32], index: 2, kind: output, shape index: {}]
  %s3 = sld [smem:[#allocation0]]
  $region49: #{encoder_forward.36} parent=0
    _
  %s5 = ssub.s32 1, %s3
  %s6 = scalar_select 0, %s5, %s3
  loop: start=0, step=1, limit=4
  $region2: #{encoder_forward.36} parent=0 // loop_pre_header
    _
  $region3: #{encoder_forward.36} parent=0 // loop_header
    %s8 = sphi 0, %s12
    %p9 = scmp.ge.s32.totalorder %s8, 4
    %s15 = sphi 0, %s27
    %s16 = sphi 0, %s23
    %s17 = sphi 0, %s15
    %s18 = sphi 0, %s16
    %s19 = sphi 0, %s17
    %s20 = sphi 0, %s18
    %s32 = sphi 0, %s34
    %s35 = sphi 0, %s32
    %s36 = sphi 0, %s35
    %s52 = sphi 0, %s36
    %s56 = sphi 0, %s56
    %s58 = sphi 0, %s56
    %s59 = sphi 0, %s58
    %s73 = sphi 0, %s59
    %s79 = sphi 0, %s81
    %s82 = sphi 0, %s79
    %s83 = sphi 0, %s82
    %s99 = sphi 0, %s83
  $region4: #{encoder_forward.36} parent=0 // loop_header_branch
    %11 = sbr.rel (%p9) target = $region8
  $region5: #{encoder_forward.36} parent=0 // loop_body
    %s13 = ssub.s32 %s8, 1
    %s14 = ssub.s32 %s8, 2
    %s21 = sadd.s32 1, %s16
    %p22 = scmp.ge.s32.totalorder %s21, 1
    %s23 = scalar_select %p22, 0, %s21
    %s24 = sadd.s32 1, %s15
    %s25 = scalar_select %p22, %s24, %s15
    %p26 = scmp.ge.s32.totalorder %s25, 2
    %s27 = scalar_select %p26, 0, %s25
    %s28 = ssub.s32 %s15, %s27
    %s29 = ssub.s32 %s16, %s23
    %s30 = sor.u32 %s28, %s29
    %p31 = scmp.eq.s32.totalorder %s30, 0
    %s33 = sadd.s32 %s32, 1
    %s34 = scalar_select %p31, %s32, %s33
    %p37 = pneg %p31
    %p38 = scmp.eq.s32.totalorder %s8, 1
    %p39 = por %p37, %p38
    %p40 = scmp.ne.s32.totalorder %s32, %s35
    %p41 = scmp.eq.s32.totalorder %s8, 0
    %p42 = por %p40, %p41
    %p43 = scmp.ne.s32.totalorder %s32, %s35
    %p44 = scmp.eq.s32.totalorder %s13, 1
    %p45 = por %p43, %p44
    %p46 = scmp.ne.s32.totalorder %s35, %s36
    %p47 = scmp.eq.s32.totalorder %s13, 0
    %p48 = por %p46, %p47
    %p49 = scmp.ne.s32.totalorder %s35, %s36
    %p50 = scmp.eq.s32.totalorder %s14, 1
    %p51 = por %p49, %p50
    %p53 = scmp.ne.s32.totalorder %s36, %s52
    %p54 = scmp.eq.s32.totalorder %s14, 0
    %p55 = por %p53, %p54
    %s57 = sadd.s32 %s56, 1
    %p60 = scmp.eq.s32.totalorder %s8, 1
    %p61 = scmp.ne.s32.totalorder %s56, %s58
    %p62 = scmp.eq.s32.totalorder %s8, 0
    %p63 = por %p61, %p62
    %p64 = scmp.ne.s32.totalorder %s56, %s58
    %p65 = scmp.eq.s32.totalorder %s13, 1
    %p66 = por %p64, %p65
    %p67 = scmp.ne.s32.totalorder %s58, %s59
    %p68 = scmp.eq.s32.totalorder %s13, 0
    %p69 = por %p67, %p68
    %p70 = scmp.ne.s32.totalorder %s58, %s59
    %p71 = scmp.eq.s32.totalorder %s14, 1
    %p72 = por %p70, %p71
    %p74 = scmp.ne.s32.totalorder %s59, %s73
    %p75 = scmp.eq.s32.totalorder %s14, 0
    %p76 = por %p74, %p75
    %s77 = ssub.s32 %s15, %s27
    %p78 = scmp.eq.s32.totalorder %s77, 0
    %s80 = sadd.s32 %s79, 1
    %s81 = scalar_select %p78, %s79, %s80
    %p84 = pneg %p78
    %p85 = scmp.eq.s32.totalorder %s8, 1
    %p86 = por %p84, %p85
    %p87 = scmp.ne.s32.totalorder %s79, %s82
    %p88 = scmp.eq.s32.totalorder %s8, 0
    %p89 = por %p87, %p88
    %p90 = scmp.ne.s32.totalorder %s79, %s82
    %p91 = scmp.eq.s32.totalorder %s13, 1
    %p92 = por %p90, %p91
    %p93 = scmp.ne.s32.totalorder %s82, %s83
    %p94 = scmp.eq.s32.totalorder %s13, 0
    %p95 = por %p93, %p94
    %p96 = scmp.ne.s32.totalorder %s82, %s83
    %p97 = scmp.eq.s32.totalorder %s14, 1
    %p98 = por %p96, %p97
    %p100 = scmp.ne.s32.totalorder %s83, %s99
    %p101 = scmp.eq.s32.totalorder %s14, 0
    %p102 = por %p100, %p101
    %p103 = scmp.le.s32.totalorder 1, %s8
    %p104 = scmp.lt.s32.totalorder %s8, 3
    %p105 = pnand %p103, %p104
    %p106 = pneg %p105
    // Predicated region
    $region9: #{encoder_forward.36} parent=5 // pred_check
      _
    $region10: #{encoder_forward.36} parent=5 // pred_check_branch
      %108 = sbr.rel (%p105) target = $region12
    $region11: #{encoder_forward.36} parent=5 // pred_region
      %s109 = ssub.s32 %s8, 1
      // Predicated region
      $region13: #{encoder_forward.36} parent=11 // pred_check
        %p110 = pneg %p69
      $region14: #{encoder_forward.36} parent=11 // pred_check_branch
        %112 = sbr.rel (%p110) target = $region16
      $region15: #{encoder_forward.36} parent=11 // pred_region
        _
      $region16: #{encoder_forward.36} parent=11 // pred_fallthru
        _
    $region12: #{encoder_forward.36} parent=5 // pred_fallthru
      _
    %p113 = scmp.lt.s32.totalorder %s8, 2
    // Predicated region
    $region17: #{encoder_forward.36} parent=5 // pred_check
      %p114 = pneg %p113
    $region18: #{encoder_forward.36} parent=5 // pred_check_branch
      %116 = sbr.rel (%p114) target = $region20
    $region19: #{encoder_forward.36} parent=5 // pred_region
      // Predicated region
      $region21: #{encoder_forward.36} parent=19 // pred_check
        %p117 = pneg %p42
      $region22: #{encoder_forward.36} parent=19 // pred_check_branch
        %119 = sbr.rel (%p117) target = $region24
      $region23: #{encoder_forward.36} parent=19 // pred_region
        %s120 = smul.u32 2, %s16
        %p121 = scmp.lt.s32.totalorder %s15, 1
        %s122 = scalar_select %p121, %s15, 1
        %p123 = scmp.lt.s32.totalorder %s120, 1
        %s124 = scalar_select %p123, %s120, 1
        %s125 = smul.addr %s122, 2
        %s126 = sadd.s32 %s124, %s125
        %s127 = smul.addr %s126, 4
        %s128 = scalar_lea.vmem %s0, %s127
        %s129 = smul.u32 2, %s16
      $region24: #{encoder_forward.36} parent=19 // pred_fallthru
        _
    $region20: #{encoder_forward.36} parent=5 // pred_fallthru
      _
    %p130 = scmp.le.s32.totalorder 1, %s8
    %p131 = scmp.lt.s32.totalorder %s8, 3
    %p132 = pnand %p130, %p131
    %p133 = pneg %p132
    // Predicated region
    $region25: #{encoder_forward.36} parent=5 // pred_check
      _
    $region26: #{encoder_forward.36} parent=5 // pred_check_branch
      %135 = sbr.rel (%p132) target = $region28
    $region27: #{encoder_forward.36} parent=5 // pred_region
      %s136 = ssub.s32 %s8, 1
      %s137 = smul.u32 2, %s18
      %p138 = scmp.lt.s32.totalorder %s17, 1
      %s139 = scalar_select %p138, %s17, 1
      %p140 = scmp.lt.s32.totalorder %s137, 1
      %s141 = scalar_select %p140, %s137, 1
      %s142 = smul.addr %s139, 2
      %s143 = sadd.s32 %s141, %s142
      %s144 = smul.addr %s143, 4
      %s145 = scalar_lea.vmem %s0, %s144
      %p146 = pneg %p48
      %p147 = pneg %p45
      %p148 = pneg %p69
      %p149 = pneg %p66
      %p150 = pneg %p95
      %p151 = pneg %p92
      %p152 = scmp.lt.s32.totalorder %s17, 1
      %s153 = scalar_select %p152, %s17, 1
      %s154 = smul.addr %s153, 2
      %s155 = scalar_lea.vmem %s2, %s154
      %s156 = smul.u32 2, %s18
      %p157 = scmp.lt.s32.totalorder %s17, 1
      %s158 = scalar_select %p157, %s17, 1
      %p159 = scmp.lt.s32.totalorder %s156, 1
      %s160 = scalar_select %p159, %s156, 1
      %s161 = smul.addr %s158, 2
      %s162 = sadd.s32 %s160, %s161
      %s163 = smul.addr %s162, 4
      %s164 = scalar_lea.vmem %s0, %s163
      %s165 = smul.u32 2, %s18
      %p166 = scmp.lt.s32.totalorder %s17, 1
      %s167 = scalar_select %p166, %s17, 1
      %s168 = smul.addr %s167, 2
      %s169 = scalar_lea.vmem %s2, %s168
      %p170 = scmp.eq.s32.totalorder %s18, 0
      // Predicated region
      $region29: #{encoder_forward.36} parent=27 // pred_check
        %p171 = pneg %p170
      $region30: #{encoder_forward.36} parent=27 // pred_check_branch
        %173 = sbr.rel (%p171) target = $region32
      $region31: #{encoder_forward.36} parent=27 // pred_region
        %vm174 = vcmask 253952
        %175 = vst.msk [vmem:[#allocation2] sm:$0x1] %vm174, 0.0
        %176 = vst.msk [vmem:[#allocation3] sm:$0x1] %vm174, 0.0
      $region32: #{encoder_forward.36} parent=27 // pred_fallthru
        _
      %v177 = vld [vmem:[%s164] sm:$0xf]
      %v178 = vld [vmem:[%s164 + $0x4] sm:$0xf]
      %v179 = vunpack.c.l.bf16 %v177
      %v180 = vunpack.c.l.bf16 %v178
      %v181 = vld [vmem:[#allocation2] sm:$0x1]
      %vm182 = vcmask 261120
      %v183 = vsel %vm182, %v179, 0.0
      %v184 = vsel %vm182, %v180, 0.0
      %v185 = vadd.f32 %v183, %v184
      %v186 = vrot.slane %v185, 4
      %v187 = vadd.f32 %v185, %v186
      %v188 = vrot.slane %v187, 2
      %v189 = vadd.f32 %v187, %v188
      %v190 = vrot.slane %v189, 1
      %v191 = vadd.f32 %v189, %v190
      %v192 = vadd.f32 %v181, %v191
      %vm193 = vcmask 253952
      %194 = vst.msk [vmem:[#allocation2] sm:$0x1] %vm193, %v192
      %v195 = vld [vmem:[#allocation3] sm:$0x1]
      %v196 = vmul.f32 %v179, %v179
      %v197 = vmul.f32 %v180, %v180
      %v198 = vsel %vm182, %v196, 0.0
      %v199 = vsel %vm182, %v197, 0.0
      %v200 = vadd.f32 %v198, %v199
      %v201 = vrot.slane %v200, 4
      %v202 = vadd.f32 %v200, %v201
      %v203 = vrot.slane %v202, 2
      %v204 = vadd.f32 %v202, %v203
      %v205 = vrot.slane %v204, 1
      %v206 = vadd.f32 %v204, %v205
      %v207 = vadd.f32 %v195, %v206
      %208 = vst.msk [vmem:[#allocation3] sm:$0x1] %vm193, %v207
      // Predicated region
      $region33: #{encoder_forward.36} parent=27 // pred_check
        %p209 = pneg %p170
      $region34: #{encoder_forward.36} parent=27 // pred_check_branch
        %211 = sbr.rel (%p209) target = $region36
      $region35: #{encoder_forward.36} parent=27 // pred_region
        %v212 = vld [vmem:[%s1] sm:$0xff]
        %v213 = vld [vmem:[%s1 + $0x8] sm:$0xff]
        %v214 = vld [vmem:[%s1 + $0x10] sm:$0xff]
        %v215 = vld [vmem:[%s1 + $0x18] sm:$0xff]
        %v216 = vld [vmem:[#allocation2] sm:$0x1]
        %v218 = vsel %vm182, %v216, 0
        %220 = vmatprep.subr.mxu0 0.0
        %221 = vmatpush1.msra.mxu0 %v212
        %222 = vmatprep.subr.mxu0 0.0
        %223 = vmatpush1.msra.mxu0 %v213
        %224 = vmatprep.subr.mxu0 0.0
        %225 = vmatpush1.msra.mxu0 %v214
        %226 = vmatprep.subr.mxu0 0.0
        %227 = vmatpush1.msra.mxu0 %v215
        %228 = vmatprep.subr.mxu0 0.0
        %229 = vmatpush1.msra.mxu0 0.0
        %230 = vmatprep.subr.mxu0 0.0
        %231 = vmatpush1.msra.mxu0 0.0
        %232 = vmatprep.subr.mxu0 0.0
        %233 = vmatpush1.msra.mxu0 0.0
        %234 = vmatprep.subr.mxu0 0.0
        %235 = vmatpush1.msra.mxu0 0.0
        %236 = vmatprep.subr.mxu0 0.0
        %237 = vmatpush1.msra.mxu0 0.0
        %238 = vmatprep.subr.mxu0 0.0
        %239 = vmatpush1.msra.mxu0 0.0
        %240 = vmatprep.subr.mxu0 0.0
        %241 = vmatpush1.msra.mxu0 0.0
        %242 = vmatprep.subr.mxu0 0.0
        %243 = vmatpush1.msra.mxu0 0.0
        %244 = vmatprep.subr.mxu0 0.0
        %245 = vmatpush1.msra.mxu0 0.0
        %246 = vmatprep.subr.mxu0 0.0
        %247 = vmatpush1.msra.mxu0 0.0
        %248 = vmatprep.subr.mxu0 0.0
        %249 = vmatpush1.msra.mxu0 0.0
        %250 = vmatprep.subr.mxu0 0.0
        %251 = vmatpush1.msra.mxu0 0.0
        %252 = vmatprep.subr.mxu0 0.0
        %253 = vmatpush1.msra.mxu0 0.0
        %254 = vmatprep.subr.mxu0 0.0
        %255 = vmatpush1.msra.mxu0 0.0
        %256 = vmatprep.subr.mxu0 0.0
        %257 = vmatpush1.msra.mxu0 0.0
        %258 = vmatprep.subr.mxu0 0.0
        %259 = vmatpush1.msra.mxu0 0.0
        %260 = vmatprep.subr.mxu0 0.0
        %261 = vmatpush1.msra.mxu0 0.0
        %262 = vmatprep.subr.mxu0 0.0
        %263 = vmatpush1.msra.mxu0 0.0
        %264 = vmatprep.subr.mxu0 0.0
        %265 = vmatpush1.msra.mxu0 0.0
        %266 = vmatprep.subr.mxu0 0.0
        %267 = vmatpush1.msra.mxu0 0.0
        %268 = vmatprep.subr.mxu0 0.0
        %269 = vmatpush1.msra.mxu0 0.0
        %270 = vmatprep.subr.mxu0 0.0
        %271 = vmatpush1.msra.mxu0 0.0
        %272 = vmatprep.subr.mxu0 0.0
        %273 = vmatpush1.msra.mxu0 0.0
        %274 = vmatprep.subr.mxu0 0.0
        %275 = vmatpush1.msra.mxu0 0.0
        %276 = vmatprep.subr.mxu0 0.0
        %277 = vmatpush1.msra.mxu0 0.0
        %278 = vmatprep.subr.mxu0 0.0
        %279 = vmatpush1.msra.mxu0 0.0
        %280 = vmatprep.subr.mxu0 0.0
        %281 = vmatpush1.msra.mxu0 0.0
        %282 = vmatprep.subr.mxu0 0.0
        %283 = vmatpush1.msra.mxu0 0.0
        %284 = vmatprep.mubr.f32.mxu0 0.0
        %285 = vmatmul.mubr.f32.gmra.mrb[0].mxu0 %v218
        %v286 = vpop.f32.mrb[0].mxu0
        %v287 = vadd.f32 0.0, %v286
        %v288 = vpop.f32.mrb[0].mxu0
        %289 = vdwg.mxu0
        %v290 = vmul.f32 %v287, 0.0625
        %v291 = vld [vmem:[#allocation3] sm:$0x1]
        %v293 = vsel %vm182, %v291, 0
        %295 = vmatprep.subr.mxu0 0.0
        %296 = vmatpush1.msra.mxu0 %v212
        %297 = vmatprep.subr.mxu0 0.0
        %298 = vmatpush1.msra.mxu0 %v213
        %299 = vmatprep.subr.mxu0 0.0
        %300 = vmatpush1.msra.mxu0 %v214
        %301 = vmatprep.subr.mxu0 0.0
        %302 = vmatpush1.msra.mxu0 %v215
        %303 = vmatprep.subr.mxu0 0.0
        %304 = vmatpush1.msra.mxu0 0.0
        %305 = vmatprep.subr.mxu0 0.0
        %306 = vmatpush1.msra.mxu0 0.0
        %307 = vmatprep.subr.mxu0 0.0
        %308 = vmatpush1.msra.mxu0 0.0
        %309 = vmatprep.subr.mxu0 0.0
        %310 = vmatpush1.msra.mxu0 0.0
        %311 = vmatprep.subr.mxu0 0.0
        %312 = vmatpush1.msra.mxu0 0.0
        %313 = vmatprep.subr.mxu0 0.0
        %314 = vmatpush1.msra.mxu0 0.0
        %315 = vmatprep.subr.mxu0 0.0
        %316 = vmatpush1.msra.mxu0 0.0
        %317 = vmatprep.subr.mxu0 0.0
        %318 = vmatpush1.msra.mxu0 0.0
        %319 = vmatprep.subr.mxu0 0.0
        %320 = vmatpush1.msra.mxu0 0.0
        %321 = vmatprep.subr.mxu0 0.0
        %322 = vmatpush1.msra.mxu0 0.0
        %323 = vmatprep.subr.mxu0 0.0
        %324 = vmatpush1.msra.mxu0 0.0
        %325 = vmatprep.subr.mxu0 0.0
        %326 = vmatpush1.msra.mxu0 0.0
        %327 = vmatprep.subr.mxu0 0.0
        %328 = vmatpush1.msra.mxu0 0.0
        %329 = vmatprep.subr.mxu0 0.0
        %330 = vmatpush1.msra.mxu0 0.0
        %331 = vmatprep.subr.mxu0 0.0
        %332 = vmatpush1.msra.mxu0 0.0
        %333 = vmatprep.subr.mxu0 0.0
        %334 = vmatpush1.msra.mxu0 0.0
        %335 = vmatprep.subr.mxu0 0.0
        %336 = vmatpush1.msra.mxu0 0.0
        %337 = vmatprep.subr.mxu0 0.0
        %338 = vmatpush1.msra.mxu0 0.0
        %339 = vmatprep.subr.mxu0 0.0
        %340 = vmatpush1.msra.mxu0 0.0
        %341 = vmatprep.subr.mxu0 0.0
        %342 = vmatpush1.msra.mxu0 0.0
        %343 = vmatprep.subr.mxu0 0.0
        %344 = vmatpush1.msra.mxu0 0.0
        %345 = vmatprep.subr.mxu0 0.0
        %346 = vmatpush1.msra.mxu0 0.0
        %347 = vmatprep.subr.mxu0 0.0
        %348 = vmatpush1.msra.mxu0 0.0
        %349 = vmatprep.subr.mxu0 0.0
        %350 = vmatpush1.msra.mxu0 0.0
        %351 = vmatprep.subr.mxu0 0.0
        %352 = vmatpush1.msra.mxu0 0.0
        %353 = vmatprep.subr.mxu0 0.0
        %354 = vmatpush1.msra.mxu0 0.0
        %355 = vmatprep.subr.mxu0 0.0
        %356 = vmatpush1.msra.mxu0 0.0
        %357 = vmatprep.subr.mxu0 0.0
        %358 = vmatpush1.msra.mxu0 0.0
        %359 = vmatprep.mubr.f32.mxu0 0.0
        %360 = vmatmul.mubr.f32.gmra.mrb[0].mxu0 %v293
        %v361 = vpop.f32.mrb[0].mxu0
        %v362 = vadd.f32 0.0, %v361
        %v363 = vpop.f32.mrb[0].mxu0
        %364 = vdwg.mxu0
        %v365 = vmul.f32 %v362, 0.0625
        %v366 = vmul.f32 %v290, %v290
        %v367 = vsub.f32 %v365, %v366
        %v368 = vmax.f32 %v367, 0.0
        %369 = vst.msk [vmem:[%s169] sm:$0x1] %vm193, %v290
        %v370 = vadd.f32 %v368, 1e-06
        %v371 = vrsqrt.pop %v370
        %372 = vst.msk [vmem:[%s169 + $0x1] sm:$0x1] %vm193, %v371
      $region36: #{encoder_forward.36} parent=27 // pred_fallthru
        _
      %p373 = scmp.lt.s32.totalorder %s17, 1
      %s374 = scalar_select %p373, %s17, 1
      %s375 = smul.addr %s374, 2
      %s376 = scalar_lea.vmem %s2, %s375
      // Predicated region
      $region37: #{encoder_forward.36} parent=27 // pred_check
        %p377 = pneg %p92
      $region38: #{encoder_forward.36} parent=27 // pred_check_branch
        %379 = sbr.rel (%p377) target = $region40
      $region39: #{encoder_forward.36} parent=27 // pred_region
        _
      $region40: #{encoder_forward.36} parent=27 // pred_fallthru
        _
    $region28: #{encoder_forward.36} parent=5 // pred_fallthru
      _
    %p380 = scmp.le.s32.totalorder 2, %s8
    // Predicated region
    $region41: #{encoder_forward.36} parent=5 // pred_check
      %p381 = pneg %p380
    $region42: #{encoder_forward.36} parent=5 // pred_check_branch
      %383 = sbr.rel (%p381) target = $region44
    $region43: #{encoder_forward.36} parent=5 // pred_region
      %s384 = ssub.s32 %s8, 2
      // Predicated region
      $region45: #{encoder_forward.36} parent=43 // pred_check
        %p385 = pneg %p98
      $region46: #{encoder_forward.36} parent=43 // pred_check_branch
        %387 = sbr.rel (%p385) target = $region48
      $region47: #{encoder_forward.36} parent=43 // pred_region
        %p388 = scmp.lt.s32.totalorder %s19, 1
        %s389 = scalar_select %p388, %s19, 1
        %s390 = smul.addr %s389, 2
        %s391 = scalar_lea.vmem %s2, %s390
      $region48: #{encoder_forward.36} parent=43 // pred_fallthru
        _
    $region44: #{encoder_forward.36} parent=5 // pred_fallthru
      _
  $region6: #{encoder_forward.36} parent=0 // loop_footer
    %s12 = sadd.s32 1, %s8
  $region7: #{encoder_forward.36} parent=0 // loop_footer_branch
    %7 = sbr.rel target = $region3
  $region8: #{encoder_forward.36} parent=0 // loop_exit
    _

// kernel: encoder_forward.35
$region0: #{encoder_forward.35}
  #allocation0 [shape = 'u32[]', space=smem, size = 0x4, offset = 0x4, fixed_abs, tag = 'smem constant byte address 0x4 - core index']
  #allocation1 [shape = 'u32[144,128]{1,0:T(1,128)}', space=vmem, size = 0x12000, scoped, tag = 'internal scratch']
  %s0 = inlined_call_operand.vmem [shape: bf16[2,16,4], index: 0, kind: input, shape index: {}]
  %s1 = inlined_call_operand.vmem [shape: bf16[3,4,32], index: 1, kind: input, shape index: {}]
  %s2 = inlined_call_operand.vmem [shape: f32[1,32], index: 2, kind: input, shape index: {}]
  %s3 = inlined_call_operand.vmem [shape: bf16[2,16,32], index: 3, kind: output, shape index: {}]
  %s4 = sld [smem:[#allocation0]]
  $region45: #{encoder_forward.35} parent=0
    _
  %s6 = ssub.s32 1, %s4
  %s7 = scalar_select 0, %s6, %s4
  loop: start=0, step=1, limit=4
  $region2: #{encoder_forward.35} parent=0 // loop_pre_header
    _
  $region3: #{encoder_forward.35} parent=0 // loop_header
    %s9 = sphi 0, %s13
    %p10 = scmp.ge.s32.totalorder %s9, 4
    %s16 = sphi 0, %s28
    %s17 = sphi 0, %s24
    %s18 = sphi 0, %s16
    %s19 = sphi 0, %s17
    %s20 = sphi 0, %s18
    %s21 = sphi 0, %s19
    %s33 = sphi 0, %s35
    %s36 = sphi 0, %s33
    %s37 = sphi 0, %s36
    %s53 = sphi 0, %s37
    %s57 = sphi 0, %s57
    %s59 = sphi 0, %s57
    %s60 = sphi 0, %s59
    %s74 = sphi 0, %s60
    %s78 = sphi 0, %s78
    %s80 = sphi 0, %s78
    %s81 = sphi 0, %s80
    %s95 = sphi 0, %s81
    %s103 = sphi 0, %s105
    %s106 = sphi 0, %s103
    %s107 = sphi 0, %s106
    %s123 = sphi 0, %s107
  $region4: #{encoder_forward.35} parent=0 // loop_header_branch
    %12 = sbr.rel (%p10) target = $region8
  $region5: #{encoder_forward.35} parent=0 // loop_body
    %s14 = ssub.s32 %s9, 1
    %s15 = ssub.s32 %s9, 2
    %s22 = sadd.s32 1, %s17
    %p23 = scmp.ge.s32.totalorder %s22, 1
    %s24 = scalar_select %p23, 0, %s22
    %s25 = sadd.s32 1, %s16
    %s26 = scalar_select %p23, %s25, %s16
    %p27 = scmp.ge.s32.totalorder %s26, 2
    %s28 = scalar_select %p27, 0, %s26
    %s29 = ssub.s32 %s16, %s28
    %s30 = ssub.s32 %s17, %s24
    %s31 = sor.u32 %s29, %s30
    %p32 = scmp.eq.s32.totalorder %s31, 0
    %s34 = sadd.s32 %s33, 1
    %s35 = scalar_select %p32, %s33, %s34
    %p38 = pneg %p32
    %p39 = scmp.eq.s32.totalorder %s9, 1
    %p40 = por %p38, %p39
    %p41 = scmp.ne.s32.totalorder %s33, %s36
    %p42 = scmp.eq.s32.totalorder %s9, 0
    %p43 = por %p41, %p42
    %p44 = scmp.ne.s32.totalorder %s33, %s36
    %p45 = scmp.eq.s32.totalorder %s14, 1
    %p46 = por %p44, %p45
    %p47 = scmp.ne.s32.totalorder %s36, %s37
    %p48 = scmp.eq.s32.totalorder %s14, 0
    %p49 = por %p47, %p48
    %p50 = scmp.ne.s32.totalorder %s36, %s37
    %p51 = scmp.eq.s32.totalorder %s15, 1
    %p52 = por %p50, %p51
    %p54 = scmp.ne.s32.totalorder %s37, %s53
    %p55 = scmp.eq.s32.totalorder %s15, 0
    %p56 = por %p54, %p55
    %s58 = sadd.s32 %s57, 1
    %p61 = scmp.eq.s32.totalorder %s9, 1
    %p62 = scmp.ne.s32.totalorder %s57, %s59
    %p63 = scmp.eq.s32.totalorder %s9, 0
    %p64 = por %p62, %p63
    %p65 = scmp.ne.s32.totalorder %s57, %s59
    %p66 = scmp.eq.s32.totalorder %s14, 1
    %p67 = por %p65, %p66
    %p68 = scmp.ne.s32.totalorder %s59, %s60
    %p69 = scmp.eq.s32.totalorder %s14, 0
    %p70 = por %p68, %p69
    %p71 = scmp.ne.s32.totalorder %s59, %s60
    %p72 = scmp.eq.s32.totalorder %s15, 1
    %p73 = por %p71, %p72
    %p75 = scmp.ne.s32.totalorder %s60, %s74
    %p76 = scmp.eq.s32.totalorder %s15, 0
    %p77 = por %p75, %p76
    %s79 = sadd.s32 %s78, 1
    %p82 = scmp.eq.s32.totalorder %s9, 1
    %p83 = scmp.ne.s32.totalorder %s78, %s80
    %p84 = scmp.eq.s32.totalorder %s9, 0
    %p85 = por %p83, %p84
    %p86 = scmp.ne.s32.totalorder %s78, %s80
    %p87 = scmp.eq.s32.totalorder %s14, 1
    %p88 = por %p86, %p87
    %p89 = scmp.ne.s32.totalorder %s80, %s81
    %p90 = scmp.eq.s32.totalorder %s14, 0
    %p91 = por %p89, %p90
    %p92 = scmp.ne.s32.totalorder %s80, %s81
    %p93 = scmp.eq.s32.totalorder %s15, 1
    %p94 = por %p92, %p93
    %p96 = scmp.ne.s32.totalorder %s81, %s95
    %p97 = scmp.eq.s32.totalorder %s15, 0
    %p98 = por %p96, %p97
    %s99 = ssub.s32 %s16, %s28
    %s100 = ssub.s32 %s17, %s24
    %s101 = sor.u32 %s99, %s100
    %p102 = scmp.eq.s32.totalorder %s101, 0
    %s104 = sadd.s32 %s103, 1
    %s105 = scalar_select %p102, %s103, %s104
    %p108 = pneg %p102
    %p109 = scmp.eq.s32.totalorder %s9, 1
    %p110 = por %p108, %p109
    %p111 = scmp.ne.s32.totalorder %s103, %s106
    %p112 = scmp.eq.s32.totalorder %s9, 0
    %p113 = por %p111, %p112
    %p114 = scmp.ne.s32.totalorder %s103, %s106
    %p115 = scmp.eq.s32.totalorder %s14, 1
    %p116 = por %p114, %p115
    %p117 = scmp.ne.s32.totalorder %s106, %s107
    %p118 = scmp.eq.s32.totalorder %s14, 0
    %p119 = por %p117, %p118
    %p120 = scmp.ne.s32.totalorder %s106, %s107
    %p121 = scmp.eq.s32.totalorder %s15, 1
    %p122 = por %p120, %p121
    %p124 = scmp.ne.s32.totalorder %s107, %s123
    %p125 = scmp.eq.s32.totalorder %s15, 0
    %p126 = por %p124, %p125
    %p127 = scmp.le.s32.totalorder 1, %s9
    %p128 = scmp.lt.s32.totalorder %s9, 3
    %p129 = pnand %p127, %p128
    %p130 = pneg %p129
    // Predicated region
    $region9: #{encoder_forward.35} parent=5 // pred_check
      _
    $region10: #{encoder_forward.35} parent=5 // pred_check_branch
      %132 = sbr.rel (%p129) target = $region12
    $region11: #{encoder_forward.35} parent=5 // pred_region
      %s133 = ssub.s32 %s9, 1
      // Predicated region
      $region13: #{encoder_forward.35} parent=11 // pred_check
        %p134 = pneg %p70
      $region14: #{encoder_forward.35} parent=11 // pred_check_branch
        %136 = sbr.rel (%p134) target = $region16
      $region15: #{encoder_forward.35} parent=11 // pred_region
        _
      $region16: #{encoder_forward.35} parent=11 // pred_fallthru
        _
      // Predicated region
      $region17: #{encoder_forward.35} parent=11 // pred_check
        %p137 = pneg %p91
      $region18: #{encoder_forward.35} parent=11 // pred_check_branch
        %139 = sbr.rel (%p137) target = $region20
      $region19: #{encoder_forward.35} parent=11 // pred_region
        _
      $region20: #{encoder_forward.35} parent=11 // pred_fallthru
        _
    $region12: #{encoder_forward.35} parent=5 // pred_fallthru
      _
    %p140 = scmp.lt.s32.totalorder %s9, 2
    // Predicated region
    $region21: #{encoder_forward.35} parent=5 // pred_check
      %p141 = pneg %p140
    $region22: #{encoder_forward.35} parent=5 // pred_check_branch
      %143 = sbr.rel (%p141) target = $region24
    $region23: #{encoder_forward.35} parent=5 // pred_region
      // Predicated region
      $region25: #{encoder_forward.35} parent=23 // pred_check
        %p144 = pneg %p43
      $region26: #{encoder_forward.35} parent=23 // pred_check_branch
        %146 = sbr.rel (%p144) target = $region28
      $region27: #{encoder_forward.35} parent=23 // pred_region
        %s147 = smul.u32 2, %s17
        %p148 = scmp.lt.s32.totalorder %s16, 1
        %s149 = scalar_select %p148, %s16, 1
        %p150 = scmp.lt.s32.totalorder %s147, 1
        %s151 = scalar_select %p150, %s147, 1
        %s152 = smul.addr %s149, 2
        %s153 = sadd.s32 %s151, %s152
        %s154 = smul.addr %s153, 4
        %s155 = scalar_lea.vmem %s0, %s154
        %s156 = smul.u32 2, %s17
      $region28: #{encoder_forward.35} parent=23 // pred_fallthru
        _
    $region24: #{encoder_forward.35} parent=5 // pred_fallthru
      _
    %p157 = scmp.le.s32.totalorder 1, %s9
    %p158 = scmp.lt.s32.totalorder %s9, 3
    %p159 = pnand %p157, %p158
    %p160 = pneg %p159
    // Predicated region
    $region29: #{encoder_forward.35} parent=5 // pred_check
      _
    $region30: #{encoder_forward.35} parent=5 // pred_check_branch
      %162 = sbr.rel (%p159) target = $region32
    $region31: #{encoder_forward.35} parent=5 // pred_region
      %s163 = ssub.s32 %s9, 1
      %s164 = smul.u32 2, %s19
      %p165 = scmp.lt.s32.totalorder %s18, 1
      %s166 = scalar_select %p165, %s18, 1
      %p167 = scmp.lt.s32.totalorder %s164, 1
      %s168 = scalar_select %p167, %s164, 1
      %s169 = smul.addr %s166, 2
      %s170 = sadd.s32 %s168, %s169
      %s171 = smul.addr %s170, 4
      %s172 = scalar_lea.vmem %s0, %s171
      %p173 = pneg %p49
      %p174 = pneg %p46
      %p175 = pneg %p70
      %p176 = pneg %p67
      %p177 = pneg %p91
      %p178 = pneg %p88
      %p179 = pneg %p119
      %p180 = pneg %p116
      %s181 = smul.u32 2, %s19
      %p182 = scmp.lt.s32.totalorder %s18, 1
      %s183 = scalar_select %p182, %s18, 1
      %p184 = scmp.lt.s32.totalorder %s181, 1
      %s185 = scalar_select %p184, %s181, 1
      %s186 = smul.addr %s183, 2
      %s187 = sadd.s32 %s185, %s186
      %s188 = smul.addr %s187, 4
      %s189 = scalar_lea.vmem %s3, %s188
      %s190 = smul.u32 2, %s19
      %p191 = scmp.lt.s32.totalorder %s18, 1
      %s192 = scalar_select %p191, %s18, 1
      %p193 = scmp.lt.s32.totalorder %s190, 1
      %s194 = scalar_select %p193, %s190, 1
      %s195 = smul.addr %s192, 2
      %s196 = sadd.s32 %s194, %s195
      %s197 = smul.addr %s196, 4
      %s198 = scalar_lea.vmem %s0, %s197
      %s199 = smul.u32 2, %s19
      %s200 = smul.u32 2, %s19
      %p201 = scmp.lt.s32.totalorder %s18, 1
      %s202 = scalar_select %p201, %s18, 1
      %p203 = scmp.lt.s32.totalorder %s200, 1
      %s204 = scalar_select %p203, %s200, 1
      %s205 = smul.addr %s202, 2
      %s206 = sadd.s32 %s204, %s205
      %s207 = smul.addr %s206, 4
      %s208 = scalar_lea.vmem %s3, %s207
      %s209 = smul.u32 2, %s19
      %v211 = vld [vmem:[%s198] sm:$0xf]
      %v212 = vld [vmem:[%s198 + $0x4] sm:$0xf]
      %v215 = vunpack.c.l.b16 %v211
      %v216 = vunpack.c.l.b16 %v212
      %v217 = vpack.c.b16 %v216, %v215
      %v219 = vshrl.u32 %v217, 16
      %v221 = vrot.slane %v219, 7
      %v222 = vshll.u32 %v217, 16
      %v224 = vor.u32 %v221, %v222
      %vm226 = vcmask 1040384
      %vm227 = vsmask.f32 256
      %vm228 = vmand %vm226, %vm227
      %v229 = vsel %vm228, 0, %v224
      %v230 = vrot.slane %v222, 1
      %v231 = vor.u32 %v219, %v230
      %vm233 = vcmask 1047552
      %vm234 = vsmask.f32 7424
      %vm235 = vmand %vm233, %vm234
      %v236 = vsel %vm235, %v231, 0
      %s237 = scalar_lea.vmem %s1, 2
      %v238 = vld [vmem:[%s237] sm:$0x3]
      %v239 = vld [vmem:[%s1] sm:$0x3]
      %vm240 = vcmask 31744
      %v242 = vsel %vm240, %v229, 0
      %vm244 = vcmask 1041408
      %v246 = vsel %vm244, %v239, 0
      %248 = vmatprep.subr.bf16.mxu0 0
      %249 = vmatpush1.bf16.msra.mxu0 %v246
      %250 = vmatprep.subr.bf16.mxu0 0
      %251 = vmatpush1.bf16.msra.mxu0 0
      %252 = vmatprep.subr.bf16.mxu0 0
      %253 = vmatpush1.bf16.msra.mxu0 0
      %254 = vmatprep.subr.bf16.mxu0 0
      %255 = vmatpush1.bf16.msra.mxu0 0
      %256 = vmatprep.subr.bf16.mxu0 0
      %257 = vmatpush1.bf16.msra.mxu0 0
      %258 = vmatprep.subr.bf16.mxu0 0
      %259 = vmatpush1.bf16.msra.mxu0 0
      %260 = vmatprep.subr.bf16.mxu0 0
      %261 = vmatpush1.bf16.msra.mxu0 0
      %262 = vmatprep.subr.bf16.mxu0 0
      %263 = vmatpush1.bf16.msra.mxu0 0
      %264 = vmatprep.subr.bf16.mxu0 0
      %265 = vmatpush1.bf16.msra.mxu0 0
      %266 = vmatprep.subr.bf16.mxu0 0
      %267 = vmatpush1.bf16.msra.mxu0 0
      %268 = vmatprep.subr.bf16.mxu0 0
      %269 = vmatpush1.bf16.msra.mxu0 0
      %270 = vmatprep.subr.bf16.mxu0 0
      %271 = vmatpush1.bf16.msra.mxu0 0
      %272 = vmatprep.subr.bf16.mxu0 0
      %273 = vmatpush1.bf16.msra.mxu0 0
      %274 = vmatprep.subr.bf16.mxu0 0
      %275 = vmatpush1.bf16.msra.mxu0 0
      %276 = vmatprep.subr.bf16.mxu0 0
      %277 = vmatpush1.bf16.msra.mxu0 0
      %278 = vmatprep.subr.bf16.mxu0 0
      %279 = vmatpush1.bf16.msra.mxu0 0
      %280 = vmatprep.mubr.bf16.mxu0 0
      %281 = vmatmul.mubr.bf16.gmra.mrb[0].mxu0 %v242
      %v282 = vpop.f32.mrb[0].mxu0
      %v283 = vadd.f32 0.0, %v282
      %v284 = vpop.f32.mrb[0].mxu0
      %v285 = vpop.f32.mrb[0].mxu0
      %v286 = vadd.f32 0.0, %v285
      %v287 = vpop.f32.mrb[0].mxu0
      %288 = vdwg.mxu0
      %v289 = vsel %vm240, %v217, 0
      %v292 = vsel %vm244, %v238, 0
      %294 = vmatprep.subr.bf16.mxu0 0
      %295 = vmatpush1.bf16.msra.mxu0 %v292
      %296 = vmatprep.subr.bf16.mxu0 0
      %297 = vmatpush1.bf16.msra.mxu0 0
      %298 = vmatprep.subr.bf16.mxu0 0
      %299 = vmatpush1.bf16.msra.mxu0 0
      %300 = vmatprep.subr.bf16.mxu0 0
      %301 = vmatpush1.bf16.msra.mxu0 0
      %302 = vmatprep.subr.bf16.mxu0 0
      %303 = vmatpush1.bf16.msra.mxu0 0
      %304 = vmatprep.subr.bf16.mxu0 0
      %305 = vmatpush1.bf16.msra.mxu0 0
      %306 = vmatprep.subr.bf16.mxu0 0
      %307 = vmatpush1.bf16.msra.mxu0 0
      %308 = vmatprep.subr.bf16.mxu0 0
      %309 = vmatpush1.bf16.msra.mxu0 0
      %310 = vmatprep.subr.bf16.mxu0 0
      %311 = vmatpush1.bf16.msra.mxu0 0
      %312 = vmatprep.subr.bf16.mxu0 0
      %313 = vmatpush1.bf16.msra.mxu0 0
      %314 = vmatprep.subr.bf16.mxu0 0
      %315 = vmatpush1.bf16.msra.mxu0 0
      %316 = vmatprep.subr.bf16.mxu0 0
      %317 = vmatpush1.bf16.msra.mxu0 0
      %318 = vmatprep.subr.bf16.mxu0 0
      %319 = vmatpush1.bf16.msra.mxu0 0
      %320 = vmatprep.subr.bf16.mxu0 0
      %321 = vmatpush1.bf16.msra.mxu0 0
      %322 = vmatprep.subr.bf16.mxu0 0
      %323 = vmatpush1.bf16.msra.mxu0 0
      %324 = vmatprep.subr.bf16.mxu0 0
      %325 = vmatpush1.bf16.msra.mxu0 0
      %326 = vmatprep.mubr.bf16.mxu0 0
      %327 = vmatmul.mubr.bf16.gmra.mrb[0].mxu0 %v289
      %v328 = vpop.f32.mrb[0].mxu0
      %v329 = vadd.f32 %v283, %v328
      %v330 = vpop.f32.mrb[0].mxu0
      %v331 = vpop.f32.mrb[0].mxu0
      %v332 = vadd.f32 %v286, %v331
      %v333 = vpop.f32.mrb[0].mxu0
      %334 = vdwg.mxu0
      %s335 = scalar_lea.vmem %s1, 4
      %v336 = vld [vmem:[%s335] sm:$0x3]
      %v338 = vsel %vm240, %v236, 0
      %v341 = vsel %vm244, %v336, 0
      %343 = vmatprep.subr.bf16.mxu0 0
      %344 = vmatpush1.bf16.msra.mxu0 %v341
      %345 = vmatprep.subr.bf16.mxu0 0
      %346 = vmatpush1.bf16.msra.mxu0 0
      %347 = vmatprep.subr.bf16.mxu0 0
      %348 = vmatpush1.bf16.msra.mxu0 0
      %349 = vmatprep.subr.bf16.mxu0 0
      %350 = vmatpush1.bf16.msra.mxu0 0
      %351 = vmatprep.subr.bf16.mxu0 0
      %352 = vmatpush1.bf16.msra.mxu0 0
      %353 = vmatprep.subr.bf16.mxu0 0
      %354 = vmatpush1.bf16.msra.mxu0 0
      %355 = vmatprep.subr.bf16.mxu0 0
      %356 = vmatpush1.bf16.msra.mxu0 0
      %357 = vmatprep.subr.bf16.mxu0 0
      %358 = vmatpush1.bf16.msra.mxu0 0
      %359 = vmatprep.subr.bf16.mxu0 0
      %360 = vmatpush1.bf16.msra.mxu0 0
      %361 = vmatprep.subr.bf16.mxu0 0
      %362 = vmatpush1.bf16.msra.mxu0 0
      %363 = vmatprep.subr.bf16.mxu0 0
      %364 = vmatpush1.bf16.msra.mxu0 0
      %365 = vmatprep.subr.bf16.mxu0 0
      %366 = vmatpush1.bf16.msra.mxu0 0
      %367 = vmatprep.subr.bf16.mxu0 0
      %368 = vmatpush1.bf16.msra.mxu0 0
      %369 = vmatprep.subr.bf16.mxu0 0
      %370 = vmatpush1.bf16.msra.mxu0 0
      %371 = vmatprep.subr.bf16.mxu0 0
      %372 = vmatpush1.bf16.msra.mxu0 0
      %373 = vmatprep.subr.bf16.mxu0 0
      %374 = vmatpush1.bf16.msra.mxu0 0
      %375 = vmatprep.mubr.bf16.mxu0 0
      %376 = vmatmul.mubr.bf16.gmra.mrb[0].mxu0 %v338
      %v377 = vpop.f32.mrb[0].mxu0
      %v378 = vadd.f32 0.0, %v377
      %v379 = vpop.f32.mrb[0].mxu0
      %v380 = vpop.f32.mrb[0].mxu0
      %v381 = vadd.f32 0.0, %v380
      %v382 = vpop.f32.mrb[0].mxu0
      %383 = vdwg.mxu0
      %v384 = vadd.f32 %v329, %v378
      %v385 = vadd.f32 %v332, %v381
      %v386 = vld [vmem:[%s2] sm:$0x1]
      %v388 = vlaneseq
      %v389 = vshrl.u32 %v388, 7
      %v390 = vsub.s32 0, %v389
      %v391 = vrot.slane %v386, %v390
      %v393 = vadd.f32 %v384, %v391
      %v394 = vadd.f32 %v385, %v391
      %v395 = vpack.c.bf16 %v394, %v393
      %v397 = vunpack.c.l.b16 %v395
      %v398 = vunpack.c.h.b16 %v395
      %v399 = vpack.c.b16 %v397, %v397
      %v400 = vpack.c.b16 %v398, %v398
      %vm403 = vcmask 257024
      %404 = vst.msk [vmem:[%s208] sm:$0xf] %vm403, %v399
      %405 = vst.msk [vmem:[%s208 + $0x4] sm:$0xf] %vm403, %v400
      %s406 = smul.u32 2, %s19
      %p407 = scmp.lt.s32.totalorder %s18, 1
      %s408 = scalar_select %p407, %s18, 1
      %p409 = scmp.lt.s32.totalorder %s406, 1
      %s410 = scalar_select %p409, %s406, 1
      %s411 = smul.addr %s408, 2
      %s412 = sadd.s32 %s410, %s411
      %s413 = smul.addr %s412, 4
      %s414 = scalar_lea.vmem %s3, %s413
      // Predicated region
      $region33: #{encoder_forward.35} parent=31 // pred_check
        %p415 = pneg %p116
      $region34: #{encoder_forward.35} parent=31 // pred_check_branch
        %417 = sbr.rel (%p415) target = $region36
      $region35: #{encoder_forward.35} parent=31 // pred_region
        %s418 = smul.u32 2, %s19
      $region36: #{encoder_forward.35} parent=31 // pred_fallthru
        _
    $region32: #{encoder_forward.35} parent=5 // pred_fallthru
      _
    %p419 = scmp.le.s32.totalorder 2, %s9
    // Predicated region
    $region37: #{encoder_forward.35} parent=5 // pred_check
      %p420 = pneg %p419
    $region38: #{encoder_forward.35} parent=5 // pred_check_branch
      %422 = sbr.rel (%p420) target = $region40
    $region39: #{encoder_forward.35} parent=5 // pred_region
      %s423 = ssub.s32 %s9, 2
      // Predicated region
      $region41: #{encoder_forward.35} parent=39 // pred_check
        %p424 = pneg %p122
      $region42: #{encoder_forward.35} parent=39 // pred_check_branch
        %426 = sbr.rel (%p424) target = $region44
      $region43: #{encoder_forward.35} parent=39 // pred_region
        %s427 = smul.u32 2, %s21
        %p428 = scmp.lt.s32.totalorder %s20, 1
        %s429 = scalar_select %p428, %s20, 1
        %p430 = scmp.lt.s32.totalorder %s427, 1
        %s431 = scalar_select %p430, %s427, 1
        %s432 = smul.addr %s429, 2
        %s433 = sadd.s32 %s431, %s432
        %s434 = smul.addr %s433, 4
        %s435 = scalar_lea.vmem %s3, %s434
      $region44: #{encoder_forward.35} parent=39 // pred_fallthru
        _
    $region40: #{encoder_forward.35} parent=5 // pred_fallthru
      _
  $region6: #{encoder_forward.35} parent=0 // loop_footer
    %s13 = sadd.s32 1, %s9
  $region7: #{encoder_forward.35} parent=0 // loop_footer_branch
    %8 = sbr.rel target = $region3
  $region8: #{encoder_forward.35} parent=0 // loop_exit
    _

// kernel: encoder_forward.38
$region0: #{encoder_forward.38}
  #allocation0 [shape = 'u32[]', space=smem, size = 0x4, offset = 0x4, fixed_abs, tag = 'smem constant byte address 0x4 - core index']
  #allocation1 [shape = 'u32[144,128]{1,0:T(1,128)}', space=vmem, size = 0x12000, scoped, tag = 'internal scratch']
  %s0 = inlined_call_operand.vmem [shape: bf16[2,16,32], index: 0, kind: input, shape index: {}]
  %s1 = inlined_call_operand.vmem [shape: bf16[3,32,32], index: 1, kind: input, shape index: {}]
  %s2 = inlined_call_operand.vmem [shape: f32[1,32], index: 2, kind: input, shape index: {}]
  %s3 = inlined_call_operand.vmem [shape: bf16[2,16,32], index: 3, kind: output, shape index: {}]
  %s4 = sld [smem:[#allocation0]]
  $region45: #{encoder_forward.38} parent=0
    _
  %s6 = ssub.s32 1, %s4
  %s7 = scalar_select 0, %s6, %s4
  loop: start=0, step=1, limit=4
  $region2: #{encoder_forward.38} parent=0 // loop_pre_header
    _
  $region3: #{encoder_forward.38} parent=0 // loop_header
    %s9 = sphi 0, %s13
    %p10 = scmp.ge.s32.totalorder %s9, 4
    %s16 = sphi 0, %s28
    %s17 = sphi 0, %s24
    %s18 = sphi 0, %s16
    %s19 = sphi 0, %s17
    %s20 = sphi 0, %s18
    %s21 = sphi 0, %s19
    %s33 = sphi 0, %s35
    %s36 = sphi 0, %s33
    %s37 = sphi 0, %s36
    %s53 = sphi 0, %s37
    %s57 = sphi 0, %s57
    %s59 = sphi 0, %s57
    %s60 = sphi 0, %s59
    %s74 = sphi 0, %s60
    %s78 = sphi 0, %s78
    %s80 = sphi 0, %s78
    %s81 = sphi 0, %s80
    %s95 = sphi 0, %s81
    %s103 = sphi 0, %s105
    %s106 = sphi 0, %s103
    %s107 = sphi 0, %s106
    %s123 = sphi 0, %s107
  $region4: #{encoder_forward.38} parent=0 // loop_header_branch
    %12 = sbr.rel (%p10) target = $region8
  $region5: #{encoder_forward.38} parent=0 // loop_body
    %s14 = ssub.s32 %s9, 1
    %s15 = ssub.s32 %s9, 2
    %s22 = sadd.s32 1, %s17
    %p23 = scmp.ge.s32.totalorder %s22, 1
    %s24 = scalar_select %p23, 0, %s22
    %s25 = sadd.s32 1, %s16
    %s26 = scalar_select %p23, %s25, %s16
    %p27 = scmp.ge.s32.totalorder %s26, 2
    %s28 = scalar_select %p27, 0, %s26
    %s29 = ssub.s32 %s16, %s28
    %s30 = ssub.s32 %s17, %s24
    %s31 = sor.u32 %s29, %s30
    %p32 = scmp.eq.s32.totalorder %s31, 0
    %s34 = sadd.s32 %s33, 1
    %s35 = scalar_select %p32, %s33, %s34
    %p38 = pneg %p32
    %p39 = scmp.eq.s32.totalorder %s9, 1
    %p40 = por %p38, %p39
    %p41 = scmp.ne.s32.totalorder %s33, %s36
    %p42 = scmp.eq.s32.totalorder %s9, 0
    %p43 = por %p41, %p42
    %p44 = scmp.ne.s32.totalorder %s33, %s36
    %p45 = scmp.eq.s32.totalorder %s14, 1
    %p46 = por %p44, %p45
    %p47 = scmp.ne.s32.totalorder %s36, %s37
    %p48 = scmp.eq.s32.totalorder %s14, 0
    %p49 = por %p47, %p48
    %p50 = scmp.ne.s32.totalorder %s36, %s37
    %p51 = scmp.eq.s32.totalorder %s15, 1
    %p52 = por %p50, %p51
    %p54 = scmp.ne.s32.totalorder %s37, %s53
    %p55 = scmp.eq.s32.totalorder %s15, 0
    %p56 = por %p54, %p55
    %s58 = sadd.s32 %s57, 1
    %p61 = scmp.eq.s32.totalorder %s9, 1
    %p62 = scmp.ne.s32.totalorder %s57, %s59
    %p63 = scmp.eq.s32.totalorder %s9, 0
    %p64 = por %p62, %p63
    %p65 = scmp.ne.s32.totalorder %s57, %s59
    %p66 = scmp.eq.s32.totalorder %s14, 1
    %p67 = por %p65, %p66
    %p68 = scmp.ne.s32.totalorder %s59, %s60
    %p69 = scmp.eq.s32.totalorder %s14, 0
    %p70 = por %p68, %p69
    %p71 = scmp.ne.s32.totalorder %s59, %s60
    %p72 = scmp.eq.s32.totalorder %s15, 1
    %p73 = por %p71, %p72
    %p75 = scmp.ne.s32.totalorder %s60, %s74
    %p76 = scmp.eq.s32.totalorder %s15, 0
    %p77 = por %p75, %p76
    %s79 = sadd.s32 %s78, 1
    %p82 = scmp.eq.s32.totalorder %s9, 1
    %p83 = scmp.ne.s32.totalorder %s78, %s80
    %p84 = scmp.eq.s32.totalorder %s9, 0
    %p85 = por %p83, %p84
    %p86 = scmp.ne.s32.totalorder %s78, %s80
    %p87 = scmp.eq.s32.totalorder %s14, 1
    %p88 = por %p86, %p87
    %p89 = scmp.ne.s32.totalorder %s80, %s81
    %p90 = scmp.eq.s32.totalorder %s14, 0
    %p91 = por %p89, %p90
    %p92 = scmp.ne.s32.totalorder %s80, %s81
    %p93 = scmp.eq.s32.totalorder %s15, 1
    %p94 = por %p92, %p93
    %p96 = scmp.ne.s32.totalorder %s81, %s95
    %p97 = scmp.eq.s32.totalorder %s15, 0
    %p98 = por %p96, %p97
    %s99 = ssub.s32 %s16, %s28
    %s100 = ssub.s32 %s17, %s24
    %s101 = sor.u32 %s99, %s100
    %p102 = scmp.eq.s32.totalorder %s101, 0
    %s104 = sadd.s32 %s103, 1
    %s105 = scalar_select %p102, %s103, %s104
    %p108 = pneg %p102
    %p109 = scmp.eq.s32.totalorder %s9, 1
    %p110 = por %p108, %p109
    %p111 = scmp.ne.s32.totalorder %s103, %s106
    %p112 = scmp.eq.s32.totalorder %s9, 0
    %p113 = por %p111, %p112
    %p114 = scmp.ne.s32.totalorder %s103, %s106
    %p115 = scmp.eq.s32.totalorder %s14, 1
    %p116 = por %p114, %p115
    %p117 = scmp.ne.s32.totalorder %s106, %s107
    %p118 = scmp.eq.s32.totalorder %s14, 0
    %p119 = por %p117, %p118
    %p120 = scmp.ne.s32.totalorder %s106, %s107
    %p121 = scmp.eq.s32.totalorder %s15, 1
    %p122 = por %p120, %p121
    %p124 = scmp.ne.s32.totalorder %s107, %s123
    %p125 = scmp.eq.s32.totalorder %s15, 0
    %p126 = por %p124, %p125
    %p127 = scmp.le.s32.totalorder 1, %s9
    %p128 = scmp.lt.s32.totalorder %s9, 3
    %p129 = pnand %p127, %p128
    %p130 = pneg %p129
    // Predicated region
    $region9: #{encoder_forward.38} parent=5 // pred_check
      _
    $region10: #{encoder_forward.38} parent=5 // pred_check_branch
      %132 = sbr.rel (%p129) target = $region12
    $region11: #{encoder_forward.38} parent=5 // pred_region
      %s133 = ssub.s32 %s9, 1
      // Predicated region
      $region13: #{encoder_forward.38} parent=11 // pred_check
        %p134 = pneg %p70
      $region14: #{encoder_forward.38} parent=11 // pred_check_branch
        %136 = sbr.rel (%p134) target = $region16
      $region15: #{encoder_forward.38} parent=11 // pred_region
        _
      $region16: #{encoder_forward.38} parent=11 // pred_fallthru
        _
      // Predicated region
      $region17: #{encoder_forward.38} parent=11 // pred_check
        %p137 = pneg %p91
      $region18: #{encoder_forward.38} parent=11 // pred_check_branch
        %139 = sbr.rel (%p137) target = $region20
      $region19: #{encoder_forward.38} parent=11 // pred_region
        _
      $region20: #{encoder_forward.38} parent=11 // pred_fallthru
        _
    $region12: #{encoder_forward.38} parent=5 // pred_fallthru
      _
    %p140 = scmp.lt.s32.totalorder %s9, 2
    // Predicated region
    $region21: #{encoder_forward.38} parent=5 // pred_check
      %p141 = pneg %p140
    $region22: #{encoder_forward.38} parent=5 // pred_check_branch
      %143 = sbr.rel (%p141) target = $region24
    $region23: #{encoder_forward.38} parent=5 // pred_region
      // Predicated region
      $region25: #{encoder_forward.38} parent=23 // pred_check
        %p144 = pneg %p43
      $region26: #{encoder_forward.38} parent=23 // pred_check_branch
        %146 = sbr.rel (%p144) target = $region28
      $region27: #{encoder_forward.38} parent=23 // pred_region
        %s147 = smul.u32 2, %s17
        %p148 = scmp.lt.s32.totalorder %s16, 1
        %s149 = scalar_select %p148, %s16, 1
        %p150 = scmp.lt.s32.totalorder %s147, 1
        %s151 = scalar_select %p150, %s147, 1
        %s152 = smul.addr %s149, 2
        %s153 = sadd.s32 %s151, %s152
        %s154 = smul.addr %s153, 4
        %s155 = scalar_lea.vmem %s0, %s154
        %s156 = smul.u32 2, %s17
      $region28: #{encoder_forward.38} parent=23 // pred_fallthru
        _
    $region24: #{encoder_forward.38} parent=5 // pred_fallthru
      _
    %p157 = scmp.le.s32.totalorder 1, %s9
    %p158 = scmp.lt.s32.totalorder %s9, 3
    %p159 = pnand %p157, %p158
    %p160 = pneg %p159
    // Predicated region
    $region29: #{encoder_forward.38} parent=5 // pred_check
      _
    $region30: #{encoder_forward.38} parent=5 // pred_check_branch
      %162 = sbr.rel (%p159) target = $region32
    $region31: #{encoder_forward.38} parent=5 // pred_region
      %s163 = ssub.s32 %s9, 1
      %s164 = smul.u32 2, %s19
      %p165 = scmp.lt.s32.totalorder %s18, 1
      %s166 = scalar_select %p165, %s18, 1
      %p167 = scmp.lt.s32.totalorder %s164, 1
      %s168 = scalar_select %p167, %s164, 1
      %s169 = smul.addr %s166, 2
      %s170 = sadd.s32 %s168, %s169
      %s171 = smul.addr %s170, 4
      %s172 = scalar_lea.vmem %s0, %s171
      %p173 = pneg %p49
      %p174 = pneg %p46
      %p175 = pneg %p70
      %p176 = pneg %p67
      %p177 = pneg %p91
      %p178 = pneg %p88
      %p179 = pneg %p119
      %p180 = pneg %p116
      %s181 = smul.u32 2, %s19
      %p182 = scmp.lt.s32.totalorder %s18, 1
      %s183 = scalar_select %p182, %s18, 1
      %p184 = scmp.lt.s32.totalorder %s181, 1
      %s185 = scalar_select %p184, %s181, 1
      %s186 = smul.addr %s183, 2
      %s187 = sadd.s32 %s185, %s186
      %s188 = smul.addr %s187, 4
      %s189 = scalar_lea.vmem %s3, %s188
      %s190 = smul.u32 2, %s19
      %p191 = scmp.lt.s32.totalorder %s18, 1
      %s192 = scalar_select %p191, %s18, 1
      %p193 = scmp.lt.s32.totalorder %s190, 1
      %s194 = scalar_select %p193, %s190, 1
      %s195 = smul.addr %s192, 2
      %s196 = sadd.s32 %s194, %s195
      %s197 = smul.addr %s196, 4
      %s198 = scalar_lea.vmem %s0, %s197
      %s199 = smul.u32 2, %s19
      %s200 = smul.u32 2, %s19
      %p201 = scmp.lt.s32.totalorder %s18, 1
      %s202 = scalar_select %p201, %s18, 1
      %p203 = scmp.lt.s32.totalorder %s200, 1
      %s204 = scalar_select %p203, %s200, 1
      %s205 = smul.addr %s202, 2
      %s206 = sadd.s32 %s204, %s205
      %s207 = smul.addr %s206, 4
      %s208 = scalar_lea.vmem %s3, %s207
      %s209 = smul.u32 2, %s19
      %v211 = vld [vmem:[%s198] sm:$0xf]
      %v212 = vld [vmem:[%s198 + $0x4] sm:$0xf]
      %v215 = vunpack.c.l.b16 %v211
      %v216 = vunpack.c.l.b16 %v212
      %v217 = vpack.c.b16 %v216, %v215
      %v219 = vshrl.u32 %v217, 16
      %v221 = vrot.slane %v219, 7
      %v222 = vshll.u32 %v217, 16
      %v224 = vor.u32 %v221, %v222
      %vm226 = vcmask 1040384
      %vm227 = vsmask.f32 256
      %vm228 = vmand %vm226, %vm227
      %v229 = vsel %vm228, 0, %v224
      %v230 = vrot.slane %v222, 1
      %v231 = vor.u32 %v219, %v230
      %vm233 = vcmask 1047552
      %vm234 = vsmask.f32 7424
      %vm235 = vmand %vm233, %vm234
      %v236 = vsel %vm235, %v231, 0
      %s237 = scalar_lea.vmem %s1, 16
      %v238 = vld [vmem:[%s237] sm:$0xf]
      %v239 = vld [vmem:[%s237 + $0x4] sm:$0xf]
      %v240 = vld [vmem:[%s237 + $0x8] sm:$0xf]
      %v241 = vld [vmem:[%s237 + $0xc] sm:$0xf]
      %v242 = vld [vmem:[%s1] sm:$0xf]
      %v243 = vld [vmem:[%s1 + $0x4] sm:$0xf]
      %v244 = vld [vmem:[%s1 + $0x8] sm:$0xf]
      %v245 = vld [vmem:[%s1 + $0xc] sm:$0xf]
      %v250 = vunpack.c.l.b16 %v242
      %v251 = vunpack.c.l.b16 %v243
      %v252 = vunpack.c.l.b16 %v244
      %v253 = vunpack.c.l.b16 %v245
      %v254 = vpack.c.b16 %v251, %v250
      %v255 = vpack.c.b16 %v253, %v252
      %vm258 = vcmask 261120
      %v260 = vsel %vm258, %v229, 0
      %262 = vmatprep.subr.bf16.mxu0 0
      %263 = vmatpush1.bf16.msra.mxu0 %v254
      %264 = vmatprep.subr.bf16.mxu0 0
      %265 = vmatpush1.bf16.msra.mxu0 %v255
      %266 = vmatprep.subr.bf16.mxu0 0
      %267 = vmatpush1.bf16.msra.mxu0 0
      %268 = vmatprep.subr.bf16.mxu0 0
      %269 = vmatpush1.bf16.msra.mxu0 0
      %270 = vmatprep.subr.bf16.mxu0 0
      %271 = vmatpush1.bf16.msra.mxu0 0
      %272 = vmatprep.subr.bf16.mxu0 0
      %273 = vmatpush1.bf16.msra.mxu0 0
      %274 = vmatprep.subr.bf16.mxu0 0
      %275 = vmatpush1.bf16.msra.mxu0 0
      %276 = vmatprep.subr.bf16.mxu0 0
      %277 = vmatpush1.bf16.msra.mxu0 0
      %278 = vmatprep.subr.bf16.mxu0 0
      %279 = vmatpush1.bf16.msra.mxu0 0
      %280 = vmatprep.subr.bf16.mxu0 0
      %281 = vmatpush1.bf16.msra.mxu0 0
      %282 = vmatprep.subr.bf16.mxu0 0
      %283 = vmatpush1.bf16.msra.mxu0 0
      %284 = vmatprep.subr.bf16.mxu0 0
      %285 = vmatpush1.bf16.msra.mxu0 0
      %286 = vmatprep.subr.bf16.mxu0 0
      %287 = vmatpush1.bf16.msra.mxu0 0
      %288 = vmatprep.subr.bf16.mxu0 0
      %289 = vmatpush1.bf16.msra.mxu0 0
      %290 = vmatprep.subr.bf16.mxu0 0
      %291 = vmatpush1.bf16.msra.mxu0 0
      %292 = vmatprep.subr.bf16.mxu0 0
      %293 = vmatpush1.bf16.msra.mxu0 0
      %294 = vmatprep.mubr.bf16.mxu0 0
      %295 = vmatmul.mubr.bf16.gmra.mrb[0].mxu0 %v260
      %v296 = vpop.f32.mrb[0].mxu0
      %v297 = vadd.f32 0.0, %v296
      %v298 = vpop.f32.mrb[0].mxu0
      %v299 = vpop.f32.mrb[0].mxu0
      %v300 = vadd.f32 0.0, %v299
      %v301 = vpop.f32.mrb[0].mxu0
      %302 = vdwg.mxu0
      %v307 = vunpack.c.l.b16 %v238
      %v308 = vunpack.c.l.b16 %v239
      %v309 = vunpack.c.l.b16 %v240
      %v310 = vunpack.c.l.b16 %v241
      %v311 = vpack.c.b16 %v308, %v307
      %v312 = vpack.c.b16 %v310, %v309
      %v315 = vsel %vm258, %v217, 0
      %317 = vmatprep.subr.bf16.mxu0 0
      %318 = vmatpush1.bf16.msra.mxu0 %v311
      %319 = vmatprep.subr.bf16.mxu0 0
      %320 = vmatpush1.bf16.msra.mxu0 %v312
      %321 = vmatprep.subr.bf16.mxu0 0
      %322 = vmatpush1.bf16.msra.mxu0 0
      %323 = vmatprep.subr.bf16.mxu0 0
      %324 = vmatpush1.bf16.msra.mxu0 0
      %325 = vmatprep.subr.bf16.mxu0 0
      %326 = vmatpush1.bf16.msra.mxu0 0
      %327 = vmatprep.subr.bf16.mxu0 0
      %328 = vmatpush1.bf16.msra.mxu0 0
      %329 = vmatprep.subr.bf16.mxu0 0
      %330 = vmatpush1.bf16.msra.mxu0 0
      %331 = vmatprep.subr.bf16.mxu0 0
      %332 = vmatpush1.bf16.msra.mxu0 0
      %333 = vmatprep.subr.bf16.mxu0 0
      %334 = vmatpush1.bf16.msra.mxu0 0
      %335 = vmatprep.subr.bf16.mxu0 0
      %336 = vmatpush1.bf16.msra.mxu0 0
      %337 = vmatprep.subr.bf16.mxu0 0
      %338 = vmatpush1.bf16.msra.mxu0 0
      %339 = vmatprep.subr.bf16.mxu0 0
      %340 = vmatpush1.bf16.msra.mxu0 0
      %341 = vmatprep.subr.bf16.mxu0 0
      %342 = vmatpush1.bf16.msra.mxu0 0
      %343 = vmatprep.subr.bf16.mxu0 0
      %344 = vmatpush1.bf16.msra.mxu0 0
      %345 = vmatprep.subr.bf16.mxu0 0
      %346 = vmatpush1.bf16.msra.mxu0 0
      %347 = vmatprep.subr.bf16.mxu0 0
      %348 = vmatpush1.bf16.msra.mxu0 0
      %349 = vmatprep.mubr.bf16.mxu0 0
      %350 = vmatmul.mubr.bf16.gmra.mrb[0].mxu0 %v315
      %v351 = vpop.f32.mrb[0].mxu0
      %v352 = vadd.f32 %v297, %v351
      %v353 = vpop.f32.mrb[0].mxu0
      %v354 = vpop.f32.mrb[0].mxu0
      %v355 = vadd.f32 %v300, %v354
      %v356 = vpop.f32.mrb[0].mxu0
      %357 = vdwg.mxu0
      %s358 = scalar_lea.vmem %s1, 32
      %v359 = vld [vmem:[%s358] sm:$0xf]
      %v360 = vld [vmem:[%s358 + $0x4] sm:$0xf]
      %v361 = vld [vmem:[%s358 + $0x8] sm:$0xf]
      %v362 = vld [vmem:[%s358 + $0xc] sm:$0xf]
      %v367 = vunpack.c.l.b16 %v359
      %v368 = vunpack.c.l.b16 %v360
      %v369 = vunpack.c.l.b16 %v361
      %v370 = vunpack.c.l.b16 %v362
      %v371 = vpack.c.b16 %v368, %v367
      %v372 = vpack.c.b16 %v370, %v369
      %v376 = vsel %vm258, %v236, 0
      %378 = vmatprep.subr.bf16.mxu0 0
      %379 = vmatpush1.bf16.msra.mxu0 %v371
      %380 = vmatprep.subr.bf16.mxu0 0
      %381 = vmatpush1.bf16.msra.mxu0 %v372
      %382 = vmatprep.subr.bf16.mxu0 0
      %383 = vmatpush1.bf16.msra.mxu0 0
      %384 = vmatprep.subr.bf16.mxu0 0
      %385 = vmatpush1.bf16.msra.mxu0 0
      %386 = vmatprep.subr.bf16.mxu0 0
      %387 = vmatpush1.bf16.msra.mxu0 0
      %388 = vmatprep.subr.bf16.mxu0 0
      %389 = vmatpush1.bf16.msra.mxu0 0
      %390 = vmatprep.subr.bf16.mxu0 0
      %391 = vmatpush1.bf16.msra.mxu0 0
      %392 = vmatprep.subr.bf16.mxu0 0
      %393 = vmatpush1.bf16.msra.mxu0 0
      %394 = vmatprep.subr.bf16.mxu0 0
      %395 = vmatpush1.bf16.msra.mxu0 0
      %396 = vmatprep.subr.bf16.mxu0 0
      %397 = vmatpush1.bf16.msra.mxu0 0
      %398 = vmatprep.subr.bf16.mxu0 0
      %399 = vmatpush1.bf16.msra.mxu0 0
      %400 = vmatprep.subr.bf16.mxu0 0
      %401 = vmatpush1.bf16.msra.mxu0 0
      %402 = vmatprep.subr.bf16.mxu0 0
      %403 = vmatpush1.bf16.msra.mxu0 0
      %404 = vmatprep.subr.bf16.mxu0 0
      %405 = vmatpush1.bf16.msra.mxu0 0
      %406 = vmatprep.subr.bf16.mxu0 0
      %407 = vmatpush1.bf16.msra.mxu0 0
      %408 = vmatprep.subr.bf16.mxu0 0
      %409 = vmatpush1.bf16.msra.mxu0 0
      %410 = vmatprep.mubr.bf16.mxu0 0
      %411 = vmatmul.mubr.bf16.gmra.mrb[0].mxu0 %v376
      %v412 = vpop.f32.mrb[0].mxu0
      %v413 = vadd.f32 0.0, %v412
      %v414 = vpop.f32.mrb[0].mxu0
      %v415 = vpop.f32.mrb[0].mxu0
      %v416 = vadd.f32 0.0, %v415
      %v417 = vpop.f32.mrb[0].mxu0
      %418 = vdwg.mxu0
      %v419 = vadd.f32 %v352, %v413
      %v420 = vadd.f32 %v355, %v416
      %v421 = vld [vmem:[%s2] sm:$0x1]
      %v423 = vlaneseq
      %v424 = vshrl.u32 %v423, 7
      %v425 = vsub.s32 0, %v424
      %v426 = vrot.slane %v421, %v425
      %v428 = vadd.f32 %v419, %v426
      %v429 = vadd.f32 %v420, %v426
      %v430 = vpack.c.bf16 %v429, %v428
      %v432 = vunpack.c.l.b16 %v430
      %v433 = vunpack.c.h.b16 %v430
      %v434 = vpack.c.b16 %v432, %v432
      %v435 = vpack.c.b16 %v433, %v433
      %vm438 = vcmask 257024
      %439 = vst.msk [vmem:[%s208] sm:$0xf] %vm438, %v434
      %440 = vst.msk [vmem:[%s208 + $0x4] sm:$0xf] %vm438, %v435
      %s441 = smul.u32 2, %s19
      %p442 = scmp.lt.s32.totalorder %s18, 1
      %s443 = scalar_select %p442, %s18, 1
      %p444 = scmp.lt.s32.totalorder %s441, 1
      %s445 = scalar_select %p444, %s441, 1
      %s446 = smul.addr %s443, 2
      %s447 = sadd.s32 %s445, %s446
      %s448 = smul.addr %s447, 4
      %s449 = scalar_lea.vmem %s3, %s448
      // Predicated region
      $region33: #{encoder_forward.38} parent=31 // pred_check
        %p450 = pneg %p116
      $region34: #{encoder_forward.38} parent=31 // pred_check_branch
        %452 = sbr.rel (%p450) target = $region36
      $region35: #{encoder_forward.38} parent=31 // pred_region
        %s453 = smul.u32 2, %s19
      $region36: #{encoder_forward.38} parent=31 // pred_fallthru
        _
    $region32: #{encoder_forward.38} parent=5 // pred_fallthru
      _
    %p454 = scmp.le.s32.totalorder 2, %s9
    // Predicated region
    $region37: #{encoder_forward.38} parent=5 // pred_check
      %p455 = pneg %p454
    $region38: #{encoder_forward.38} parent=5 // pred_check_branch
      %457 = sbr.rel (%p455) target = $region40
    $region39: #{encoder_forward.38} parent=5 // pred_region
      %s458 = ssub.s32 %s9, 2
      // Predicated region
      $region41: #{encoder_forward.38} parent=39 // pred_check
        %p459 = pneg %p122
      $region42: #{encoder_forward.38} parent=39 // pred_check_branch
        %461 = sbr.rel (%p459) target = $region44
      $region43: #{encoder_forward.38} parent=39 // pred_region
        %s462 = smul.u32 2, %s21
        %p463 = scmp.lt.s32.totalorder %s20, 1
        %s464 = scalar_select %p463, %s20, 1
        %p465 = scmp.lt.s32.totalorder %s462, 1
        %s466 = scalar_select %p465, %s462, 1
        %s467 = smul.addr %s464, 2
        %s468 = sadd.s32 %s466, %s467
        %s469 = smul.addr %s468, 4
        %s470 = scalar_lea.vmem %s3, %s469
      $region44: #{encoder_forward.38} parent=39 // pred_fallthru
        _
    $region40: #{encoder_forward.38} parent=5 // pred_fallthru
      _
  $region6: #{encoder_forward.38} parent=0 // loop_footer
    %s13 = sadd.s32 1, %s9
  $region7: #{encoder_forward.38} parent=0 // loop_footer_branch
    %8 = sbr.rel target = $region3
  $region8: #{encoder_forward.38} parent=0 // loop_exit
    _

// kernel: encoder_forward.41
$region0: #{encoder_forward.41}
  #allocation0 [shape = 'u32[]', space=smem, size = 0x4, offset = 0x4, fixed_abs, tag = 'smem constant byte address 0x4 - core index']
  #allocation1 [shape = 'u32[144,128]{1,0:T(1,128)}', space=vmem, size = 0x12000, scoped, tag = 'internal scratch']
  %s0 = inlined_call_operand.vmem [shape: bf16[2,16,32], index: 0, kind: input, shape index: {}]
  %s1 = inlined_call_operand.vmem [shape: bf16[3,32,32], index: 1, kind: input, shape index: {}]
  %s2 = inlined_call_operand.vmem [shape: f32[1,32], index: 2, kind: input, shape index: {}]
  %s3 = inlined_call_operand.vmem [shape: bf16[2,16,32], index: 3, kind: input, shape index: {}]
  %s4 = inlined_call_operand.vmem [shape: bf16[2,16,32], index: 4, kind: output, shape index: {}]
  %s5 = sld [smem:[#allocation0]]
  $region49: #{encoder_forward.41} parent=0
    _
  %s7 = ssub.s32 1, %s5
  %s8 = scalar_select 0, %s7, %s5
  loop: start=0, step=1, limit=4
  $region2: #{encoder_forward.41} parent=0 // loop_pre_header
    _
  $region3: #{encoder_forward.41} parent=0 // loop_header
    %s10 = sphi 0, %s14
    %p11 = scmp.ge.s32.totalorder %s10, 4
    %s17 = sphi 0, %s29
    %s18 = sphi 0, %s25
    %s19 = sphi 0, %s17
    %s20 = sphi 0, %s18
    %s21 = sphi 0, %s19
    %s22 = sphi 0, %s20
    %s34 = sphi 0, %s36
    %s37 = sphi 0, %s34
    %s38 = sphi 0, %s37
    %s54 = sphi 0, %s38
    %s58 = sphi 0, %s58
    %s60 = sphi 0, %s58
    %s61 = sphi 0, %s60
    %s75 = sphi 0, %s61
    %s79 = sphi 0, %s79
    %s81 = sphi 0, %s79
    %s82 = sphi 0, %s81
    %s96 = sphi 0, %s82
    %s104 = sphi 0, %s106
    %s107 = sphi 0, %s104
    %s108 = sphi 0, %s107
    %s124 = sphi 0, %s108
    %s132 = sphi 0, %s134
    %s135 = sphi 0, %s132
    %s136 = sphi 0, %s135
    %s152 = sphi 0, %s136
  $region4: #{encoder_forward.41} parent=0 // loop_header_branch
    %13 = sbr.rel (%p11) target = $region8
  $region5: #{encoder_forward.41} parent=0 // loop_body
    %s15 = ssub.s32 %s10, 1
    %s16 = ssub.s32 %s10, 2
    %s23 = sadd.s32 1, %s18
    %p24 = scmp.ge.s32.totalorder %s23, 1
    %s25 = scalar_select %p24, 0, %s23
    %s26 = sadd.s32 1, %s17
    %s27 = scalar_select %p24, %s26, %s17
    %p28 = scmp.ge.s32.totalorder %s27, 2
    %s29 = scalar_select %p28, 0, %s27
    %s30 = ssub.s32 %s17, %s29
    %s31 = ssub.s32 %s18, %s25
    %s32 = sor.u32 %s30, %s31
    %p33 = scmp.eq.s32.totalorder %s32, 0
    %s35 = sadd.s32 %s34, 1
    %s36 = scalar_select %p33, %s34, %s35
    %p39 = pneg %p33
    %p40 = scmp.eq.s32.totalorder %s10, 1
    %p41 = por %p39, %p40
    %p42 = scmp.ne.s32.totalorder %s34, %s37
    %p43 = scmp.eq.s32.totalorder %s10, 0
    %p44 = por %p42, %p43
    %p45 = scmp.ne.s32.totalorder %s34, %s37
    %p46 = scmp.eq.s32.totalorder %s15, 1
    %p47 = por %p45, %p46
    %p48 = scmp.ne.s32.totalorder %s37, %s38
    %p49 = scmp.eq.s32.totalorder %s15, 0
    %p50 = por %p48, %p49
    %p51 = scmp.ne.s32.totalorder %s37, %s38
    %p52 = scmp.eq.s32.totalorder %s16, 1
    %p53 = por %p51, %p52
    %p55 = scmp.ne.s32.totalorder %s38, %s54
    %p56 = scmp.eq.s32.totalorder %s16, 0
    %p57 = por %p55, %p56
    %s59 = sadd.s32 %s58, 1
    %p62 = scmp.eq.s32.totalorder %s10, 1
    %p63 = scmp.ne.s32.totalorder %s58, %s60
    %p64 = scmp.eq.s32.totalorder %s10, 0
    %p65 = por %p63, %p64
    %p66 = scmp.ne.s32.totalorder %s58, %s60
    %p67 = scmp.eq.s32.totalorder %s15, 1
    %p68 = por %p66, %p67
    %p69 = scmp.ne.s32.totalorder %s60, %s61
    %p70 = scmp.eq.s32.totalorder %s15, 0
    %p71 = por %p69, %p70
    %p72 = scmp.ne.s32.totalorder %s60, %s61
    %p73 = scmp.eq.s32.totalorder %s16, 1
    %p74 = por %p72, %p73
    %p76 = scmp.ne.s32.totalorder %s61, %s75
    %p77 = scmp.eq.s32.totalorder %s16, 0
    %p78 = por %p76, %p77
    %s80 = sadd.s32 %s79, 1
    %p83 = scmp.eq.s32.totalorder %s10, 1
    %p84 = scmp.ne.s32.totalorder %s79, %s81
    %p85 = scmp.eq.s32.totalorder %s10, 0
    %p86 = por %p84, %p85
    %p87 = scmp.ne.s32.totalorder %s79, %s81
    %p88 = scmp.eq.s32.totalorder %s15, 1
    %p89 = por %p87, %p88
    %p90 = scmp.ne.s32.totalorder %s81, %s82
    %p91 = scmp.eq.s32.totalorder %s15, 0
    %p92 = por %p90, %p91
    %p93 = scmp.ne.s32.totalorder %s81, %s82
    %p94 = scmp.eq.s32.totalorder %s16, 1
    %p95 = por %p93, %p94
    %p97 = scmp.ne.s32.totalorder %s82, %s96
    %p98 = scmp.eq.s32.totalorder %s16, 0
    %p99 = por %p97, %p98
    %s100 = ssub.s32 %s17, %s29
    %s101 = ssub.s32 %s18, %s25
    %s102 = sor.u32 %s100, %s101
    %p103 = scmp.eq.s32.totalorder %s102, 0
    %s105 = sadd.s32 %s104, 1
    %s106 = scalar_select %p103, %s104, %s105
    %p109 = pneg %p103
    %p110 = scmp.eq.s32.totalorder %s10, 1
    %p111 = por %p109, %p110
    %p112 = scmp.ne.s32.totalorder %s104, %s107
    %p113 = scmp.eq.s32.totalorder %s10, 0
    %p114 = por %p112, %p113
    %p115 = scmp.ne.s32.totalorder %s104, %s107
    %p116 = scmp.eq.s32.totalorder %s15, 1
    %p117 = por %p115, %p116
    %p118 = scmp.ne.s32.totalorder %s107, %s108
    %p119 = scmp.eq.s32.totalorder %s15, 0
    %p120 = por %p118, %p119
    %p121 = scmp.ne.s32.totalorder %s107, %s108
    %p122 = scmp.eq.s32.totalorder %s16, 1
    %p123 = por %p121, %p122
    %p125 = scmp.ne.s32.totalorder %s108, %s124
    %p126 = scmp.eq.s32.totalorder %s16, 0
    %p127 = por %p125, %p126
    %s128 = ssub.s32 %s17, %s29
    %s129 = ssub.s32 %s18, %s25
    %s130 = sor.u32 %s128, %s129
    %p131 = scmp.eq.s32.totalorder %s130, 0
    %s133 = sadd.s32 %s132, 1
    %s134 = scalar_select %p131, %s132, %s133
    %p137 = pneg %p131
    %p138 = scmp.eq.s32.totalorder %s10, 1
    %p139 = por %p137, %p138
    %p140 = scmp.ne.s32.totalorder %s132, %s135
    %p141 = scmp.eq.s32.totalorder %s10, 0
    %p142 = por %p140, %p141
    %p143 = scmp.ne.s32.totalorder %s132, %s135
    %p144 = scmp.eq.s32.totalorder %s15, 1
    %p145 = por %p143, %p144
    %p146 = scmp.ne.s32.totalorder %s135, %s136
    %p147 = scmp.eq.s32.totalorder %s15, 0
    %p148 = por %p146, %p147
    %p149 = scmp.ne.s32.totalorder %s135, %s136
    %p150 = scmp.eq.s32.totalorder %s16, 1
    %p151 = por %p149, %p150
    %p153 = scmp.ne.s32.totalorder %s136, %s152
    %p154 = scmp.eq.s32.totalorder %s16, 0
    %p155 = por %p153, %p154
    %p156 = scmp.le.s32.totalorder 1, %s10
    %p157 = scmp.lt.s32.totalorder %s10, 3
    %p158 = pnand %p156, %p157
    %p159 = pneg %p158
    // Predicated region
    $region9: #{encoder_forward.41} parent=5 // pred_check
      _
    $region10: #{encoder_forward.41} parent=5 // pred_check_branch
      %161 = sbr.rel (%p158) target = $region12
    $region11: #{encoder_forward.41} parent=5 // pred_region
      %s162 = ssub.s32 %s10, 1
      // Predicated region
      $region13: #{encoder_forward.41} parent=11 // pred_check
        %p163 = pneg %p71
      $region14: #{encoder_forward.41} parent=11 // pred_check_branch
        %165 = sbr.rel (%p163) target = $region16
      $region15: #{encoder_forward.41} parent=11 // pred_region
        _
      $region16: #{encoder_forward.41} parent=11 // pred_fallthru
        _
      // Predicated region
      $region17: #{encoder_forward.41} parent=11 // pred_check
        %p166 = pneg %p92
      $region18: #{encoder_forward.41} parent=11 // pred_check_branch
        %168 = sbr.rel (%p166) target = $region20
      $region19: #{encoder_forward.41} parent=11 // pred_region
        _
      $region20: #{encoder_forward.41} parent=11 // pred_fallthru
        _
    $region12: #{encoder_forward.41} parent=5 // pred_fallthru
      _
    %p169 = scmp.lt.s32.totalorder %s10, 2
    // Predicated region
    $region21: #{encoder_forward.41} parent=5 // pred_check
      %p170 = pneg %p169
    $region22: #{encoder_forward.41} parent=5 // pred_check_branch
      %172 = sbr.rel (%p170) target = $region24
    $region23: #{encoder_forward.41} parent=5 // pred_region
      // Predicated region
      $region25: #{encoder_forward.41} parent=23 // pred_check
        %p173 = pneg %p44
      $region26: #{encoder_forward.41} parent=23 // pred_check_branch
        %175 = sbr.rel (%p173) target = $region28
      $region27: #{encoder_forward.41} parent=23 // pred_region
        %s176 = smul.u32 2, %s18
        %p177 = scmp.lt.s32.totalorder %s17, 1
        %s178 = scalar_select %p177, %s17, 1
        %p179 = scmp.lt.s32.totalorder %s176, 1
        %s180 = scalar_select %p179, %s176, 1
        %s181 = smul.addr %s178, 2
        %s182 = sadd.s32 %s180, %s181
        %s183 = smul.addr %s182, 4
        %s184 = scalar_lea.vmem %s0, %s183
        %s185 = smul.u32 2, %s18
      $region28: #{encoder_forward.41} parent=23 // pred_fallthru
        _
      // Predicated region
      $region29: #{encoder_forward.41} parent=23 // pred_check
        %p186 = pneg %p114
      $region30: #{encoder_forward.41} parent=23 // pred_check_branch
        %188 = sbr.rel (%p186) target = $region32
      $region31: #{encoder_forward.41} parent=23 // pred_region
        %s189 = smul.u32 2, %s18
        %p190 = scmp.lt.s32.totalorder %s17, 1
        %s191 = scalar_select %p190, %s17, 1
        %p192 = scmp.lt.s32.totalorder %s189, 1
        %s193 = scalar_select %p192, %s189, 1
        %s194 = smul.addr %s191, 2
        %s195 = sadd.s32 %s193, %s194
        %s196 = smul.addr %s195, 4
        %s197 = scalar_lea.vmem %s3, %s196
        %s198 = smul.u32 2, %s18
      $region32: #{encoder_forward.41} parent=23 // pred_fallthru
        _
    $region24: #{encoder_forward.41} parent=5 // pred_fallthru
      _
    %p199 = scmp.le.s32.totalorder 1, %s10
    %p200 = scmp.lt.s32.totalorder %s10, 3
    %p201 = pnand %p199, %p200
    %p202 = pneg %p201
    // Predicated region
    $region33: #{encoder_forward.41} parent=5 // pred_check
      _
    $region34: #{encoder_forward.41} parent=5 // pred_check_branch
      %204 = sbr.rel (%p201) target = $region36
    $region35: #{encoder_forward.41} parent=5 // pred_region
      %s205 = ssub.s32 %s10, 1
      %s206 = smul.u32 2, %s20
      %p207 = scmp.lt.s32.totalorder %s19, 1
      %s208 = scalar_select %p207, %s19, 1
      %p209 = scmp.lt.s32.totalorder %s206, 1
      %s210 = scalar_select %p209, %s206, 1
      %s211 = smul.addr %s208, 2
      %s212 = sadd.s32 %s210, %s211
      %s213 = smul.addr %s212, 4
      %s214 = scalar_lea.vmem %s0, %s213
      %p215 = pneg %p50
      %p216 = pneg %p47
      %p217 = pneg %p71
      %p218 = pneg %p68
      %p219 = pneg %p92
      %p220 = pneg %p89
      %s221 = smul.u32 2, %s20
      %p222 = scmp.lt.s32.totalorder %s19, 1
      %s223 = scalar_select %p222, %s19, 1
      %p224 = scmp.lt.s32.totalorder %s221, 1
      %s225 = scalar_select %p224, %s221, 1
      %s226 = smul.addr %s223, 2
      %s227 = sadd.s32 %s225, %s226
      %s228 = smul.addr %s227, 4
      %s229 = scalar_lea.vmem %s3, %s228
      %p230 = pneg %p120
      %p231 = pneg %p117
      %p232 = pneg %p148
      %p233 = pneg %p145
      %s234 = smul.u32 2, %s20
      %p235 = scmp.lt.s32.totalorder %s19, 1
      %s236 = scalar_select %p235, %s19, 1
      %p237 = scmp.lt.s32.totalorder %s234, 1
      %s238 = scalar_select %p237, %s234, 1
      %s239 = smul.addr %s236, 2
      %s240 = sadd.s32 %s238, %s239
      %s241 = smul.addr %s240, 4
      %s242 = scalar_lea.vmem %s4, %s241
      %s243 = smul.u32 2, %s20
      %p244 = scmp.lt.s32.totalorder %s19, 1
      %s245 = scalar_select %p244, %s19, 1
      %p246 = scmp.lt.s32.totalorder %s243, 1
      %s247 = scalar_select %p246, %s243, 1
      %s248 = smul.addr %s245, 2
      %s249 = sadd.s32 %s247, %s248
      %s250 = smul.addr %s249, 4
      %s251 = scalar_lea.vmem %s0, %s250
      %s252 = smul.u32 2, %s20
      %s253 = smul.u32 2, %s20
      %p254 = scmp.lt.s32.totalorder %s19, 1
      %s255 = scalar_select %p254, %s19, 1
      %p256 = scmp.lt.s32.totalorder %s253, 1
      %s257 = scalar_select %p256, %s253, 1
      %s258 = smul.addr %s255, 2
      %s259 = sadd.s32 %s257, %s258
      %s260 = smul.addr %s259, 4
      %s261 = scalar_lea.vmem %s3, %s260
      %s262 = smul.u32 2, %s20
      %s263 = smul.u32 2, %s20
      %p264 = scmp.lt.s32.totalorder %s19, 1
      %s265 = scalar_select %p264, %s19, 1
      %p266 = scmp.lt.s32.totalorder %s263, 1
      %s267 = scalar_select %p266, %s263, 1
      %s268 = smul.addr %s265, 2
      %s269 = sadd.s32 %s267, %s268
      %s270 = smul.addr %s269, 4
      %s271 = scalar_lea.vmem %s4, %s270
      %s272 = smul.u32 2, %s20
      %v274 = vld [vmem:[%s251] sm:$0xf]
      %v275 = vld [vmem:[%s251 + $0x4] sm:$0xf]
      %v278 = vunpack.c.l.b16 %v274
      %v279 = vunpack.c.l.b16 %v275
      %v280 = vpack.c.b16 %v279, %v278
      %v282 = vshrl.u32 %v280, 16
      %v284 = vrot.slane %v282, 7
      %v285 = vshll.u32 %v280, 16
      %v287 = vor.u32 %v284, %v285
      %vm289 = vcmask 1040384
      %vm290 = vsmask.f32 256
      %vm291 = vmand %vm289, %vm290
      %v292 = vsel %vm291, 0, %v287
      %v293 = vrot.slane %v285, 1
      %v294 = vor.u32 %v282, %v293
      %vm296 = vcmask 1047552
      %vm297 = vsmask.f32 7424
      %vm298 = vmand %vm296, %vm297
      %v299 = vsel %vm298, %v294, 0
      %s300 = scalar_lea.vmem %s1, 16
      %v301 = vld [vmem:[%s300] sm:$0xf]
      %v302 = vld [vmem:[%s300 + $0x4] sm:$0xf]
      %v303 = vld [vmem:[%s300 + $0x8] sm:$0xf]
      %v304 = vld [vmem:[%s300 + $0xc] sm:$0xf]
      %v305 = vld [vmem:[%s1] sm:$0xf]
      %v306 = vld [vmem:[%s1 + $0x4] sm:$0xf]
      %v307 = vld [vmem:[%s1 + $0x8] sm:$0xf]
      %v308 = vld [vmem:[%s1 + $0xc] sm:$0xf]
      %v313 = vunpack.c.l.b16 %v305
      %v314 = vunpack.c.l.b16 %v306
      %v315 = vunpack.c.l.b16 %v307
      %v316 = vunpack.c.l.b16 %v308
      %v317 = vpack.c.b16 %v314, %v313
      %v318 = vpack.c.b16 %v316, %v315
      %vm321 = vcmask 261120
      %v323 = vsel %vm321, %v292, 0
      %325 = vmatprep.subr.bf16.mxu0 0
      %326 = vmatpush1.bf16.msra.mxu0 %v317
      %327 = vmatprep.subr.bf16.mxu0 0
      %328 = vmatpush1.bf16.msra.mxu0 %v318
      %329 = vmatprep.subr.bf16.mxu0 0
      %330 = vmatpush1.bf16.msra.mxu0 0
      %331 = vmatprep.subr.bf16.mxu0 0
      %332 = vmatpush1.bf16.msra.mxu0 0
      %333 = vmatprep.subr.bf16.mxu0 0
      %334 = vmatpush1.bf16.msra.mxu0 0
      %335 = vmatprep.subr.bf16.mxu0 0
      %336 = vmatpush1.bf16.msra.mxu0 0
      %337 = vmatprep.subr.bf16.mxu0 0
      %338 = vmatpush1.bf16.msra.mxu0 0
      %339 = vmatprep.subr.bf16.mxu0 0
      %340 = vmatpush1.bf16.msra.mxu0 0
      %341 = vmatprep.subr.bf16.mxu0 0
      %342 = vmatpush1.bf16.msra.mxu0 0
      %343 = vmatprep.subr.bf16.mxu0 0
      %344 = vmatpush1.bf16.msra.mxu0 0
      %345 = vmatprep.subr.bf16.mxu0 0
      %346 = vmatpush1.bf16.msra.mxu0 0
      %347 = vmatprep.subr.bf16.mxu0 0
      %348 = vmatpush1.bf16.msra.mxu0 0
      %349 = vmatprep.subr.bf16.mxu0 0
      %350 = vmatpush1.bf16.msra.mxu0 0
      %351 = vmatprep.subr.bf16.mxu0 0
      %352 = vmatpush1.bf16.msra.mxu0 0
      %353 = vmatprep.subr.bf16.mxu0 0
      %354 = vmatpush1.bf16.msra.mxu0 0
      %355 = vmatprep.subr.bf16.mxu0 0
      %356 = vmatpush1.bf16.msra.mxu0 0
      %357 = vmatprep.mubr.bf16.mxu0 0
      %358 = vmatmul.mubr.bf16.gmra.mrb[0].mxu0 %v323
      %v359 = vpop.f32.mrb[0].mxu0
      %v360 = vadd.f32 0.0, %v359
      %v361 = vpop.f32.mrb[0].mxu0
      %v362 = vpop.f32.mrb[0].mxu0
      %v363 = vadd.f32 0.0, %v362
      %v364 = vpop.f32.mrb[0].mxu0
      %365 = vdwg.mxu0
      %v370 = vunpack.c.l.b16 %v301
      %v371 = vunpack.c.l.b16 %v302
      %v372 = vunpack.c.l.b16 %v303
      %v373 = vunpack.c.l.b16 %v304
      %v374 = vpack.c.b16 %v371, %v370
      %v375 = vpack.c.b16 %v373, %v372
      %v378 = vsel %vm321, %v280, 0
      %380 = vmatprep.subr.bf16.mxu0 0
      %381 = vmatpush1.bf16.msra.mxu0 %v374
      %382 = vmatprep.subr.bf16.mxu0 0
      %383 = vmatpush1.bf16.msra.mxu0 %v375
      %384 = vmatprep.subr.bf16.mxu0 0
      %385 = vmatpush1.bf16.msra.mxu0 0
      %386 = vmatprep.subr.bf16.mxu0 0
      %387 = vmatpush1.bf16.msra.mxu0 0
      %388 = vmatprep.subr.bf16.mxu0 0
      %389 = vmatpush1.bf16.msra.mxu0 0
      %390 = vmatprep.subr.bf16.mxu0 0
      %391 = vmatpush1.bf16.msra.mxu0 0
      %392 = vmatprep.subr.bf16.mxu0 0
      %393 = vmatpush1.bf16.msra.mxu0 0
      %394 = vmatprep.subr.bf16.mxu0 0
      %395 = vmatpush1.bf16.msra.mxu0 0
      %396 = vmatprep.subr.bf16.mxu0 0
      %397 = vmatpush1.bf16.msra.mxu0 0
      %398 = vmatprep.subr.bf16.mxu0 0
      %399 = vmatpush1.bf16.msra.mxu0 0
      %400 = vmatprep.subr.bf16.mxu0 0
      %401 = vmatpush1.bf16.msra.mxu0 0
      %402 = vmatprep.subr.bf16.mxu0 0
      %403 = vmatpush1.bf16.msra.mxu0 0
      %404 = vmatprep.subr.bf16.mxu0 0
      %405 = vmatpush1.bf16.msra.mxu0 0
      %406 = vmatprep.subr.bf16.mxu0 0
      %407 = vmatpush1.bf16.msra.mxu0 0
      %408 = vmatprep.subr.bf16.mxu0 0
      %409 = vmatpush1.bf16.msra.mxu0 0
      %410 = vmatprep.subr.bf16.mxu0 0
      %411 = vmatpush1.bf16.msra.mxu0 0
      %412 = vmatprep.mubr.bf16.mxu0 0
      %413 = vmatmul.mubr.bf16.gmra.mrb[0].mxu0 %v378
      %v414 = vpop.f32.mrb[0].mxu0
      %v415 = vadd.f32 %v360, %v414
      %v416 = vpop.f32.mrb[0].mxu0
      %v417 = vpop.f32.mrb[0].mxu0
      %v418 = vadd.f32 %v363, %v417
      %v419 = vpop.f32.mrb[0].mxu0
      %420 = vdwg.mxu0
      %s421 = scalar_lea.vmem %s1, 32
      %v422 = vld [vmem:[%s421] sm:$0xf]
      %v423 = vld [vmem:[%s421 + $0x4] sm:$0xf]
      %v424 = vld [vmem:[%s421 + $0x8] sm:$0xf]
      %v425 = vld [vmem:[%s421 + $0xc] sm:$0xf]
      %v430 = vunpack.c.l.b16 %v422
      %v431 = vunpack.c.l.b16 %v423
      %v432 = vunpack.c.l.b16 %v424
      %v433 = vunpack.c.l.b16 %v425
      %v434 = vpack.c.b16 %v431, %v430
      %v435 = vpack.c.b16 %v433, %v432
      %v439 = vsel %vm321, %v299, 0
      %441 = vmatprep.subr.bf16.mxu0 0
      %442 = vmatpush1.bf16.msra.mxu0 %v434
      %443 = vmatprep.subr.bf16.mxu0 0
      %444 = vmatpush1.bf16.msra.mxu0 %v435
      %445 = vmatprep.subr.bf16.mxu0 0
      %446 = vmatpush1.bf16.msra.mxu0 0
      %447 = vmatprep.subr.bf16.mxu0 0
      %448 = vmatpush1.bf16.msra.mxu0 0
      %449 = vmatprep.subr.bf16.mxu0 0
      %450 = vmatpush1.bf16.msra.mxu0 0
      %451 = vmatprep.subr.bf16.mxu0 0
      %452 = vmatpush1.bf16.msra.mxu0 0
      %453 = vmatprep.subr.bf16.mxu0 0
      %454 = vmatpush1.bf16.msra.mxu0 0
      %455 = vmatprep.subr.bf16.mxu0 0
      %456 = vmatpush1.bf16.msra.mxu0 0
      %457 = vmatprep.subr.bf16.mxu0 0
      %458 = vmatpush1.bf16.msra.mxu0 0
      %459 = vmatprep.subr.bf16.mxu0 0
      %460 = vmatpush1.bf16.msra.mxu0 0
      %461 = vmatprep.subr.bf16.mxu0 0
      %462 = vmatpush1.bf16.msra.mxu0 0
      %463 = vmatprep.subr.bf16.mxu0 0
      %464 = vmatpush1.bf16.msra.mxu0 0
      %465 = vmatprep.subr.bf16.mxu0 0
      %466 = vmatpush1.bf16.msra.mxu0 0
      %467 = vmatprep.subr.bf16.mxu0 0
      %468 = vmatpush1.bf16.msra.mxu0 0
      %469 = vmatprep.subr.bf16.mxu0 0
      %470 = vmatpush1.bf16.msra.mxu0 0
      %471 = vmatprep.subr.bf16.mxu0 0
      %472 = vmatpush1.bf16.msra.mxu0 0
      %473 = vmatprep.mubr.bf16.mxu0 0
      %474 = vmatmul.mubr.bf16.gmra.mrb[0].mxu0 %v439
      %v475 = vpop.f32.mrb[0].mxu0
      %v476 = vadd.f32 0.0, %v475
      %v477 = vpop.f32.mrb[0].mxu0
      %v478 = vpop.f32.mrb[0].mxu0
      %v479 = vadd.f32 0.0, %v478
      %v480 = vpop.f32.mrb[0].mxu0
      %481 = vdwg.mxu0
      %v482 = vadd.f32 %v415, %v476
      %v483 = vadd.f32 %v418, %v479
      %v484 = vld [vmem:[%s2] sm:$0x1]
      %v486 = vlaneseq
      %v487 = vshrl.u32 %v486, 7
      %v488 = vsub.s32 0, %v487
      %v489 = vrot.slane %v484, %v488
      %v491 = vadd.f32 %v482, %v489
      %v492 = vadd.f32 %v483, %v489
      %v493 = vld [vmem:[%s261] sm:$0xf]
      %v494 = vld [vmem:[%s261 + $0x4] sm:$0xf]
      %v495 = vunpack.c.l.bf16 %v493
      %v496 = vunpack.c.l.bf16 %v494
      %v497 = vadd.f32 %v491, %v495
      %v498 = vadd.f32 %v492, %v496
      %v499 = vpack.c.bf16 %v498, %v497
      %v501 = vunpack.c.l.b16 %v499
      %v502 = vunpack.c.h.b16 %v499
      %v503 = vpack.c.b16 %v501, %v501
      %v504 = vpack.c.b16 %v502, %v502
      %vm507 = vcmask 257024
      %508 = vst.msk [vmem:[%s271] sm:$0xf] %vm507, %v503
      %509 = vst.msk [vmem:[%s271 + $0x4] sm:$0xf] %vm507, %v504
      %s510 = smul.u32 2, %s20
      %p511 = scmp.lt.s32.totalorder %s19, 1
      %s512 = scalar_select %p511, %s19, 1
      %p513 = scmp.lt.s32.totalorder %s510, 1
      %s514 = scalar_select %p513, %s510, 1
      %s515 = smul.addr %s512, 2
      %s516 = sadd.s32 %s514, %s515
      %s517 = smul.addr %s516, 4
      %s518 = scalar_lea.vmem %s4, %s517
      // Predicated region
      $region37: #{encoder_forward.41} parent=35 // pred_check
        %p519 = pneg %p145
      $region38: #{encoder_forward.41} parent=35 // pred_check_branch
        %521 = sbr.rel (%p519) target = $region40
      $region39: #{encoder_forward.41} parent=35 // pred_region
        %s522 = smul.u32 2, %s20
      $region40: #{encoder_forward.41} parent=35 // pred_fallthru
        _
    $region36: #{encoder_forward.41} parent=5 // pred_fallthru
      _
    %p523 = scmp.le.s32.totalorder 2, %s10
    // Predicated region
    $region41: #{encoder_forward.41} parent=5 // pred_check
      %p524 = pneg %p523
    $region42: #{encoder_forward.41} parent=5 // pred_check_branch
      %526 = sbr.rel (%p524) target = $region44
    $region43: #{encoder_forward.41} parent=5 // pred_region
      %s527 = ssub.s32 %s10, 2
      // Predicated region
      $region45: #{encoder_forward.41} parent=43 // pred_check
        %p528 = pneg %p151
      $region46: #{encoder_forward.41} parent=43 // pred_check_branch
        %530 = sbr.rel (%p528) target = $region48
      $region47: #{encoder_forward.41} parent=43 // pred_region
        %s531 = smul.u32 2, %s22
        %p532 = scmp.lt.s32.totalorder %s21, 1
        %s533 = scalar_select %p532, %s21, 1
        %p534 = scmp.lt.s32.totalorder %s531, 1
        %s535 = scalar_select %p534, %s531, 1
        %s536 = smul.addr %s533, 2
        %s537 = sadd.s32 %s535, %s536
        %s538 = smul.addr %s537, 4
        %s539 = scalar_lea.vmem %s4, %s538
      $region48: #{encoder_forward.41} parent=43 // pred_fallthru
        _
    $region44: #{encoder_forward.41} parent=5 // pred_fallthru
      _
  $region6: #{encoder_forward.41} parent=0 // loop_footer
    %s14 = sadd.s32 1, %s10
  $region7: #{encoder_forward.41} parent=0 // loop_footer_branch
    %9 = sbr.rel target = $region3
  $region8: #{encoder_forward.41} parent=0 // loop_exit
    _

// kernel: encoder_forward.44
$region0: #{encoder_forward.44}
  #allocation0 [shape = 'u32[]', space=smem, size = 0x4, offset = 0x4, fixed_abs, tag = 'smem constant byte address 0x4 - core index']
  #allocation1 [shape = 'u32[144,128]{1,0:T(1,128)}', space=vmem, size = 0x12000, scoped, tag = 'internal scratch']
  %s0 = inlined_call_operand.vmem [shape: bf16[2,8,32], index: 0, kind: input, shape index: {}]
  %s1 = inlined_call_operand.vmem [shape: f32[2,2,32], index: 1, kind: input, shape index: {}]
  %s2 = inlined_call_operand.vmem [shape: f32[1,32], index: 2, kind: input, shape index: {}]
  %s3 = inlined_call_operand.vmem [shape: f32[1,32], index: 3, kind: input, shape index: {}]
  %s4 = inlined_call_operand.vmem [shape: bf16[2,8,32], index: 4, kind: output, shape index: {}]
  %s5 = sld [smem:[#allocation0]]
  $region49: #{encoder_forward.44} parent=0
    _
  %s7 = ssub.s32 1, %s5
  %s8 = scalar_select 0, %s7, %s5
  loop: start=0, step=1, limit=4
  $region2: #{encoder_forward.44} parent=0 // loop_pre_header
    _
  $region3: #{encoder_forward.44} parent=0 // loop_header
    %s10 = sphi 0, %s14
    %p11 = scmp.ge.s32.totalorder %s10, 4
    %s17 = sphi 0, %s29
    %s18 = sphi 0, %s25
    %s19 = sphi 0, %s17
    %s20 = sphi 0, %s18
    %s21 = sphi 0, %s19
    %s22 = sphi 0, %s20
    %s34 = sphi 0, %s36
    %s37 = sphi 0, %s34
    %s38 = sphi 0, %s37
    %s54 = sphi 0, %s38
    %s60 = sphi 0, %s62
    %s63 = sphi 0, %s60
    %s64 = sphi 0, %s63
    %s80 = sphi 0, %s64
    %s84 = sphi 0, %s84
    %s86 = sphi 0, %s84
    %s87 = sphi 0, %s86
    %s101 = sphi 0, %s87
    %s105 = sphi 0, %s105
    %s107 = sphi 0, %s105
    %s108 = sphi 0, %s107
    %s122 = sphi 0, %s108
    %s130 = sphi 0, %s132
    %s133 = sphi 0, %s130
    %s134 = sphi 0, %s133
    %s150 = sphi 0, %s134
  $region4: #{encoder_forward.44} parent=0 // loop_header_branch
    %13 = sbr.rel (%p11) target = $region8
  $region5: #{encoder_forward.44} parent=0 // loop_body
    %s15 = ssub.s32 %s10, 1
    %s16 = ssub.s32 %s10, 2
    %s23 = sadd.s32 1, %s18
    %p24 = scmp.ge.s32.totalorder %s23, 1
    %s25 = scalar_select %p24, 0, %s23
    %s26 = sadd.s32 1, %s17
    %s27 = scalar_select %p24, %s26, %s17
    %p28 = scmp.ge.s32.totalorder %s27, 2
    %s29 = scalar_select %p28, 0, %s27
    %s30 = ssub.s32 %s17, %s29
    %s31 = ssub.s32 %s18, %s25
    %s32 = sor.u32 %s30, %s31
    %p33 = scmp.eq.s32.totalorder %s32, 0
    %s35 = sadd.s32 %s34, 1
    %s36 = scalar_select %p33, %s34, %s35
    %p39 = pneg %p33
    %p40 = scmp.eq.s32.totalorder %s10, 1
    %p41 = por %p39, %p40
    %p42 = scmp.ne.s32.totalorder %s34, %s37
    %p43 = scmp.eq.s32.totalorder %s10, 0
    %p44 = por %p42, %p43
    %p45 = scmp.ne.s32.totalorder %s34, %s37
    %p46 = scmp.eq.s32.totalorder %s15, 1
    %p47 = por %p45, %p46
    %p48 = scmp.ne.s32.totalorder %s37, %s38
    %p49 = scmp.eq.s32.totalorder %s15, 0
    %p50 = por %p48, %p49
    %p51 = scmp.ne.s32.totalorder %s37, %s38
    %p52 = scmp.eq.s32.totalorder %s16, 1
    %p53 = por %p51, %p52
    %p55 = scmp.ne.s32.totalorder %s38, %s54
    %p56 = scmp.eq.s32.totalorder %s16, 0
    %p57 = por %p55, %p56
    %s58 = ssub.s32 %s17, %s29
    %p59 = scmp.eq.s32.totalorder %s58, 0
    %s61 = sadd.s32 %s60, 1
    %s62 = scalar_select %p59, %s60, %s61
    %p65 = pneg %p59
    %p66 = scmp.eq.s32.totalorder %s10, 1
    %p67 = por %p65, %p66
    %p68 = scmp.ne.s32.totalorder %s60, %s63
    %p69 = scmp.eq.s32.totalorder %s10, 0
    %p70 = por %p68, %p69
    %p71 = scmp.ne.s32.totalorder %s60, %s63
    %p72 = scmp.eq.s32.totalorder %s15, 1
    %p73 = por %p71, %p72
    %p74 = scmp.ne.s32.totalorder %s63, %s64
    %p75 = scmp.eq.s32.totalorder %s15, 0
    %p76 = por %p74, %p75
    %p77 = scmp.ne.s32.totalorder %s63, %s64
    %p78 = scmp.eq.s32.totalorder %s16, 1
    %p79 = por %p77, %p78
    %p81 = scmp.ne.s32.totalorder %s64, %s80
    %p82 = scmp.eq.s32.totalorder %s16, 0
    %p83 = por %p81, %p82
    %s85 = sadd.s32 %s84, 1
    %p88 = scmp.eq.s32.totalorder %s10, 1
    %p89 = scmp.ne.s32.totalorder %s84, %s86
    %p90 = scmp.eq.s32.totalorder %s10, 0
    %p91 = por %p89, %p90
    %p92 = scmp.ne.s32.totalorder %s84, %s86
    %p93 = scmp.eq.s32.totalorder %s15, 1
    %p94 = por %p92, %p93
    %p95 = scmp.ne.s32.totalorder %s86, %s87
    %p96 = scmp.eq.s32.totalorder %s15, 0
    %p97 = por %p95, %p96
    %p98 = scmp.ne.s32.totalorder %s86, %s87
    %p99 = scmp.eq.s32.totalorder %s16, 1
    %p100 = por %p98, %p99
    %p102 = scmp.ne.s32.totalorder %s87, %s101
    %p103 = scmp.eq.s32.totalorder %s16, 0
    %p104 = por %p102, %p103
    %s106 = sadd.s32 %s105, 1
    %p109 = scmp.eq.s32.totalorder %s10, 1
    %p110 = scmp.ne.s32.totalorder %s105, %s107
    %p111 = scmp.eq.s32.totalorder %s10, 0
    %p112 = por %p110, %p111
    %p113 = scmp.ne.s32.totalorder %s105, %s107
    %p114 = scmp.eq.s32.totalorder %s15, 1
    %p115 = por %p113, %p114
    %p116 = scmp.ne.s32.totalorder %s107, %s108
    %p117 = scmp.eq.s32.totalorder %s15, 0
    %p118 = por %p116, %p117
    %p119 = scmp.ne.s32.totalorder %s107, %s108
    %p120 = scmp.eq.s32.totalorder %s16, 1
    %p121 = por %p119, %p120
    %p123 = scmp.ne.s32.totalorder %s108, %s122
    %p124 = scmp.eq.s32.totalorder %s16, 0
    %p125 = por %p123, %p124
    %s126 = ssub.s32 %s17, %s29
    %s127 = ssub.s32 %s18, %s25
    %s128 = sor.u32 %s126, %s127
    %p129 = scmp.eq.s32.totalorder %s128, 0
    %s131 = sadd.s32 %s130, 1
    %s132 = scalar_select %p129, %s130, %s131
    %p135 = pneg %p129
    %p136 = scmp.eq.s32.totalorder %s10, 1
    %p137 = por %p135, %p136
    %p138 = scmp.ne.s32.totalorder %s130, %s133
    %p139 = scmp.eq.s32.totalorder %s10, 0
    %p140 = por %p138, %p139
    %p141 = scmp.ne.s32.totalorder %s130, %s133
    %p142 = scmp.eq.s32.totalorder %s15, 1
    %p143 = por %p141, %p142
    %p144 = scmp.ne.s32.totalorder %s133, %s134
    %p145 = scmp.eq.s32.totalorder %s15, 0
    %p146 = por %p144, %p145
    %p147 = scmp.ne.s32.totalorder %s133, %s134
    %p148 = scmp.eq.s32.totalorder %s16, 1
    %p149 = por %p147, %p148
    %p151 = scmp.ne.s32.totalorder %s134, %s150
    %p152 = scmp.eq.s32.totalorder %s16, 0
    %p153 = por %p151, %p152
    %p154 = scmp.le.s32.totalorder 1, %s10
    %p155 = scmp.lt.s32.totalorder %s10, 3
    %p156 = pnand %p154, %p155
    %p157 = pneg %p156
    // Predicated region
    $region9: #{encoder_forward.44} parent=5 // pred_check
      _
    $region10: #{encoder_forward.44} parent=5 // pred_check_branch
      %159 = sbr.rel (%p156) target = $region12
    $region11: #{encoder_forward.44} parent=5 // pred_region
      %s160 = ssub.s32 %s10, 1
      // Predicated region
      $region13: #{encoder_forward.44} parent=11 // pred_check
        %p161 = pneg %p97
      $region14: #{encoder_forward.44} parent=11 // pred_check_branch
        %163 = sbr.rel (%p161) target = $region16
      $region15: #{encoder_forward.44} parent=11 // pred_region
        _
      $region16: #{encoder_forward.44} parent=11 // pred_fallthru
        _
      // Predicated region
      $region17: #{encoder_forward.44} parent=11 // pred_check
        %p164 = pneg %p118
      $region18: #{encoder_forward.44} parent=11 // pred_check_branch
        %166 = sbr.rel (%p164) target = $region20
      $region19: #{encoder_forward.44} parent=11 // pred_region
        _
      $region20: #{encoder_forward.44} parent=11 // pred_fallthru
        _
    $region12: #{encoder_forward.44} parent=5 // pred_fallthru
      _
    %p167 = scmp.lt.s32.totalorder %s10, 2
    // Predicated region
    $region21: #{encoder_forward.44} parent=5 // pred_check
      %p168 = pneg %p167
    $region22: #{encoder_forward.44} parent=5 // pred_check_branch
      %170 = sbr.rel (%p168) target = $region24
    $region23: #{encoder_forward.44} parent=5 // pred_region
      // Predicated region
      $region25: #{encoder_forward.44} parent=23 // pred_check
        %p171 = pneg %p44
      $region26: #{encoder_forward.44} parent=23 // pred_check_branch
        %173 = sbr.rel (%p171) target = $region28
      $region27: #{encoder_forward.44} parent=23 // pred_region
        %p174 = scmp.lt.s32.totalorder %s17, 1
        %s175 = scalar_select %p174, %s17, 1
        %p176 = scmp.lt.s32.totalorder %s18, 0
        %s177 = scalar_select %p176, %s18, 0
        %s178 = sadd.s32 %s177, %s175
        %s179 = smul.addr %s178, 4
        %s180 = scalar_lea.vmem %s0, %s179
      $region28: #{encoder_forward.44} parent=23 // pred_fallthru
        _
      // Predicated region
      $region29: #{encoder_forward.44} parent=23 // pred_check
        %p181 = pneg %p70
      $region30: #{encoder_forward.44} parent=23 // pred_check_branch
        %183 = sbr.rel (%p181) target = $region32
      $region31: #{encoder_forward.44} parent=23 // pred_region
        %p184 = scmp.lt.s32.totalorder %s17, 1
        %s185 = scalar_select %p184, %s17, 1
        %s186 = smul.addr %s185, 2
        %s187 = scalar_lea.vmem %s1, %s186
      $region32: #{encoder_forward.44} parent=23 // pred_fallthru
        _
    $region24: #{encoder_forward.44} parent=5 // pred_fallthru
      _
    %p188 = scmp.le.s32.totalorder 1, %s10
    %p189 = scmp.lt.s32.totalorder %s10, 3
    %p190 = pnand %p188, %p189
    %p191 = pneg %p190
    // Predicated region
    $region33: #{encoder_forward.44} parent=5 // pred_check
      _
    $region34: #{encoder_forward.44} parent=5 // pred_check_branch
      %193 = sbr.rel (%p190) target = $region36
    $region35: #{encoder_forward.44} parent=5 // pred_region
      %s194 = ssub.s32 %s10, 1
      %p195 = scmp.lt.s32.totalorder %s19, 1
      %s196 = scalar_select %p195, %s19, 1
      %p197 = scmp.lt.s32.totalorder %s20, 0
      %s198 = scalar_select %p197, %s20, 0
      %s199 = sadd.s32 %s198, %s196
      %s200 = smul.addr %s199, 4
      %s201 = scalar_lea.vmem %s0, %s200
      %p202 = pneg %p50
      %p203 = pneg %p47
      %p204 = scmp.lt.s32.totalorder %s19, 1
      %s205 = scalar_select %p204, %s19, 1
      %s206 = smul.addr %s205, 2
      %s207 = scalar_lea.vmem %s1, %s206
      %p208 = pneg %p76
      %p209 = pneg %p73
      %p210 = pneg %p97
      %p211 = pneg %p94
      %p212 = pneg %p118
      %p213 = pneg %p115
      %p214 = pneg %p146
      %p215 = pneg %p143
      %p216 = scmp.lt.s32.totalorder %s19, 1
      %s217 = scalar_select %p216, %s19, 1
      %p218 = scmp.lt.s32.totalorder %s20, 0
      %s219 = scalar_select %p218, %s20, 0
      %s220 = sadd.s32 %s219, %s217
      %s221 = smul.addr %s220, 4
      %s222 = scalar_lea.vmem %s4, %s221
      %p223 = scmp.lt.s32.totalorder %s19, 1
      %s224 = scalar_select %p223, %s19, 1
      %p225 = scmp.lt.s32.totalorder %s20, 0
      %s226 = scalar_select %p225, %s20, 0
      %s227 = sadd.s32 %s226, %s224
      %s228 = smul.addr %s227, 4
      %s229 = scalar_lea.vmem %s0, %s228
      %p230 = scmp.lt.s32.totalorder %s19, 1
      %s231 = scalar_select %p230, %s19, 1
      %s232 = smul.addr %s231, 2
      %s233 = scalar_lea.vmem %s1, %s232
      %p234 = scmp.lt.s32.totalorder %s19, 1
      %s235 = scalar_select %p234, %s19, 1
      %p236 = scmp.lt.s32.totalorder %s20, 0
      %s237 = scalar_select %p236, %s20, 0
      %s238 = sadd.s32 %s237, %s235
      %s239 = smul.addr %s238, 4
      %s240 = scalar_lea.vmem %s4, %s239
      %v241 = vld [vmem:[%s229] sm:$0xf]
      %v242 = vunpack.c.l.bf16 %v241
      %v243 = vld [vmem:[%s233] sm:$0x1]
      %v244 = vld [vmem:[%s233 + $0x1] sm:$0x1]
      %v245 = vlaneseq
      %v246 = vshrl.u32 %v245, 7
      %v247 = vsub.s32 0, %v246
      %v248 = vrot.slane %v243, %v247
      %v249 = vsub.f32 %v242, %v248
      %v250 = vld [vmem:[%s2] sm:$0x1]
      %v251 = vmul.f32 %v244, %v250
      %v252 = vlaneseq
      %v253 = vshrl.u32 %v252, 7
      %v254 = vsub.s32 0, %v253
      %v255 = vrot.slane %v251, %v254
      %v256 = vmul.f32 %v249, %v255
      %v257 = vld [vmem:[%s3] sm:$0x1]
      %v259 = vlaneseq
      %v260 = vshrl.u32 %v259, 7
      %v261 = vsub.s32 0, %v260
      %v262 = vrot.slane %v257, %v261
      %v264 = vadd.f32 %v256, %v262
      %v265 = vxor.u32 %v264, 2147483648
      %v266 = vmul.f32 %v265, 1.442695
      %v267 = vpow.pop %v266
      %v268 = vadd.f32 %v267, 1.0
      %v269 = vrcp.pop %v268
      %v270 = vmul.f32 1.0, %v269
      %v271 = vmul.f32 %v264, %v270
      %v272 = vpack.c.bf16 %v271, %v271
      %vm273 = vcmask 257024
      %274 = vst.msk [vmem:[%s240] sm:$0xf] %vm273, %v272
      %p275 = scmp.lt.s32.totalorder %s19, 1
      %s276 = scalar_select %p275, %s19, 1
      %p277 = scmp.lt.s32.totalorder %s20, 0
      %s278 = scalar_select %p277, %s20, 0
      %s279 = sadd.s32 %s278, %s276
      %s280 = smul.addr %s279, 4
      %s281 = scalar_lea.vmem %s4, %s280
      // Predicated region
      $region37: #{encoder_forward.44} parent=35 // pred_check
        %p282 = pneg %p143
      $region38: #{encoder_forward.44} parent=35 // pred_check_branch
        %284 = sbr.rel (%p282) target = $region40
      $region39: #{encoder_forward.44} parent=35 // pred_region
        _
      $region40: #{encoder_forward.44} parent=35 // pred_fallthru
        _
    $region36: #{encoder_forward.44} parent=5 // pred_fallthru
      _
    %p285 = scmp.le.s32.totalorder 2, %s10
    // Predicated region
    $region41: #{encoder_forward.44} parent=5 // pred_check
      %p286 = pneg %p285
    $region42: #{encoder_forward.44} parent=5 // pred_check_branch
      %288 = sbr.rel (%p286) target = $region44
    $region43: #{encoder_forward.44} parent=5 // pred_region
      %s289 = ssub.s32 %s10, 2
      // Predicated region
      $region45: #{encoder_forward.44} parent=43 // pred_check
        %p290 = pneg %p149
      $region46: #{encoder_forward.44} parent=43 // pred_check_branch
        %292 = sbr.rel (%p290) target = $region48
      $region47: #{encoder_forward.44} parent=43 // pred_region
        %p293 = scmp.lt.s32.totalorder %s21, 1
        %s294 = scalar_select %p293, %s21, 1
        %p295 = scmp.lt.s32.totalorder %s22, 0
        %s296 = scalar_select %p295, %s22, 0
        %s297 = sadd.s32 %s296, %s294
        %s298 = smul.addr %s297, 4
        %s299 = scalar_lea.vmem %s4, %s298
      $region48: #{encoder_forward.44} parent=43 // pred_fallthru
        _
    $region44: #{encoder_forward.44} parent=5 // pred_fallthru
      _
  $region6: #{encoder_forward.44} parent=0 // loop_footer
    %s14 = sadd.s32 1, %s10
  $region7: #{encoder_forward.44} parent=0 // loop_footer_branch
    %9 = sbr.rel target = $region3
  $region8: #{encoder_forward.44} parent=0 // loop_exit
    _

// kernel: encoder_forward.43
$region0: #{encoder_forward.43}
  #allocation0 [shape = 'u32[]', space=smem, size = 0x4, offset = 0x4, fixed_abs, tag = 'smem constant byte address 0x4 - core index']
  #allocation1 [shape = 'u32[144,128]{1,0:T(1,128)}', space=vmem, size = 0x12000, scoped, tag = 'internal scratch']
  #allocation2 [shape = 'f32[1,32]{1,0:T(1,128)}', space=vmem, size = 0x200, scoped, tag = 'scratch operand']
  #allocation3 [shape = 'f32[1,32]{1,0:T(1,128)}', space=vmem, size = 0x200, scoped, tag = 'scratch operand']
  %s0 = inlined_call_operand.vmem [shape: bf16[2,8,32], index: 0, kind: input, shape index: {}]
  %s1 = inlined_call_operand.vmem [shape: f32[32,32], index: 1, kind: input, shape index: {}]
  %s2 = inlined_call_operand.vmem [shape: f32[2,2,32], index: 2, kind: output, shape index: {}]
  %s3 = sld [smem:[#allocation0]]
  $region49: #{encoder_forward.43} parent=0
    _
  %s5 = ssub.s32 1, %s3
  %s6 = scalar_select 0, %s5, %s3
  loop: start=0, step=1, limit=4
  $region2: #{encoder_forward.43} parent=0 // loop_pre_header
    _
  $region3: #{encoder_forward.43} parent=0 // loop_header
    %s8 = sphi 0, %s12
    %p9 = scmp.ge.s32.totalorder %s8, 4
    %s15 = sphi 0, %s27
    %s16 = sphi 0, %s23
    %s17 = sphi 0, %s15
    %s18 = sphi 0, %s16
    %s19 = sphi 0, %s17
    %s20 = sphi 0, %s18
    %s32 = sphi 0, %s34
    %s35 = sphi 0, %s32
    %s36 = sphi 0, %s35
    %s52 = sphi 0, %s36
    %s56 = sphi 0, %s56
    %s58 = sphi 0, %s56
    %s59 = sphi 0, %s58
    %s73 = sphi 0, %s59
    %s79 = sphi 0, %s81
    %s82 = sphi 0, %s79
    %s83 = sphi 0, %s82
    %s99 = sphi 0, %s83
  $region4: #{encoder_forward.43} parent=0 // loop_header_branch
    %11 = sbr.rel (%p9) target = $region8
  $region5: #{encoder_forward.43} parent=0 // loop_body
    %s13 = ssub.s32 %s8, 1
    %s14 = ssub.s32 %s8, 2
    %s21 = sadd.s32 1, %s16
    %p22 = scmp.ge.s32.totalorder %s21, 1
    %s23 = scalar_select %p22, 0, %s21
    %s24 = sadd.s32 1, %s15
    %s25 = scalar_select %p22, %s24, %s15
    %p26 = scmp.ge.s32.totalorder %s25, 2
    %s27 = scalar_select %p26, 0, %s25
    %s28 = ssub.s32 %s15, %s27
    %s29 = ssub.s32 %s16, %s23
    %s30 = sor.u32 %s28, %s29
    %p31 = scmp.eq.s32.totalorder %s30, 0
    %s33 = sadd.s32 %s32, 1
    %s34 = scalar_select %p31, %s32, %s33
    %p37 = pneg %p31
    %p38 = scmp.eq.s32.totalorder %s8, 1
    %p39 = por %p37, %p38
    %p40 = scmp.ne.s32.totalorder %s32, %s35
    %p41 = scmp.eq.s32.totalorder %s8, 0
    %p42 = por %p40, %p41
    %p43 = scmp.ne.s32.totalorder %s32, %s35
    %p44 = scmp.eq.s32.totalorder %s13, 1
    %p45 = por %p43, %p44
    %p46 = scmp.ne.s32.totalorder %s35, %s36
    %p47 = scmp.eq.s32.totalorder %s13, 0
    %p48 = por %p46, %p47
    %p49 = scmp.ne.s32.totalorder %s35, %s36
    %p50 = scmp.eq.s32.totalorder %s14, 1
    %p51 = por %p49, %p50
    %p53 = scmp.ne.s32.totalorder %s36, %s52
    %p54 = scmp.eq.s32.totalorder %s14, 0
    %p55 = por %p53, %p54
    %s57 = sadd.s32 %s56, 1
    %p60 = scmp.eq.s32.totalorder %s8, 1
    %p61 = scmp.ne.s32.totalorder %s56, %s58
    %p62 = scmp.eq.s32.totalorder %s8, 0
    %p63 = por %p61, %p62
    %p64 = scmp.ne.s32.totalorder %s56, %s58
    %p65 = scmp.eq.s32.totalorder %s13, 1
    %p66 = por %p64, %p65
    %p67 = scmp.ne.s32.totalorder %s58, %s59
    %p68 = scmp.eq.s32.totalorder %s13, 0
    %p69 = por %p67, %p68
    %p70 = scmp.ne.s32.totalorder %s58, %s59
    %p71 = scmp.eq.s32.totalorder %s14, 1
    %p72 = por %p70, %p71
    %p74 = scmp.ne.s32.totalorder %s59, %s73
    %p75 = scmp.eq.s32.totalorder %s14, 0
    %p76 = por %p74, %p75
    %s77 = ssub.s32 %s15, %s27
    %p78 = scmp.eq.s32.totalorder %s77, 0
    %s80 = sadd.s32 %s79, 1
    %s81 = scalar_select %p78, %s79, %s80
    %p84 = pneg %p78
    %p85 = scmp.eq.s32.totalorder %s8, 1
    %p86 = por %p84, %p85
    %p87 = scmp.ne.s32.totalorder %s79, %s82
    %p88 = scmp.eq.s32.totalorder %s8, 0
    %p89 = por %p87, %p88
    %p90 = scmp.ne.s32.totalorder %s79, %s82
    %p91 = scmp.eq.s32.totalorder %s13, 1
    %p92 = por %p90, %p91
    %p93 = scmp.ne.s32.totalorder %s82, %s83
    %p94 = scmp.eq.s32.totalorder %s13, 0
    %p95 = por %p93, %p94
    %p96 = scmp.ne.s32.totalorder %s82, %s83
    %p97 = scmp.eq.s32.totalorder %s14, 1
    %p98 = por %p96, %p97
    %p100 = scmp.ne.s32.totalorder %s83, %s99
    %p101 = scmp.eq.s32.totalorder %s14, 0
    %p102 = por %p100, %p101
    %p103 = scmp.le.s32.totalorder 1, %s8
    %p104 = scmp.lt.s32.totalorder %s8, 3
    %p105 = pnand %p103, %p104
    %p106 = pneg %p105
    // Predicated region
    $region9: #{encoder_forward.43} parent=5 // pred_check
      _
    $region10: #{encoder_forward.43} parent=5 // pred_check_branch
      %108 = sbr.rel (%p105) target = $region12
    $region11: #{encoder_forward.43} parent=5 // pred_region
      %s109 = ssub.s32 %s8, 1
      // Predicated region
      $region13: #{encoder_forward.43} parent=11 // pred_check
        %p110 = pneg %p69
      $region14: #{encoder_forward.43} parent=11 // pred_check_branch
        %112 = sbr.rel (%p110) target = $region16
      $region15: #{encoder_forward.43} parent=11 // pred_region
        _
      $region16: #{encoder_forward.43} parent=11 // pred_fallthru
        _
    $region12: #{encoder_forward.43} parent=5 // pred_fallthru
      _
    %p113 = scmp.lt.s32.totalorder %s8, 2
    // Predicated region
    $region17: #{encoder_forward.43} parent=5 // pred_check
      %p114 = pneg %p113
    $region18: #{encoder_forward.43} parent=5 // pred_check_branch
      %116 = sbr.rel (%p114) target = $region20
    $region19: #{encoder_forward.43} parent=5 // pred_region
      // Predicated region
      $region21: #{encoder_forward.43} parent=19 // pred_check
        %p117 = pneg %p42
      $region22: #{encoder_forward.43} parent=19 // pred_check_branch
        %119 = sbr.rel (%p117) target = $region24
      $region23: #{encoder_forward.43} parent=19 // pred_region
        %p120 = scmp.lt.s32.totalorder %s15, 1
        %s121 = scalar_select %p120, %s15, 1
        %p122 = scmp.lt.s32.totalorder %s16, 0
        %s123 = scalar_select %p122, %s16, 0
        %s124 = sadd.s32 %s123, %s121
        %s125 = smul.addr %s124, 4
        %s126 = scalar_lea.vmem %s0, %s125
      $region24: #{encoder_forward.43} parent=19 // pred_fallthru
        _
    $region20: #{encoder_forward.43} parent=5 // pred_fallthru
      _
    %p127 = scmp.le.s32.totalorder 1, %s8
    %p128 = scmp.lt.s32.totalorder %s8, 3
    %p129 = pnand %p127, %p128
    %p130 = pneg %p129
    // Predicated region
    $region25: #{encoder_forward.43} parent=5 // pred_check
      _
    $region26: #{encoder_forward.43} parent=5 // pred_check_branch
      %132 = sbr.rel (%p129) target = $region28
    $region27: #{encoder_forward.43} parent=5 // pred_region
      %s133 = ssub.s32 %s8, 1
      %p134 = scmp.lt.s32.totalorder %s17, 1
      %s135 = scalar_select %p134, %s17, 1
      %p136 = scmp.lt.s32.totalorder %s18, 0
      %s137 = scalar_select %p136, %s18, 0
      %s138 = sadd.s32 %s137, %s135
      %s139 = smul.addr %s138, 4
      %s140 = scalar_lea.vmem %s0, %s139
      %p141 = pneg %p48
      %p142 = pneg %p45
      %p143 = pneg %p69
      %p144 = pneg %p66
      %p145 = pneg %p95
      %p146 = pneg %p92
      %p147 = scmp.lt.s32.totalorder %s17, 1
      %s148 = scalar_select %p147, %s17, 1
      %s149 = smul.addr %s148, 2
      %s150 = scalar_lea.vmem %s2, %s149
      %p151 = scmp.lt.s32.totalorder %s17, 1
      %s152 = scalar_select %p151, %s17, 1
      %p153 = scmp.lt.s32.totalorder %s18, 0
      %s154 = scalar_select %p153, %s18, 0
      %s155 = sadd.s32 %s154, %s152
      %s156 = smul.addr %s155, 4
      %s157 = scalar_lea.vmem %s0, %s156
      %p158 = scmp.lt.s32.totalorder %s17, 1
      %s159 = scalar_select %p158, %s17, 1
      %s160 = smul.addr %s159, 2
      %s161 = scalar_lea.vmem %s2, %s160
      %p162 = scmp.eq.s32.totalorder %s18, 0
      // Predicated region
      $region29: #{encoder_forward.43} parent=27 // pred_check
        %p163 = pneg %p162
      $region30: #{encoder_forward.43} parent=27 // pred_check_branch
        %165 = sbr.rel (%p163) target = $region32
      $region31: #{encoder_forward.43} parent=27 // pred_region
        %vm166 = vcmask 253952
        %167 = vst.msk [vmem:[#allocation2] sm:$0x1] %vm166, 0.0
        %168 = vst.msk [vmem:[#allocation3] sm:$0x1] %vm166, 0.0
      $region32: #{encoder_forward.43} parent=27 // pred_fallthru
        _
      %v169 = vld [vmem:[%s157] sm:$0xf]
      %v170 = vunpack.c.l.bf16 %v169
      %v171 = vld [vmem:[#allocation2] sm:$0x1]
      %vm172 = vcmask 261120
      %v173 = vsel %vm172, %v170, 0.0
      %v174 = vrot.slane %v173, 4
      %v175 = vadd.f32 %v173, %v174
      %v176 = vrot.slane %v175, 2
      %v177 = vadd.f32 %v175, %v176
      %v178 = vrot.slane %v177, 1
      %v179 = vadd.f32 %v177, %v178
      %v180 = vadd.f32 %v171, %v179
      %vm181 = vcmask 253952
      %182 = vst.msk [vmem:[#allocation2] sm:$0x1] %vm181, %v180
      %v183 = vld [vmem:[#allocation3] sm:$0x1]
      %v184 = vmul.f32 %v170, %v170
      %v185 = vsel %vm172, %v184, 0.0
      %v186 = vrot.slane %v185, 4
      %v187 = vadd.f32 %v185, %v186
      %v188 = vrot.slane %v187, 2
      %v189 = vadd.f32 %v187, %v188
      %v190 = vrot.slane %v189, 1
      %v191 = vadd.f32 %v189, %v190
      %v192 = vadd.f32 %v183, %v191
      %193 = vst.msk [vmem:[#allocation3] sm:$0x1] %vm181, %v192
      // Predicated region
      $region33: #{encoder_forward.43} parent=27 // pred_check
        %p194 = pneg %p162
      $region34: #{encoder_forward.43} parent=27 // pred_check_branch
        %196 = sbr.rel (%p194) target = $region36
      $region35: #{encoder_forward.43} parent=27 // pred_region
        %v197 = vld [vmem:[%s1] sm:$0xff]
        %v198 = vld [vmem:[%s1 + $0x8] sm:$0xff]
        %v199 = vld [vmem:[%s1 + $0x10] sm:$0xff]
        %v200 = vld [vmem:[%s1 + $0x18] sm:$0xff]
        %v201 = vld [vmem:[#allocation2] sm:$0x1]
        %v203 = vsel %vm172, %v201, 0
        %205 = vmatprep.subr.mxu0 0.0
        %206 = vmatpush1.msra.mxu0 %v197
        %207 = vmatprep.subr.mxu0 0.0
        %208 = vmatpush1.msra.mxu0 %v198
        %209 = vmatprep.subr.mxu0 0.0
        %210 = vmatpush1.msra.mxu0 %v199
        %211 = vmatprep.subr.mxu0 0.0
        %212 = vmatpush1.msra.mxu0 %v200
        %213 = vmatprep.subr.mxu0 0.0
        %214 = vmatpush1.msra.mxu0 0.0
        %215 = vmatprep.subr.mxu0 0.0
        %216 = vmatpush1.msra.mxu0 0.0
        %217 = vmatprep.subr.mxu0 0.0
        %218 = vmatpush1.msra.mxu0 0.0
        %219 = vmatprep.subr.mxu0 0.0
        %220 = vmatpush1.msra.mxu0 0.0
        %221 = vmatprep.subr.mxu0 0.0
        %222 = vmatpush1.msra.mxu0 0.0
        %223 = vmatprep.subr.mxu0 0.0
        %224 = vmatpush1.msra.mxu0 0.0
        %225 = vmatprep.subr.mxu0 0.0
        %226 = vmatpush1.msra.mxu0 0.0
        %227 = vmatprep.subr.mxu0 0.0
        %228 = vmatpush1.msra.mxu0 0.0
        %229 = vmatprep.subr.mxu0 0.0
        %230 = vmatpush1.msra.mxu0 0.0
        %231 = vmatprep.subr.mxu0 0.0
        %232 = vmatpush1.msra.mxu0 0.0
        %233 = vmatprep.subr.mxu0 0.0
        %234 = vmatpush1.msra.mxu0 0.0
        %235 = vmatprep.subr.mxu0 0.0
        %236 = vmatpush1.msra.mxu0 0.0
        %237 = vmatprep.subr.mxu0 0.0
        %238 = vmatpush1.msra.mxu0 0.0
        %239 = vmatprep.subr.mxu0 0.0
        %240 = vmatpush1.msra.mxu0 0.0
        %241 = vmatprep.subr.mxu0 0.0
        %242 = vmatpush1.msra.mxu0 0.0
        %243 = vmatprep.subr.mxu0 0.0
        %244 = vmatpush1.msra.mxu0 0.0
        %245 = vmatprep.subr.mxu0 0.0
        %246 = vmatpush1.msra.mxu0 0.0
        %247 = vmatprep.subr.mxu0 0.0
        %248 = vmatpush1.msra.mxu0 0.0
        %249 = vmatprep.subr.mxu0 0.0
        %250 = vmatpush1.msra.mxu0 0.0
        %251 = vmatprep.subr.mxu0 0.0
        %252 = vmatpush1.msra.mxu0 0.0
        %253 = vmatprep.subr.mxu0 0.0
        %254 = vmatpush1.msra.mxu0 0.0
        %255 = vmatprep.subr.mxu0 0.0
        %256 = vmatpush1.msra.mxu0 0.0
        %257 = vmatprep.subr.mxu0 0.0
        %258 = vmatpush1.msra.mxu0 0.0
        %259 = vmatprep.subr.mxu0 0.0
        %260 = vmatpush1.msra.mxu0 0.0
        %261 = vmatprep.subr.mxu0 0.0
        %262 = vmatpush1.msra.mxu0 0.0
        %263 = vmatprep.subr.mxu0 0.0
        %264 = vmatpush1.msra.mxu0 0.0
        %265 = vmatprep.subr.mxu0 0.0
        %266 = vmatpush1.msra.mxu0 0.0
        %267 = vmatprep.subr.mxu0 0.0
        %268 = vmatpush1.msra.mxu0 0.0
        %269 = vmatprep.mubr.f32.mxu0 0.0
        %270 = vmatmul.mubr.f32.gmra.mrb[0].mxu0 %v203
        %v271 = vpop.f32.mrb[0].mxu0
        %v272 = vadd.f32 0.0, %v271
        %v273 = vpop.f32.mrb[0].mxu0
        %274 = vdwg.mxu0
        %v275 = vmul.f32 %v272, 0.125
        %v276 = vld [vmem:[#allocation3] sm:$0x1]
        %v278 = vsel %vm172, %v276, 0
        %280 = vmatprep.subr.mxu0 0.0
        %281 = vmatpush1.msra.mxu0 %v197
        %282 = vmatprep.subr.mxu0 0.0
        %283 = vmatpush1.msra.mxu0 %v198
        %284 = vmatprep.subr.mxu0 0.0
        %285 = vmatpush1.msra.mxu0 %v199
        %286 = vmatprep.subr.mxu0 0.0
        %287 = vmatpush1.msra.mxu0 %v200
        %288 = vmatprep.subr.mxu0 0.0
        %289 = vmatpush1.msra.mxu0 0.0
        %290 = vmatprep.subr.mxu0 0.0
        %291 = vmatpush1.msra.mxu0 0.0
        %292 = vmatprep.subr.mxu0 0.0
        %293 = vmatpush1.msra.mxu0 0.0
        %294 = vmatprep.subr.mxu0 0.0
        %295 = vmatpush1.msra.mxu0 0.0
        %296 = vmatprep.subr.mxu0 0.0
        %297 = vmatpush1.msra.mxu0 0.0
        %298 = vmatprep.subr.mxu0 0.0
        %299 = vmatpush1.msra.mxu0 0.0
        %300 = vmatprep.subr.mxu0 0.0
        %301 = vmatpush1.msra.mxu0 0.0
        %302 = vmatprep.subr.mxu0 0.0
        %303 = vmatpush1.msra.mxu0 0.0
        %304 = vmatprep.subr.mxu0 0.0
        %305 = vmatpush1.msra.mxu0 0.0
        %306 = vmatprep.subr.mxu0 0.0
        %307 = vmatpush1.msra.mxu0 0.0
        %308 = vmatprep.subr.mxu0 0.0
        %309 = vmatpush1.msra.mxu0 0.0
        %310 = vmatprep.subr.mxu0 0.0
        %311 = vmatpush1.msra.mxu0 0.0
        %312 = vmatprep.subr.mxu0 0.0
        %313 = vmatpush1.msra.mxu0 0.0
        %314 = vmatprep.subr.mxu0 0.0
        %315 = vmatpush1.msra.mxu0 0.0
        %316 = vmatprep.subr.mxu0 0.0
        %317 = vmatpush1.msra.mxu0 0.0
        %318 = vmatprep.subr.mxu0 0.0
        %319 = vmatpush1.msra.mxu0 0.0
        %320 = vmatprep.subr.mxu0 0.0
        %321 = vmatpush1.msra.mxu0 0.0
        %322 = vmatprep.subr.mxu0 0.0
        %323 = vmatpush1.msra.mxu0 0.0
        %324 = vmatprep.subr.mxu0 0.0
        %325 = vmatpush1.msra.mxu0 0.0
        %326 = vmatprep.subr.mxu0 0.0
        %327 = vmatpush1.msra.mxu0 0.0
        %328 = vmatprep.subr.mxu0 0.0
        %329 = vmatpush1.msra.mxu0 0.0
        %330 = vmatprep.subr.mxu0 0.0
        %331 = vmatpush1.msra.mxu0 0.0
        %332 = vmatprep.subr.mxu0 0.0
        %333 = vmatpush1.msra.mxu0 0.0
        %334 = vmatprep.subr.mxu0 0.0
        %335 = vmatpush1.msra.mxu0 0.0
        %336 = vmatprep.subr.mxu0 0.0
        %337 = vmatpush1.msra.mxu0 0.0
        %338 = vmatprep.subr.mxu0 0.0
        %339 = vmatpush1.msra.mxu0 0.0
        %340 = vmatprep.subr.mxu0 0.0
        %341 = vmatpush1.msra.mxu0 0.0
        %342 = vmatprep.subr.mxu0 0.0
        %343 = vmatpush1.msra.mxu0 0.0
        %344 = vmatprep.mubr.f32.mxu0 0.0
        %345 = vmatmul.mubr.f32.gmra.mrb[0].mxu0 %v278
        %v346 = vpop.f32.mrb[0].mxu0
        %v347 = vadd.f32 0.0, %v346
        %v348 = vpop.f32.mrb[0].mxu0
        %349 = vdwg.mxu0
        %v350 = vmul.f32 %v347, 0.125
        %v351 = vmul.f32 %v275, %v275
        %v352 = vsub.f32 %v350, %v351
        %v353 = vmax.f32 %v352, 0.0
        %354 = vst.msk [vmem:[%s161] sm:$0x1] %vm181, %v275
        %v355 = vadd.f32 %v353, 1e-06
        %v356 = vrsqrt.pop %v355
        %357 = vst.msk [vmem:[%s161 + $0x1] sm:$0x1] %vm181, %v356
      $region36: #{encoder_forward.43} parent=27 // pred_fallthru
        _
      %p358 = scmp.lt.s32.totalorder %s17, 1
      %s359 = scalar_select %p358, %s17, 1
      %s360 = smul.addr %s359, 2
      %s361 = scalar_lea.vmem %s2, %s360
      // Predicated region
      $region37: #{encoder_forward.43} parent=27 // pred_check
        %p362 = pneg %p92
      $region38: #{encoder_forward.43} parent=27 // pred_check_branch
        %364 = sbr.rel (%p362) target = $region40
      $region39: #{encoder_forward.43} parent=27 // pred_region
        _
      $region40: #{encoder_forward.43} parent=27 // pred_fallthru
        _
    $region28: #{encoder_forward.43} parent=5 // pred_fallthru
      _
    %p365 = scmp.le.s32.totalorder 2, %s8
    // Predicated region
    $region41: #{encoder_forward.43} parent=5 // pred_check
      %p366 = pneg %p365
    $region42: #{encoder_forward.43} parent=5 // pred_check_branch
      %368 = sbr.rel (%p366) target = $region44
    $region43: #{encoder_forward.43} parent=5 // pred_region
      %s369 = ssub.s32 %s8, 2
      // Predicated region
      $region45: #{encoder_forward.43} parent=43 // pred_check
        %p370 = pneg %p98
      $region46: #{encoder_forward.43} parent=43 // pred_check_branch
        %372 = sbr.rel (%p370) target = $region48
      $region47: #{encoder_forward.43} parent=43 // pred_region
        %p373 = scmp.lt.s32.totalorder %s19, 1
        %s374 = scalar_select %p373, %s19, 1
        %s375 = smul.addr %s374, 2
        %s376 = scalar_lea.vmem %s2, %s375
      $region48: #{encoder_forward.43} parent=43 // pred_fallthru
        _
    $region44: #{encoder_forward.43} parent=5 // pred_fallthru
      _
  $region6: #{encoder_forward.43} parent=0 // loop_footer
    %s12 = sadd.s32 1, %s8
  $region7: #{encoder_forward.43} parent=0 // loop_footer_branch
    %7 = sbr.rel target = $region3
  $region8: #{encoder_forward.43} parent=0 // loop_exit
    _

// kernel: encoder_forward.42
$region0: #{encoder_forward.42}
  #allocation0 [shape = 'u32[]', space=smem, size = 0x4, offset = 0x4, fixed_abs, tag = 'smem constant byte address 0x4 - core index']
  #allocation1 [shape = 'u32[144,128]{1,0:T(1,128)}', space=vmem, size = 0x12000, scoped, tag = 'internal scratch']
  %s0 = inlined_call_operand.vmem [shape: bf16[2,8,64], index: 0, kind: input, shape index: {}]
  %s1 = inlined_call_operand.vmem [shape: bf16[3,64,32], index: 1, kind: input, shape index: {}]
  %s2 = inlined_call_operand.vmem [shape: f32[1,32], index: 2, kind: input, shape index: {}]
  %s3 = inlined_call_operand.vmem [shape: bf16[2,8,32], index: 3, kind: output, shape index: {}]
  %s4 = sld [smem:[#allocation0]]
  $region45: #{encoder_forward.42} parent=0
    _
  %s6 = ssub.s32 1, %s4
  %s7 = scalar_select 0, %s6, %s4
  loop: start=0, step=1, limit=4
  $region2: #{encoder_forward.42} parent=0 // loop_pre_header
    _
  $region3: #{encoder_forward.42} parent=0 // loop_header
    %s9 = sphi 0, %s13
    %p10 = scmp.ge.s32.totalorder %s9, 4
    %s16 = sphi 0, %s28
    %s17 = sphi 0, %s24
    %s18 = sphi 0, %s16
    %s19 = sphi 0, %s17
    %s20 = sphi 0, %s18
    %s21 = sphi 0, %s19
    %s33 = sphi 0, %s35
    %s36 = sphi 0, %s33
    %s37 = sphi 0, %s36
    %s53 = sphi 0, %s37
    %s57 = sphi 0, %s57
    %s59 = sphi 0, %s57
    %s60 = sphi 0, %s59
    %s74 = sphi 0, %s60
    %s78 = sphi 0, %s78
    %s80 = sphi 0, %s78
    %s81 = sphi 0, %s80
    %s95 = sphi 0, %s81
    %s103 = sphi 0, %s105
    %s106 = sphi 0, %s103
    %s107 = sphi 0, %s106
    %s123 = sphi 0, %s107
  $region4: #{encoder_forward.42} parent=0 // loop_header_branch
    %12 = sbr.rel (%p10) target = $region8
  $region5: #{encoder_forward.42} parent=0 // loop_body
    %s14 = ssub.s32 %s9, 1
    %s15 = ssub.s32 %s9, 2
    %s22 = sadd.s32 1, %s17
    %p23 = scmp.ge.s32.totalorder %s22, 1
    %s24 = scalar_select %p23, 0, %s22
    %s25 = sadd.s32 1, %s16
    %s26 = scalar_select %p23, %s25, %s16
    %p27 = scmp.ge.s32.totalorder %s26, 2
    %s28 = scalar_select %p27, 0, %s26
    %s29 = ssub.s32 %s16, %s28
    %s30 = ssub.s32 %s17, %s24
    %s31 = sor.u32 %s29, %s30
    %p32 = scmp.eq.s32.totalorder %s31, 0
    %s34 = sadd.s32 %s33, 1
    %s35 = scalar_select %p32, %s33, %s34
    %p38 = pneg %p32
    %p39 = scmp.eq.s32.totalorder %s9, 1
    %p40 = por %p38, %p39
    %p41 = scmp.ne.s32.totalorder %s33, %s36
    %p42 = scmp.eq.s32.totalorder %s9, 0
    %p43 = por %p41, %p42
    %p44 = scmp.ne.s32.totalorder %s33, %s36
    %p45 = scmp.eq.s32.totalorder %s14, 1
    %p46 = por %p44, %p45
    %p47 = scmp.ne.s32.totalorder %s36, %s37
    %p48 = scmp.eq.s32.totalorder %s14, 0
    %p49 = por %p47, %p48
    %p50 = scmp.ne.s32.totalorder %s36, %s37
    %p51 = scmp.eq.s32.totalorder %s15, 1
    %p52 = por %p50, %p51
    %p54 = scmp.ne.s32.totalorder %s37, %s53
    %p55 = scmp.eq.s32.totalorder %s15, 0
    %p56 = por %p54, %p55
    %s58 = sadd.s32 %s57, 1
    %p61 = scmp.eq.s32.totalorder %s9, 1
    %p62 = scmp.ne.s32.totalorder %s57, %s59
    %p63 = scmp.eq.s32.totalorder %s9, 0
    %p64 = por %p62, %p63
    %p65 = scmp.ne.s32.totalorder %s57, %s59
    %p66 = scmp.eq.s32.totalorder %s14, 1
    %p67 = por %p65, %p66
    %p68 = scmp.ne.s32.totalorder %s59, %s60
    %p69 = scmp.eq.s32.totalorder %s14, 0
    %p70 = por %p68, %p69
    %p71 = scmp.ne.s32.totalorder %s59, %s60
    %p72 = scmp.eq.s32.totalorder %s15, 1
    %p73 = por %p71, %p72
    %p75 = scmp.ne.s32.totalorder %s60, %s74
    %p76 = scmp.eq.s32.totalorder %s15, 0
    %p77 = por %p75, %p76
    %s79 = sadd.s32 %s78, 1
    %p82 = scmp.eq.s32.totalorder %s9, 1
    %p83 = scmp.ne.s32.totalorder %s78, %s80
    %p84 = scmp.eq.s32.totalorder %s9, 0
    %p85 = por %p83, %p84
    %p86 = scmp.ne.s32.totalorder %s78, %s80
    %p87 = scmp.eq.s32.totalorder %s14, 1
    %p88 = por %p86, %p87
    %p89 = scmp.ne.s32.totalorder %s80, %s81
    %p90 = scmp.eq.s32.totalorder %s14, 0
    %p91 = por %p89, %p90
    %p92 = scmp.ne.s32.totalorder %s80, %s81
    %p93 = scmp.eq.s32.totalorder %s15, 1
    %p94 = por %p92, %p93
    %p96 = scmp.ne.s32.totalorder %s81, %s95
    %p97 = scmp.eq.s32.totalorder %s15, 0
    %p98 = por %p96, %p97
    %s99 = ssub.s32 %s16, %s28
    %s100 = ssub.s32 %s17, %s24
    %s101 = sor.u32 %s99, %s100
    %p102 = scmp.eq.s32.totalorder %s101, 0
    %s104 = sadd.s32 %s103, 1
    %s105 = scalar_select %p102, %s103, %s104
    %p108 = pneg %p102
    %p109 = scmp.eq.s32.totalorder %s9, 1
    %p110 = por %p108, %p109
    %p111 = scmp.ne.s32.totalorder %s103, %s106
    %p112 = scmp.eq.s32.totalorder %s9, 0
    %p113 = por %p111, %p112
    %p114 = scmp.ne.s32.totalorder %s103, %s106
    %p115 = scmp.eq.s32.totalorder %s14, 1
    %p116 = por %p114, %p115
    %p117 = scmp.ne.s32.totalorder %s106, %s107
    %p118 = scmp.eq.s32.totalorder %s14, 0
    %p119 = por %p117, %p118
    %p120 = scmp.ne.s32.totalorder %s106, %s107
    %p121 = scmp.eq.s32.totalorder %s15, 1
    %p122 = por %p120, %p121
    %p124 = scmp.ne.s32.totalorder %s107, %s123
    %p125 = scmp.eq.s32.totalorder %s15, 0
    %p126 = por %p124, %p125
    %p127 = scmp.le.s32.totalorder 1, %s9
    %p128 = scmp.lt.s32.totalorder %s9, 3
    %p129 = pnand %p127, %p128
    %p130 = pneg %p129
    // Predicated region
    $region9: #{encoder_forward.42} parent=5 // pred_check
      _
    $region10: #{encoder_forward.42} parent=5 // pred_check_branch
      %132 = sbr.rel (%p129) target = $region12
    $region11: #{encoder_forward.42} parent=5 // pred_region
      %s133 = ssub.s32 %s9, 1
      // Predicated region
      $region13: #{encoder_forward.42} parent=11 // pred_check
        %p134 = pneg %p70
      $region14: #{encoder_forward.42} parent=11 // pred_check_branch
        %136 = sbr.rel (%p134) target = $region16
      $region15: #{encoder_forward.42} parent=11 // pred_region
        _
      $region16: #{encoder_forward.42} parent=11 // pred_fallthru
        _
      // Predicated region
      $region17: #{encoder_forward.42} parent=11 // pred_check
        %p137 = pneg %p91
      $region18: #{encoder_forward.42} parent=11 // pred_check_branch
        %139 = sbr.rel (%p137) target = $region20
      $region19: #{encoder_forward.42} parent=11 // pred_region
        _
      $region20: #{encoder_forward.42} parent=11 // pred_fallthru
        _
    $region12: #{encoder_forward.42} parent=5 // pred_fallthru
      _
    %p140 = scmp.lt.s32.totalorder %s9, 2
    // Predicated region
    $region21: #{encoder_forward.42} parent=5 // pred_check
      %p141 = pneg %p140
    $region22: #{encoder_forward.42} parent=5 // pred_check_branch
      %143 = sbr.rel (%p141) target = $region24
    $region23: #{encoder_forward.42} parent=5 // pred_region
      // Predicated region
      $region25: #{encoder_forward.42} parent=23 // pred_check
        %p144 = pneg %p43
      $region26: #{encoder_forward.42} parent=23 // pred_check_branch
        %146 = sbr.rel (%p144) target = $region28
      $region27: #{encoder_forward.42} parent=23 // pred_region
        %p147 = scmp.lt.s32.totalorder %s16, 1
        %s148 = scalar_select %p147, %s16, 1
        %p149 = scmp.lt.s32.totalorder %s17, 0
        %s150 = scalar_select %p149, %s17, 0
        %s151 = sadd.s32 %s150, %s148
        %s152 = smul.addr %s151, 4
        %s153 = scalar_lea.vmem %s0, %s152
      $region28: #{encoder_forward.42} parent=23 // pred_fallthru
        _
    $region24: #{encoder_forward.42} parent=5 // pred_fallthru
      _
    %p154 = scmp.le.s32.totalorder 1, %s9
    %p155 = scmp.lt.s32.totalorder %s9, 3
    %p156 = pnand %p154, %p155
    %p157 = pneg %p156
    // Predicated region
    $region29: #{encoder_forward.42} parent=5 // pred_check
      _
    $region30: #{encoder_forward.42} parent=5 // pred_check_branch
      %159 = sbr.rel (%p156) target = $region32
    $region31: #{encoder_forward.42} parent=5 // pred_region
      %s160 = ssub.s32 %s9, 1
      %p161 = scmp.lt.s32.totalorder %s18, 1
      %s162 = scalar_select %p161, %s18, 1
      %p163 = scmp.lt.s32.totalorder %s19, 0
      %s164 = scalar_select %p163, %s19, 0
      %s165 = sadd.s32 %s164, %s162
      %s166 = smul.addr %s165, 4
      %s167 = scalar_lea.vmem %s0, %s166
      %p168 = pneg %p49
      %p169 = pneg %p46
      %p170 = pneg %p70
      %p171 = pneg %p67
      %p172 = pneg %p91
      %p173 = pneg %p88
      %p174 = pneg %p119
      %p175 = pneg %p116
      %p176 = scmp.lt.s32.totalorder %s18, 1
      %s177 = scalar_select %p176, %s18, 1
      %p178 = scmp.lt.s32.totalorder %s19, 0
      %s179 = scalar_select %p178, %s19, 0
      %s180 = sadd.s32 %s179, %s177
      %s181 = smul.addr %s180, 4
      %s182 = scalar_lea.vmem %s3, %s181
      %p183 = scmp.lt.s32.totalorder %s18, 1
      %s184 = scalar_select %p183, %s18, 1
      %p185 = scmp.lt.s32.totalorder %s19, 0
      %s186 = scalar_select %p185, %s19, 0
      %s187 = sadd.s32 %s186, %s184
      %s188 = smul.addr %s187, 4
      %s189 = scalar_lea.vmem %s0, %s188
      %p190 = scmp.lt.s32.totalorder %s18, 1
      %s191 = scalar_select %p190, %s18, 1
      %p192 = scmp.lt.s32.totalorder %s19, 0
      %s193 = scalar_select %p192, %s19, 0
      %s194 = sadd.s32 %s193, %s191
      %s195 = smul.addr %s194, 4
      %s196 = scalar_lea.vmem %s3, %s195
      %v198 = vld [vmem:[%s189] sm:$0xf]
      %v200 = vunpack.c.l.b16 %v198
      %v201 = vpack.c.b16 %v200, %v200
      %v203 = vshrl.u32 %v201, 16
      %v205 = vrot.slane %v203, 7
      %v206 = vshll.u32 %v201, 16
      %v208 = vor.u32 %v205, %v206
      %vm210 = vcmask 1040384
      %vm211 = vsmask.f32 256
      %vm212 = vmand %vm210, %vm211
      %v213 = vsel %vm212, 0, %v208
      %v214 = vrot.slane %v206, 1
      %v215 = vor.u32 %v203, %v214
      %vm217 = vcmask 1043456
      %vm218 = vsmask.f32 3328
      %vm219 = vmand %vm217, %vm218
      %v220 = vsel %vm219, %v215, 0
      %s221 = scalar_lea.vmem %s1, 32
      %v222 = vld [vmem:[%s221] sm:$0xf]
      %v223 = vld [vmem:[%s221 + $0x4] sm:$0xf]
      %v224 = vld [vmem:[%s221 + $0x8] sm:$0xf]
      %v225 = vld [vmem:[%s221 + $0xc] sm:$0xf]
      %v226 = vld [vmem:[%s221 + $0x10] sm:$0xf]
      %v227 = vld [vmem:[%s221 + $0x14] sm:$0xf]
      %v228 = vld [vmem:[%s221 + $0x18] sm:$0xf]
      %v229 = vld [vmem:[%s221 + $0x1c] sm:$0xf]
      %v230 = vld [vmem:[%s1] sm:$0xf]
      %v231 = vld [vmem:[%s1 + $0x4] sm:$0xf]
      %v232 = vld [vmem:[%s1 + $0x8] sm:$0xf]
      %v233 = vld [vmem:[%s1 + $0xc] sm:$0xf]
      %v234 = vld [vmem:[%s1 + $0x10] sm:$0xf]
      %v235 = vld [vmem:[%s1 + $0x14] sm:$0xf]
      %v236 = vld [vmem:[%s1 + $0x18] sm:$0xf]
      %v237 = vld [vmem:[%s1 + $0x1c] sm:$0xf]
      %v246 = vunpack.c.l.b16 %v230
      %v247 = vunpack.c.l.b16 %v231
      %v248 = vunpack.c.l.b16 %v232
      %v249 = vunpack.c.l.b16 %v233
      %v250 = vunpack.c.l.b16 %v234
      %v251 = vunpack.c.l.b16 %v235
      %v252 = vunpack.c.l.b16 %v236
      %v253 = vunpack.c.l.b16 %v237
      %v254 = vpack.c.b16 %v247, %v246
      %v255 = vpack.c.b16 %v249, %v248
      %v256 = vpack.c.b16 %v251, %v250
      %v257 = vpack.c.b16 %v253, %v252
      %vm262 = vcmask 523264
      %v264 = vsel %vm262, %v213, 0
      %266 = vmatprep.subr.bf16.mxu0 0
      %267 = vmatpush1.bf16.msra.mxu0 %v254
      %268 = vmatprep.subr.bf16.mxu0 0
      %269 = vmatpush1.bf16.msra.mxu0 %v255
      %270 = vmatprep.subr.bf16.mxu0 0
      %271 = vmatpush1.bf16.msra.mxu0 %v256
      %272 = vmatprep.subr.bf16.mxu0 0
      %273 = vmatpush1.bf16.msra.mxu0 %v257
      %274 = vmatprep.subr.bf16.mxu0 0
      %275 = vmatpush1.bf16.msra.mxu0 0
      %276 = vmatprep.subr.bf16.mxu0 0
      %277 = vmatpush1.bf16.msra.mxu0 0
      %278 = vmatprep.subr.bf16.mxu0 0
      %279 = vmatpush1.bf16.msra.mxu0 0
      %280 = vmatprep.subr.bf16.mxu0 0
      %281 = vmatpush1.bf16.msra.mxu0 0
      %282 = vmatprep.subr.bf16.mxu0 0
      %283 = vmatpush1.bf16.msra.mxu0 0
      %284 = vmatprep.subr.bf16.mxu0 0
      %285 = vmatpush1.bf16.msra.mxu0 0
      %286 = vmatprep.subr.bf16.mxu0 0
      %287 = vmatpush1.bf16.msra.mxu0 0
      %288 = vmatprep.subr.bf16.mxu0 0
      %289 = vmatpush1.bf16.msra.mxu0 0
      %290 = vmatprep.subr.bf16.mxu0 0
      %291 = vmatpush1.bf16.msra.mxu0 0
      %292 = vmatprep.subr.bf16.mxu0 0
      %293 = vmatpush1.bf16.msra.mxu0 0
      %294 = vmatprep.subr.bf16.mxu0 0
      %295 = vmatpush1.bf16.msra.mxu0 0
      %296 = vmatprep.subr.bf16.mxu0 0
      %297 = vmatpush1.bf16.msra.mxu0 0
      %298 = vmatprep.mubr.bf16.mxu0 0
      %299 = vmatmul.mubr.bf16.gmra.mrb[0].mxu0 %v264
      %v300 = vpop.f32.mrb[0].mxu0
      %v301 = vadd.f32 0.0, %v300
      %v302 = vpop.f32.mrb[0].mxu0
      %v303 = vpop.f32.mrb[0].mxu0
      %v304 = vpop.f32.mrb[0].mxu0
      %305 = vdwg.mxu0
      %v314 = vunpack.c.l.b16 %v222
      %v315 = vunpack.c.l.b16 %v223
      %v316 = vunpack.c.l.b16 %v224
      %v317 = vunpack.c.l.b16 %v225
      %v318 = vunpack.c.l.b16 %v226
      %v319 = vunpack.c.l.b16 %v227
      %v320 = vunpack.c.l.b16 %v228
      %v321 = vunpack.c.l.b16 %v229
      %v322 = vpack.c.b16 %v315, %v314
      %v323 = vpack.c.b16 %v317, %v316
      %v324 = vpack.c.b16 %v319, %v318
      %v325 = vpack.c.b16 %v321, %v320
      %v331 = vsel %vm262, %v198, 0
      %333 = vmatprep.subr.bf16.mxu0 0
      %334 = vmatpush1.bf16.msra.mxu0 %v322
      %335 = vmatprep.subr.bf16.mxu0 0
      %336 = vmatpush1.bf16.msra.mxu0 %v323
      %337 = vmatprep.subr.bf16.mxu0 0
      %338 = vmatpush1.bf16.msra.mxu0 %v324
      %339 = vmatprep.subr.bf16.mxu0 0
      %340 = vmatpush1.bf16.msra.mxu0 %v325
      %341 = vmatprep.subr.bf16.mxu0 0
      %342 = vmatpush1.bf16.msra.mxu0 0
      %343 = vmatprep.subr.bf16.mxu0 0
      %344 = vmatpush1.bf16.msra.mxu0 0
      %345 = vmatprep.subr.bf16.mxu0 0
      %346 = vmatpush1.bf16.msra.mxu0 0
      %347 = vmatprep.subr.bf16.mxu0 0
      %348 = vmatpush1.bf16.msra.mxu0 0
      %349 = vmatprep.subr.bf16.mxu0 0
      %350 = vmatpush1.bf16.msra.mxu0 0
      %351 = vmatprep.subr.bf16.mxu0 0
      %352 = vmatpush1.bf16.msra.mxu0 0
      %353 = vmatprep.subr.bf16.mxu0 0
      %354 = vmatpush1.bf16.msra.mxu0 0
      %355 = vmatprep.subr.bf16.mxu0 0
      %356 = vmatpush1.bf16.msra.mxu0 0
      %357 = vmatprep.subr.bf16.mxu0 0
      %358 = vmatpush1.bf16.msra.mxu0 0
      %359 = vmatprep.subr.bf16.mxu0 0
      %360 = vmatpush1.bf16.msra.mxu0 0
      %361 = vmatprep.subr.bf16.mxu0 0
      %362 = vmatpush1.bf16.msra.mxu0 0
      %363 = vmatprep.subr.bf16.mxu0 0
      %364 = vmatpush1.bf16.msra.mxu0 0
      %365 = vmatprep.mubr.bf16.mxu0 0
      %366 = vmatmul.mubr.bf16.gmra.mrb[0].mxu0 %v331
      %v367 = vpop.f32.mrb[0].mxu0
      %v368 = vadd.f32 %v301, %v367
      %v369 = vpop.f32.mrb[0].mxu0
      %v370 = vpop.f32.mrb[0].mxu0
      %v371 = vpop.f32.mrb[0].mxu0
      %372 = vdwg.mxu0
      %s373 = scalar_lea.vmem %s1, 64
      %v374 = vld [vmem:[%s373] sm:$0xf]
      %v375 = vld [vmem:[%s373 + $0x4] sm:$0xf]
      %v376 = vld [vmem:[%s373 + $0x8] sm:$0xf]
      %v377 = vld [vmem:[%s373 + $0xc] sm:$0xf]
      %v378 = vld [vmem:[%s373 + $0x10] sm:$0xf]
      %v379 = vld [vmem:[%s373 + $0x14] sm:$0xf]
      %v380 = vld [vmem:[%s373 + $0x18] sm:$0xf]
      %v381 = vld [vmem:[%s373 + $0x1c] sm:$0xf]
      %v390 = vunpack.c.l.b16 %v374
      %v391 = vunpack.c.l.b16 %v375
      %v392 = vunpack.c.l.b16 %v376
      %v393 = vunpack.c.l.b16 %v377
      %v394 = vunpack.c.l.b16 %v378
      %v395 = vunpack.c.l.b16 %v379
      %v396 = vunpack.c.l.b16 %v380
      %v397 = vunpack.c.l.b16 %v381
      %v398 = vpack.c.b16 %v391, %v390
      %v399 = vpack.c.b16 %v393, %v392
      %v400 = vpack.c.b16 %v395, %v394
      %v401 = vpack.c.b16 %v397, %v396
      %v407 = vsel %vm262, %v220, 0
      %409 = vmatprep.subr.bf16.mxu0 0
      %410 = vmatpush1.bf16.msra.mxu0 %v398
      %411 = vmatprep.subr.bf16.mxu0 0
      %412 = vmatpush1.bf16.msra.mxu0 %v399
      %413 = vmatprep.subr.bf16.mxu0 0
      %414 = vmatpush1.bf16.msra.mxu0 %v400
      %415 = vmatprep.subr.bf16.mxu0 0
      %416 = vmatpush1.bf16.msra.mxu0 %v401
      %417 = vmatprep.subr.bf16.mxu0 0
      %418 = vmatpush1.bf16.msra.mxu0 0
      %419 = vmatprep.subr.bf16.mxu0 0
      %420 = vmatpush1.bf16.msra.mxu0 0
      %421 = vmatprep.subr.bf16.mxu0 0
      %422 = vmatpush1.bf16.msra.mxu0 0
      %423 = vmatprep.subr.bf16.mxu0 0
      %424 = vmatpush1.bf16.msra.mxu0 0
      %425 = vmatprep.subr.bf16.mxu0 0
      %426 = vmatpush1.bf16.msra.mxu0 0
      %427 = vmatprep.subr.bf16.mxu0 0
      %428 = vmatpush1.bf16.msra.mxu0 0
      %429 = vmatprep.subr.bf16.mxu0 0
      %430 = vmatpush1.bf16.msra.mxu0 0
      %431 = vmatprep.subr.bf16.mxu0 0
      %432 = vmatpush1.bf16.msra.mxu0 0
      %433 = vmatprep.subr.bf16.mxu0 0
      %434 = vmatpush1.bf16.msra.mxu0 0
      %435 = vmatprep.subr.bf16.mxu0 0
      %436 = vmatpush1.bf16.msra.mxu0 0
      %437 = vmatprep.subr.bf16.mxu0 0
      %438 = vmatpush1.bf16.msra.mxu0 0
      %439 = vmatprep.subr.bf16.mxu0 0
      %440 = vmatpush1.bf16.msra.mxu0 0
      %441 = vmatprep.mubr.bf16.mxu0 0
      %442 = vmatmul.mubr.bf16.gmra.mrb[0].mxu0 %v407
      %v443 = vpop.f32.mrb[0].mxu0
      %v444 = vadd.f32 0.0, %v443
      %v445 = vpop.f32.mrb[0].mxu0
      %v446 = vpop.f32.mrb[0].mxu0
      %v447 = vpop.f32.mrb[0].mxu0
      %448 = vdwg.mxu0
      %v449 = vadd.f32 %v368, %v444
      %v450 = vld [vmem:[%s2] sm:$0x1]
      %v452 = vlaneseq
      %v453 = vshrl.u32 %v452, 7
      %v454 = vsub.s32 0, %v453
      %v455 = vrot.slane %v450, %v454
      %v457 = vadd.f32 %v449, %v455
      %v458 = vpack.c.bf16 %v457, %v457
      %vm459 = vcmask 257024
      %460 = vst.msk [vmem:[%s196] sm:$0xf] %vm459, %v458
      %p461 = scmp.lt.s32.totalorder %s18, 1
      %s462 = scalar_select %p461, %s18, 1
      %p463 = scmp.lt.s32.totalorder %s19, 0
      %s464 = scalar_select %p463, %s19, 0
      %s465 = sadd.s32 %s464, %s462
      %s466 = smul.addr %s465, 4
      %s467 = scalar_lea.vmem %s3, %s466
      // Predicated region
      $region33: #{encoder_forward.42} parent=31 // pred_check
        %p468 = pneg %p116
      $region34: #{encoder_forward.42} parent=31 // pred_check_branch
        %470 = sbr.rel (%p468) target = $region36
      $region35: #{encoder_forward.42} parent=31 // pred_region
        _
      $region36: #{encoder_forward.42} parent=31 // pred_fallthru
        _
    $region32: #{encoder_forward.42} parent=5 // pred_fallthru
      _
    %p471 = scmp.le.s32.totalorder 2, %s9
    // Predicated region
    $region37: #{encoder_forward.42} parent=5 // pred_check
      %p472 = pneg %p471
    $region38: #{encoder_forward.42} parent=5 // pred_check_branch
      %474 = sbr.rel (%p472) target = $region40
    $region39: #{encoder_forward.42} parent=5 // pred_region
      %s475 = ssub.s32 %s9, 2
      // Predicated region
      $region41: #{encoder_forward.42} parent=39 // pred_check
        %p476 = pneg %p122
      $region42: #{encoder_forward.42} parent=39 // pred_check_branch
        %478 = sbr.rel (%p476) target = $region44
      $region43: #{encoder_forward.42} parent=39 // pred_region
        %p479 = scmp.lt.s32.totalorder %s20, 1
        %s480 = scalar_select %p479, %s20, 1
        %p481 = scmp.lt.s32.totalorder %s21, 0
        %s482 = scalar_select %p481, %s21, 0
        %s483 = sadd.s32 %s482, %s480
        %s484 = smul.addr %s483, 4
        %s485 = scalar_lea.vmem %s3, %s484
      $region44: #{encoder_forward.42} parent=39 // pred_fallthru
        _
    $region40: #{encoder_forward.42} parent=5 // pred_fallthru
      _
  $region6: #{encoder_forward.42} parent=0 // loop_footer
    %s13 = sadd.s32 1, %s9
  $region7: #{encoder_forward.42} parent=0 // loop_footer_branch
    %8 = sbr.rel target = $region3
  $region8: #{encoder_forward.42} parent=0 // loop_exit
    _

// kernel: encoder_forward.45
$region0: #{encoder_forward.45}
  #allocation0 [shape = 'u32[]', space=smem, size = 0x4, offset = 0x4, fixed_abs, tag = 'smem constant byte address 0x4 - core index']
  #allocation1 [shape = 'u32[144,128]{1,0:T(1,128)}', space=vmem, size = 0x12000, scoped, tag = 'internal scratch']
  %s0 = inlined_call_operand.vmem [shape: bf16[2,8,32], index: 0, kind: input, shape index: {}]
  %s1 = inlined_call_operand.vmem [shape: bf16[3,32,64], index: 1, kind: input, shape index: {}]
  %s2 = inlined_call_operand.vmem [shape: f32[1,64], index: 2, kind: input, shape index: {}]
  %s3 = inlined_call_operand.vmem [shape: bf16[2,8,64], index: 3, kind: output, shape index: {}]
  %s4 = sld [smem:[#allocation0]]
  $region45: #{encoder_forward.45} parent=0
    _
  %s6 = ssub.s32 1, %s4
  %s7 = scalar_select 0, %s6, %s4
  loop: start=0, step=1, limit=4
  $region2: #{encoder_forward.45} parent=0 // loop_pre_header
    _
  $region3: #{encoder_forward.45} parent=0 // loop_header
    %s9 = sphi 0, %s13
    %p10 = scmp.ge.s32.totalorder %s9, 4
    %s16 = sphi 0, %s28
    %s17 = sphi 0, %s24
    %s18 = sphi 0, %s16
    %s19 = sphi 0, %s17
    %s20 = sphi 0, %s18
    %s21 = sphi 0, %s19
    %s33 = sphi 0, %s35
    %s36 = sphi 0, %s33
    %s37 = sphi 0, %s36
    %s53 = sphi 0, %s37
    %s57 = sphi 0, %s57
    %s59 = sphi 0, %s57
    %s60 = sphi 0, %s59
    %s74 = sphi 0, %s60
    %s78 = sphi 0, %s78
    %s80 = sphi 0, %s78
    %s81 = sphi 0, %s80
    %s95 = sphi 0, %s81
    %s103 = sphi 0, %s105
    %s106 = sphi 0, %s103
    %s107 = sphi 0, %s106
    %s123 = sphi 0, %s107
  $region4: #{encoder_forward.45} parent=0 // loop_header_branch
    %12 = sbr.rel (%p10) target = $region8
  $region5: #{encoder_forward.45} parent=0 // loop_body
    %s14 = ssub.s32 %s9, 1
    %s15 = ssub.s32 %s9, 2
    %s22 = sadd.s32 1, %s17
    %p23 = scmp.ge.s32.totalorder %s22, 1
    %s24 = scalar_select %p23, 0, %s22
    %s25 = sadd.s32 1, %s16
    %s26 = scalar_select %p23, %s25, %s16
    %p27 = scmp.ge.s32.totalorder %s26, 2
    %s28 = scalar_select %p27, 0, %s26
    %s29 = ssub.s32 %s16, %s28
    %s30 = ssub.s32 %s17, %s24
    %s31 = sor.u32 %s29, %s30
    %p32 = scmp.eq.s32.totalorder %s31, 0
    %s34 = sadd.s32 %s33, 1
    %s35 = scalar_select %p32, %s33, %s34
    %p38 = pneg %p32
    %p39 = scmp.eq.s32.totalorder %s9, 1
    %p40 = por %p38, %p39
    %p41 = scmp.ne.s32.totalorder %s33, %s36
    %p42 = scmp.eq.s32.totalorder %s9, 0
    %p43 = por %p41, %p42
    %p44 = scmp.ne.s32.totalorder %s33, %s36
    %p45 = scmp.eq.s32.totalorder %s14, 1
    %p46 = por %p44, %p45
    %p47 = scmp.ne.s32.totalorder %s36, %s37
    %p48 = scmp.eq.s32.totalorder %s14, 0
    %p49 = por %p47, %p48
    %p50 = scmp.ne.s32.totalorder %s36, %s37
    %p51 = scmp.eq.s32.totalorder %s15, 1
    %p52 = por %p50, %p51
    %p54 = scmp.ne.s32.totalorder %s37, %s53
    %p55 = scmp.eq.s32.totalorder %s15, 0
    %p56 = por %p54, %p55
    %s58 = sadd.s32 %s57, 1
    %p61 = scmp.eq.s32.totalorder %s9, 1
    %p62 = scmp.ne.s32.totalorder %s57, %s59
    %p63 = scmp.eq.s32.totalorder %s9, 0
    %p64 = por %p62, %p63
    %p65 = scmp.ne.s32.totalorder %s57, %s59
    %p66 = scmp.eq.s32.totalorder %s14, 1
    %p67 = por %p65, %p66
    %p68 = scmp.ne.s32.totalorder %s59, %s60
    %p69 = scmp.eq.s32.totalorder %s14, 0
    %p70 = por %p68, %p69
    %p71 = scmp.ne.s32.totalorder %s59, %s60
    %p72 = scmp.eq.s32.totalorder %s15, 1
    %p73 = por %p71, %p72
    %p75 = scmp.ne.s32.totalorder %s60, %s74
    %p76 = scmp.eq.s32.totalorder %s15, 0
    %p77 = por %p75, %p76
    %s79 = sadd.s32 %s78, 1
    %p82 = scmp.eq.s32.totalorder %s9, 1
    %p83 = scmp.ne.s32.totalorder %s78, %s80
    %p84 = scmp.eq.s32.totalorder %s9, 0
    %p85 = por %p83, %p84
    %p86 = scmp.ne.s32.totalorder %s78, %s80
    %p87 = scmp.eq.s32.totalorder %s14, 1
    %p88 = por %p86, %p87
    %p89 = scmp.ne.s32.totalorder %s80, %s81
    %p90 = scmp.eq.s32.totalorder %s14, 0
    %p91 = por %p89, %p90
    %p92 = scmp.ne.s32.totalorder %s80, %s81
    %p93 = scmp.eq.s32.totalorder %s15, 1
    %p94 = por %p92, %p93
    %p96 = scmp.ne.s32.totalorder %s81, %s95
    %p97 = scmp.eq.s32.totalorder %s15, 0
    %p98 = por %p96, %p97
    %s99 = ssub.s32 %s16, %s28
    %s100 = ssub.s32 %s17, %s24
    %s101 = sor.u32 %s99, %s100
    %p102 = scmp.eq.s32.totalorder %s101, 0
    %s104 = sadd.s32 %s103, 1
    %s105 = scalar_select %p102, %s103, %s104
    %p108 = pneg %p102
    %p109 = scmp.eq.s32.totalorder %s9, 1
    %p110 = por %p108, %p109
    %p111 = scmp.ne.s32.totalorder %s103, %s106
    %p112 = scmp.eq.s32.totalorder %s9, 0
    %p113 = por %p111, %p112
    %p114 = scmp.ne.s32.totalorder %s103, %s106
    %p115 = scmp.eq.s32.totalorder %s14, 1
    %p116 = por %p114, %p115
    %p117 = scmp.ne.s32.totalorder %s106, %s107
    %p118 = scmp.eq.s32.totalorder %s14, 0
    %p119 = por %p117, %p118
    %p120 = scmp.ne.s32.totalorder %s106, %s107
    %p121 = scmp.eq.s32.totalorder %s15, 1
    %p122 = por %p120, %p121
    %p124 = scmp.ne.s32.totalorder %s107, %s123
    %p125 = scmp.eq.s32.totalorder %s15, 0
    %p126 = por %p124, %p125
    %p127 = scmp.le.s32.totalorder 1, %s9
    %p128 = scmp.lt.s32.totalorder %s9, 3
    %p129 = pnand %p127, %p128
    %p130 = pneg %p129
    // Predicated region
    $region9: #{encoder_forward.45} parent=5 // pred_check
      _
    $region10: #{encoder_forward.45} parent=5 // pred_check_branch
      %132 = sbr.rel (%p129) target = $region12
    $region11: #{encoder_forward.45} parent=5 // pred_region
      %s133 = ssub.s32 %s9, 1
      // Predicated region
      $region13: #{encoder_forward.45} parent=11 // pred_check
        %p134 = pneg %p70
      $region14: #{encoder_forward.45} parent=11 // pred_check_branch
        %136 = sbr.rel (%p134) target = $region16
      $region15: #{encoder_forward.45} parent=11 // pred_region
        _
      $region16: #{encoder_forward.45} parent=11 // pred_fallthru
        _
      // Predicated region
      $region17: #{encoder_forward.45} parent=11 // pred_check
        %p137 = pneg %p91
      $region18: #{encoder_forward.45} parent=11 // pred_check_branch
        %139 = sbr.rel (%p137) target = $region20
      $region19: #{encoder_forward.45} parent=11 // pred_region
        _
      $region20: #{encoder_forward.45} parent=11 // pred_fallthru
        _
    $region12: #{encoder_forward.45} parent=5 // pred_fallthru
      _
    %p140 = scmp.lt.s32.totalorder %s9, 2
    // Predicated region
    $region21: #{encoder_forward.45} parent=5 // pred_check
      %p141 = pneg %p140
    $region22: #{encoder_forward.45} parent=5 // pred_check_branch
      %143 = sbr.rel (%p141) target = $region24
    $region23: #{encoder_forward.45} parent=5 // pred_region
      // Predicated region
      $region25: #{encoder_forward.45} parent=23 // pred_check
        %p144 = pneg %p43
      $region26: #{encoder_forward.45} parent=23 // pred_check_branch
        %146 = sbr.rel (%p144) target = $region28
      $region27: #{encoder_forward.45} parent=23 // pred_region
        %p147 = scmp.lt.s32.totalorder %s16, 1
        %s148 = scalar_select %p147, %s16, 1
        %p149 = scmp.lt.s32.totalorder %s17, 0
        %s150 = scalar_select %p149, %s17, 0
        %s151 = sadd.s32 %s150, %s148
        %s152 = smul.addr %s151, 4
        %s153 = scalar_lea.vmem %s0, %s152
      $region28: #{encoder_forward.45} parent=23 // pred_fallthru
        _
    $region24: #{encoder_forward.45} parent=5 // pred_fallthru
      _
    %p154 = scmp.le.s32.totalorder 1, %s9
    %p155 = scmp.lt.s32.totalorder %s9, 3
    %p156 = pnand %p154, %p155
    %p157 = pneg %p156
    // Predicated region
    $region29: #{encoder_forward.45} parent=5 // pred_check
      _
    $region30: #{encoder_forward.45} parent=5 // pred_check_branch
      %159 = sbr.rel (%p156) target = $region32
    $region31: #{encoder_forward.45} parent=5 // pred_region
      %s160 = ssub.s32 %s9, 1
      %p161 = scmp.lt.s32.totalorder %s18, 1
      %s162 = scalar_select %p161, %s18, 1
      %p163 = scmp.lt.s32.totalorder %s19, 0
      %s164 = scalar_select %p163, %s19, 0
      %s165 = sadd.s32 %s164, %s162
      %s166 = smul.addr %s165, 4
      %s167 = scalar_lea.vmem %s0, %s166
      %p168 = pneg %p49
      %p169 = pneg %p46
      %p170 = pneg %p70
      %p171 = pneg %p67
      %p172 = pneg %p91
      %p173 = pneg %p88
      %p174 = pneg %p119
      %p175 = pneg %p116
      %p176 = scmp.lt.s32.totalorder %s18, 1
      %s177 = scalar_select %p176, %s18, 1
      %p178 = scmp.lt.s32.totalorder %s19, 0
      %s179 = scalar_select %p178, %s19, 0
      %s180 = sadd.s32 %s179, %s177
      %s181 = smul.addr %s180, 4
      %s182 = scalar_lea.vmem %s3, %s181
      %p183 = scmp.lt.s32.totalorder %s18, 1
      %s184 = scalar_select %p183, %s18, 1
      %p185 = scmp.lt.s32.totalorder %s19, 0
      %s186 = scalar_select %p185, %s19, 0
      %s187 = sadd.s32 %s186, %s184
      %s188 = smul.addr %s187, 4
      %s189 = scalar_lea.vmem %s0, %s188
      %p190 = scmp.lt.s32.totalorder %s18, 1
      %s191 = scalar_select %p190, %s18, 1
      %p192 = scmp.lt.s32.totalorder %s19, 0
      %s193 = scalar_select %p192, %s19, 0
      %s194 = sadd.s32 %s193, %s191
      %s195 = smul.addr %s194, 4
      %s196 = scalar_lea.vmem %s3, %s195
      %v198 = vld [vmem:[%s189] sm:$0xf]
      %v200 = vunpack.c.l.b16 %v198
      %v201 = vpack.c.b16 %v200, %v200
      %v203 = vshrl.u32 %v201, 16
      %v205 = vrot.slane %v203, 7
      %v206 = vshll.u32 %v201, 16
      %v208 = vor.u32 %v205, %v206
      %vm210 = vcmask 1040384
      %vm211 = vsmask.f32 256
      %vm212 = vmand %vm210, %vm211
      %v213 = vsel %vm212, 0, %v208
      %v214 = vrot.slane %v206, 1
      %v215 = vor.u32 %v203, %v214
      %vm217 = vcmask 1043456
      %vm218 = vsmask.f32 3328
      %vm219 = vmand %vm217, %vm218
      %v220 = vsel %vm219, %v215, 0
      %s221 = scalar_lea.vmem %s1, 16
      %v222 = vld [vmem:[%s221] sm:$0xf]
      %v223 = vld [vmem:[%s221 + $0x4] sm:$0xf]
      %v224 = vld [vmem:[%s221 + $0x8] sm:$0xf]
      %v225 = vld [vmem:[%s221 + $0xc] sm:$0xf]
      %v226 = vld [vmem:[%s1] sm:$0xf]
      %v227 = vld [vmem:[%s1 + $0x4] sm:$0xf]
      %v228 = vld [vmem:[%s1 + $0x8] sm:$0xf]
      %v229 = vld [vmem:[%s1 + $0xc] sm:$0xf]
      %v234 = vunpack.c.l.b16 %v226
      %v235 = vunpack.c.l.b16 %v227
      %v236 = vunpack.c.l.b16 %v228
      %v237 = vunpack.c.l.b16 %v229
      %v238 = vpack.c.b16 %v235, %v234
      %v239 = vpack.c.b16 %v237, %v236
      %vm242 = vcmask 261120
      %v244 = vsel %vm242, %v213, 0
      %246 = vmatprep.subr.bf16.mxu0 0
      %247 = vmatpush1.bf16.msra.mxu0 %v238
      %248 = vmatprep.subr.bf16.mxu0 0
      %249 = vmatpush1.bf16.msra.mxu0 %v239
      %250 = vmatprep.subr.bf16.mxu0 0
      %251 = vmatpush1.bf16.msra.mxu0 0
      %252 = vmatprep.subr.bf16.mxu0 0
      %253 = vmatpush1.bf16.msra.mxu0 0
      %254 = vmatprep.subr.bf16.mxu0 0
      %255 = vmatpush1.bf16.msra.mxu0 0
      %256 = vmatprep.subr.bf16.mxu0 0
      %257 = vmatpush1.bf16.msra.mxu0 0
      %258 = vmatprep.subr.bf16.mxu0 0
      %259 = vmatpush1.bf16.msra.mxu0 0
      %260 = vmatprep.subr.bf16.mxu0 0
      %261 = vmatpush1.bf16.msra.mxu0 0
      %262 = vmatprep.subr.bf16.mxu0 0
      %263 = vmatpush1.bf16.msra.mxu0 0
      %264 = vmatprep.subr.bf16.mxu0 0
      %265 = vmatpush1.bf16.msra.mxu0 0
      %266 = vmatprep.subr.bf16.mxu0 0
      %267 = vmatpush1.bf16.msra.mxu0 0
      %268 = vmatprep.subr.bf16.mxu0 0
      %269 = vmatpush1.bf16.msra.mxu0 0
      %270 = vmatprep.subr.bf16.mxu0 0
      %271 = vmatpush1.bf16.msra.mxu0 0
      %272 = vmatprep.subr.bf16.mxu0 0
      %273 = vmatpush1.bf16.msra.mxu0 0
      %274 = vmatprep.subr.bf16.mxu0 0
      %275 = vmatpush1.bf16.msra.mxu0 0
      %276 = vmatprep.subr.bf16.mxu0 0
      %277 = vmatpush1.bf16.msra.mxu0 0
      %278 = vmatprep.mubr.bf16.mxu0 0
      %279 = vmatmul.mubr.bf16.gmra.mrb[0].mxu0 %v244
      %v280 = vpop.f32.mrb[0].mxu0
      %v281 = vadd.f32 0.0, %v280
      %v282 = vpop.f32.mrb[0].mxu0
      %v283 = vpop.f32.mrb[0].mxu0
      %v284 = vpop.f32.mrb[0].mxu0
      %285 = vdwg.mxu0
      %v290 = vunpack.c.l.b16 %v222
      %v291 = vunpack.c.l.b16 %v223
      %v292 = vunpack.c.l.b16 %v224
      %v293 = vunpack.c.l.b16 %v225
      %v294 = vpack.c.b16 %v291, %v290
      %v295 = vpack.c.b16 %v293, %v292
      %v299 = vsel %vm242, %v198, 0
      %301 = vmatprep.subr.bf16.mxu0 0
      %302 = vmatpush1.bf16.msra.mxu0 %v294
      %303 = vmatprep.subr.bf16.mxu0 0
      %304 = vmatpush1.bf16.msra.mxu0 %v295
      %305 = vmatprep.subr.bf16.mxu0 0
      %306 = vmatpush1.bf16.msra.mxu0 0
      %307 = vmatprep.subr.bf16.mxu0 0
      %308 = vmatpush1.bf16.msra.mxu0 0
      %309 = vmatprep.subr.bf16.mxu0 0
      %310 = vmatpush1.bf16.msra.mxu0 0
      %311 = vmatprep.subr.bf16.mxu0 0
      %312 = vmatpush1.bf16.msra.mxu0 0
      %313 = vmatprep.subr.bf16.mxu0 0
      %314 = vmatpush1.bf16.msra.mxu0 0
      %315 = vmatprep.subr.bf16.mxu0 0
      %316 = vmatpush1.bf16.msra.mxu0 0
      %317 = vmatprep.subr.bf16.mxu0 0
      %318 = vmatpush1.bf16.msra.mxu0 0
      %319 = vmatprep.subr.bf16.mxu0 0
      %320 = vmatpush1.bf16.msra.mxu0 0
      %321 = vmatprep.subr.bf16.mxu0 0
      %322 = vmatpush1.bf16.msra.mxu0 0
      %323 = vmatprep.subr.bf16.mxu0 0
      %324 = vmatpush1.bf16.msra.mxu0 0
      %325 = vmatprep.subr.bf16.mxu0 0
      %326 = vmatpush1.bf16.msra.mxu0 0
      %327 = vmatprep.subr.bf16.mxu0 0
      %328 = vmatpush1.bf16.msra.mxu0 0
      %329 = vmatprep.subr.bf16.mxu0 0
      %330 = vmatpush1.bf16.msra.mxu0 0
      %331 = vmatprep.subr.bf16.mxu0 0
      %332 = vmatpush1.bf16.msra.mxu0 0
      %333 = vmatprep.mubr.bf16.mxu0 0
      %334 = vmatmul.mubr.bf16.gmra.mrb[0].mxu0 %v299
      %v335 = vpop.f32.mrb[0].mxu0
      %v336 = vadd.f32 %v281, %v335
      %v337 = vpop.f32.mrb[0].mxu0
      %v338 = vpop.f32.mrb[0].mxu0
      %v339 = vpop.f32.mrb[0].mxu0
      %340 = vdwg.mxu0
      %s341 = scalar_lea.vmem %s1, 32
      %v342 = vld [vmem:[%s341] sm:$0xf]
      %v343 = vld [vmem:[%s341 + $0x4] sm:$0xf]
      %v344 = vld [vmem:[%s341 + $0x8] sm:$0xf]
      %v345 = vld [vmem:[%s341 + $0xc] sm:$0xf]
      %v350 = vunpack.c.l.b16 %v342
      %v351 = vunpack.c.l.b16 %v343
      %v352 = vunpack.c.l.b16 %v344
      %v353 = vunpack.c.l.b16 %v345
      %v354 = vpack.c.b16 %v351, %v350
      %v355 = vpack.c.b16 %v353, %v352
      %v359 = vsel %vm242, %v220, 0
      %361 = vmatprep.subr.bf16.mxu0 0
      %362 = vmatpush1.bf16.msra.mxu0 %v354
      %363 = vmatprep.subr.bf16.mxu0 0
      %364 = vmatpush1.bf16.msra.mxu0 %v355
      %365 = vmatprep.subr.bf16.mxu0 0
      %366 = vmatpush1.bf16.msra.mxu0 0
      %367 = vmatprep.subr.bf16.mxu0 0
      %368 = vmatpush1.bf16.msra.mxu0 0
      %369 = vmatprep.subr.bf16.mxu0 0
      %370 = vmatpush1.bf16.msra.mxu0 0
      %371 = vmatprep.subr.bf16.mxu0 0
      %372 = vmatpush1.bf16.msra.mxu0 0
      %373 = vmatprep.subr.bf16.mxu0 0
      %374 = vmatpush1.bf16.msra.mxu0 0
      %375 = vmatprep.subr.bf16.mxu0 0
      %376 = vmatpush1.bf16.msra.mxu0 0
      %377 = vmatprep.subr.bf16.mxu0 0
      %378 = vmatpush1.bf16.msra.mxu0 0
      %379 = vmatprep.subr.bf16.mxu0 0
      %380 = vmatpush1.bf16.msra.mxu0 0
      %381 = vmatprep.subr.bf16.mxu0 0
      %382 = vmatpush1.bf16.msra.mxu0 0
      %383 = vmatprep.subr.bf16.mxu0 0
      %384 = vmatpush1.bf16.msra.mxu0 0
      %385 = vmatprep.subr.bf16.mxu0 0
      %386 = vmatpush1.bf16.msra.mxu0 0
      %387 = vmatprep.subr.bf16.mxu0 0
      %388 = vmatpush1.bf16.msra.mxu0 0
      %389 = vmatprep.subr.bf16.mxu0 0
      %390 = vmatpush1.bf16.msra.mxu0 0
      %391 = vmatprep.subr.bf16.mxu0 0
      %392 = vmatpush1.bf16.msra.mxu0 0
      %393 = vmatprep.mubr.bf16.mxu0 0
      %394 = vmatmul.mubr.bf16.gmra.mrb[0].mxu0 %v359
      %v395 = vpop.f32.mrb[0].mxu0
      %v396 = vadd.f32 0.0, %v395
      %v397 = vpop.f32.mrb[0].mxu0
      %v398 = vpop.f32.mrb[0].mxu0
      %v399 = vpop.f32.mrb[0].mxu0
      %400 = vdwg.mxu0
      %v401 = vadd.f32 %v336, %v396
      %v402 = vld [vmem:[%s2] sm:$0x1]
      %v404 = vlaneseq
      %v405 = vshrl.u32 %v404, 7
      %v406 = vsub.s32 0, %v405
      %v407 = vrot.slane %v402, %v406
      %v409 = vadd.f32 %v401, %v407
      %v410 = vpack.c.bf16 %v409, %v409
      %vm411 = vcmask 519168
      %412 = vst.msk [vmem:[%s196] sm:$0xf] %vm411, %v410
      %p413 = scmp.lt.s32.totalorder %s18, 1
      %s414 = scalar_select %p413, %s18, 1
      %p415 = scmp.lt.s32.totalorder %s19, 0
      %s416 = scalar_select %p415, %s19, 0
      %s417 = sadd.s32 %s416, %s414
      %s418 = smul.addr %s417, 4
      %s419 = scalar_lea.vmem %s3, %s418
      // Predicated region
      $region33: #{encoder_forward.45} parent=31 // pred_check
        %p420 = pneg %p116
      $region34: #{encoder_forward.45} parent=31 // pred_check_branch
        %422 = sbr.rel (%p420) target = $region36
      $region35: #{encoder_forward.45} parent=31 // pred_region
        _
      $region36: #{encoder_forward.45} parent=31 // pred_fallthru
        _
    $region32: #{encoder_forward.45} parent=5 // pred_fallthru
      _
    %p423 = scmp.le.s32.totalorder 2, %s9
    // Predicated region
    $region37: #{encoder_forward.45} parent=5 // pred_check
      %p424 = pneg %p423
    $region38: #{encoder_forward.45} parent=5 // pred_check_branch
      %426 = sbr.rel (%p424) target = $region40
    $region39: #{encoder_forward.45} parent=5 // pred_region
      %s427 = ssub.s32 %s9, 2
      // Predicated region
      $region41: #{encoder_forward.45} parent=39 // pred_check
        %p428 = pneg %p122
      $region42: #{encoder_forward.45} parent=39 // pred_check_branch
        %430 = sbr.rel (%p428) target = $region44
      $region43: #{encoder_forward.45} parent=39 // pred_region
        %p431 = scmp.lt.s32.totalorder %s20, 1
        %s432 = scalar_select %p431, %s20, 1
        %p433 = scmp.lt.s32.totalorder %s21, 0
        %s434 = scalar_select %p433, %s21, 0
        %s435 = sadd.s32 %s434, %s432
        %s436 = smul.addr %s435, 4
        %s437 = scalar_lea.vmem %s3, %s436
      $region44: #{encoder_forward.45} parent=39 // pred_fallthru
        _
    $region40: #{encoder_forward.45} parent=5 // pred_fallthru
      _
  $region6: #{encoder_forward.45} parent=0 // loop_footer
    %s13 = sadd.s32 1, %s9
  $region7: #{encoder_forward.45} parent=0 // loop_footer_branch
    %8 = sbr.rel target = $region3
  $region8: #{encoder_forward.45} parent=0 // loop_exit
    _

// kernel: encoder_forward.47
$region0: #{encoder_forward.47}
  #allocation0 [shape = 'u32[]', space=smem, size = 0x4, offset = 0x4, fixed_abs, tag = 'smem constant byte address 0x4 - core index']
  #allocation1 [shape = 'u32[144,128]{1,0:T(1,128)}', space=vmem, size = 0x12000, scoped, tag = 'internal scratch']
  %s0 = inlined_call_operand.vmem [shape: bf16[2,8,64], index: 0, kind: input, shape index: {}]
  %s1 = inlined_call_operand.vmem [shape: f32[2,2,64], index: 1, kind: input, shape index: {}]
  %s2 = inlined_call_operand.vmem [shape: f32[1,64], index: 2, kind: input, shape index: {}]
  %s3 = inlined_call_operand.vmem [shape: f32[1,64], index: 3, kind: input, shape index: {}]
  %s4 = inlined_call_operand.vmem [shape: bf16[2,8,64], index: 4, kind: output, shape index: {}]
  %s5 = sld [smem:[#allocation0]]
  $region49: #{encoder_forward.47} parent=0
    _
  %s7 = ssub.s32 1, %s5
  %s8 = scalar_select 0, %s7, %s5
  loop: start=0, step=1, limit=4
  $region2: #{encoder_forward.47} parent=0 // loop_pre_header
    _
  $region3: #{encoder_forward.47} parent=0 // loop_header
    %s10 = sphi 0, %s14
    %p11 = scmp.ge.s32.totalorder %s10, 4
    %s17 = sphi 0, %s29
    %s18 = sphi 0, %s25
    %s19 = sphi 0, %s17
    %s20 = sphi 0, %s18
    %s21 = sphi 0, %s19
    %s22 = sphi 0, %s20
    %s34 = sphi 0, %s36
    %s37 = sphi 0, %s34
    %s38 = sphi 0, %s37
    %s54 = sphi 0, %s38
    %s60 = sphi 0, %s62
    %s63 = sphi 0, %s60
    %s64 = sphi 0, %s63
    %s80 = sphi 0, %s64
    %s84 = sphi 0, %s84
    %s86 = sphi 0, %s84
    %s87 = sphi 0, %s86
    %s101 = sphi 0, %s87
    %s105 = sphi 0, %s105
    %s107 = sphi 0, %s105
    %s108 = sphi 0, %s107
    %s122 = sphi 0, %s108
    %s130 = sphi 0, %s132
    %s133 = sphi 0, %s130
    %s134 = sphi 0, %s133
    %s150 = sphi 0, %s134
  $region4: #{encoder_forward.47} parent=0 // loop_header_branch
    %13 = sbr.rel (%p11) target = $region8
  $region5: #{encoder_forward.47} parent=0 // loop_body
    %s15 = ssub.s32 %s10, 1
    %s16 = ssub.s32 %s10, 2
    %s23 = sadd.s32 1, %s18
    %p24 = scmp.ge.s32.totalorder %s23, 1
    %s25 = scalar_select %p24, 0, %s23
    %s26 = sadd.s32 1, %s17
    %s27 = scalar_select %p24, %s26, %s17
    %p28 = scmp.ge.s32.totalorder %s27, 2
    %s29 = scalar_select %p28, 0, %s27
    %s30 = ssub.s32 %s17, %s29
    %s31 = ssub.s32 %s18, %s25
    %s32 = sor.u32 %s30, %s31
    %p33 = scmp.eq.s32.totalorder %s32, 0
    %s35 = sadd.s32 %s34, 1
    %s36 = scalar_select %p33, %s34, %s35
    %p39 = pneg %p33
    %p40 = scmp.eq.s32.totalorder %s10, 1
    %p41 = por %p39, %p40
    %p42 = scmp.ne.s32.totalorder %s34, %s37
    %p43 = scmp.eq.s32.totalorder %s10, 0
    %p44 = por %p42, %p43
    %p45 = scmp.ne.s32.totalorder %s34, %s37
    %p46 = scmp.eq.s32.totalorder %s15, 1
    %p47 = por %p45, %p46
    %p48 = scmp.ne.s32.totalorder %s37, %s38
    %p49 = scmp.eq.s32.totalorder %s15, 0
    %p50 = por %p48, %p49
    %p51 = scmp.ne.s32.totalorder %s37, %s38
    %p52 = scmp.eq.s32.totalorder %s16, 1
    %p53 = por %p51, %p52
    %p55 = scmp.ne.s32.totalorder %s38, %s54
    %p56 = scmp.eq.s32.totalorder %s16, 0
    %p57 = por %p55, %p56
    %s58 = ssub.s32 %s17, %s29
    %p59 = scmp.eq.s32.totalorder %s58, 0
    %s61 = sadd.s32 %s60, 1
    %s62 = scalar_select %p59, %s60, %s61
    %p65 = pneg %p59
    %p66 = scmp.eq.s32.totalorder %s10, 1
    %p67 = por %p65, %p66
    %p68 = scmp.ne.s32.totalorder %s60, %s63
    %p69 = scmp.eq.s32.totalorder %s10, 0
    %p70 = por %p68, %p69
    %p71 = scmp.ne.s32.totalorder %s60, %s63
    %p72 = scmp.eq.s32.totalorder %s15, 1
    %p73 = por %p71, %p72
    %p74 = scmp.ne.s32.totalorder %s63, %s64
    %p75 = scmp.eq.s32.totalorder %s15, 0
    %p76 = por %p74, %p75
    %p77 = scmp.ne.s32.totalorder %s63, %s64
    %p78 = scmp.eq.s32.totalorder %s16, 1
    %p79 = por %p77, %p78
    %p81 = scmp.ne.s32.totalorder %s64, %s80
    %p82 = scmp.eq.s32.totalorder %s16, 0
    %p83 = por %p81, %p82
    %s85 = sadd.s32 %s84, 1
    %p88 = scmp.eq.s32.totalorder %s10, 1
    %p89 = scmp.ne.s32.totalorder %s84, %s86
    %p90 = scmp.eq.s32.totalorder %s10, 0
    %p91 = por %p89, %p90
    %p92 = scmp.ne.s32.totalorder %s84, %s86
    %p93 = scmp.eq.s32.totalorder %s15, 1
    %p94 = por %p92, %p93
    %p95 = scmp.ne.s32.totalorder %s86, %s87
    %p96 = scmp.eq.s32.totalorder %s15, 0
    %p97 = por %p95, %p96
    %p98 = scmp.ne.s32.totalorder %s86, %s87
    %p99 = scmp.eq.s32.totalorder %s16, 1
    %p100 = por %p98, %p99
    %p102 = scmp.ne.s32.totalorder %s87, %s101
    %p103 = scmp.eq.s32.totalorder %s16, 0
    %p104 = por %p102, %p103
    %s106 = sadd.s32 %s105, 1
    %p109 = scmp.eq.s32.totalorder %s10, 1
    %p110 = scmp.ne.s32.totalorder %s105, %s107
    %p111 = scmp.eq.s32.totalorder %s10, 0
    %p112 = por %p110, %p111
    %p113 = scmp.ne.s32.totalorder %s105, %s107
    %p114 = scmp.eq.s32.totalorder %s15, 1
    %p115 = por %p113, %p114
    %p116 = scmp.ne.s32.totalorder %s107, %s108
    %p117 = scmp.eq.s32.totalorder %s15, 0
    %p118 = por %p116, %p117
    %p119 = scmp.ne.s32.totalorder %s107, %s108
    %p120 = scmp.eq.s32.totalorder %s16, 1
    %p121 = por %p119, %p120
    %p123 = scmp.ne.s32.totalorder %s108, %s122
    %p124 = scmp.eq.s32.totalorder %s16, 0
    %p125 = por %p123, %p124
    %s126 = ssub.s32 %s17, %s29
    %s127 = ssub.s32 %s18, %s25
    %s128 = sor.u32 %s126, %s127
    %p129 = scmp.eq.s32.totalorder %s128, 0
    %s131 = sadd.s32 %s130, 1
    %s132 = scalar_select %p129, %s130, %s131
    %p135 = pneg %p129
    %p136 = scmp.eq.s32.totalorder %s10, 1
    %p137 = por %p135, %p136
    %p138 = scmp.ne.s32.totalorder %s130, %s133
    %p139 = scmp.eq.s32.totalorder %s10, 0
    %p140 = por %p138, %p139
    %p141 = scmp.ne.s32.totalorder %s130, %s133
    %p142 = scmp.eq.s32.totalorder %s15, 1
    %p143 = por %p141, %p142
    %p144 = scmp.ne.s32.totalorder %s133, %s134
    %p145 = scmp.eq.s32.totalorder %s15, 0
    %p146 = por %p144, %p145
    %p147 = scmp.ne.s32.totalorder %s133, %s134
    %p148 = scmp.eq.s32.totalorder %s16, 1
    %p149 = por %p147, %p148
    %p151 = scmp.ne.s32.totalorder %s134, %s150
    %p152 = scmp.eq.s32.totalorder %s16, 0
    %p153 = por %p151, %p152
    %p154 = scmp.le.s32.totalorder 1, %s10
    %p155 = scmp.lt.s32.totalorder %s10, 3
    %p156 = pnand %p154, %p155
    %p157 = pneg %p156
    // Predicated region
    $region9: #{encoder_forward.47} parent=5 // pred_check
      _
    $region10: #{encoder_forward.47} parent=5 // pred_check_branch
      %159 = sbr.rel (%p156) target = $region12
    $region11: #{encoder_forward.47} parent=5 // pred_region
      %s160 = ssub.s32 %s10, 1
      // Predicated region
      $region13: #{encoder_forward.47} parent=11 // pred_check
        %p161 = pneg %p97
      $region14: #{encoder_forward.47} parent=11 // pred_check_branch
        %163 = sbr.rel (%p161) target = $region16
      $region15: #{encoder_forward.47} parent=11 // pred_region
        _
      $region16: #{encoder_forward.47} parent=11 // pred_fallthru
        _
      // Predicated region
      $region17: #{encoder_forward.47} parent=11 // pred_check
        %p164 = pneg %p118
      $region18: #{encoder_forward.47} parent=11 // pred_check_branch
        %166 = sbr.rel (%p164) target = $region20
      $region19: #{encoder_forward.47} parent=11 // pred_region
        _
      $region20: #{encoder_forward.47} parent=11 // pred_fallthru
        _
    $region12: #{encoder_forward.47} parent=5 // pred_fallthru
      _
    %p167 = scmp.lt.s32.totalorder %s10, 2
    // Predicated region
    $region21: #{encoder_forward.47} parent=5 // pred_check
      %p168 = pneg %p167
    $region22: #{encoder_forward.47} parent=5 // pred_check_branch
      %170 = sbr.rel (%p168) target = $region24
    $region23: #{encoder_forward.47} parent=5 // pred_region
      // Predicated region
      $region25: #{encoder_forward.47} parent=23 // pred_check
        %p171 = pneg %p44
      $region26: #{encoder_forward.47} parent=23 // pred_check_branch
        %173 = sbr.rel (%p171) target = $region28
      $region27: #{encoder_forward.47} parent=23 // pred_region
        %p174 = scmp.lt.s32.totalorder %s17, 1
        %s175 = scalar_select %p174, %s17, 1
        %p176 = scmp.lt.s32.totalorder %s18, 0
        %s177 = scalar_select %p176, %s18, 0
        %s178 = sadd.s32 %s177, %s175
        %s179 = smul.addr %s178, 4
        %s180 = scalar_lea.vmem %s0, %s179
      $region28: #{encoder_forward.47} parent=23 // pred_fallthru
        _
      // Predicated region
      $region29: #{encoder_forward.47} parent=23 // pred_check
        %p181 = pneg %p70
      $region30: #{encoder_forward.47} parent=23 // pred_check_branch
        %183 = sbr.rel (%p181) target = $region32
      $region31: #{encoder_forward.47} parent=23 // pred_region
        %p184 = scmp.lt.s32.totalorder %s17, 1
        %s185 = scalar_select %p184, %s17, 1
        %s186 = smul.addr %s185, 2
        %s187 = scalar_lea.vmem %s1, %s186
      $region32: #{encoder_forward.47} parent=23 // pred_fallthru
        _
    $region24: #{encoder_forward.47} parent=5 // pred_fallthru
      _
    %p188 = scmp.le.s32.totalorder 1, %s10
    %p189 = scmp.lt.s32.totalorder %s10, 3
    %p190 = pnand %p188, %p189
    %p191 = pneg %p190
    // Predicated region
    $region33: #{encoder_forward.47} parent=5 // pred_check
      _
    $region34: #{encoder_forward.47} parent=5 // pred_check_branch
      %193 = sbr.rel (%p190) target = $region36
    $region35: #{encoder_forward.47} parent=5 // pred_region
      %s194 = ssub.s32 %s10, 1
      %p195 = scmp.lt.s32.totalorder %s19, 1
      %s196 = scalar_select %p195, %s19, 1
      %p197 = scmp.lt.s32.totalorder %s20, 0
      %s198 = scalar_select %p197, %s20, 0
      %s199 = sadd.s32 %s198, %s196
      %s200 = smul.addr %s199, 4
      %s201 = scalar_lea.vmem %s0, %s200
      %p202 = pneg %p50
      %p203 = pneg %p47
      %p204 = scmp.lt.s32.totalorder %s19, 1
      %s205 = scalar_select %p204, %s19, 1
      %s206 = smul.addr %s205, 2
      %s207 = scalar_lea.vmem %s1, %s206
      %p208 = pneg %p76
      %p209 = pneg %p73
      %p210 = pneg %p97
      %p211 = pneg %p94
      %p212 = pneg %p118
      %p213 = pneg %p115
      %p214 = pneg %p146
      %p215 = pneg %p143
      %p216 = scmp.lt.s32.totalorder %s19, 1
      %s217 = scalar_select %p216, %s19, 1
      %p218 = scmp.lt.s32.totalorder %s20, 0
      %s219 = scalar_select %p218, %s20, 0
      %s220 = sadd.s32 %s219, %s217
      %s221 = smul.addr %s220, 4
      %s222 = scalar_lea.vmem %s4, %s221
      %p223 = scmp.lt.s32.totalorder %s19, 1
      %s224 = scalar_select %p223, %s19, 1
      %p225 = scmp.lt.s32.totalorder %s20, 0
      %s226 = scalar_select %p225, %s20, 0
      %s227 = sadd.s32 %s226, %s224
      %s228 = smul.addr %s227, 4
      %s229 = scalar_lea.vmem %s0, %s228
      %p230 = scmp.lt.s32.totalorder %s19, 1
      %s231 = scalar_select %p230, %s19, 1
      %s232 = smul.addr %s231, 2
      %s233 = scalar_lea.vmem %s1, %s232
      %p234 = scmp.lt.s32.totalorder %s19, 1
      %s235 = scalar_select %p234, %s19, 1
      %p236 = scmp.lt.s32.totalorder %s20, 0
      %s237 = scalar_select %p236, %s20, 0
      %s238 = sadd.s32 %s237, %s235
      %s239 = smul.addr %s238, 4
      %s240 = scalar_lea.vmem %s4, %s239
      %v241 = vld [vmem:[%s229] sm:$0xf]
      %v242 = vunpack.c.l.bf16 %v241
      %v243 = vld [vmem:[%s233] sm:$0x1]
      %v244 = vld [vmem:[%s233 + $0x1] sm:$0x1]
      %v245 = vlaneseq
      %v246 = vshrl.u32 %v245, 7
      %v247 = vsub.s32 0, %v246
      %v248 = vrot.slane %v243, %v247
      %v249 = vsub.f32 %v242, %v248
      %v250 = vld [vmem:[%s2] sm:$0x1]
      %v251 = vmul.f32 %v244, %v250
      %v252 = vlaneseq
      %v253 = vshrl.u32 %v252, 7
      %v254 = vsub.s32 0, %v253
      %v255 = vrot.slane %v251, %v254
      %v256 = vmul.f32 %v249, %v255
      %v257 = vld [vmem:[%s3] sm:$0x1]
      %v259 = vlaneseq
      %v260 = vshrl.u32 %v259, 7
      %v261 = vsub.s32 0, %v260
      %v262 = vrot.slane %v257, %v261
      %v264 = vadd.f32 %v256, %v262
      %v265 = vxor.u32 %v264, 2147483648
      %v266 = vmul.f32 %v265, 1.442695
      %v267 = vpow.pop %v266
      %v268 = vadd.f32 %v267, 1.0
      %v269 = vrcp.pop %v268
      %v270 = vmul.f32 1.0, %v269
      %v271 = vmul.f32 %v264, %v270
      %v272 = vpack.c.bf16 %v271, %v271
      %vm273 = vcmask 519168
      %274 = vst.msk [vmem:[%s240] sm:$0xf] %vm273, %v272
      %p275 = scmp.lt.s32.totalorder %s19, 1
      %s276 = scalar_select %p275, %s19, 1
      %p277 = scmp.lt.s32.totalorder %s20, 0
      %s278 = scalar_select %p277, %s20, 0
      %s279 = sadd.s32 %s278, %s276
      %s280 = smul.addr %s279, 4
      %s281 = scalar_lea.vmem %s4, %s280
      // Predicated region
      $region37: #{encoder_forward.47} parent=35 // pred_check
        %p282 = pneg %p143
      $region38: #{encoder_forward.47} parent=35 // pred_check_branch
        %284 = sbr.rel (%p282) target = $region40
      $region39: #{encoder_forward.47} parent=35 // pred_region
        _
      $region40: #{encoder_forward.47} parent=35 // pred_fallthru
        _
    $region36: #{encoder_forward.47} parent=5 // pred_fallthru
      _
    %p285 = scmp.le.s32.totalorder 2, %s10
    // Predicated region
    $region41: #{encoder_forward.47} parent=5 // pred_check
      %p286 = pneg %p285
    $region42: #{encoder_forward.47} parent=5 // pred_check_branch
      %288 = sbr.rel (%p286) target = $region44
    $region43: #{encoder_forward.47} parent=5 // pred_region
      %s289 = ssub.s32 %s10, 2
      // Predicated region
      $region45: #{encoder_forward.47} parent=43 // pred_check
        %p290 = pneg %p149
      $region46: #{encoder_forward.47} parent=43 // pred_check_branch
        %292 = sbr.rel (%p290) target = $region48
      $region47: #{encoder_forward.47} parent=43 // pred_region
        %p293 = scmp.lt.s32.totalorder %s21, 1
        %s294 = scalar_select %p293, %s21, 1
        %p295 = scmp.lt.s32.totalorder %s22, 0
        %s296 = scalar_select %p295, %s22, 0
        %s297 = sadd.s32 %s296, %s294
        %s298 = smul.addr %s297, 4
        %s299 = scalar_lea.vmem %s4, %s298
      $region48: #{encoder_forward.47} parent=43 // pred_fallthru
        _
    $region44: #{encoder_forward.47} parent=5 // pred_fallthru
      _
  $region6: #{encoder_forward.47} parent=0 // loop_footer
    %s14 = sadd.s32 1, %s10
  $region7: #{encoder_forward.47} parent=0 // loop_footer_branch
    %9 = sbr.rel target = $region3
  $region8: #{encoder_forward.47} parent=0 // loop_exit
    _

// kernel: encoder_forward.46
$region0: #{encoder_forward.46}
  #allocation0 [shape = 'u32[]', space=smem, size = 0x4, offset = 0x4, fixed_abs, tag = 'smem constant byte address 0x4 - core index']
  #allocation1 [shape = 'u32[144,128]{1,0:T(1,128)}', space=vmem, size = 0x12000, scoped, tag = 'internal scratch']
  #allocation2 [shape = 'f32[1,64]{1,0:T(1,128)}', space=vmem, size = 0x200, scoped, tag = 'scratch operand']
  #allocation3 [shape = 'f32[1,64]{1,0:T(1,128)}', space=vmem, size = 0x200, scoped, tag = 'scratch operand']
  %s0 = inlined_call_operand.vmem [shape: bf16[2,8,64], index: 0, kind: input, shape index: {}]
  %s1 = inlined_call_operand.vmem [shape: f32[64,64], index: 1, kind: input, shape index: {}]
  %s2 = inlined_call_operand.vmem [shape: f32[2,2,64], index: 2, kind: output, shape index: {}]
  %s3 = sld [smem:[#allocation0]]
  $region49: #{encoder_forward.46} parent=0
    _
  %s5 = ssub.s32 1, %s3
  %s6 = scalar_select 0, %s5, %s3
  loop: start=0, step=1, limit=4
  $region2: #{encoder_forward.46} parent=0 // loop_pre_header
    _
  $region3: #{encoder_forward.46} parent=0 // loop_header
    %s8 = sphi 0, %s12
    %p9 = scmp.ge.s32.totalorder %s8, 4
    %s15 = sphi 0, %s27
    %s16 = sphi 0, %s23
    %s17 = sphi 0, %s15
    %s18 = sphi 0, %s16
    %s19 = sphi 0, %s17
    %s20 = sphi 0, %s18
    %s32 = sphi 0, %s34
    %s35 = sphi 0, %s32
    %s36 = sphi 0, %s35
    %s52 = sphi 0, %s36
    %s56 = sphi 0, %s56
    %s58 = sphi 0, %s56
    %s59 = sphi 0, %s58
    %s73 = sphi 0, %s59
    %s79 = sphi 0, %s81
    %s82 = sphi 0, %s79
    %s83 = sphi 0, %s82
    %s99 = sphi 0, %s83
  $region4: #{encoder_forward.46} parent=0 // loop_header_branch
    %11 = sbr.rel (%p9) target = $region8
  $region5: #{encoder_forward.46} parent=0 // loop_body
    %s13 = ssub.s32 %s8, 1
    %s14 = ssub.s32 %s8, 2
    %s21 = sadd.s32 1, %s16
    %p22 = scmp.ge.s32.totalorder %s21, 1
    %s23 = scalar_select %p22, 0, %s21
    %s24 = sadd.s32 1, %s15
    %s25 = scalar_select %p22, %s24, %s15
    %p26 = scmp.ge.s32.totalorder %s25, 2
    %s27 = scalar_select %p26, 0, %s25
    %s28 = ssub.s32 %s15, %s27
    %s29 = ssub.s32 %s16, %s23
    %s30 = sor.u32 %s28, %s29
    %p31 = scmp.eq.s32.totalorder %s30, 0
    %s33 = sadd.s32 %s32, 1
    %s34 = scalar_select %p31, %s32, %s33
    %p37 = pneg %p31
    %p38 = scmp.eq.s32.totalorder %s8, 1
    %p39 = por %p37, %p38
    %p40 = scmp.ne.s32.totalorder %s32, %s35
    %p41 = scmp.eq.s32.totalorder %s8, 0
    %p42 = por %p40, %p41
    %p43 = scmp.ne.s32.totalorder %s32, %s35
    %p44 = scmp.eq.s32.totalorder %s13, 1
    %p45 = por %p43, %p44
    %p46 = scmp.ne.s32.totalorder %s35, %s36
    %p47 = scmp.eq.s32.totalorder %s13, 0
    %p48 = por %p46, %p47
    %p49 = scmp.ne.s32.totalorder %s35, %s36
    %p50 = scmp.eq.s32.totalorder %s14, 1
    %p51 = por %p49, %p50
    %p53 = scmp.ne.s32.totalorder %s36, %s52
    %p54 = scmp.eq.s32.totalorder %s14, 0
    %p55 = por %p53, %p54
    %s57 = sadd.s32 %s56, 1
    %p60 = scmp.eq.s32.totalorder %s8, 1
    %p61 = scmp.ne.s32.totalorder %s56, %s58
    %p62 = scmp.eq.s32.totalorder %s8, 0
    %p63 = por %p61, %p62
    %p64 = scmp.ne.s32.totalorder %s56, %s58
    %p65 = scmp.eq.s32.totalorder %s13, 1
    %p66 = por %p64, %p65
    %p67 = scmp.ne.s32.totalorder %s58, %s59
    %p68 = scmp.eq.s32.totalorder %s13, 0
    %p69 = por %p67, %p68
    %p70 = scmp.ne.s32.totalorder %s58, %s59
    %p71 = scmp.eq.s32.totalorder %s14, 1
    %p72 = por %p70, %p71
    %p74 = scmp.ne.s32.totalorder %s59, %s73
    %p75 = scmp.eq.s32.totalorder %s14, 0
    %p76 = por %p74, %p75
    %s77 = ssub.s32 %s15, %s27
    %p78 = scmp.eq.s32.totalorder %s77, 0
    %s80 = sadd.s32 %s79, 1
    %s81 = scalar_select %p78, %s79, %s80
    %p84 = pneg %p78
    %p85 = scmp.eq.s32.totalorder %s8, 1
    %p86 = por %p84, %p85
    %p87 = scmp.ne.s32.totalorder %s79, %s82
    %p88 = scmp.eq.s32.totalorder %s8, 0
    %p89 = por %p87, %p88
    %p90 = scmp.ne.s32.totalorder %s79, %s82
    %p91 = scmp.eq.s32.totalorder %s13, 1
    %p92 = por %p90, %p91
    %p93 = scmp.ne.s32.totalorder %s82, %s83
    %p94 = scmp.eq.s32.totalorder %s13, 0
    %p95 = por %p93, %p94
    %p96 = scmp.ne.s32.totalorder %s82, %s83
    %p97 = scmp.eq.s32.totalorder %s14, 1
    %p98 = por %p96, %p97
    %p100 = scmp.ne.s32.totalorder %s83, %s99
    %p101 = scmp.eq.s32.totalorder %s14, 0
    %p102 = por %p100, %p101
    %p103 = scmp.le.s32.totalorder 1, %s8
    %p104 = scmp.lt.s32.totalorder %s8, 3
    %p105 = pnand %p103, %p104
    %p106 = pneg %p105
    // Predicated region
    $region9: #{encoder_forward.46} parent=5 // pred_check
      _
    $region10: #{encoder_forward.46} parent=5 // pred_check_branch
      %108 = sbr.rel (%p105) target = $region12
    $region11: #{encoder_forward.46} parent=5 // pred_region
      %s109 = ssub.s32 %s8, 1
      // Predicated region
      $region13: #{encoder_forward.46} parent=11 // pred_check
        %p110 = pneg %p69
      $region14: #{encoder_forward.46} parent=11 // pred_check_branch
        %112 = sbr.rel (%p110) target = $region16
      $region15: #{encoder_forward.46} parent=11 // pred_region
        _
      $region16: #{encoder_forward.46} parent=11 // pred_fallthru
        _
    $region12: #{encoder_forward.46} parent=5 // pred_fallthru
      _
    %p113 = scmp.lt.s32.totalorder %s8, 2
    // Predicated region
    $region17: #{encoder_forward.46} parent=5 // pred_check
      %p114 = pneg %p113
    $region18: #{encoder_forward.46} parent=5 // pred_check_branch
      %116 = sbr.rel (%p114) target = $region20
    $region19: #{encoder_forward.46} parent=5 // pred_region
      // Predicated region
      $region21: #{encoder_forward.46} parent=19 // pred_check
        %p117 = pneg %p42
      $region22: #{encoder_forward.46} parent=19 // pred_check_branch
        %119 = sbr.rel (%p117) target = $region24
      $region23: #{encoder_forward.46} parent=19 // pred_region
        %p120 = scmp.lt.s32.totalorder %s15, 1
        %s121 = scalar_select %p120, %s15, 1
        %p122 = scmp.lt.s32.totalorder %s16, 0
        %s123 = scalar_select %p122, %s16, 0
        %s124 = sadd.s32 %s123, %s121
        %s125 = smul.addr %s124, 4
        %s126 = scalar_lea.vmem %s0, %s125
      $region24: #{encoder_forward.46} parent=19 // pred_fallthru
        _
    $region20: #{encoder_forward.46} parent=5 // pred_fallthru
      _
    %p127 = scmp.le.s32.totalorder 1, %s8
    %p128 = scmp.lt.s32.totalorder %s8, 3
    %p129 = pnand %p127, %p128
    %p130 = pneg %p129
    // Predicated region
    $region25: #{encoder_forward.46} parent=5 // pred_check
      _
    $region26: #{encoder_forward.46} parent=5 // pred_check_branch
      %132 = sbr.rel (%p129) target = $region28
    $region27: #{encoder_forward.46} parent=5 // pred_region
      %s133 = ssub.s32 %s8, 1
      %p134 = scmp.lt.s32.totalorder %s17, 1
      %s135 = scalar_select %p134, %s17, 1
      %p136 = scmp.lt.s32.totalorder %s18, 0
      %s137 = scalar_select %p136, %s18, 0
      %s138 = sadd.s32 %s137, %s135
      %s139 = smul.addr %s138, 4
      %s140 = scalar_lea.vmem %s0, %s139
      %p141 = pneg %p48
      %p142 = pneg %p45
      %p143 = pneg %p69
      %p144 = pneg %p66
      %p145 = pneg %p95
      %p146 = pneg %p92
      %p147 = scmp.lt.s32.totalorder %s17, 1
      %s148 = scalar_select %p147, %s17, 1
      %s149 = smul.addr %s148, 2
      %s150 = scalar_lea.vmem %s2, %s149
      %p151 = scmp.lt.s32.totalorder %s17, 1
      %s152 = scalar_select %p151, %s17, 1
      %p153 = scmp.lt.s32.totalorder %s18, 0
      %s154 = scalar_select %p153, %s18, 0
      %s155 = sadd.s32 %s154, %s152
      %s156 = smul.addr %s155, 4
      %s157 = scalar_lea.vmem %s0, %s156
      %p158 = scmp.lt.s32.totalorder %s17, 1
      %s159 = scalar_select %p158, %s17, 1
      %s160 = smul.addr %s159, 2
      %s161 = scalar_lea.vmem %s2, %s160
      %p162 = scmp.eq.s32.totalorder %s18, 0
      // Predicated region
      $region29: #{encoder_forward.46} parent=27 // pred_check
        %p163 = pneg %p162
      $region30: #{encoder_forward.46} parent=27 // pred_check_branch
        %165 = sbr.rel (%p163) target = $region32
      $region31: #{encoder_forward.46} parent=27 // pred_region
        %vm166 = vcmask 516096
        %167 = vst.msk [vmem:[#allocation2] sm:$0x1] %vm166, 0.0
        %168 = vst.msk [vmem:[#allocation3] sm:$0x1] %vm166, 0.0
      $region32: #{encoder_forward.46} parent=27 // pred_fallthru
        _
      %v169 = vld [vmem:[%s157] sm:$0xf]
      %v170 = vunpack.c.l.bf16 %v169
      %v171 = vld [vmem:[#allocation2] sm:$0x1]
      %vm172 = vcmask 523264
      %v173 = vsel %vm172, %v170, 0.0
      %v174 = vrot.slane %v173, 4
      %v175 = vadd.f32 %v173, %v174
      %v176 = vrot.slane %v175, 2
      %v177 = vadd.f32 %v175, %v176
      %v178 = vrot.slane %v177, 1
      %v179 = vadd.f32 %v177, %v178
      %v180 = vadd.f32 %v171, %v179
      %vm181 = vcmask 516096
      %182 = vst.msk [vmem:[#allocation2] sm:$0x1] %vm181, %v180
      %v183 = vld [vmem:[#allocation3] sm:$0x1]
      %v184 = vmul.f32 %v170, %v170
      %v185 = vsel %vm172, %v184, 0.0
      %v186 = vrot.slane %v185, 4
      %v187 = vadd.f32 %v185, %v186
      %v188 = vrot.slane %v187, 2
      %v189 = vadd.f32 %v187, %v188
      %v190 = vrot.slane %v189, 1
      %v191 = vadd.f32 %v189, %v190
      %v192 = vadd.f32 %v183, %v191
      %193 = vst.msk [vmem:[#allocation3] sm:$0x1] %vm181, %v192
      // Predicated region
      $region33: #{encoder_forward.46} parent=27 // pred_check
        %p194 = pneg %p162
      $region34: #{encoder_forward.46} parent=27 // pred_check_branch
        %196 = sbr.rel (%p194) target = $region36
      $region35: #{encoder_forward.46} parent=27 // pred_region
        %v197 = vld [vmem:[%s1] sm:$0xff]
        %v198 = vld [vmem:[%s1 + $0x8] sm:$0xff]
        %v199 = vld [vmem:[%s1 + $0x10] sm:$0xff]
        %v200 = vld [vmem:[%s1 + $0x18] sm:$0xff]
        %v201 = vld [vmem:[%s1 + $0x20] sm:$0xff]
        %v202 = vld [vmem:[%s1 + $0x28] sm:$0xff]
        %v203 = vld [vmem:[%s1 + $0x30] sm:$0xff]
        %v204 = vld [vmem:[%s1 + $0x38] sm:$0xff]
        %v205 = vld [vmem:[#allocation2] sm:$0x1]
        %v207 = vsel %vm172, %v205, 0
        %209 = vmatprep.subr.mxu0 0.0
        %210 = vmatpush1.msra.mxu0 %v197
        %211 = vmatprep.subr.mxu0 0.0
        %212 = vmatpush1.msra.mxu0 %v198
        %213 = vmatprep.subr.mxu0 0.0
        %214 = vmatpush1.msra.mxu0 %v199
        %215 = vmatprep.subr.mxu0 0.0
        %216 = vmatpush1.msra.mxu0 %v200
        %217 = vmatprep.subr.mxu0 0.0
        %218 = vmatpush1.msra.mxu0 %v201
        %219 = vmatprep.subr.mxu0 0.0
        %220 = vmatpush1.msra.mxu0 %v202
        %221 = vmatprep.subr.mxu0 0.0
        %222 = vmatpush1.msra.mxu0 %v203
        %223 = vmatprep.subr.mxu0 0.0
        %224 = vmatpush1.msra.mxu0 %v204
        %225 = vmatprep.subr.mxu0 0.0
        %226 = vmatpush1.msra.mxu0 0.0
        %227 = vmatprep.subr.mxu0 0.0
        %228 = vmatpush1.msra.mxu0 0.0
        %229 = vmatprep.subr.mxu0 0.0
        %230 = vmatpush1.msra.mxu0 0.0
        %231 = vmatprep.subr.mxu0 0.0
        %232 = vmatpush1.msra.mxu0 0.0
        %233 = vmatprep.subr.mxu0 0.0
        %234 = vmatpush1.msra.mxu0 0.0
        %235 = vmatprep.subr.mxu0 0.0
        %236 = vmatpush1.msra.mxu0 0.0
        %237 = vmatprep.subr.mxu0 0.0
        %238 = vmatpush1.msra.mxu0 0.0
        %239 = vmatprep.subr.mxu0 0.0
        %240 = vmatpush1.msra.mxu0 0.0
        %241 = vmatprep.subr.mxu0 0.0
        %242 = vmatpush1.msra.mxu0 0.0
        %243 = vmatprep.subr.mxu0 0.0
        %244 = vmatpush1.msra.mxu0 0.0
        %245 = vmatprep.subr.mxu0 0.0
        %246 = vmatpush1.msra.mxu0 0.0
        %247 = vmatprep.subr.mxu0 0.0
        %248 = vmatpush1.msra.mxu0 0.0
        %249 = vmatprep.subr.mxu0 0.0
        %250 = vmatpush1.msra.mxu0 0.0
        %251 = vmatprep.subr.mxu0 0.0
        %252 = vmatpush1.msra.mxu0 0.0
        %253 = vmatprep.subr.mxu0 0.0
        %254 = vmatpush1.msra.mxu0 0.0
        %255 = vmatprep.subr.mxu0 0.0
        %256 = vmatpush1.msra.mxu0 0.0
        %257 = vmatprep.subr.mxu0 0.0
        %258 = vmatpush1.msra.mxu0 0.0
        %259 = vmatprep.subr.mxu0 0.0
        %260 = vmatpush1.msra.mxu0 0.0
        %261 = vmatprep.subr.mxu0 0.0
        %262 = vmatpush1.msra.mxu0 0.0
        %263 = vmatprep.subr.mxu0 0.0
        %264 = vmatpush1.msra.mxu0 0.0
        %265 = vmatprep.subr.mxu0 0.0
        %266 = vmatpush1.msra.mxu0 0.0
        %267 = vmatprep.subr.mxu0 0.0
        %268 = vmatpush1.msra.mxu0 0.0
        %269 = vmatprep.subr.mxu0 0.0
        %270 = vmatpush1.msra.mxu0 0.0
        %271 = vmatprep.subr.mxu0 0.0
        %272 = vmatpush1.msra.mxu0 0.0
        %273 = vmatprep.mubr.f32.mxu0 0.0
        %274 = vmatmul.mubr.f32.gmra.mrb[0].mxu0 %v207
        %v275 = vpop.f32.mrb[0].mxu0
        %v276 = vadd.f32 0.0, %v275
        %v277 = vpop.f32.mrb[0].mxu0
        %278 = vdwg.mxu0
        %v279 = vmul.f32 %v276, 0.0625
        %v280 = vld [vmem:[#allocation3] sm:$0x1]
        %v282 = vsel %vm172, %v280, 0
        %284 = vmatprep.subr.mxu0 0.0
        %285 = vmatpush1.msra.mxu0 %v197
        %286 = vmatprep.subr.mxu0 0.0
        %287 = vmatpush1.msra.mxu0 %v198
        %288 = vmatprep.subr.mxu0 0.0
        %289 = vmatpush1.msra.mxu0 %v199
        %290 = vmatprep.subr.mxu0 0.0
        %291 = vmatpush1.msra.mxu0 %v200
        %292 = vmatprep.subr.mxu0 0.0
        %293 = vmatpush1.msra.mxu0 %v201
        %294 = vmatprep.subr.mxu0 0.0
        %295 = vmatpush1.msra.mxu0 %v202
        %296 = vmatprep.subr.mxu0 0.0
        %297 = vmatpush1.msra.mxu0 %v203
        %298 = vmatprep.subr.mxu0 0.0
        %299 = vmatpush1.msra.mxu0 %v204
        %300 = vmatprep.subr.mxu0 0.0
        %301 = vmatpush1.msra.mxu0 0.0
        %302 = vmatprep.subr.mxu0 0.0
        %303 = vmatpush1.msra.mxu0 0.0
        %304 = vmatprep.subr.mxu0 0.0
        %305 = vmatpush1.msra.mxu0 0.0
        %306 = vmatprep.subr.mxu0 0.0
        %307 = vmatpush1.msra.mxu0 0.0
        %308 = vmatprep.subr.mxu0 0.0
        %309 = vmatpush1.msra.mxu0 0.0
        %310 = vmatprep.subr.mxu0 0.0
        %311 = vmatpush1.msra.mxu0 0.0
        %312 = vmatprep.subr.mxu0 0.0
        %313 = vmatpush1.msra.mxu0 0.0
        %314 = vmatprep.subr.mxu0 0.0
        %315 = vmatpush1.msra.mxu0 0.0
        %316 = vmatprep.subr.mxu0 0.0
        %317 = vmatpush1.msra.mxu0 0.0
        %318 = vmatprep.subr.mxu0 0.0
        %319 = vmatpush1.msra.mxu0 0.0
        %320 = vmatprep.subr.mxu0 0.0
        %321 = vmatpush1.msra.mxu0 0.0
        %322 = vmatprep.subr.mxu0 0.0
        %323 = vmatpush1.msra.mxu0 0.0
        %324 = vmatprep.subr.mxu0 0.0
        %325 = vmatpush1.msra.mxu0 0.0
        %326 = vmatprep.subr.mxu0 0.0
        %327 = vmatpush1.msra.mxu0 0.0
        %328 = vmatprep.subr.mxu0 0.0
        %329 = vmatpush1.msra.mxu0 0.0
        %330 = vmatprep.subr.mxu0 0.0
        %331 = vmatpush1.msra.mxu0 0.0
        %332 = vmatprep.subr.mxu0 0.0
        %333 = vmatpush1.msra.mxu0 0.0
        %334 = vmatprep.subr.mxu0 0.0
        %335 = vmatpush1.msra.mxu0 0.0
        %336 = vmatprep.subr.mxu0 0.0
        %337 = vmatpush1.msra.mxu0 0.0
        %338 = vmatprep.subr.mxu0 0.0
        %339 = vmatpush1.msra.mxu0 0.0
        %340 = vmatprep.subr.mxu0 0.0
        %341 = vmatpush1.msra.mxu0 0.0
        %342 = vmatprep.subr.mxu0 0.0
        %343 = vmatpush1.msra.mxu0 0.0
        %344 = vmatprep.subr.mxu0 0.0
        %345 = vmatpush1.msra.mxu0 0.0
        %346 = vmatprep.subr.mxu0 0.0
        %347 = vmatpush1.msra.mxu0 0.0
        %348 = vmatprep.mubr.f32.mxu0 0.0
        %349 = vmatmul.mubr.f32.gmra.mrb[0].mxu0 %v282
        %v350 = vpop.f32.mrb[0].mxu0
        %v351 = vadd.f32 0.0, %v350
        %v352 = vpop.f32.mrb[0].mxu0
        %353 = vdwg.mxu0
        %v354 = vmul.f32 %v351, 0.0625
        %v355 = vmul.f32 %v279, %v279
        %v356 = vsub.f32 %v354, %v355
        %v357 = vmax.f32 %v356, 0.0
        %358 = vst.msk [vmem:[%s161] sm:$0x1] %vm181, %v279
        %v359 = vadd.f32 %v357, 1e-06
        %v360 = vrsqrt.pop %v359
        %361 = vst.msk [vmem:[%s161 + $0x1] sm:$0x1] %vm181, %v360
      $region36: #{encoder_forward.46} parent=27 // pred_fallthru
        _
      %p362 = scmp.lt.s32.totalorder %s17, 1
      %s363 = scalar_select %p362, %s17, 1
      %s364 = smul.addr %s363, 2
      %s365 = scalar_lea.vmem %s2, %s364
      // Predicated region
      $region37: #{encoder_forward.46} parent=27 // pred_check
        %p366 = pneg %p92
      $region38: #{encoder_forward.46} parent=27 // pred_check_branch
        %368 = sbr.rel (%p366) target = $region40
      $region39: #{encoder_forward.46} parent=27 // pred_region
        _
      $region40: #{encoder_forward.46} parent=27 // pred_fallthru
        _
    $region28: #{encoder_forward.46} parent=5 // pred_fallthru
      _
    %p369 = scmp.le.s32.totalorder 2, %s8
    // Predicated region
    $region41: #{encoder_forward.46} parent=5 // pred_check
      %p370 = pneg %p369
    $region42: #{encoder_forward.46} parent=5 // pred_check_branch
      %372 = sbr.rel (%p370) target = $region44
    $region43: #{encoder_forward.46} parent=5 // pred_region
      %s373 = ssub.s32 %s8, 2
      // Predicated region
      $region45: #{encoder_forward.46} parent=43 // pred_check
        %p374 = pneg %p98
      $region46: #{encoder_forward.46} parent=43 // pred_check_branch
        %376 = sbr.rel (%p374) target = $region48
      $region47: #{encoder_forward.46} parent=43 // pred_region
        %p377 = scmp.lt.s32.totalorder %s19, 1
        %s378 = scalar_select %p377, %s19, 1
        %s379 = smul.addr %s378, 2
        %s380 = scalar_lea.vmem %s2, %s379
      $region48: #{encoder_forward.46} parent=43 // pred_fallthru
        _
    $region44: #{encoder_forward.46} parent=5 // pred_fallthru
      _
  $region6: #{encoder_forward.46} parent=0 // loop_footer
    %s12 = sadd.s32 1, %s8
  $region7: #{encoder_forward.46} parent=0 // loop_footer_branch
    %7 = sbr.rel target = $region3
  $region8: #{encoder_forward.46} parent=0 // loop_exit
    _

// kernel: encoder_forward.48
$region0: #{encoder_forward.48}
  #allocation0 [shape = 'u32[]', space=smem, size = 0x4, offset = 0x4, fixed_abs, tag = 'smem constant byte address 0x4 - core index']
  #allocation1 [shape = 'u32[144,128]{1,0:T(1,128)}', space=vmem, size = 0x12000, scoped, tag = 'internal scratch']
  %s0 = inlined_call_operand.vmem [shape: bf16[2,8,32], index: 0, kind: input, shape index: {}]
  %s1 = inlined_call_operand.vmem [shape: bf16[32,64], index: 1, kind: input, shape index: {}]
  %s2 = inlined_call_operand.vmem [shape: f32[1,64], index: 2, kind: input, shape index: {}]
  %s3 = inlined_call_operand.vmem [shape: bf16[2,8,64], index: 3, kind: output, shape index: {}]
  %s4 = sld [smem:[#allocation0]]
  $region45: #{encoder_forward.48} parent=0
    _
  %s6 = ssub.s32 1, %s4
  %s7 = scalar_select 0, %s6, %s4
  loop: start=0, step=1, limit=4
  $region2: #{encoder_forward.48} parent=0 // loop_pre_header
    _
  $region3: #{encoder_forward.48} parent=0 // loop_header
    %s9 = sphi 0, %s13
    %p10 = scmp.ge.s32.totalorder %s9, 4
    %s16 = sphi 0, %s28
    %s17 = sphi 0, %s24
    %s18 = sphi 0, %s16
    %s19 = sphi 0, %s17
    %s20 = sphi 0, %s18
    %s21 = sphi 0, %s19
    %s33 = sphi 0, %s35
    %s36 = sphi 0, %s33
    %s37 = sphi 0, %s36
    %s53 = sphi 0, %s37
    %s57 = sphi 0, %s57
    %s59 = sphi 0, %s57
    %s60 = sphi 0, %s59
    %s74 = sphi 0, %s60
    %s78 = sphi 0, %s78
    %s80 = sphi 0, %s78
    %s81 = sphi 0, %s80
    %s95 = sphi 0, %s81
    %s103 = sphi 0, %s105
    %s106 = sphi 0, %s103
    %s107 = sphi 0, %s106
    %s123 = sphi 0, %s107
  $region4: #{encoder_forward.48} parent=0 // loop_header_branch
    %12 = sbr.rel (%p10) target = $region8
  $region5: #{encoder_forward.48} parent=0 // loop_body
    %s14 = ssub.s32 %s9, 1
    %s15 = ssub.s32 %s9, 2
    %s22 = sadd.s32 1, %s17
    %p23 = scmp.ge.s32.totalorder %s22, 1
    %s24 = scalar_select %p23, 0, %s22
    %s25 = sadd.s32 1, %s16
    %s26 = scalar_select %p23, %s25, %s16
    %p27 = scmp.ge.s32.totalorder %s26, 2
    %s28 = scalar_select %p27, 0, %s26
    %s29 = ssub.s32 %s16, %s28
    %s30 = ssub.s32 %s17, %s24
    %s31 = sor.u32 %s29, %s30
    %p32 = scmp.eq.s32.totalorder %s31, 0
    %s34 = sadd.s32 %s33, 1
    %s35 = scalar_select %p32, %s33, %s34
    %p38 = pneg %p32
    %p39 = scmp.eq.s32.totalorder %s9, 1
    %p40 = por %p38, %p39
    %p41 = scmp.ne.s32.totalorder %s33, %s36
    %p42 = scmp.eq.s32.totalorder %s9, 0
    %p43 = por %p41, %p42
    %p44 = scmp.ne.s32.totalorder %s33, %s36
    %p45 = scmp.eq.s32.totalorder %s14, 1
    %p46 = por %p44, %p45
    %p47 = scmp.ne.s32.totalorder %s36, %s37
    %p48 = scmp.eq.s32.totalorder %s14, 0
    %p49 = por %p47, %p48
    %p50 = scmp.ne.s32.totalorder %s36, %s37
    %p51 = scmp.eq.s32.totalorder %s15, 1
    %p52 = por %p50, %p51
    %p54 = scmp.ne.s32.totalorder %s37, %s53
    %p55 = scmp.eq.s32.totalorder %s15, 0
    %p56 = por %p54, %p55
    %s58 = sadd.s32 %s57, 1
    %p61 = scmp.eq.s32.totalorder %s9, 1
    %p62 = scmp.ne.s32.totalorder %s57, %s59
    %p63 = scmp.eq.s32.totalorder %s9, 0
    %p64 = por %p62, %p63
    %p65 = scmp.ne.s32.totalorder %s57, %s59
    %p66 = scmp.eq.s32.totalorder %s14, 1
    %p67 = por %p65, %p66
    %p68 = scmp.ne.s32.totalorder %s59, %s60
    %p69 = scmp.eq.s32.totalorder %s14, 0
    %p70 = por %p68, %p69
    %p71 = scmp.ne.s32.totalorder %s59, %s60
    %p72 = scmp.eq.s32.totalorder %s15, 1
    %p73 = por %p71, %p72
    %p75 = scmp.ne.s32.totalorder %s60, %s74
    %p76 = scmp.eq.s32.totalorder %s15, 0
    %p77 = por %p75, %p76
    %s79 = sadd.s32 %s78, 1
    %p82 = scmp.eq.s32.totalorder %s9, 1
    %p83 = scmp.ne.s32.totalorder %s78, %s80
    %p84 = scmp.eq.s32.totalorder %s9, 0
    %p85 = por %p83, %p84
    %p86 = scmp.ne.s32.totalorder %s78, %s80
    %p87 = scmp.eq.s32.totalorder %s14, 1
    %p88 = por %p86, %p87
    %p89 = scmp.ne.s32.totalorder %s80, %s81
    %p90 = scmp.eq.s32.totalorder %s14, 0
    %p91 = por %p89, %p90
    %p92 = scmp.ne.s32.totalorder %s80, %s81
    %p93 = scmp.eq.s32.totalorder %s15, 1
    %p94 = por %p92, %p93
    %p96 = scmp.ne.s32.totalorder %s81, %s95
    %p97 = scmp.eq.s32.totalorder %s15, 0
    %p98 = por %p96, %p97
    %s99 = ssub.s32 %s16, %s28
    %s100 = ssub.s32 %s17, %s24
    %s101 = sor.u32 %s99, %s100
    %p102 = scmp.eq.s32.totalorder %s101, 0
    %s104 = sadd.s32 %s103, 1
    %s105 = scalar_select %p102, %s103, %s104
    %p108 = pneg %p102
    %p109 = scmp.eq.s32.totalorder %s9, 1
    %p110 = por %p108, %p109
    %p111 = scmp.ne.s32.totalorder %s103, %s106
    %p112 = scmp.eq.s32.totalorder %s9, 0
    %p113 = por %p111, %p112
    %p114 = scmp.ne.s32.totalorder %s103, %s106
    %p115 = scmp.eq.s32.totalorder %s14, 1
    %p116 = por %p114, %p115
    %p117 = scmp.ne.s32.totalorder %s106, %s107
    %p118 = scmp.eq.s32.totalorder %s14, 0
    %p119 = por %p117, %p118
    %p120 = scmp.ne.s32.totalorder %s106, %s107
    %p121 = scmp.eq.s32.totalorder %s15, 1
    %p122 = por %p120, %p121
    %p124 = scmp.ne.s32.totalorder %s107, %s123
    %p125 = scmp.eq.s32.totalorder %s15, 0
    %p126 = por %p124, %p125
    %p127 = scmp.le.s32.totalorder 1, %s9
    %p128 = scmp.lt.s32.totalorder %s9, 3
    %p129 = pnand %p127, %p128
    %p130 = pneg %p129
    // Predicated region
    $region9: #{encoder_forward.48} parent=5 // pred_check
      _
    $region10: #{encoder_forward.48} parent=5 // pred_check_branch
      %132 = sbr.rel (%p129) target = $region12
    $region11: #{encoder_forward.48} parent=5 // pred_region
      %s133 = ssub.s32 %s9, 1
      // Predicated region
      $region13: #{encoder_forward.48} parent=11 // pred_check
        %p134 = pneg %p70
      $region14: #{encoder_forward.48} parent=11 // pred_check_branch
        %136 = sbr.rel (%p134) target = $region16
      $region15: #{encoder_forward.48} parent=11 // pred_region
        _
      $region16: #{encoder_forward.48} parent=11 // pred_fallthru
        _
      // Predicated region
      $region17: #{encoder_forward.48} parent=11 // pred_check
        %p137 = pneg %p91
      $region18: #{encoder_forward.48} parent=11 // pred_check_branch
        %139 = sbr.rel (%p137) target = $region20
      $region19: #{encoder_forward.48} parent=11 // pred_region
        _
      $region20: #{encoder_forward.48} parent=11 // pred_fallthru
        _
    $region12: #{encoder_forward.48} parent=5 // pred_fallthru
      _
    %p140 = scmp.lt.s32.totalorder %s9, 2
    // Predicated region
    $region21: #{encoder_forward.48} parent=5 // pred_check
      %p141 = pneg %p140
    $region22: #{encoder_forward.48} parent=5 // pred_check_branch
      %143 = sbr.rel (%p141) target = $region24
    $region23: #{encoder_forward.48} parent=5 // pred_region
      // Predicated region
      $region25: #{encoder_forward.48} parent=23 // pred_check
        %p144 = pneg %p43
      $region26: #{encoder_forward.48} parent=23 // pred_check_branch
        %146 = sbr.rel (%p144) target = $region28
      $region27: #{encoder_forward.48} parent=23 // pred_region
        %p147 = scmp.lt.s32.totalorder %s16, 1
        %s148 = scalar_select %p147, %s16, 1
        %p149 = scmp.lt.s32.totalorder %s17, 0
        %s150 = scalar_select %p149, %s17, 0
        %s151 = sadd.s32 %s150, %s148
        %s152 = smul.addr %s151, 4
        %s153 = scalar_lea.vmem %s0, %s152
      $region28: #{encoder_forward.48} parent=23 // pred_fallthru
        _
    $region24: #{encoder_forward.48} parent=5 // pred_fallthru
      _
    %p154 = scmp.le.s32.totalorder 1, %s9
    %p155 = scmp.lt.s32.totalorder %s9, 3
    %p156 = pnand %p154, %p155
    %p157 = pneg %p156
    // Predicated region
    $region29: #{encoder_forward.48} parent=5 // pred_check
      _
    $region30: #{encoder_forward.48} parent=5 // pred_check_branch
      %159 = sbr.rel (%p156) target = $region32
    $region31: #{encoder_forward.48} parent=5 // pred_region
      %s160 = ssub.s32 %s9, 1
      %p161 = scmp.lt.s32.totalorder %s18, 1
      %s162 = scalar_select %p161, %s18, 1
      %p163 = scmp.lt.s32.totalorder %s19, 0
      %s164 = scalar_select %p163, %s19, 0
      %s165 = sadd.s32 %s164, %s162
      %s166 = smul.addr %s165, 4
      %s167 = scalar_lea.vmem %s0, %s166
      %p168 = pneg %p49
      %p169 = pneg %p46
      %p170 = pneg %p70
      %p171 = pneg %p67
      %p172 = pneg %p91
      %p173 = pneg %p88
      %p174 = pneg %p119
      %p175 = pneg %p116
      %p176 = scmp.lt.s32.totalorder %s18, 1
      %s177 = scalar_select %p176, %s18, 1
      %p178 = scmp.lt.s32.totalorder %s19, 0
      %s179 = scalar_select %p178, %s19, 0
      %s180 = sadd.s32 %s179, %s177
      %s181 = smul.addr %s180, 4
      %s182 = scalar_lea.vmem %s3, %s181
      %p183 = scmp.lt.s32.totalorder %s18, 1
      %s184 = scalar_select %p183, %s18, 1
      %p185 = scmp.lt.s32.totalorder %s19, 0
      %s186 = scalar_select %p185, %s19, 0
      %s187 = sadd.s32 %s186, %s184
      %s188 = smul.addr %s187, 4
      %s189 = scalar_lea.vmem %s0, %s188
      %p190 = scmp.lt.s32.totalorder %s18, 1
      %s191 = scalar_select %p190, %s18, 1
      %p192 = scmp.lt.s32.totalorder %s19, 0
      %s193 = scalar_select %p192, %s19, 0
      %s194 = sadd.s32 %s193, %s191
      %s195 = smul.addr %s194, 4
      %s196 = scalar_lea.vmem %s3, %s195
      %v198 = vld [vmem:[%s189] sm:$0xf]
      %v199 = vld [vmem:[%s1] sm:$0xf]
      %v200 = vld [vmem:[%s1 + $0x4] sm:$0xf]
      %v201 = vld [vmem:[%s1 + $0x8] sm:$0xf]
      %v202 = vld [vmem:[%s1 + $0xc] sm:$0xf]
      %v203 = vld [vmem:[%s2] sm:$0x1]
      %v205 = vlaneseq
      %v206 = vshrl.u32 %v205, 7
      %v207 = vsub.s32 0, %v206
      %v208 = vrot.slane %v203, %v207
      %v214 = vunpack.c.l.b16 %v199
      %v215 = vunpack.c.l.b16 %v200
      %v216 = vunpack.c.l.b16 %v201
      %v217 = vunpack.c.l.b16 %v202
      %v218 = vpack.c.b16 %v215, %v214
      %v219 = vpack.c.b16 %v217, %v216
      %vm222 = vcmask 261120
      %v224 = vsel %vm222, %v198, 0
      %226 = vmatprep.subr.bf16.mxu0 0
      %227 = vmatpush1.bf16.msra.mxu0 %v218
      %228 = vmatprep.subr.bf16.mxu0 0
      %229 = vmatpush1.bf16.msra.mxu0 %v219
      %230 = vmatprep.subr.bf16.mxu0 0
      %231 = vmatpush1.bf16.msra.mxu0 0
      %232 = vmatprep.subr.bf16.mxu0 0
      %233 = vmatpush1.bf16.msra.mxu0 0
      %234 = vmatprep.subr.bf16.mxu0 0
      %235 = vmatpush1.bf16.msra.mxu0 0
      %236 = vmatprep.subr.bf16.mxu0 0
      %237 = vmatpush1.bf16.msra.mxu0 0
      %238 = vmatprep.subr.bf16.mxu0 0
      %239 = vmatpush1.bf16.msra.mxu0 0
      %240 = vmatprep.subr.bf16.mxu0 0
      %241 = vmatpush1.bf16.msra.mxu0 0
      %242 = vmatprep.subr.bf16.mxu0 0
      %243 = vmatpush1.bf16.msra.mxu0 0
      %244 = vmatprep.subr.bf16.mxu0 0
      %245 = vmatpush1.bf16.msra.mxu0 0
      %246 = vmatprep.subr.bf16.mxu0 0
      %247 = vmatpush1.bf16.msra.mxu0 0
      %248 = vmatprep.subr.bf16.mxu0 0
      %249 = vmatpush1.bf16.msra.mxu0 0
      %250 = vmatprep.subr.bf16.mxu0 0
      %251 = vmatpush1.bf16.msra.mxu0 0
      %252 = vmatprep.subr.bf16.mxu0 0
      %253 = vmatpush1.bf16.msra.mxu0 0
      %254 = vmatprep.subr.bf16.mxu0 0
      %255 = vmatpush1.bf16.msra.mxu0 0
      %256 = vmatprep.subr.bf16.mxu0 0
      %257 = vmatpush1.bf16.msra.mxu0 0
      %258 = vmatprep.mubr.bf16.mxu0 0
      %259 = vmatmul.mubr.bf16.gmra.mrb[0].mxu0 %v224
      %v260 = vpop.f32.mrb[0].mxu0
      %v261 = vadd.f32 %v208, %v260
      %v262 = vpop.f32.mrb[0].mxu0
      %v263 = vpop.f32.mrb[0].mxu0
      %v264 = vpop.f32.mrb[0].mxu0
      %265 = vdwg.mxu0
      %v266 = vpack.c.bf16 %v261, %v261
      %vm267 = vcmask 519168
      %268 = vst.msk [vmem:[%s196] sm:$0xf] %vm267, %v266
      %p269 = scmp.lt.s32.totalorder %s18, 1
      %s270 = scalar_select %p269, %s18, 1
      %p271 = scmp.lt.s32.totalorder %s19, 0
      %s272 = scalar_select %p271, %s19, 0
      %s273 = sadd.s32 %s272, %s270
      %s274 = smul.addr %s273, 4
      %s275 = scalar_lea.vmem %s3, %s274
      // Predicated region
      $region33: #{encoder_forward.48} parent=31 // pred_check
        %p276 = pneg %p116
      $region34: #{encoder_forward.48} parent=31 // pred_check_branch
        %278 = sbr.rel (%p276) target = $region36
      $region35: #{encoder_forward.48} parent=31 // pred_region
        _
      $region36: #{encoder_forward.48} parent=31 // pred_fallthru
        _
    $region32: #{encoder_forward.48} parent=5 // pred_fallthru
      _
    %p279 = scmp.le.s32.totalorder 2, %s9
    // Predicated region
    $region37: #{encoder_forward.48} parent=5 // pred_check
      %p280 = pneg %p279
    $region38: #{encoder_forward.48} parent=5 // pred_check_branch
      %282 = sbr.rel (%p280) target = $region40
    $region39: #{encoder_forward.48} parent=5 // pred_region
      %s283 = ssub.s32 %s9, 2
      // Predicated region
      $region41: #{encoder_forward.48} parent=39 // pred_check
        %p284 = pneg %p122
      $region42: #{encoder_forward.48} parent=39 // pred_check_branch
        %286 = sbr.rel (%p284) target = $region44
      $region43: #{encoder_forward.48} parent=39 // pred_region
        %p287 = scmp.lt.s32.totalorder %s20, 1
        %s288 = scalar_select %p287, %s20, 1
        %p289 = scmp.lt.s32.totalorder %s21, 0
        %s290 = scalar_select %p289, %s21, 0
        %s291 = sadd.s32 %s290, %s288
        %s292 = smul.addr %s291, 4
        %s293 = scalar_lea.vmem %s3, %s292
      $region44: #{encoder_forward.48} parent=39 // pred_fallthru
        _
    $region40: #{encoder_forward.48} parent=5 // pred_fallthru
      _
  $region6: #{encoder_forward.48} parent=0 // loop_footer
    %s13 = sadd.s32 1, %s9
  $region7: #{encoder_forward.48} parent=0 // loop_footer_branch
    %8 = sbr.rel target = $region3
  $region8: #{encoder_forward.48} parent=0 // loop_exit
    _

// kernel: encoder_forward.57
$region0: #{encoder_forward.57}
  #allocation0 [shape = 'u32[]', space=smem, size = 0x4, offset = 0x4, fixed_abs, tag = 'smem constant byte address 0x4 - core index']
  #allocation1 [shape = 'u32[144,128]{1,0:T(1,128)}', space=vmem, size = 0x12000, scoped, tag = 'internal scratch']
  %s0 = inlined_call_operand.vmem [shape: bf16[2,8,64], index: 0, kind: input, shape index: {}]
  %s1 = inlined_call_operand.vmem [shape: f32[2,2,64], index: 1, kind: input, shape index: {}]
  %s2 = inlined_call_operand.vmem [shape: f32[1,64], index: 2, kind: input, shape index: {}]
  %s3 = inlined_call_operand.vmem [shape: f32[1,64], index: 3, kind: input, shape index: {}]
  %s4 = inlined_call_operand.vmem [shape: bf16[2,8,64], index: 4, kind: output, shape index: {}]
  %s5 = sld [smem:[#allocation0]]
  $region49: #{encoder_forward.57} parent=0
    _
  %s7 = ssub.s32 1, %s5
  %s8 = scalar_select 0, %s7, %s5
  loop: start=0, step=1, limit=4
  $region2: #{encoder_forward.57} parent=0 // loop_pre_header
    _
  $region3: #{encoder_forward.57} parent=0 // loop_header
    %s10 = sphi 0, %s14
    %p11 = scmp.ge.s32.totalorder %s10, 4
    %s17 = sphi 0, %s29
    %s18 = sphi 0, %s25
    %s19 = sphi 0, %s17
    %s20 = sphi 0, %s18
    %s21 = sphi 0, %s19
    %s22 = sphi 0, %s20
    %s34 = sphi 0, %s36
    %s37 = sphi 0, %s34
    %s38 = sphi 0, %s37
    %s54 = sphi 0, %s38
    %s60 = sphi 0, %s62
    %s63 = sphi 0, %s60
    %s64 = sphi 0, %s63
    %s80 = sphi 0, %s64
    %s84 = sphi 0, %s84
    %s86 = sphi 0, %s84
    %s87 = sphi 0, %s86
    %s101 = sphi 0, %s87
    %s105 = sphi 0, %s105
    %s107 = sphi 0, %s105
    %s108 = sphi 0, %s107
    %s122 = sphi 0, %s108
    %s130 = sphi 0, %s132
    %s133 = sphi 0, %s130
    %s134 = sphi 0, %s133
    %s150 = sphi 0, %s134
  $region4: #{encoder_forward.57} parent=0 // loop_header_branch
    %13 = sbr.rel (%p11) target = $region8
  $region5: #{encoder_forward.57} parent=0 // loop_body
    %s15 = ssub.s32 %s10, 1
    %s16 = ssub.s32 %s10, 2
    %s23 = sadd.s32 1, %s18
    %p24 = scmp.ge.s32.totalorder %s23, 1
    %s25 = scalar_select %p24, 0, %s23
    %s26 = sadd.s32 1, %s17
    %s27 = scalar_select %p24, %s26, %s17
    %p28 = scmp.ge.s32.totalorder %s27, 2
    %s29 = scalar_select %p28, 0, %s27
    %s30 = ssub.s32 %s17, %s29
    %s31 = ssub.s32 %s18, %s25
    %s32 = sor.u32 %s30, %s31
    %p33 = scmp.eq.s32.totalorder %s32, 0
    %s35 = sadd.s32 %s34, 1
    %s36 = scalar_select %p33, %s34, %s35
    %p39 = pneg %p33
    %p40 = scmp.eq.s32.totalorder %s10, 1
    %p41 = por %p39, %p40
    %p42 = scmp.ne.s32.totalorder %s34, %s37
    %p43 = scmp.eq.s32.totalorder %s10, 0
    %p44 = por %p42, %p43
    %p45 = scmp.ne.s32.totalorder %s34, %s37
    %p46 = scmp.eq.s32.totalorder %s15, 1
    %p47 = por %p45, %p46
    %p48 = scmp.ne.s32.totalorder %s37, %s38
    %p49 = scmp.eq.s32.totalorder %s15, 0
    %p50 = por %p48, %p49
    %p51 = scmp.ne.s32.totalorder %s37, %s38
    %p52 = scmp.eq.s32.totalorder %s16, 1
    %p53 = por %p51, %p52
    %p55 = scmp.ne.s32.totalorder %s38, %s54
    %p56 = scmp.eq.s32.totalorder %s16, 0
    %p57 = por %p55, %p56
    %s58 = ssub.s32 %s17, %s29
    %p59 = scmp.eq.s32.totalorder %s58, 0
    %s61 = sadd.s32 %s60, 1
    %s62 = scalar_select %p59, %s60, %s61
    %p65 = pneg %p59
    %p66 = scmp.eq.s32.totalorder %s10, 1
    %p67 = por %p65, %p66
    %p68 = scmp.ne.s32.totalorder %s60, %s63
    %p69 = scmp.eq.s32.totalorder %s10, 0
    %p70 = por %p68, %p69
    %p71 = scmp.ne.s32.totalorder %s60, %s63
    %p72 = scmp.eq.s32.totalorder %s15, 1
    %p73 = por %p71, %p72
    %p74 = scmp.ne.s32.totalorder %s63, %s64
    %p75 = scmp.eq.s32.totalorder %s15, 0
    %p76 = por %p74, %p75
    %p77 = scmp.ne.s32.totalorder %s63, %s64
    %p78 = scmp.eq.s32.totalorder %s16, 1
    %p79 = por %p77, %p78
    %p81 = scmp.ne.s32.totalorder %s64, %s80
    %p82 = scmp.eq.s32.totalorder %s16, 0
    %p83 = por %p81, %p82
    %s85 = sadd.s32 %s84, 1
    %p88 = scmp.eq.s32.totalorder %s10, 1
    %p89 = scmp.ne.s32.totalorder %s84, %s86
    %p90 = scmp.eq.s32.totalorder %s10, 0
    %p91 = por %p89, %p90
    %p92 = scmp.ne.s32.totalorder %s84, %s86
    %p93 = scmp.eq.s32.totalorder %s15, 1
    %p94 = por %p92, %p93
    %p95 = scmp.ne.s32.totalorder %s86, %s87
    %p96 = scmp.eq.s32.totalorder %s15, 0
    %p97 = por %p95, %p96
    %p98 = scmp.ne.s32.totalorder %s86, %s87
    %p99 = scmp.eq.s32.totalorder %s16, 1
    %p100 = por %p98, %p99
    %p102 = scmp.ne.s32.totalorder %s87, %s101
    %p103 = scmp.eq.s32.totalorder %s16, 0
    %p104 = por %p102, %p103
    %s106 = sadd.s32 %s105, 1
    %p109 = scmp.eq.s32.totalorder %s10, 1
    %p110 = scmp.ne.s32.totalorder %s105, %s107
    %p111 = scmp.eq.s32.totalorder %s10, 0
    %p112 = por %p110, %p111
    %p113 = scmp.ne.s32.totalorder %s105, %s107
    %p114 = scmp.eq.s32.totalorder %s15, 1
    %p115 = por %p113, %p114
    %p116 = scmp.ne.s32.totalorder %s107, %s108
    %p117 = scmp.eq.s32.totalorder %s15, 0
    %p118 = por %p116, %p117
    %p119 = scmp.ne.s32.totalorder %s107, %s108
    %p120 = scmp.eq.s32.totalorder %s16, 1
    %p121 = por %p119, %p120
    %p123 = scmp.ne.s32.totalorder %s108, %s122
    %p124 = scmp.eq.s32.totalorder %s16, 0
    %p125 = por %p123, %p124
    %s126 = ssub.s32 %s17, %s29
    %s127 = ssub.s32 %s18, %s25
    %s128 = sor.u32 %s126, %s127
    %p129 = scmp.eq.s32.totalorder %s128, 0
    %s131 = sadd.s32 %s130, 1
    %s132 = scalar_select %p129, %s130, %s131
    %p135 = pneg %p129
    %p136 = scmp.eq.s32.totalorder %s10, 1
    %p137 = por %p135, %p136
    %p138 = scmp.ne.s32.totalorder %s130, %s133
    %p139 = scmp.eq.s32.totalorder %s10, 0
    %p140 = por %p138, %p139
    %p141 = scmp.ne.s32.totalorder %s130, %s133
    %p142 = scmp.eq.s32.totalorder %s15, 1
    %p143 = por %p141, %p142
    %p144 = scmp.ne.s32.totalorder %s133, %s134
    %p145 = scmp.eq.s32.totalorder %s15, 0
    %p146 = por %p144, %p145
    %p147 = scmp.ne.s32.totalorder %s133, %s134
    %p148 = scmp.eq.s32.totalorder %s16, 1
    %p149 = por %p147, %p148
    %p151 = scmp.ne.s32.totalorder %s134, %s150
    %p152 = scmp.eq.s32.totalorder %s16, 0
    %p153 = por %p151, %p152
    %p154 = scmp.le.s32.totalorder 1, %s10
    %p155 = scmp.lt.s32.totalorder %s10, 3
    %p156 = pnand %p154, %p155
    %p157 = pneg %p156
    // Predicated region
    $region9: #{encoder_forward.57} parent=5 // pred_check
      _
    $region10: #{encoder_forward.57} parent=5 // pred_check_branch
      %159 = sbr.rel (%p156) target = $region12
    $region11: #{encoder_forward.57} parent=5 // pred_region
      %s160 = ssub.s32 %s10, 1
      // Predicated region
      $region13: #{encoder_forward.57} parent=11 // pred_check
        %p161 = pneg %p97
      $region14: #{encoder_forward.57} parent=11 // pred_check_branch
        %163 = sbr.rel (%p161) target = $region16
      $region15: #{encoder_forward.57} parent=11 // pred_region
        _
      $region16: #{encoder_forward.57} parent=11 // pred_fallthru
        _
      // Predicated region
      $region17: #{encoder_forward.57} parent=11 // pred_check
        %p164 = pneg %p118
      $region18: #{encoder_forward.57} parent=11 // pred_check_branch
        %166 = sbr.rel (%p164) target = $region20
      $region19: #{encoder_forward.57} parent=11 // pred_region
        _
      $region20: #{encoder_forward.57} parent=11 // pred_fallthru
        _
    $region12: #{encoder_forward.57} parent=5 // pred_fallthru
      _
    %p167 = scmp.lt.s32.totalorder %s10, 2
    // Predicated region
    $region21: #{encoder_forward.57} parent=5 // pred_check
      %p168 = pneg %p167
    $region22: #{encoder_forward.57} parent=5 // pred_check_branch
      %170 = sbr.rel (%p168) target = $region24
    $region23: #{encoder_forward.57} parent=5 // pred_region
      // Predicated region
      $region25: #{encoder_forward.57} parent=23 // pred_check
        %p171 = pneg %p44
      $region26: #{encoder_forward.57} parent=23 // pred_check_branch
        %173 = sbr.rel (%p171) target = $region28
      $region27: #{encoder_forward.57} parent=23 // pred_region
        %p174 = scmp.lt.s32.totalorder %s17, 1
        %s175 = scalar_select %p174, %s17, 1
        %p176 = scmp.lt.s32.totalorder %s18, 0
        %s177 = scalar_select %p176, %s18, 0
        %s178 = sadd.s32 %s177, %s175
        %s179 = smul.addr %s178, 4
        %s180 = scalar_lea.vmem %s0, %s179
      $region28: #{encoder_forward.57} parent=23 // pred_fallthru
        _
      // Predicated region
      $region29: #{encoder_forward.57} parent=23 // pred_check
        %p181 = pneg %p70
      $region30: #{encoder_forward.57} parent=23 // pred_check_branch
        %183 = sbr.rel (%p181) target = $region32
      $region31: #{encoder_forward.57} parent=23 // pred_region
        %p184 = scmp.lt.s32.totalorder %s17, 1
        %s185 = scalar_select %p184, %s17, 1
        %s186 = smul.addr %s185, 2
        %s187 = scalar_lea.vmem %s1, %s186
      $region32: #{encoder_forward.57} parent=23 // pred_fallthru
        _
    $region24: #{encoder_forward.57} parent=5 // pred_fallthru
      _
    %p188 = scmp.le.s32.totalorder 1, %s10
    %p189 = scmp.lt.s32.totalorder %s10, 3
    %p190 = pnand %p188, %p189
    %p191 = pneg %p190
    // Predicated region
    $region33: #{encoder_forward.57} parent=5 // pred_check
      _
    $region34: #{encoder_forward.57} parent=5 // pred_check_branch
      %193 = sbr.rel (%p190) target = $region36
    $region35: #{encoder_forward.57} parent=5 // pred_region
      %s194 = ssub.s32 %s10, 1
      %p195 = scmp.lt.s32.totalorder %s19, 1
      %s196 = scalar_select %p195, %s19, 1
      %p197 = scmp.lt.s32.totalorder %s20, 0
      %s198 = scalar_select %p197, %s20, 0
      %s199 = sadd.s32 %s198, %s196
      %s200 = smul.addr %s199, 4
      %s201 = scalar_lea.vmem %s0, %s200
      %p202 = pneg %p50
      %p203 = pneg %p47
      %p204 = scmp.lt.s32.totalorder %s19, 1
      %s205 = scalar_select %p204, %s19, 1
      %s206 = smul.addr %s205, 2
      %s207 = scalar_lea.vmem %s1, %s206
      %p208 = pneg %p76
      %p209 = pneg %p73
      %p210 = pneg %p97
      %p211 = pneg %p94
      %p212 = pneg %p118
      %p213 = pneg %p115
      %p214 = pneg %p146
      %p215 = pneg %p143
      %p216 = scmp.lt.s32.totalorder %s19, 1
      %s217 = scalar_select %p216, %s19, 1
      %p218 = scmp.lt.s32.totalorder %s20, 0
      %s219 = scalar_select %p218, %s20, 0
      %s220 = sadd.s32 %s219, %s217
      %s221 = smul.addr %s220, 4
      %s222 = scalar_lea.vmem %s4, %s221
      %p223 = scmp.lt.s32.totalorder %s19, 1
      %s224 = scalar_select %p223, %s19, 1
      %p225 = scmp.lt.s32.totalorder %s20, 0
      %s226 = scalar_select %p225, %s20, 0
      %s227 = sadd.s32 %s226, %s224
      %s228 = smul.addr %s227, 4
      %s229 = scalar_lea.vmem %s0, %s228
      %p230 = scmp.lt.s32.totalorder %s19, 1
      %s231 = scalar_select %p230, %s19, 1
      %s232 = smul.addr %s231, 2
      %s233 = scalar_lea.vmem %s1, %s232
      %p234 = scmp.lt.s32.totalorder %s19, 1
      %s235 = scalar_select %p234, %s19, 1
      %p236 = scmp.lt.s32.totalorder %s20, 0
      %s237 = scalar_select %p236, %s20, 0
      %s238 = sadd.s32 %s237, %s235
      %s239 = smul.addr %s238, 4
      %s240 = scalar_lea.vmem %s4, %s239
      %v241 = vld [vmem:[%s229] sm:$0xf]
      %v242 = vunpack.c.l.bf16 %v241
      %v243 = vld [vmem:[%s233] sm:$0x1]
      %v244 = vld [vmem:[%s233 + $0x1] sm:$0x1]
      %v245 = vlaneseq
      %v246 = vshrl.u32 %v245, 7
      %v247 = vsub.s32 0, %v246
      %v248 = vrot.slane %v243, %v247
      %v249 = vsub.f32 %v242, %v248
      %v250 = vld [vmem:[%s2] sm:$0x1]
      %v251 = vmul.f32 %v244, %v250
      %v252 = vlaneseq
      %v253 = vshrl.u32 %v252, 7
      %v254 = vsub.s32 0, %v253
      %v255 = vrot.slane %v251, %v254
      %v256 = vmul.f32 %v249, %v255
      %v257 = vld [vmem:[%s3] sm:$0x1]
      %v259 = vlaneseq
      %v260 = vshrl.u32 %v259, 7
      %v261 = vsub.s32 0, %v260
      %v262 = vrot.slane %v257, %v261
      %v264 = vadd.f32 %v256, %v262
      %v265 = vpack.c.bf16 %v264, %v264
      %vm266 = vcmask 519168
      %267 = vst.msk [vmem:[%s240] sm:$0xf] %vm266, %v265
      %p268 = scmp.lt.s32.totalorder %s19, 1
      %s269 = scalar_select %p268, %s19, 1
      %p270 = scmp.lt.s32.totalorder %s20, 0
      %s271 = scalar_select %p270, %s20, 0
      %s272 = sadd.s32 %s271, %s269
      %s273 = smul.addr %s272, 4
      %s274 = scalar_lea.vmem %s4, %s273
      // Predicated region
      $region37: #{encoder_forward.57} parent=35 // pred_check
        %p275 = pneg %p143
      $region38: #{encoder_forward.57} parent=35 // pred_check_branch
        %277 = sbr.rel (%p275) target = $region40
      $region39: #{encoder_forward.57} parent=35 // pred_region
        _
      $region40: #{encoder_forward.57} parent=35 // pred_fallthru
        _
    $region36: #{encoder_forward.57} parent=5 // pred_fallthru
      _
    %p278 = scmp.le.s32.totalorder 2, %s10
    // Predicated region
    $region41: #{encoder_forward.57} parent=5 // pred_check
      %p279 = pneg %p278
    $region42: #{encoder_forward.57} parent=5 // pred_check_branch
      %281 = sbr.rel (%p279) target = $region44
    $region43: #{encoder_forward.57} parent=5 // pred_region
      %s282 = ssub.s32 %s10, 2
      // Predicated region
      $region45: #{encoder_forward.57} parent=43 // pred_check
        %p283 = pneg %p149
      $region46: #{encoder_forward.57} parent=43 // pred_check_branch
        %285 = sbr.rel (%p283) target = $region48
      $region47: #{encoder_forward.57} parent=43 // pred_region
        %p286 = scmp.lt.s32.totalorder %s21, 1
        %s287 = scalar_select %p286, %s21, 1
        %p288 = scmp.lt.s32.totalorder %s22, 0
        %s289 = scalar_select %p288, %s22, 0
        %s290 = sadd.s32 %s289, %s287
        %s291 = smul.addr %s290, 4
        %s292 = scalar_lea.vmem %s4, %s291
      $region48: #{encoder_forward.57} parent=43 // pred_fallthru
        _
    $region44: #{encoder_forward.57} parent=5 // pred_fallthru
      _
  $region6: #{encoder_forward.57} parent=0 // loop_footer
    %s14 = sadd.s32 1, %s10
  $region7: #{encoder_forward.57} parent=0 // loop_footer_branch
    %9 = sbr.rel target = $region3
  $region8: #{encoder_forward.57} parent=0 // loop_exit
    _

// kernel: encoder_forward.52
$region0: #{encoder_forward.52}
  #allocation0 [shape = 'u32[]', space=smem, size = 0x4, offset = 0x4, fixed_abs, tag = 'smem constant byte address 0x4 - core index']
  #allocation1 [shape = 'u32[144,128]{1,0:T(1,128)}', space=vmem, size = 0x12000, scoped, tag = 'internal scratch']
  %s0 = inlined_call_operand.vmem [shape: bf16[2,8,64], index: 0, kind: input, shape index: {}]
  %s1 = inlined_call_operand.vmem [shape: bf16[3,64,64], index: 1, kind: input, shape index: {}]
  %s2 = inlined_call_operand.vmem [shape: f32[1,64], index: 2, kind: input, shape index: {}]
  %s3 = inlined_call_operand.vmem [shape: bf16[2,8,64], index: 3, kind: output, shape index: {}]
  %s4 = sld [smem:[#allocation0]]
  $region45: #{encoder_forward.52} parent=0
    _
  %s6 = ssub.s32 1, %s4
  %s7 = scalar_select 0, %s6, %s4
  loop: start=0, step=1, limit=4
  $region2: #{encoder_forward.52} parent=0 // loop_pre_header
    _
  $region3: #{encoder_forward.52} parent=0 // loop_header
    %s9 = sphi 0, %s13
    %p10 = scmp.ge.s32.totalorder %s9, 4
    %s16 = sphi 0, %s28
    %s17 = sphi 0, %s24
    %s18 = sphi 0, %s16
    %s19 = sphi 0, %s17
    %s20 = sphi 0, %s18
    %s21 = sphi 0, %s19
    %s33 = sphi 0, %s35
    %s36 = sphi 0, %s33
    %s37 = sphi 0, %s36
    %s53 = sphi 0, %s37
    %s57 = sphi 0, %s57
    %s59 = sphi 0, %s57
    %s60 = sphi 0, %s59
    %s74 = sphi 0, %s60
    %s78 = sphi 0, %s78
    %s80 = sphi 0, %s78
    %s81 = sphi 0, %s80
    %s95 = sphi 0, %s81
    %s103 = sphi 0, %s105
    %s106 = sphi 0, %s103
    %s107 = sphi 0, %s106
    %s123 = sphi 0, %s107
  $region4: #{encoder_forward.52} parent=0 // loop_header_branch
    %12 = sbr.rel (%p10) target = $region8
  $region5: #{encoder_forward.52} parent=0 // loop_body
    %s14 = ssub.s32 %s9, 1
    %s15 = ssub.s32 %s9, 2
    %s22 = sadd.s32 1, %s17
    %p23 = scmp.ge.s32.totalorder %s22, 1
    %s24 = scalar_select %p23, 0, %s22
    %s25 = sadd.s32 1, %s16
    %s26 = scalar_select %p23, %s25, %s16
    %p27 = scmp.ge.s32.totalorder %s26, 2
    %s28 = scalar_select %p27, 0, %s26
    %s29 = ssub.s32 %s16, %s28
    %s30 = ssub.s32 %s17, %s24
    %s31 = sor.u32 %s29, %s30
    %p32 = scmp.eq.s32.totalorder %s31, 0
    %s34 = sadd.s32 %s33, 1
    %s35 = scalar_select %p32, %s33, %s34
    %p38 = pneg %p32
    %p39 = scmp.eq.s32.totalorder %s9, 1
    %p40 = por %p38, %p39
    %p41 = scmp.ne.s32.totalorder %s33, %s36
    %p42 = scmp.eq.s32.totalorder %s9, 0
    %p43 = por %p41, %p42
    %p44 = scmp.ne.s32.totalorder %s33, %s36
    %p45 = scmp.eq.s32.totalorder %s14, 1
    %p46 = por %p44, %p45
    %p47 = scmp.ne.s32.totalorder %s36, %s37
    %p48 = scmp.eq.s32.totalorder %s14, 0
    %p49 = por %p47, %p48
    %p50 = scmp.ne.s32.totalorder %s36, %s37
    %p51 = scmp.eq.s32.totalorder %s15, 1
    %p52 = por %p50, %p51
    %p54 = scmp.ne.s32.totalorder %s37, %s53
    %p55 = scmp.eq.s32.totalorder %s15, 0
    %p56 = por %p54, %p55
    %s58 = sadd.s32 %s57, 1
    %p61 = scmp.eq.s32.totalorder %s9, 1
    %p62 = scmp.ne.s32.totalorder %s57, %s59
    %p63 = scmp.eq.s32.totalorder %s9, 0
    %p64 = por %p62, %p63
    %p65 = scmp.ne.s32.totalorder %s57, %s59
    %p66 = scmp.eq.s32.totalorder %s14, 1
    %p67 = por %p65, %p66
    %p68 = scmp.ne.s32.totalorder %s59, %s60
    %p69 = scmp.eq.s32.totalorder %s14, 0
    %p70 = por %p68, %p69
    %p71 = scmp.ne.s32.totalorder %s59, %s60
    %p72 = scmp.eq.s32.totalorder %s15, 1
    %p73 = por %p71, %p72
    %p75 = scmp.ne.s32.totalorder %s60, %s74
    %p76 = scmp.eq.s32.totalorder %s15, 0
    %p77 = por %p75, %p76
    %s79 = sadd.s32 %s78, 1
    %p82 = scmp.eq.s32.totalorder %s9, 1
    %p83 = scmp.ne.s32.totalorder %s78, %s80
    %p84 = scmp.eq.s32.totalorder %s9, 0
    %p85 = por %p83, %p84
    %p86 = scmp.ne.s32.totalorder %s78, %s80
    %p87 = scmp.eq.s32.totalorder %s14, 1
    %p88 = por %p86, %p87
    %p89 = scmp.ne.s32.totalorder %s80, %s81
    %p90 = scmp.eq.s32.totalorder %s14, 0
    %p91 = por %p89, %p90
    %p92 = scmp.ne.s32.totalorder %s80, %s81
    %p93 = scmp.eq.s32.totalorder %s15, 1
    %p94 = por %p92, %p93
    %p96 = scmp.ne.s32.totalorder %s81, %s95
    %p97 = scmp.eq.s32.totalorder %s15, 0
    %p98 = por %p96, %p97
    %s99 = ssub.s32 %s16, %s28
    %s100 = ssub.s32 %s17, %s24
    %s101 = sor.u32 %s99, %s100
    %p102 = scmp.eq.s32.totalorder %s101, 0
    %s104 = sadd.s32 %s103, 1
    %s105 = scalar_select %p102, %s103, %s104
    %p108 = pneg %p102
    %p109 = scmp.eq.s32.totalorder %s9, 1
    %p110 = por %p108, %p109
    %p111 = scmp.ne.s32.totalorder %s103, %s106
    %p112 = scmp.eq.s32.totalorder %s9, 0
    %p113 = por %p111, %p112
    %p114 = scmp.ne.s32.totalorder %s103, %s106
    %p115 = scmp.eq.s32.totalorder %s14, 1
    %p116 = por %p114, %p115
    %p117 = scmp.ne.s32.totalorder %s106, %s107
    %p118 = scmp.eq.s32.totalorder %s14, 0
    %p119 = por %p117, %p118
    %p120 = scmp.ne.s32.totalorder %s106, %s107
    %p121 = scmp.eq.s32.totalorder %s15, 1
    %p122 = por %p120, %p121
    %p124 = scmp.ne.s32.totalorder %s107, %s123
    %p125 = scmp.eq.s32.totalorder %s15, 0
    %p126 = por %p124, %p125
    %p127 = scmp.le.s32.totalorder 1, %s9
    %p128 = scmp.lt.s32.totalorder %s9, 3
    %p129 = pnand %p127, %p128
    %p130 = pneg %p129
    // Predicated region
    $region9: #{encoder_forward.52} parent=5 // pred_check
      _
    $region10: #{encoder_forward.52} parent=5 // pred_check_branch
      %132 = sbr.rel (%p129) target = $region12
    $region11: #{encoder_forward.52} parent=5 // pred_region
      %s133 = ssub.s32 %s9, 1
      // Predicated region
      $region13: #{encoder_forward.52} parent=11 // pred_check
        %p134 = pneg %p70
      $region14: #{encoder_forward.52} parent=11 // pred_check_branch
        %136 = sbr.rel (%p134) target = $region16
      $region15: #{encoder_forward.52} parent=11 // pred_region
        _
      $region16: #{encoder_forward.52} parent=11 // pred_fallthru
        _
      // Predicated region
      $region17: #{encoder_forward.52} parent=11 // pred_check
        %p137 = pneg %p91
      $region18: #{encoder_forward.52} parent=11 // pred_check_branch
        %139 = sbr.rel (%p137) target = $region20
      $region19: #{encoder_forward.52} parent=11 // pred_region
        _
      $region20: #{encoder_forward.52} parent=11 // pred_fallthru
        _
    $region12: #{encoder_forward.52} parent=5 // pred_fallthru
      _
    %p140 = scmp.lt.s32.totalorder %s9, 2
    // Predicated region
    $region21: #{encoder_forward.52} parent=5 // pred_check
      %p141 = pneg %p140
    $region22: #{encoder_forward.52} parent=5 // pred_check_branch
      %143 = sbr.rel (%p141) target = $region24
    $region23: #{encoder_forward.52} parent=5 // pred_region
      // Predicated region
      $region25: #{encoder_forward.52} parent=23 // pred_check
        %p144 = pneg %p43
      $region26: #{encoder_forward.52} parent=23 // pred_check_branch
        %146 = sbr.rel (%p144) target = $region28
      $region27: #{encoder_forward.52} parent=23 // pred_region
        %p147 = scmp.lt.s32.totalorder %s16, 1
        %s148 = scalar_select %p147, %s16, 1
        %p149 = scmp.lt.s32.totalorder %s17, 0
        %s150 = scalar_select %p149, %s17, 0
        %s151 = sadd.s32 %s150, %s148
        %s152 = smul.addr %s151, 4
        %s153 = scalar_lea.vmem %s0, %s152
      $region28: #{encoder_forward.52} parent=23 // pred_fallthru
        _
    $region24: #{encoder_forward.52} parent=5 // pred_fallthru
      _
    %p154 = scmp.le.s32.totalorder 1, %s9
    %p155 = scmp.lt.s32.totalorder %s9, 3
    %p156 = pnand %p154, %p155
    %p157 = pneg %p156
    // Predicated region
    $region29: #{encoder_forward.52} parent=5 // pred_check
      _
    $region30: #{encoder_forward.52} parent=5 // pred_check_branch
      %159 = sbr.rel (%p156) target = $region32
    $region31: #{encoder_forward.52} parent=5 // pred_region
      %s160 = ssub.s32 %s9, 1
      %p161 = scmp.lt.s32.totalorder %s18, 1
      %s162 = scalar_select %p161, %s18, 1
      %p163 = scmp.lt.s32.totalorder %s19, 0
      %s164 = scalar_select %p163, %s19, 0
      %s165 = sadd.s32 %s164, %s162
      %s166 = smul.addr %s165, 4
      %s167 = scalar_lea.vmem %s0, %s166
      %p168 = pneg %p49
      %p169 = pneg %p46
      %p170 = pneg %p70
      %p171 = pneg %p67
      %p172 = pneg %p91
      %p173 = pneg %p88
      %p174 = pneg %p119
      %p175 = pneg %p116
      %p176 = scmp.lt.s32.totalorder %s18, 1
      %s177 = scalar_select %p176, %s18, 1
      %p178 = scmp.lt.s32.totalorder %s19, 0
      %s179 = scalar_select %p178, %s19, 0
      %s180 = sadd.s32 %s179, %s177
      %s181 = smul.addr %s180, 4
      %s182 = scalar_lea.vmem %s3, %s181
      %p183 = scmp.lt.s32.totalorder %s18, 1
      %s184 = scalar_select %p183, %s18, 1
      %p185 = scmp.lt.s32.totalorder %s19, 0
      %s186 = scalar_select %p185, %s19, 0
      %s187 = sadd.s32 %s186, %s184
      %s188 = smul.addr %s187, 4
      %s189 = scalar_lea.vmem %s0, %s188
      %p190 = scmp.lt.s32.totalorder %s18, 1
      %s191 = scalar_select %p190, %s18, 1
      %p192 = scmp.lt.s32.totalorder %s19, 0
      %s193 = scalar_select %p192, %s19, 0
      %s194 = sadd.s32 %s193, %s191
      %s195 = smul.addr %s194, 4
      %s196 = scalar_lea.vmem %s3, %s195
      %v198 = vld [vmem:[%s189] sm:$0xf]
      %v200 = vunpack.c.l.b16 %v198
      %v201 = vpack.c.b16 %v200, %v200
      %v203 = vshrl.u32 %v201, 16
      %v205 = vrot.slane %v203, 7
      %v206 = vshll.u32 %v201, 16
      %v208 = vor.u32 %v205, %v206
      %vm210 = vcmask 1040384
      %vm211 = vsmask.f32 256
      %vm212 = vmand %vm210, %vm211
      %v213 = vsel %vm212, 0, %v208
      %v214 = vrot.slane %v206, 1
      %v215 = vor.u32 %v203, %v214
      %vm217 = vcmask 1043456
      %vm218 = vsmask.f32 3328
      %vm219 = vmand %vm217, %vm218
      %v220 = vsel %vm219, %v215, 0
      %s221 = scalar_lea.vmem %s1, 32
      %v222 = vld [vmem:[%s221] sm:$0xf]
      %v223 = vld [vmem:[%s221 + $0x4] sm:$0xf]
      %v224 = vld [vmem:[%s221 + $0x8] sm:$0xf]
      %v225 = vld [vmem:[%s221 + $0xc] sm:$0xf]
      %v226 = vld [vmem:[%s221 + $0x10] sm:$0xf]
      %v227 = vld [vmem:[%s221 + $0x14] sm:$0xf]
      %v228 = vld [vmem:[%s221 + $0x18] sm:$0xf]
      %v229 = vld [vmem:[%s221 + $0x1c] sm:$0xf]
      %v230 = vld [vmem:[%s1] sm:$0xf]
      %v231 = vld [vmem:[%s1 + $0x4] sm:$0xf]
      %v232 = vld [vmem:[%s1 + $0x8] sm:$0xf]
      %v233 = vld [vmem:[%s1 + $0xc] sm:$0xf]
      %v234 = vld [vmem:[%s1 + $0x10] sm:$0xf]
      %v235 = vld [vmem:[%s1 + $0x14] sm:$0xf]
      %v236 = vld [vmem:[%s1 + $0x18] sm:$0xf]
      %v237 = vld [vmem:[%s1 + $0x1c] sm:$0xf]
      %v246 = vunpack.c.l.b16 %v230
      %v247 = vunpack.c.l.b16 %v231
      %v248 = vunpack.c.l.b16 %v232
      %v249 = vunpack.c.l.b16 %v233
      %v250 = vunpack.c.l.b16 %v234
      %v251 = vunpack.c.l.b16 %v235
      %v252 = vunpack.c.l.b16 %v236
      %v253 = vunpack.c.l.b16 %v237
      %v254 = vpack.c.b16 %v247, %v246
      %v255 = vpack.c.b16 %v249, %v248
      %v256 = vpack.c.b16 %v251, %v250
      %v257 = vpack.c.b16 %v253, %v252
      %vm262 = vcmask 523264
      %v264 = vsel %vm262, %v213, 0
      %266 = vmatprep.subr.bf16.mxu0 0
      %267 = vmatpush1.bf16.msra.mxu0 %v254
      %268 = vmatprep.subr.bf16.mxu0 0
      %269 = vmatpush1.bf16.msra.mxu0 %v255
      %270 = vmatprep.subr.bf16.mxu0 0
      %271 = vmatpush1.bf16.msra.mxu0 %v256
      %272 = vmatprep.subr.bf16.mxu0 0
      %273 = vmatpush1.bf16.msra.mxu0 %v257
      %274 = vmatprep.subr.bf16.mxu0 0
      %275 = vmatpush1.bf16.msra.mxu0 0
      %276 = vmatprep.subr.bf16.mxu0 0
      %277 = vmatpush1.bf16.msra.mxu0 0
      %278 = vmatprep.subr.bf16.mxu0 0
      %279 = vmatpush1.bf16.msra.mxu0 0
      %280 = vmatprep.subr.bf16.mxu0 0
      %281 = vmatpush1.bf16.msra.mxu0 0
      %282 = vmatprep.subr.bf16.mxu0 0
      %283 = vmatpush1.bf16.msra.mxu0 0
      %284 = vmatprep.subr.bf16.mxu0 0
      %285 = vmatpush1.bf16.msra.mxu0 0
      %286 = vmatprep.subr.bf16.mxu0 0
      %287 = vmatpush1.bf16.msra.mxu0 0
      %288 = vmatprep.subr.bf16.mxu0 0
      %289 = vmatpush1.bf16.msra.mxu0 0
      %290 = vmatprep.subr.bf16.mxu0 0
      %291 = vmatpush1.bf16.msra.mxu0 0
      %292 = vmatprep.subr.bf16.mxu0 0
      %293 = vmatpush1.bf16.msra.mxu0 0
      %294 = vmatprep.subr.bf16.mxu0 0
      %295 = vmatpush1.bf16.msra.mxu0 0
      %296 = vmatprep.subr.bf16.mxu0 0
      %297 = vmatpush1.bf16.msra.mxu0 0
      %298 = vmatprep.mubr.bf16.mxu0 0
      %299 = vmatmul.mubr.bf16.gmra.mrb[0].mxu0 %v264
      %v300 = vpop.f32.mrb[0].mxu0
      %v301 = vadd.f32 0.0, %v300
      %v302 = vpop.f32.mrb[0].mxu0
      %v303 = vpop.f32.mrb[0].mxu0
      %v304 = vpop.f32.mrb[0].mxu0
      %305 = vdwg.mxu0
      %v314 = vunpack.c.l.b16 %v222
      %v315 = vunpack.c.l.b16 %v223
      %v316 = vunpack.c.l.b16 %v224
      %v317 = vunpack.c.l.b16 %v225
      %v318 = vunpack.c.l.b16 %v226
      %v319 = vunpack.c.l.b16 %v227
      %v320 = vunpack.c.l.b16 %v228
      %v321 = vunpack.c.l.b16 %v229
      %v322 = vpack.c.b16 %v315, %v314
      %v323 = vpack.c.b16 %v317, %v316
      %v324 = vpack.c.b16 %v319, %v318
      %v325 = vpack.c.b16 %v321, %v320
      %v331 = vsel %vm262, %v198, 0
      %333 = vmatprep.subr.bf16.mxu0 0
      %334 = vmatpush1.bf16.msra.mxu0 %v322
      %335 = vmatprep.subr.bf16.mxu0 0
      %336 = vmatpush1.bf16.msra.mxu0 %v323
      %337 = vmatprep.subr.bf16.mxu0 0
      %338 = vmatpush1.bf16.msra.mxu0 %v324
      %339 = vmatprep.subr.bf16.mxu0 0
      %340 = vmatpush1.bf16.msra.mxu0 %v325
      %341 = vmatprep.subr.bf16.mxu0 0
      %342 = vmatpush1.bf16.msra.mxu0 0
      %343 = vmatprep.subr.bf16.mxu0 0
      %344 = vmatpush1.bf16.msra.mxu0 0
      %345 = vmatprep.subr.bf16.mxu0 0
      %346 = vmatpush1.bf16.msra.mxu0 0
      %347 = vmatprep.subr.bf16.mxu0 0
      %348 = vmatpush1.bf16.msra.mxu0 0
      %349 = vmatprep.subr.bf16.mxu0 0
      %350 = vmatpush1.bf16.msra.mxu0 0
      %351 = vmatprep.subr.bf16.mxu0 0
      %352 = vmatpush1.bf16.msra.mxu0 0
      %353 = vmatprep.subr.bf16.mxu0 0
      %354 = vmatpush1.bf16.msra.mxu0 0
      %355 = vmatprep.subr.bf16.mxu0 0
      %356 = vmatpush1.bf16.msra.mxu0 0
      %357 = vmatprep.subr.bf16.mxu0 0
      %358 = vmatpush1.bf16.msra.mxu0 0
      %359 = vmatprep.subr.bf16.mxu0 0
      %360 = vmatpush1.bf16.msra.mxu0 0
      %361 = vmatprep.subr.bf16.mxu0 0
      %362 = vmatpush1.bf16.msra.mxu0 0
      %363 = vmatprep.subr.bf16.mxu0 0
      %364 = vmatpush1.bf16.msra.mxu0 0
      %365 = vmatprep.mubr.bf16.mxu0 0
      %366 = vmatmul.mubr.bf16.gmra.mrb[0].mxu0 %v331
      %v367 = vpop.f32.mrb[0].mxu0
      %v368 = vadd.f32 %v301, %v367
      %v369 = vpop.f32.mrb[0].mxu0
      %v370 = vpop.f32.mrb[0].mxu0
      %v371 = vpop.f32.mrb[0].mxu0
      %372 = vdwg.mxu0
      %s373 = scalar_lea.vmem %s1, 64
      %v374 = vld [vmem:[%s373] sm:$0xf]
      %v375 = vld [vmem:[%s373 + $0x4] sm:$0xf]
      %v376 = vld [vmem:[%s373 + $0x8] sm:$0xf]
      %v377 = vld [vmem:[%s373 + $0xc] sm:$0xf]
      %v378 = vld [vmem:[%s373 + $0x10] sm:$0xf]
      %v379 = vld [vmem:[%s373 + $0x14] sm:$0xf]
      %v380 = vld [vmem:[%s373 + $0x18] sm:$0xf]
      %v381 = vld [vmem:[%s373 + $0x1c] sm:$0xf]
      %v390 = vunpack.c.l.b16 %v374
      %v391 = vunpack.c.l.b16 %v375
      %v392 = vunpack.c.l.b16 %v376
      %v393 = vunpack.c.l.b16 %v377
      %v394 = vunpack.c.l.b16 %v378
      %v395 = vunpack.c.l.b16 %v379
      %v396 = vunpack.c.l.b16 %v380
      %v397 = vunpack.c.l.b16 %v381
      %v398 = vpack.c.b16 %v391, %v390
      %v399 = vpack.c.b16 %v393, %v392
      %v400 = vpack.c.b16 %v395, %v394
      %v401 = vpack.c.b16 %v397, %v396
      %v407 = vsel %vm262, %v220, 0
      %409 = vmatprep.subr.bf16.mxu0 0
      %410 = vmatpush1.bf16.msra.mxu0 %v398
      %411 = vmatprep.subr.bf16.mxu0 0
      %412 = vmatpush1.bf16.msra.mxu0 %v399
      %413 = vmatprep.subr.bf16.mxu0 0
      %414 = vmatpush1.bf16.msra.mxu0 %v400
      %415 = vmatprep.subr.bf16.mxu0 0
      %416 = vmatpush1.bf16.msra.mxu0 %v401
      %417 = vmatprep.subr.bf16.mxu0 0
      %418 = vmatpush1.bf16.msra.mxu0 0
      %419 = vmatprep.subr.bf16.mxu0 0
      %420 = vmatpush1.bf16.msra.mxu0 0
      %421 = vmatprep.subr.bf16.mxu0 0
      %422 = vmatpush1.bf16.msra.mxu0 0
      %423 = vmatprep.subr.bf16.mxu0 0
      %424 = vmatpush1.bf16.msra.mxu0 0
      %425 = vmatprep.subr.bf16.mxu0 0
      %426 = vmatpush1.bf16.msra.mxu0 0
      %427 = vmatprep.subr.bf16.mxu0 0
      %428 = vmatpush1.bf16.msra.mxu0 0
      %429 = vmatprep.subr.bf16.mxu0 0
      %430 = vmatpush1.bf16.msra.mxu0 0
      %431 = vmatprep.subr.bf16.mxu0 0
      %432 = vmatpush1.bf16.msra.mxu0 0
      %433 = vmatprep.subr.bf16.mxu0 0
      %434 = vmatpush1.bf16.msra.mxu0 0
      %435 = vmatprep.subr.bf16.mxu0 0
      %436 = vmatpush1.bf16.msra.mxu0 0
      %437 = vmatprep.subr.bf16.mxu0 0
      %438 = vmatpush1.bf16.msra.mxu0 0
      %439 = vmatprep.subr.bf16.mxu0 0
      %440 = vmatpush1.bf16.msra.mxu0 0
      %441 = vmatprep.mubr.bf16.mxu0 0
      %442 = vmatmul.mubr.bf16.gmra.mrb[0].mxu0 %v407
      %v443 = vpop.f32.mrb[0].mxu0
      %v444 = vadd.f32 0.0, %v443
      %v445 = vpop.f32.mrb[0].mxu0
      %v446 = vpop.f32.mrb[0].mxu0
      %v447 = vpop.f32.mrb[0].mxu0
      %448 = vdwg.mxu0
      %v449 = vadd.f32 %v368, %v444
      %v450 = vld [vmem:[%s2] sm:$0x1]
      %v452 = vlaneseq
      %v453 = vshrl.u32 %v452, 7
      %v454 = vsub.s32 0, %v453
      %v455 = vrot.slane %v450, %v454
      %v457 = vadd.f32 %v449, %v455
      %v458 = vpack.c.bf16 %v457, %v457
      %vm459 = vcmask 519168
      %460 = vst.msk [vmem:[%s196] sm:$0xf] %vm459, %v458
      %p461 = scmp.lt.s32.totalorder %s18, 1
      %s462 = scalar_select %p461, %s18, 1
      %p463 = scmp.lt.s32.totalorder %s19, 0
      %s464 = scalar_select %p463, %s19, 0
      %s465 = sadd.s32 %s464, %s462
      %s466 = smul.addr %s465, 4
      %s467 = scalar_lea.vmem %s3, %s466
      // Predicated region
      $region33: #{encoder_forward.52} parent=31 // pred_check
        %p468 = pneg %p116
      $region34: #{encoder_forward.52} parent=31 // pred_check_branch
        %470 = sbr.rel (%p468) target = $region36
      $region35: #{encoder_forward.52} parent=31 // pred_region
        _
      $region36: #{encoder_forward.52} parent=31 // pred_fallthru
        _
    $region32: #{encoder_forward.52} parent=5 // pred_fallthru
      _
    %p471 = scmp.le.s32.totalorder 2, %s9
    // Predicated region
    $region37: #{encoder_forward.52} parent=5 // pred_check
      %p472 = pneg %p471
    $region38: #{encoder_forward.52} parent=5 // pred_check_branch
      %474 = sbr.rel (%p472) target = $region40
    $region39: #{encoder_forward.52} parent=5 // pred_region
      %s475 = ssub.s32 %s9, 2
      // Predicated region
      $region41: #{encoder_forward.52} parent=39 // pred_check
        %p476 = pneg %p122
      $region42: #{encoder_forward.52} parent=39 // pred_check_branch
        %478 = sbr.rel (%p476) target = $region44
      $region43: #{encoder_forward.52} parent=39 // pred_region
        %p479 = scmp.lt.s32.totalorder %s20, 1
        %s480 = scalar_select %p479, %s20, 1
        %p481 = scmp.lt.s32.totalorder %s21, 0
        %s482 = scalar_select %p481, %s21, 0
        %s483 = sadd.s32 %s482, %s480
        %s484 = smul.addr %s483, 4
        %s485 = scalar_lea.vmem %s3, %s484
      $region44: #{encoder_forward.52} parent=39 // pred_fallthru
        _
    $region40: #{encoder_forward.52} parent=5 // pred_fallthru
      _
  $region6: #{encoder_forward.52} parent=0 // loop_footer
    %s13 = sadd.s32 1, %s9
  $region7: #{encoder_forward.52} parent=0 // loop_footer_branch
    %8 = sbr.rel target = $region3
  $region8: #{encoder_forward.52} parent=0 // loop_exit
    _

// kernel: encoder_forward.49
$region0: #{encoder_forward.49}
  #allocation0 [shape = 'u32[]', space=smem, size = 0x4, offset = 0x4, fixed_abs, tag = 'smem constant byte address 0x4 - core index']
  #allocation1 [shape = 'u32[144,128]{1,0:T(1,128)}', space=vmem, size = 0x12000, scoped, tag = 'internal scratch']
  %s0 = inlined_call_operand.vmem [shape: bf16[2,8,64], index: 0, kind: input, shape index: {}]
  %s1 = inlined_call_operand.vmem [shape: bf16[3,64,64], index: 1, kind: input, shape index: {}]
  %s2 = inlined_call_operand.vmem [shape: f32[1,64], index: 2, kind: input, shape index: {}]
  %s3 = inlined_call_operand.vmem [shape: bf16[2,8,64], index: 3, kind: input, shape index: {}]
  %s4 = inlined_call_operand.vmem [shape: bf16[2,8,64], index: 4, kind: output, shape index: {}]
  %s5 = sld [smem:[#allocation0]]
  $region49: #{encoder_forward.49} parent=0
    _
  %s7 = ssub.s32 1, %s5
  %s8 = scalar_select 0, %s7, %s5
  loop: start=0, step=1, limit=4
  $region2: #{encoder_forward.49} parent=0 // loop_pre_header
    _
  $region3: #{encoder_forward.49} parent=0 // loop_header
    %s10 = sphi 0, %s14
    %p11 = scmp.ge.s32.totalorder %s10, 4
    %s17 = sphi 0, %s29
    %s18 = sphi 0, %s25
    %s19 = sphi 0, %s17
    %s20 = sphi 0, %s18
    %s21 = sphi 0, %s19
    %s22 = sphi 0, %s20
    %s34 = sphi 0, %s36
    %s37 = sphi 0, %s34
    %s38 = sphi 0, %s37
    %s54 = sphi 0, %s38
    %s58 = sphi 0, %s58
    %s60 = sphi 0, %s58
    %s61 = sphi 0, %s60
    %s75 = sphi 0, %s61
    %s79 = sphi 0, %s79
    %s81 = sphi 0, %s79
    %s82 = sphi 0, %s81
    %s96 = sphi 0, %s82
    %s104 = sphi 0, %s106
    %s107 = sphi 0, %s104
    %s108 = sphi 0, %s107
    %s124 = sphi 0, %s108
    %s132 = sphi 0, %s134
    %s135 = sphi 0, %s132
    %s136 = sphi 0, %s135
    %s152 = sphi 0, %s136
  $region4: #{encoder_forward.49} parent=0 // loop_header_branch
    %13 = sbr.rel (%p11) target = $region8
  $region5: #{encoder_forward.49} parent=0 // loop_body
    %s15 = ssub.s32 %s10, 1
    %s16 = ssub.s32 %s10, 2
    %s23 = sadd.s32 1, %s18
    %p24 = scmp.ge.s32.totalorder %s23, 1
    %s25 = scalar_select %p24, 0, %s23
    %s26 = sadd.s32 1, %s17
    %s27 = scalar_select %p24, %s26, %s17
    %p28 = scmp.ge.s32.totalorder %s27, 2
    %s29 = scalar_select %p28, 0, %s27
    %s30 = ssub.s32 %s17, %s29
    %s31 = ssub.s32 %s18, %s25
    %s32 = sor.u32 %s30, %s31
    %p33 = scmp.eq.s32.totalorder %s32, 0
    %s35 = sadd.s32 %s34, 1
    %s36 = scalar_select %p33, %s34, %s35
    %p39 = pneg %p33
    %p40 = scmp.eq.s32.totalorder %s10, 1
    %p41 = por %p39, %p40
    %p42 = scmp.ne.s32.totalorder %s34, %s37
    %p43 = scmp.eq.s32.totalorder %s10, 0
    %p44 = por %p42, %p43
    %p45 = scmp.ne.s32.totalorder %s34, %s37
    %p46 = scmp.eq.s32.totalorder %s15, 1
    %p47 = por %p45, %p46
    %p48 = scmp.ne.s32.totalorder %s37, %s38
    %p49 = scmp.eq.s32.totalorder %s15, 0
    %p50 = por %p48, %p49
    %p51 = scmp.ne.s32.totalorder %s37, %s38
    %p52 = scmp.eq.s32.totalorder %s16, 1
    %p53 = por %p51, %p52
    %p55 = scmp.ne.s32.totalorder %s38, %s54
    %p56 = scmp.eq.s32.totalorder %s16, 0
    %p57 = por %p55, %p56
    %s59 = sadd.s32 %s58, 1
    %p62 = scmp.eq.s32.totalorder %s10, 1
    %p63 = scmp.ne.s32.totalorder %s58, %s60
    %p64 = scmp.eq.s32.totalorder %s10, 0
    %p65 = por %p63, %p64
    %p66 = scmp.ne.s32.totalorder %s58, %s60
    %p67 = scmp.eq.s32.totalorder %s15, 1
    %p68 = por %p66, %p67
    %p69 = scmp.ne.s32.totalorder %s60, %s61
    %p70 = scmp.eq.s32.totalorder %s15, 0
    %p71 = por %p69, %p70
    %p72 = scmp.ne.s32.totalorder %s60, %s61
    %p73 = scmp.eq.s32.totalorder %s16, 1
    %p74 = por %p72, %p73
    %p76 = scmp.ne.s32.totalorder %s61, %s75
    %p77 = scmp.eq.s32.totalorder %s16, 0
    %p78 = por %p76, %p77
    %s80 = sadd.s32 %s79, 1
    %p83 = scmp.eq.s32.totalorder %s10, 1
    %p84 = scmp.ne.s32.totalorder %s79, %s81
    %p85 = scmp.eq.s32.totalorder %s10, 0
    %p86 = por %p84, %p85
    %p87 = scmp.ne.s32.totalorder %s79, %s81
    %p88 = scmp.eq.s32.totalorder %s15, 1
    %p89 = por %p87, %p88
    %p90 = scmp.ne.s32.totalorder %s81, %s82
    %p91 = scmp.eq.s32.totalorder %s15, 0
    %p92 = por %p90, %p91
    %p93 = scmp.ne.s32.totalorder %s81, %s82
    %p94 = scmp.eq.s32.totalorder %s16, 1
    %p95 = por %p93, %p94
    %p97 = scmp.ne.s32.totalorder %s82, %s96
    %p98 = scmp.eq.s32.totalorder %s16, 0
    %p99 = por %p97, %p98
    %s100 = ssub.s32 %s17, %s29
    %s101 = ssub.s32 %s18, %s25
    %s102 = sor.u32 %s100, %s101
    %p103 = scmp.eq.s32.totalorder %s102, 0
    %s105 = sadd.s32 %s104, 1
    %s106 = scalar_select %p103, %s104, %s105
    %p109 = pneg %p103
    %p110 = scmp.eq.s32.totalorder %s10, 1
    %p111 = por %p109, %p110
    %p112 = scmp.ne.s32.totalorder %s104, %s107
    %p113 = scmp.eq.s32.totalorder %s10, 0
    %p114 = por %p112, %p113
    %p115 = scmp.ne.s32.totalorder %s104, %s107
    %p116 = scmp.eq.s32.totalorder %s15, 1
    %p117 = por %p115, %p116
    %p118 = scmp.ne.s32.totalorder %s107, %s108
    %p119 = scmp.eq.s32.totalorder %s15, 0
    %p120 = por %p118, %p119
    %p121 = scmp.ne.s32.totalorder %s107, %s108
    %p122 = scmp.eq.s32.totalorder %s16, 1
    %p123 = por %p121, %p122
    %p125 = scmp.ne.s32.totalorder %s108, %s124
    %p126 = scmp.eq.s32.totalorder %s16, 0
    %p127 = por %p125, %p126
    %s128 = ssub.s32 %s17, %s29
    %s129 = ssub.s32 %s18, %s25
    %s130 = sor.u32 %s128, %s129
    %p131 = scmp.eq.s32.totalorder %s130, 0
    %s133 = sadd.s32 %s132, 1
    %s134 = scalar_select %p131, %s132, %s133
    %p137 = pneg %p131
    %p138 = scmp.eq.s32.totalorder %s10, 1
    %p139 = por %p137, %p138
    %p140 = scmp.ne.s32.totalorder %s132, %s135
    %p141 = scmp.eq.s32.totalorder %s10, 0
    %p142 = por %p140, %p141
    %p143 = scmp.ne.s32.totalorder %s132, %s135
    %p144 = scmp.eq.s32.totalorder %s15, 1
    %p145 = por %p143, %p144
    %p146 = scmp.ne.s32.totalorder %s135, %s136
    %p147 = scmp.eq.s32.totalorder %s15, 0
    %p148 = por %p146, %p147
    %p149 = scmp.ne.s32.totalorder %s135, %s136
    %p150 = scmp.eq.s32.totalorder %s16, 1
    %p151 = por %p149, %p150
    %p153 = scmp.ne.s32.totalorder %s136, %s152
    %p154 = scmp.eq.s32.totalorder %s16, 0
    %p155 = por %p153, %p154
    %p156 = scmp.le.s32.totalorder 1, %s10
    %p157 = scmp.lt.s32.totalorder %s10, 3
    %p158 = pnand %p156, %p157
    %p159 = pneg %p158
    // Predicated region
    $region9: #{encoder_forward.49} parent=5 // pred_check
      _
    $region10: #{encoder_forward.49} parent=5 // pred_check_branch
      %161 = sbr.rel (%p158) target = $region12
    $region11: #{encoder_forward.49} parent=5 // pred_region
      %s162 = ssub.s32 %s10, 1
      // Predicated region
      $region13: #{encoder_forward.49} parent=11 // pred_check
        %p163 = pneg %p71
      $region14: #{encoder_forward.49} parent=11 // pred_check_branch
        %165 = sbr.rel (%p163) target = $region16
      $region15: #{encoder_forward.49} parent=11 // pred_region
        _
      $region16: #{encoder_forward.49} parent=11 // pred_fallthru
        _
      // Predicated region
      $region17: #{encoder_forward.49} parent=11 // pred_check
        %p166 = pneg %p92
      $region18: #{encoder_forward.49} parent=11 // pred_check_branch
        %168 = sbr.rel (%p166) target = $region20
      $region19: #{encoder_forward.49} parent=11 // pred_region
        _
      $region20: #{encoder_forward.49} parent=11 // pred_fallthru
        _
    $region12: #{encoder_forward.49} parent=5 // pred_fallthru
      _
    %p169 = scmp.lt.s32.totalorder %s10, 2
    // Predicated region
    $region21: #{encoder_forward.49} parent=5 // pred_check
      %p170 = pneg %p169
    $region22: #{encoder_forward.49} parent=5 // pred_check_branch
      %172 = sbr.rel (%p170) target = $region24
    $region23: #{encoder_forward.49} parent=5 // pred_region
      // Predicated region
      $region25: #{encoder_forward.49} parent=23 // pred_check
        %p173 = pneg %p44
      $region26: #{encoder_forward.49} parent=23 // pred_check_branch
        %175 = sbr.rel (%p173) target = $region28
      $region27: #{encoder_forward.49} parent=23 // pred_region
        %p176 = scmp.lt.s32.totalorder %s17, 1
        %s177 = scalar_select %p176, %s17, 1
        %p178 = scmp.lt.s32.totalorder %s18, 0
        %s179 = scalar_select %p178, %s18, 0
        %s180 = sadd.s32 %s179, %s177
        %s181 = smul.addr %s180, 4
        %s182 = scalar_lea.vmem %s0, %s181
      $region28: #{encoder_forward.49} parent=23 // pred_fallthru
        _
      // Predicated region
      $region29: #{encoder_forward.49} parent=23 // pred_check
        %p183 = pneg %p114
      $region30: #{encoder_forward.49} parent=23 // pred_check_branch
        %185 = sbr.rel (%p183) target = $region32
      $region31: #{encoder_forward.49} parent=23 // pred_region
        %p186 = scmp.lt.s32.totalorder %s17, 1
        %s187 = scalar_select %p186, %s17, 1
        %p188 = scmp.lt.s32.totalorder %s18, 0
        %s189 = scalar_select %p188, %s18, 0
        %s190 = sadd.s32 %s189, %s187
        %s191 = smul.addr %s190, 4
        %s192 = scalar_lea.vmem %s3, %s191
      $region32: #{encoder_forward.49} parent=23 // pred_fallthru
        _
    $region24: #{encoder_forward.49} parent=5 // pred_fallthru
      _
    %p193 = scmp.le.s32.totalorder 1, %s10
    %p194 = scmp.lt.s32.totalorder %s10, 3
    %p195 = pnand %p193, %p194
    %p196 = pneg %p195
    // Predicated region
    $region33: #{encoder_forward.49} parent=5 // pred_check
      _
    $region34: #{encoder_forward.49} parent=5 // pred_check_branch
      %198 = sbr.rel (%p195) target = $region36
    $region35: #{encoder_forward.49} parent=5 // pred_region
      %s199 = ssub.s32 %s10, 1
      %p200 = scmp.lt.s32.totalorder %s19, 1
      %s201 = scalar_select %p200, %s19, 1
      %p202 = scmp.lt.s32.totalorder %s20, 0
      %s203 = scalar_select %p202, %s20, 0
      %s204 = sadd.s32 %s203, %s201
      %s205 = smul.addr %s204, 4
      %s206 = scalar_lea.vmem %s0, %s205
      %p207 = pneg %p50
      %p208 = pneg %p47
      %p209 = pneg %p71
      %p210 = pneg %p68
      %p211 = pneg %p92
      %p212 = pneg %p89
      %p213 = scmp.lt.s32.totalorder %s19, 1
      %s214 = scalar_select %p213, %s19, 1
      %p215 = scmp.lt.s32.totalorder %s20, 0
      %s216 = scalar_select %p215, %s20, 0
      %s217 = sadd.s32 %s216, %s214
      %s218 = smul.addr %s217, 4
      %s219 = scalar_lea.vmem %s3, %s218
      %p220 = pneg %p120
      %p221 = pneg %p117
      %p222 = pneg %p148
      %p223 = pneg %p145
      %p224 = scmp.lt.s32.totalorder %s19, 1
      %s225 = scalar_select %p224, %s19, 1
      %p226 = scmp.lt.s32.totalorder %s20, 0
      %s227 = scalar_select %p226, %s20, 0
      %s228 = sadd.s32 %s227, %s225
      %s229 = smul.addr %s228, 4
      %s230 = scalar_lea.vmem %s4, %s229
      %p231 = scmp.lt.s32.totalorder %s19, 1
      %s232 = scalar_select %p231, %s19, 1
      %p233 = scmp.lt.s32.totalorder %s20, 0
      %s234 = scalar_select %p233, %s20, 0
      %s235 = sadd.s32 %s234, %s232
      %s236 = smul.addr %s235, 4
      %s237 = scalar_lea.vmem %s0, %s236
      %p238 = scmp.lt.s32.totalorder %s19, 1
      %s239 = scalar_select %p238, %s19, 1
      %p240 = scmp.lt.s32.totalorder %s20, 0
      %s241 = scalar_select %p240, %s20, 0
      %s242 = sadd.s32 %s241, %s239
      %s243 = smul.addr %s242, 4
      %s244 = scalar_lea.vmem %s3, %s243
      %p245 = scmp.lt.s32.totalorder %s19, 1
      %s246 = scalar_select %p245, %s19, 1
      %p247 = scmp.lt.s32.totalorder %s20, 0
      %s248 = scalar_select %p247, %s20, 0
      %s249 = sadd.s32 %s248, %s246
      %s250 = smul.addr %s249, 4
      %s251 = scalar_lea.vmem %s4, %s250
      %v253 = vld [vmem:[%s237] sm:$0xf]
      %v255 = vunpack.c.l.b16 %v253
      %v256 = vpack.c.b16 %v255, %v255
      %v258 = vshrl.u32 %v256, 16
      %v260 = vrot.slane %v258, 7
      %v261 = vshll.u32 %v256, 16
      %v263 = vor.u32 %v260, %v261
      %vm265 = vcmask 1040384
      %vm266 = vsmask.f32 256
      %vm267 = vmand %vm265, %vm266
      %v268 = vsel %vm267, 0, %v263
      %v269 = vrot.slane %v261, 1
      %v270 = vor.u32 %v258, %v269
      %vm272 = vcmask 1043456
      %vm273 = vsmask.f32 3328
      %vm274 = vmand %vm272, %vm273
      %v275 = vsel %vm274, %v270, 0
      %s276 = scalar_lea.vmem %s1, 32
      %v277 = vld [vmem:[%s276] sm:$0xf]
      %v278 = vld [vmem:[%s276 + $0x4] sm:$0xf]
      %v279 = vld [vmem:[%s276 + $0x8] sm:$0xf]
      %v280 = vld [vmem:[%s276 + $0xc] sm:$0xf]
      %v281 = vld [vmem:[%s276 + $0x10] sm:$0xf]
      %v282 = vld [vmem:[%s276 + $0x14] sm:$0xf]
      %v283 = vld [vmem:[%s276 + $0x18] sm:$0xf]
      %v284 = vld [vmem:[%s276 + $0x1c] sm:$0xf]
      %v285 = vld [vmem:[%s1] sm:$0xf]
      %v286 = vld [vmem:[%s1 + $0x4] sm:$0xf]
      %v287 = vld [vmem:[%s1 + $0x8] sm:$0xf]
      %v288 = vld [vmem:[%s1 + $0xc] sm:$0xf]
      %v289 = vld [vmem:[%s1 + $0x10] sm:$0xf]
      %v290 = vld [vmem:[%s1 + $0x14] sm:$0xf]
      %v291 = vld [vmem:[%s1 + $0x18] sm:$0xf]
      %v292 = vld [vmem:[%s1 + $0x1c] sm:$0xf]
      %v301 = vunpack.c.l.b16 %v285
      %v302 = vunpack.c.l.b16 %v286
      %v303 = vunpack.c.l.b16 %v287
      %v304 = vunpack.c.l.b16 %v288
      %v305 = vunpack.c.l.b16 %v289
      %v306 = vunpack.c.l.b16 %v290
      %v307 = vunpack.c.l.b16 %v291
      %v308 = vunpack.c.l.b16 %v292
      %v309 = vpack.c.b16 %v302, %v301
      %v310 = vpack.c.b16 %v304, %v303
      %v311 = vpack.c.b16 %v306, %v305
      %v312 = vpack.c.b16 %v308, %v307
      %vm317 = vcmask 523264
      %v319 = vsel %vm317, %v268, 0
      %321 = vmatprep.subr.bf16.mxu0 0
      %322 = vmatpush1.bf16.msra.mxu0 %v309
      %323 = vmatprep.subr.bf16.mxu0 0
      %324 = vmatpush1.bf16.msra.mxu0 %v310
      %325 = vmatprep.subr.bf16.mxu0 0
      %326 = vmatpush1.bf16.msra.mxu0 %v311
      %327 = vmatprep.subr.bf16.mxu0 0
      %328 = vmatpush1.bf16.msra.mxu0 %v312
      %329 = vmatprep.subr.bf16.mxu0 0
      %330 = vmatpush1.bf16.msra.mxu0 0
      %331 = vmatprep.subr.bf16.mxu0 0
      %332 = vmatpush1.bf16.msra.mxu0 0
      %333 = vmatprep.subr.bf16.mxu0 0
      %334 = vmatpush1.bf16.msra.mxu0 0
      %335 = vmatprep.subr.bf16.mxu0 0
      %336 = vmatpush1.bf16.msra.mxu0 0
      %337 = vmatprep.subr.bf16.mxu0 0
      %338 = vmatpush1.bf16.msra.mxu0 0
      %339 = vmatprep.subr.bf16.mxu0 0
      %340 = vmatpush1.bf16.msra.mxu0 0
      %341 = vmatprep.subr.bf16.mxu0 0
      %342 = vmatpush1.bf16.msra.mxu0 0
      %343 = vmatprep.subr.bf16.mxu0 0
      %344 = vmatpush1.bf16.msra.mxu0 0
      %345 = vmatprep.subr.bf16.mxu0 0
      %346 = vmatpush1.bf16.msra.mxu0 0
      %347 = vmatprep.subr.bf16.mxu0 0
      %348 = vmatpush1.bf16.msra.mxu0 0
      %349 = vmatprep.subr.bf16.mxu0 0
      %350 = vmatpush1.bf16.msra.mxu0 0
      %351 = vmatprep.subr.bf16.mxu0 0
      %352 = vmatpush1.bf16.msra.mxu0 0
      %353 = vmatprep.mubr.bf16.mxu0 0
      %354 = vmatmul.mubr.bf16.gmra.mrb[0].mxu0 %v319
      %v355 = vpop.f32.mrb[0].mxu0
      %v356 = vadd.f32 0.0, %v355
      %v357 = vpop.f32.mrb[0].mxu0
      %v358 = vpop.f32.mrb[0].mxu0
      %v359 = vpop.f32.mrb[0].mxu0
      %360 = vdwg.mxu0
      %v369 = vunpack.c.l.b16 %v277
      %v370 = vunpack.c.l.b16 %v278
      %v371 = vunpack.c.l.b16 %v279
      %v372 = vunpack.c.l.b16 %v280
      %v373 = vunpack.c.l.b16 %v281
      %v374 = vunpack.c.l.b16 %v282
      %v375 = vunpack.c.l.b16 %v283
      %v376 = vunpack.c.l.b16 %v284
      %v377 = vpack.c.b16 %v370, %v369
      %v378 = vpack.c.b16 %v372, %v371
      %v379 = vpack.c.b16 %v374, %v373
      %v380 = vpack.c.b16 %v376, %v375
      %v386 = vsel %vm317, %v253, 0
      %388 = vmatprep.subr.bf16.mxu0 0
      %389 = vmatpush1.bf16.msra.mxu0 %v377
      %390 = vmatprep.subr.bf16.mxu0 0
      %391 = vmatpush1.bf16.msra.mxu0 %v378
      %392 = vmatprep.subr.bf16.mxu0 0
      %393 = vmatpush1.bf16.msra.mxu0 %v379
      %394 = vmatprep.subr.bf16.mxu0 0
      %395 = vmatpush1.bf16.msra.mxu0 %v380
      %396 = vmatprep.subr.bf16.mxu0 0
      %397 = vmatpush1.bf16.msra.mxu0 0
      %398 = vmatprep.subr.bf16.mxu0 0
      %399 = vmatpush1.bf16.msra.mxu0 0
      %400 = vmatprep.subr.bf16.mxu0 0
      %401 = vmatpush1.bf16.msra.mxu0 0
      %402 = vmatprep.subr.bf16.mxu0 0
      %403 = vmatpush1.bf16.msra.mxu0 0
      %404 = vmatprep.subr.bf16.mxu0 0
      %405 = vmatpush1.bf16.msra.mxu0 0
      %406 = vmatprep.subr.bf16.mxu0 0
      %407 = vmatpush1.bf16.msra.mxu0 0
      %408 = vmatprep.subr.bf16.mxu0 0
      %409 = vmatpush1.bf16.msra.mxu0 0
      %410 = vmatprep.subr.bf16.mxu0 0
      %411 = vmatpush1.bf16.msra.mxu0 0
      %412 = vmatprep.subr.bf16.mxu0 0
      %413 = vmatpush1.bf16.msra.mxu0 0
      %414 = vmatprep.subr.bf16.mxu0 0
      %415 = vmatpush1.bf16.msra.mxu0 0
      %416 = vmatprep.subr.bf16.mxu0 0
      %417 = vmatpush1.bf16.msra.mxu0 0
      %418 = vmatprep.subr.bf16.mxu0 0
      %419 = vmatpush1.bf16.msra.mxu0 0
      %420 = vmatprep.mubr.bf16.mxu0 0
      %421 = vmatmul.mubr.bf16.gmra.mrb[0].mxu0 %v386
      %v422 = vpop.f32.mrb[0].mxu0
      %v423 = vadd.f32 %v356, %v422
      %v424 = vpop.f32.mrb[0].mxu0
      %v425 = vpop.f32.mrb[0].mxu0
      %v426 = vpop.f32.mrb[0].mxu0
      %427 = vdwg.mxu0
      %s428 = scalar_lea.vmem %s1, 64
      %v429 = vld [vmem:[%s428] sm:$0xf]
      %v430 = vld [vmem:[%s428 + $0x4] sm:$0xf]
      %v431 = vld [vmem:[%s428 + $0x8] sm:$0xf]
      %v432 = vld [vmem:[%s428 + $0xc] sm:$0xf]
      %v433 = vld [vmem:[%s428 + $0x10] sm:$0xf]
      %v434 = vld [vmem:[%s428 + $0x14] sm:$0xf]
      %v435 = vld [vmem:[%s428 + $0x18] sm:$0xf]
      %v436 = vld [vmem:[%s428 + $0x1c] sm:$0xf]
      %v445 = vunpack.c.l.b16 %v429
      %v446 = vunpack.c.l.b16 %v430
      %v447 = vunpack.c.l.b16 %v431
      %v448 = vunpack.c.l.b16 %v432
      %v449 = vunpack.c.l.b16 %v433
      %v450 = vunpack.c.l.b16 %v434
      %v451 = vunpack.c.l.b16 %v435
      %v452 = vunpack.c.l.b16 %v436
      %v453 = vpack.c.b16 %v446, %v445
      %v454 = vpack.c.b16 %v448, %v447
      %v455 = vpack.c.b16 %v450, %v449
      %v456 = vpack.c.b16 %v452, %v451
      %v462 = vsel %vm317, %v275, 0
      %464 = vmatprep.subr.bf16.mxu0 0
      %465 = vmatpush1.bf16.msra.mxu0 %v453
      %466 = vmatprep.subr.bf16.mxu0 0
      %467 = vmatpush1.bf16.msra.mxu0 %v454
      %468 = vmatprep.subr.bf16.mxu0 0
      %469 = vmatpush1.bf16.msra.mxu0 %v455
      %470 = vmatprep.subr.bf16.mxu0 0
      %471 = vmatpush1.bf16.msra.mxu0 %v456
      %472 = vmatprep.subr.bf16.mxu0 0
      %473 = vmatpush1.bf16.msra.mxu0 0
      %474 = vmatprep.subr.bf16.mxu0 0
      %475 = vmatpush1.bf16.msra.mxu0 0
      %476 = vmatprep.subr.bf16.mxu0 0
      %477 = vmatpush1.bf16.msra.mxu0 0
      %478 = vmatprep.subr.bf16.mxu0 0
      %479 = vmatpush1.bf16.msra.mxu0 0
      %480 = vmatprep.subr.bf16.mxu0 0
      %481 = vmatpush1.bf16.msra.mxu0 0
      %482 = vmatprep.subr.bf16.mxu0 0
      %483 = vmatpush1.bf16.msra.mxu0 0
      %484 = vmatprep.subr.bf16.mxu0 0
      %485 = vmatpush1.bf16.msra.mxu0 0
      %486 = vmatprep.subr.bf16.mxu0 0
      %487 = vmatpush1.bf16.msra.mxu0 0
      %488 = vmatprep.subr.bf16.mxu0 0
      %489 = vmatpush1.bf16.msra.mxu0 0
      %490 = vmatprep.subr.bf16.mxu0 0
      %491 = vmatpush1.bf16.msra.mxu0 0
      %492 = vmatprep.subr.bf16.mxu0 0
      %493 = vmatpush1.bf16.msra.mxu0 0
      %494 = vmatprep.subr.bf16.mxu0 0
      %495 = vmatpush1.bf16.msra.mxu0 0
      %496 = vmatprep.mubr.bf16.mxu0 0
      %497 = vmatmul.mubr.bf16.gmra.mrb[0].mxu0 %v462
      %v498 = vpop.f32.mrb[0].mxu0
      %v499 = vadd.f32 0.0, %v498
      %v500 = vpop.f32.mrb[0].mxu0
      %v501 = vpop.f32.mrb[0].mxu0
      %v502 = vpop.f32.mrb[0].mxu0
      %503 = vdwg.mxu0
      %v504 = vadd.f32 %v423, %v499
      %v505 = vld [vmem:[%s2] sm:$0x1]
      %v507 = vlaneseq
      %v508 = vshrl.u32 %v507, 7
      %v509 = vsub.s32 0, %v508
      %v510 = vrot.slane %v505, %v509
      %v512 = vadd.f32 %v504, %v510
      %v513 = vld [vmem:[%s244] sm:$0xf]
      %v514 = vunpack.c.l.bf16 %v513
      %v515 = vadd.f32 %v512, %v514
      %v516 = vpack.c.bf16 %v515, %v515
      %vm517 = vcmask 519168
      %518 = vst.msk [vmem:[%s251] sm:$0xf] %vm517, %v516
      %p519 = scmp.lt.s32.totalorder %s19, 1
      %s520 = scalar_select %p519, %s19, 1
      %p521 = scmp.lt.s32.totalorder %s20, 0
      %s522 = scalar_select %p521, %s20, 0
      %s523 = sadd.s32 %s522, %s520
      %s524 = smul.addr %s523, 4
      %s525 = scalar_lea.vmem %s4, %s524
      // Predicated region
      $region37: #{encoder_forward.49} parent=35 // pred_check
        %p526 = pneg %p145
      $region38: #{encoder_forward.49} parent=35 // pred_check_branch
        %528 = sbr.rel (%p526) target = $region40
      $region39: #{encoder_forward.49} parent=35 // pred_region
        _
      $region40: #{encoder_forward.49} parent=35 // pred_fallthru
        _
    $region36: #{encoder_forward.49} parent=5 // pred_fallthru
      _
    %p529 = scmp.le.s32.totalorder 2, %s10
    // Predicated region
    $region41: #{encoder_forward.49} parent=5 // pred_check
      %p530 = pneg %p529
    $region42: #{encoder_forward.49} parent=5 // pred_check_branch
      %532 = sbr.rel (%p530) target = $region44
    $region43: #{encoder_forward.49} parent=5 // pred_region
      %s533 = ssub.s32 %s10, 2
      // Predicated region
      $region45: #{encoder_forward.49} parent=43 // pred_check
        %p534 = pneg %p151
      $region46: #{encoder_forward.49} parent=43 // pred_check_branch
        %536 = sbr.rel (%p534) target = $region48
      $region47: #{encoder_forward.49} parent=43 // pred_region
        %p537 = scmp.lt.s32.totalorder %s21, 1
        %s538 = scalar_select %p537, %s21, 1
        %p539 = scmp.lt.s32.totalorder %s22, 0
        %s540 = scalar_select %p539, %s22, 0
        %s541 = sadd.s32 %s540, %s538
        %s542 = smul.addr %s541, 4
        %s543 = scalar_lea.vmem %s4, %s542
      $region48: #{encoder_forward.49} parent=43 // pred_fallthru
        _
    $region44: #{encoder_forward.49} parent=5 // pred_fallthru
      _
  $region6: #{encoder_forward.49} parent=0 // loop_footer
    %s14 = sadd.s32 1, %s10
  $region7: #{encoder_forward.49} parent=0 // loop_footer_branch
    %9 = sbr.rel target = $region3
  $region8: #{encoder_forward.49} parent=0 // loop_exit
    _

// kernel: encoder_forward.58
$region0: #{encoder_forward.58}
  #allocation0 [shape = 'u32[]', space=smem, size = 0x4, offset = 0x4, fixed_abs, tag = 'smem constant byte address 0x4 - core index']
  #allocation1 [shape = 'u32[144,128]{1,0:T(1,128)}', space=vmem, size = 0x12000, scoped, tag = 'internal scratch']
  %s0 = inlined_call_operand.vmem [shape: bf16[2,8,64], index: 0, kind: input, shape index: {}]
  %s1 = inlined_call_operand.vmem [shape: bf16[64,64], index: 1, kind: input, shape index: {}]
  %s2 = inlined_call_operand.vmem [shape: bf16[64,64], index: 2, kind: input, shape index: {}]
  %s3 = inlined_call_operand.vmem [shape: bf16[64,64], index: 3, kind: input, shape index: {}]
  %s4 = inlined_call_operand.vmem [shape: f32[1,64], index: 4, kind: input, shape index: {}]
  %s5 = inlined_call_operand.vmem [shape: f32[1,64], index: 5, kind: input, shape index: {}]
  %s6 = inlined_call_operand.vmem [shape: f32[1,64], index: 6, kind: input, shape index: {}]
  %s7 = inlined_call_operand.vmem [shape: bf16[2,8,64], index: 7, kind: output, shape index: {0}]
  %s8 = inlined_call_operand.vmem [shape: bf16[2,8,64], index: 8, kind: output, shape index: {1}]
  %s9 = inlined_call_operand.vmem [shape: bf16[2,8,64], index: 9, kind: output, shape index: {2}]
  %10 = xla_tuple %s7, %s8, %s9
  %s11 = sld [smem:[#allocation0]]
  $region77: #{encoder_forward.58} parent=0
    _
  %s13 = ssub.s32 1, %s11
  %s14 = scalar_select 0, %s13, %s11
  loop: start=0, step=1, limit=4
  $region2: #{encoder_forward.58} parent=0 // loop_pre_header
    _
  $region3: #{encoder_forward.58} parent=0 // loop_header
    %s16 = sphi 0, %s20
    %p17 = scmp.ge.s32.totalorder %s16, 4
    %s23 = sphi 0, %s35
    %s24 = sphi 0, %s31
    %s25 = sphi 0, %s23
    %s26 = sphi 0, %s24
    %s27 = sphi 0, %s25
    %s28 = sphi 0, %s26
    %s40 = sphi 0, %s42
    %s43 = sphi 0, %s40
    %s44 = sphi 0, %s43
    %s60 = sphi 0, %s44
    %s64 = sphi 0, %s64
    %s66 = sphi 0, %s64
    %s67 = sphi 0, %s66
    %s81 = sphi 0, %s67
    %s85 = sphi 0, %s85
    %s87 = sphi 0, %s85
    %s88 = sphi 0, %s87
    %s102 = sphi 0, %s88
    %s106 = sphi 0, %s106
    %s108 = sphi 0, %s106
    %s109 = sphi 0, %s108
    %s123 = sphi 0, %s109
    %s127 = sphi 0, %s127
    %s129 = sphi 0, %s127
    %s130 = sphi 0, %s129
    %s144 = sphi 0, %s130
    %s148 = sphi 0, %s148
    %s150 = sphi 0, %s148
    %s151 = sphi 0, %s150
    %s165 = sphi 0, %s151
    %s169 = sphi 0, %s169
    %s171 = sphi 0, %s169
    %s172 = sphi 0, %s171
    %s186 = sphi 0, %s172
    %s194 = sphi 0, %s196
    %s197 = sphi 0, %s194
    %s198 = sphi 0, %s197
    %s214 = sphi 0, %s198
    %s222 = sphi 0, %s224
    %s225 = sphi 0, %s222
    %s226 = sphi 0, %s225
    %s242 = sphi 0, %s226
    %s250 = sphi 0, %s252
    %s253 = sphi 0, %s250
    %s254 = sphi 0, %s253
    %s270 = sphi 0, %s254
  $region4: #{encoder_forward.58} parent=0 // loop_header_branch
    %19 = sbr.rel (%p17) target = $region8
  $region5: #{encoder_forward.58} parent=0 // loop_body
    %s21 = ssub.s32 %s16, 1
    %s22 = ssub.s32 %s16, 2
    %s29 = sadd.s32 1, %s24
    %p30 = scmp.ge.s32.totalorder %s29, 1
    %s31 = scalar_select %p30, 0, %s29
    %s32 = sadd.s32 1, %s23
    %s33 = scalar_select %p30, %s32, %s23
    %p34 = scmp.ge.s32.totalorder %s33, 2
    %s35 = scalar_select %p34, 0, %s33
    %s36 = ssub.s32 %s23, %s35
    %s37 = ssub.s32 %s24, %s31
    %s38 = sor.u32 %s36, %s37
    %p39 = scmp.eq.s32.totalorder %s38, 0
    %s41 = sadd.s32 %s40, 1
    %s42 = scalar_select %p39, %s40, %s41
    %p45 = pneg %p39
    %p46 = scmp.eq.s32.totalorder %s16, 1
    %p47 = por %p45, %p46
    %p48 = scmp.ne.s32.totalorder %s40, %s43
    %p49 = scmp.eq.s32.totalorder %s16, 0
    %p50 = por %p48, %p49
    %p51 = scmp.ne.s32.totalorder %s40, %s43
    %p52 = scmp.eq.s32.totalorder %s21, 1
    %p53 = por %p51, %p52
    %p54 = scmp.ne.s32.totalorder %s43, %s44
    %p55 = scmp.eq.s32.totalorder %s21, 0
    %p56 = por %p54, %p55
    %p57 = scmp.ne.s32.totalorder %s43, %s44
    %p58 = scmp.eq.s32.totalorder %s22, 1
    %p59 = por %p57, %p58
    %p61 = scmp.ne.s32.totalorder %s44, %s60
    %p62 = scmp.eq.s32.totalorder %s22, 0
    %p63 = por %p61, %p62
    %s65 = sadd.s32 %s64, 1
    %p68 = scmp.eq.s32.totalorder %s16, 1
    %p69 = scmp.ne.s32.totalorder %s64, %s66
    %p70 = scmp.eq.s32.totalorder %s16, 0
    %p71 = por %p69, %p70
    %p72 = scmp.ne.s32.totalorder %s64, %s66
    %p73 = scmp.eq.s32.totalorder %s21, 1
    %p74 = por %p72, %p73
    %p75 = scmp.ne.s32.totalorder %s66, %s67
    %p76 = scmp.eq.s32.totalorder %s21, 0
    %p77 = por %p75, %p76
    %p78 = scmp.ne.s32.totalorder %s66, %s67
    %p79 = scmp.eq.s32.totalorder %s22, 1
    %p80 = por %p78, %p79
    %p82 = scmp.ne.s32.totalorder %s67, %s81
    %p83 = scmp.eq.s32.totalorder %s22, 0
    %p84 = por %p82, %p83
    %s86 = sadd.s32 %s85, 1
    %p89 = scmp.eq.s32.totalorder %s16, 1
    %p90 = scmp.ne.s32.totalorder %s85, %s87
    %p91 = scmp.eq.s32.totalorder %s16, 0
    %p92 = por %p90, %p91
    %p93 = scmp.ne.s32.totalorder %s85, %s87
    %p94 = scmp.eq.s32.totalorder %s21, 1
    %p95 = por %p93, %p94
    %p96 = scmp.ne.s32.totalorder %s87, %s88
    %p97 = scmp.eq.s32.totalorder %s21, 0
    %p98 = por %p96, %p97
    %p99 = scmp.ne.s32.totalorder %s87, %s88
    %p100 = scmp.eq.s32.totalorder %s22, 1
    %p101 = por %p99, %p100
    %p103 = scmp.ne.s32.totalorder %s88, %s102
    %p104 = scmp.eq.s32.totalorder %s22, 0
    %p105 = por %p103, %p104
    %s107 = sadd.s32 %s106, 1
    %p110 = scmp.eq.s32.totalorder %s16, 1
    %p111 = scmp.ne.s32.totalorder %s106, %s108
    %p112 = scmp.eq.s32.totalorder %s16, 0
    %p113 = por %p111, %p112
    %p114 = scmp.ne.s32.totalorder %s106, %s108
    %p115 = scmp.eq.s32.totalorder %s21, 1
    %p116 = por %p114, %p115
    %p117 = scmp.ne.s32.totalorder %s108, %s109
    %p118 = scmp.eq.s32.totalorder %s21, 0
    %p119 = por %p117, %p118
    %p120 = scmp.ne.s32.totalorder %s108, %s109
    %p121 = scmp.eq.s32.totalorder %s22, 1
    %p122 = por %p120, %p121
    %p124 = scmp.ne.s32.totalorder %s109, %s123
    %p125 = scmp.eq.s32.totalorder %s22, 0
    %p126 = por %p124, %p125
    %s128 = sadd.s32 %s127, 1
    %p131 = scmp.eq.s32.totalorder %s16, 1
    %p132 = scmp.ne.s32.totalorder %s127, %s129
    %p133 = scmp.eq.s32.totalorder %s16, 0
    %p134 = por %p132, %p133
    %p135 = scmp.ne.s32.totalorder %s127, %s129
    %p136 = scmp.eq.s32.totalorder %s21, 1
    %p137 = por %p135, %p136
    %p138 = scmp.ne.s32.totalorder %s129, %s130
    %p139 = scmp.eq.s32.totalorder %s21, 0
    %p140 = por %p138, %p139
    %p141 = scmp.ne.s32.totalorder %s129, %s130
    %p142 = scmp.eq.s32.totalorder %s22, 1
    %p143 = por %p141, %p142
    %p145 = scmp.ne.s32.totalorder %s130, %s144
    %p146 = scmp.eq.s32.totalorder %s22, 0
    %p147 = por %p145, %p146
    %s149 = sadd.s32 %s148, 1
    %p152 = scmp.eq.s32.totalorder %s16, 1
    %p153 = scmp.ne.s32.totalorder %s148, %s150
    %p154 = scmp.eq.s32.totalorder %s16, 0
    %p155 = por %p153, %p154
    %p156 = scmp.ne.s32.totalorder %s148, %s150
    %p157 = scmp.eq.s32.totalorder %s21, 1
    %p158 = por %p156, %p157
    %p159 = scmp.ne.s32.totalorder %s150, %s151
    %p160 = scmp.eq.s32.totalorder %s21, 0
    %p161 = por %p159, %p160
    %p162 = scmp.ne.s32.totalorder %s150, %s151
    %p163 = scmp.eq.s32.totalorder %s22, 1
    %p164 = por %p162, %p163
    %p166 = scmp.ne.s32.totalorder %s151, %s165
    %p167 = scmp.eq.s32.totalorder %s22, 0
    %p168 = por %p166, %p167
    %s170 = sadd.s32 %s169, 1
    %p173 = scmp.eq.s32.totalorder %s16, 1
    %p174 = scmp.ne.s32.totalorder %s169, %s171
    %p175 = scmp.eq.s32.totalorder %s16, 0
    %p176 = por %p174, %p175
    %p177 = scmp.ne.s32.totalorder %s169, %s171
    %p178 = scmp.eq.s32.totalorder %s21, 1
    %p179 = por %p177, %p178
    %p180 = scmp.ne.s32.totalorder %s171, %s172
    %p181 = scmp.eq.s32.totalorder %s21, 0
    %p182 = por %p180, %p181
    %p183 = scmp.ne.s32.totalorder %s171, %s172
    %p184 = scmp.eq.s32.totalorder %s22, 1
    %p185 = por %p183, %p184
    %p187 = scmp.ne.s32.totalorder %s172, %s186
    %p188 = scmp.eq.s32.totalorder %s22, 0
    %p189 = por %p187, %p188
    %s190 = ssub.s32 %s23, %s35
    %s191 = ssub.s32 %s24, %s31
    %s192 = sor.u32 %s190, %s191
    %p193 = scmp.eq.s32.totalorder %s192, 0
    %s195 = sadd.s32 %s194, 1
    %s196 = scalar_select %p193, %s194, %s195
    %p199 = pneg %p193
    %p200 = scmp.eq.s32.totalorder %s16, 1
    %p201 = por %p199, %p200
    %p202 = scmp.ne.s32.totalorder %s194, %s197
    %p203 = scmp.eq.s32.totalorder %s16, 0
    %p204 = por %p202, %p203
    %p205 = scmp.ne.s32.totalorder %s194, %s197
    %p206 = scmp.eq.s32.totalorder %s21, 1
    %p207 = por %p205, %p206
    %p208 = scmp.ne.s32.totalorder %s197, %s198
    %p209 = scmp.eq.s32.totalorder %s21, 0
    %p210 = por %p208, %p209
    %p211 = scmp.ne.s32.totalorder %s197, %s198
    %p212 = scmp.eq.s32.totalorder %s22, 1
    %p213 = por %p211, %p212
    %p215 = scmp.ne.s32.totalorder %s198, %s214
    %p216 = scmp.eq.s32.totalorder %s22, 0
    %p217 = por %p215, %p216
    %s218 = ssub.s32 %s23, %s35
    %s219 = ssub.s32 %s24, %s31
    %s220 = sor.u32 %s218, %s219
    %p221 = scmp.eq.s32.totalorder %s220, 0
    %s223 = sadd.s32 %s222, 1
    %s224 = scalar_select %p221, %s222, %s223
    %p227 = pneg %p221
    %p228 = scmp.eq.s32.totalorder %s16, 1
    %p229 = por %p227, %p228
    %p230 = scmp.ne.s32.totalorder %s222, %s225
    %p231 = scmp.eq.s32.totalorder %s16, 0
    %p232 = por %p230, %p231
    %p233 = scmp.ne.s32.totalorder %s222, %s225
    %p234 = scmp.eq.s32.totalorder %s21, 1
    %p235 = por %p233, %p234
    %p236 = scmp.ne.s32.totalorder %s225, %s226
    %p237 = scmp.eq.s32.totalorder %s21, 0
    %p238 = por %p236, %p237
    %p239 = scmp.ne.s32.totalorder %s225, %s226
    %p240 = scmp.eq.s32.totalorder %s22, 1
    %p241 = por %p239, %p240
    %p243 = scmp.ne.s32.totalorder %s226, %s242
    %p244 = scmp.eq.s32.totalorder %s22, 0
    %p245 = por %p243, %p244
    %s246 = ssub.s32 %s23, %s35
    %s247 = ssub.s32 %s24, %s31
    %s248 = sor.u32 %s246, %s247
    %p249 = scmp.eq.s32.totalorder %s248, 0
    %s251 = sadd.s32 %s250, 1
    %s252 = scalar_select %p249, %s250, %s251
    %p255 = pneg %p249
    %p256 = scmp.eq.s32.totalorder %s16, 1
    %p257 = por %p255, %p256
    %p258 = scmp.ne.s32.totalorder %s250, %s253
    %p259 = scmp.eq.s32.totalorder %s16, 0
    %p260 = por %p258, %p259
    %p261 = scmp.ne.s32.totalorder %s250, %s253
    %p262 = scmp.eq.s32.totalorder %s21, 1
    %p263 = por %p261, %p262
    %p264 = scmp.ne.s32.totalorder %s253, %s254
    %p265 = scmp.eq.s32.totalorder %s21, 0
    %p266 = por %p264, %p265
    %p267 = scmp.ne.s32.totalorder %s253, %s254
    %p268 = scmp.eq.s32.totalorder %s22, 1
    %p269 = por %p267, %p268
    %p271 = scmp.ne.s32.totalorder %s254, %s270
    %p272 = scmp.eq.s32.totalorder %s22, 0
    %p273 = por %p271, %p272
    %p274 = scmp.le.s32.totalorder 1, %s16
    %p275 = scmp.lt.s32.totalorder %s16, 3
    %p276 = pnand %p274, %p275
    %p277 = pneg %p276
    // Predicated region
    $region9: #{encoder_forward.58} parent=5 // pred_check
      _
    $region10: #{encoder_forward.58} parent=5 // pred_check_branch
      %279 = sbr.rel (%p276) target = $region12
    $region11: #{encoder_forward.58} parent=5 // pred_region
      %s280 = ssub.s32 %s16, 1
      // Predicated region
      $region13: #{encoder_forward.58} parent=11 // pred_check
        %p281 = pneg %p77
      $region14: #{encoder_forward.58} parent=11 // pred_check_branch
        %283 = sbr.rel (%p281) target = $region16
      $region15: #{encoder_forward.58} parent=11 // pred_region
        _
      $region16: #{encoder_forward.58} parent=11 // pred_fallthru
        _
      // Predicated region
      $region17: #{encoder_forward.58} parent=11 // pred_check
        %p284 = pneg %p98
      $region18: #{encoder_forward.58} parent=11 // pred_check_branch
        %286 = sbr.rel (%p284) target = $region20
      $region19: #{encoder_forward.58} parent=11 // pred_region
        _
      $region20: #{encoder_forward.58} parent=11 // pred_fallthru
        _
      // Predicated region
      $region21: #{encoder_forward.58} parent=11 // pred_check
        %p287 = pneg %p119
      $region22: #{encoder_forward.58} parent=11 // pred_check_branch
        %289 = sbr.rel (%p287) target = $region24
      $region23: #{encoder_forward.58} parent=11 // pred_region
        _
      $region24: #{encoder_forward.58} parent=11 // pred_fallthru
        _
      // Predicated region
      $region25: #{encoder_forward.58} parent=11 // pred_check
        %p290 = pneg %p140
      $region26: #{encoder_forward.58} parent=11 // pred_check_branch
        %292 = sbr.rel (%p290) target = $region28
      $region27: #{encoder_forward.58} parent=11 // pred_region
        _
      $region28: #{encoder_forward.58} parent=11 // pred_fallthru
        _
      // Predicated region
      $region29: #{encoder_forward.58} parent=11 // pred_check
        %p293 = pneg %p161
      $region30: #{encoder_forward.58} parent=11 // pred_check_branch
        %295 = sbr.rel (%p293) target = $region32
      $region31: #{encoder_forward.58} parent=11 // pred_region
        _
      $region32: #{encoder_forward.58} parent=11 // pred_fallthru
        _
      // Predicated region
      $region33: #{encoder_forward.58} parent=11 // pred_check
        %p296 = pneg %p182
      $region34: #{encoder_forward.58} parent=11 // pred_check_branch
        %298 = sbr.rel (%p296) target = $region36
      $region35: #{encoder_forward.58} parent=11 // pred_region
        _
      $region36: #{encoder_forward.58} parent=11 // pred_fallthru
        _
    $region12: #{encoder_forward.58} parent=5 // pred_fallthru
      _
    %p299 = scmp.lt.s32.totalorder %s16, 2
    // Predicated region
    $region37: #{encoder_forward.58} parent=5 // pred_check
      %p300 = pneg %p299
    $region38: #{encoder_forward.58} parent=5 // pred_check_branch
      %302 = sbr.rel (%p300) target = $region40
    $region39: #{encoder_forward.58} parent=5 // pred_region
      // Predicated region
      $region41: #{encoder_forward.58} parent=39 // pred_check
        %p303 = pneg %p50
      $region42: #{encoder_forward.58} parent=39 // pred_check_branch
        %305 = sbr.rel (%p303) target = $region44
      $region43: #{encoder_forward.58} parent=39 // pred_region
        %p306 = scmp.lt.s32.totalorder %s23, 1
        %s307 = scalar_select %p306, %s23, 1
        %p308 = scmp.lt.s32.totalorder %s24, 0
        %s309 = scalar_select %p308, %s24, 0
        %s310 = sadd.s32 %s309, %s307
        %s311 = smul.addr %s310, 4
        %s312 = scalar_lea.vmem %s0, %s311
      $region44: #{encoder_forward.58} parent=39 // pred_fallthru
        _
    $region40: #{encoder_forward.58} parent=5 // pred_fallthru
      _
    %p313 = scmp.le.s32.totalorder 1, %s16
    %p314 = scmp.lt.s32.totalorder %s16, 3
    %p315 = pnand %p313, %p314
    %p316 = pneg %p315
    // Predicated region
    $region45: #{encoder_forward.58} parent=5 // pred_check
      _
    $region46: #{encoder_forward.58} parent=5 // pred_check_branch
      %318 = sbr.rel (%p315) target = $region48
    $region47: #{encoder_forward.58} parent=5 // pred_region
      %s319 = ssub.s32 %s16, 1
      %p320 = scmp.lt.s32.totalorder %s25, 1
      %s321 = scalar_select %p320, %s25, 1
      %p322 = scmp.lt.s32.totalorder %s26, 0
      %s323 = scalar_select %p322, %s26, 0
      %s324 = sadd.s32 %s323, %s321
      %s325 = smul.addr %s324, 4
      %s326 = scalar_lea.vmem %s0, %s325
      %p327 = pneg %p56
      %p328 = pneg %p53
      %p329 = pneg %p77
      %p330 = pneg %p74
      %p331 = pneg %p98
      %p332 = pneg %p95
      %p333 = pneg %p119
      %p334 = pneg %p116
      %p335 = pneg %p140
      %p336 = pneg %p137
      %p337 = pneg %p161
      %p338 = pneg %p158
      %p339 = pneg %p182
      %p340 = pneg %p179
      %p341 = pneg %p210
      %p342 = pneg %p207
      %p343 = scmp.lt.s32.totalorder %s25, 1
      %s344 = scalar_select %p343, %s25, 1
      %p345 = scmp.lt.s32.totalorder %s26, 0
      %s346 = scalar_select %p345, %s26, 0
      %s347 = sadd.s32 %s346, %s344
      %s348 = smul.addr %s347, 4
      %s349 = scalar_lea.vmem %s7, %s348
      %p350 = pneg %p238
      %p351 = pneg %p235
      %p352 = scmp.lt.s32.totalorder %s25, 1
      %s353 = scalar_select %p352, %s25, 1
      %p354 = scmp.lt.s32.totalorder %s26, 0
      %s355 = scalar_select %p354, %s26, 0
      %s356 = sadd.s32 %s355, %s353
      %s357 = smul.addr %s356, 4
      %s358 = scalar_lea.vmem %s8, %s357
      %p359 = pneg %p266
      %p360 = pneg %p263
      %p361 = scmp.lt.s32.totalorder %s25, 1
      %s362 = scalar_select %p361, %s25, 1
      %p363 = scmp.lt.s32.totalorder %s26, 0
      %s364 = scalar_select %p363, %s26, 0
      %s365 = sadd.s32 %s364, %s362
      %s366 = smul.addr %s365, 4
      %s367 = scalar_lea.vmem %s9, %s366
      %p368 = scmp.lt.s32.totalorder %s25, 1
      %s369 = scalar_select %p368, %s25, 1
      %p370 = scmp.lt.s32.totalorder %s26, 0
      %s371 = scalar_select %p370, %s26, 0
      %s372 = sadd.s32 %s371, %s369
      %s373 = smul.addr %s372, 4
      %s374 = scalar_lea.vmem %s0, %s373
      %p375 = scmp.lt.s32.totalorder %s25, 1
      %s376 = scalar_select %p375, %s25, 1
      %p377 = scmp.lt.s32.totalorder %s26, 0
      %s378 = scalar_select %p377, %s26, 0
      %s379 = sadd.s32 %s378, %s376
      %s380 = smul.addr %s379, 4
      %s381 = scalar_lea.vmem %s7, %s380
      %p382 = scmp.lt.s32.totalorder %s25, 1
      %s383 = scalar_select %p382, %s25, 1
      %p384 = scmp.lt.s32.totalorder %s26, 0
      %s385 = scalar_select %p384, %s26, 0
      %s386 = sadd.s32 %s385, %s383
      %s387 = smul.addr %s386, 4
      %s388 = scalar_lea.vmem %s8, %s387
      %p389 = scmp.lt.s32.totalorder %s25, 1
      %s390 = scalar_select %p389, %s25, 1
      %p391 = scmp.lt.s32.totalorder %s26, 0
      %s392 = scalar_select %p391, %s26, 0
      %s393 = sadd.s32 %s392, %s390
      %s394 = smul.addr %s393, 4
      %s395 = scalar_lea.vmem %s9, %s394
      %v397 = vld [vmem:[%s374] sm:$0xf]
      %v398 = vld [vmem:[%s1] sm:$0xf]
      %v399 = vld [vmem:[%s1 + $0x4] sm:$0xf]
      %v400 = vld [vmem:[%s1 + $0x8] sm:$0xf]
      %v401 = vld [vmem:[%s1 + $0xc] sm:$0xf]
      %v402 = vld [vmem:[%s1 + $0x10] sm:$0xf]
      %v403 = vld [vmem:[%s1 + $0x14] sm:$0xf]
      %v404 = vld [vmem:[%s1 + $0x18] sm:$0xf]
      %v405 = vld [vmem:[%s1 + $0x1c] sm:$0xf]
      %v406 = vld [vmem:[%s4] sm:$0x1]
      %v408 = vlaneseq
      %v409 = vshrl.u32 %v408, 7
      %v410 = vsub.s32 0, %v409
      %v411 = vrot.slane %v406, %v410
      %v421 = vunpack.c.l.b16 %v398
      %v422 = vunpack.c.l.b16 %v399
      %v423 = vunpack.c.l.b16 %v400
      %v424 = vunpack.c.l.b16 %v401
      %v425 = vunpack.c.l.b16 %v402
      %v426 = vunpack.c.l.b16 %v403
      %v427 = vunpack.c.l.b16 %v404
      %v428 = vunpack.c.l.b16 %v405
      %v429 = vpack.c.b16 %v422, %v421
      %v430 = vpack.c.b16 %v424, %v423
      %v431 = vpack.c.b16 %v426, %v425
      %v432 = vpack.c.b16 %v428, %v427
      %vm437 = vcmask 523264
      %v439 = vsel %vm437, %v397, 0
      %441 = vmatprep.subr.bf16.mxu0 0
      %442 = vmatpush1.bf16.msra.mxu0 %v429
      %443 = vmatprep.subr.bf16.mxu0 0
      %444 = vmatpush1.bf16.msra.mxu0 %v430
      %445 = vmatprep.subr.bf16.mxu0 0
      %446 = vmatpush1.bf16.msra.mxu0 %v431
      %447 = vmatprep.subr.bf16.mxu0 0
      %448 = vmatpush1.bf16.msra.mxu0 %v432
      %449 = vmatprep.subr.bf16.mxu0 0
      %450 = vmatpush1.bf16.msra.mxu0 0
      %451 = vmatprep.subr.bf16.mxu0 0
      %452 = vmatpush1.bf16.msra.mxu0 0
      %453 = vmatprep.subr.bf16.mxu0 0
      %454 = vmatpush1.bf16.msra.mxu0 0
      %455 = vmatprep.subr.bf16.mxu0 0
      %456 = vmatpush1.bf16.msra.mxu0 0
      %457 = vmatprep.subr.bf16.mxu0 0
      %458 = vmatpush1.bf16.msra.mxu0 0
      %459 = vmatprep.subr.bf16.mxu0 0
      %460 = vmatpush1.bf16.msra.mxu0 0
      %461 = vmatprep.subr.bf16.mxu0 0
      %462 = vmatpush1.bf16.msra.mxu0 0
      %463 = vmatprep.subr.bf16.mxu0 0
      %464 = vmatpush1.bf16.msra.mxu0 0
      %465 = vmatprep.subr.bf16.mxu0 0
      %466 = vmatpush1.bf16.msra.mxu0 0
      %467 = vmatprep.subr.bf16.mxu0 0
      %468 = vmatpush1.bf16.msra.mxu0 0
      %469 = vmatprep.subr.bf16.mxu0 0
      %470 = vmatpush1.bf16.msra.mxu0 0
      %471 = vmatprep.subr.bf16.mxu0 0
      %472 = vmatpush1.bf16.msra.mxu0 0
      %473 = vmatprep.mubr.bf16.mxu0 0
      %474 = vmatmul.mubr.bf16.gmra.mrb[0].mxu0 %v439
      %v475 = vpop.f32.mrb[0].mxu0
      %v476 = vadd.f32 %v411, %v475
      %v477 = vpop.f32.mrb[0].mxu0
      %v478 = vpop.f32.mrb[0].mxu0
      %v479 = vpop.f32.mrb[0].mxu0
      %480 = vdwg.mxu0
      %v481 = vpack.c.bf16 %v476, %v476
      %vm482 = vcmask 519168
      %483 = vst.msk [vmem:[%s381] sm:$0xf] %vm482, %v481
      %v484 = vld [vmem:[%s2] sm:$0xf]
      %v485 = vld [vmem:[%s2 + $0x4] sm:$0xf]
      %v486 = vld [vmem:[%s2 + $0x8] sm:$0xf]
      %v487 = vld [vmem:[%s2 + $0xc] sm:$0xf]
      %v488 = vld [vmem:[%s2 + $0x10] sm:$0xf]
      %v489 = vld [vmem:[%s2 + $0x14] sm:$0xf]
      %v490 = vld [vmem:[%s2 + $0x18] sm:$0xf]
      %v491 = vld [vmem:[%s2 + $0x1c] sm:$0xf]
      %v492 = vld [vmem:[%s5] sm:$0x1]
      %v494 = vlaneseq
      %v495 = vshrl.u32 %v494, 7
      %v496 = vsub.s32 0, %v495
      %v497 = vrot.slane %v492, %v496
      %v507 = vunpack.c.l.b16 %v484
      %v508 = vunpack.c.l.b16 %v485
      %v509 = vunpack.c.l.b16 %v486
      %v510 = vunpack.c.l.b16 %v487
      %v511 = vunpack.c.l.b16 %v488
      %v512 = vunpack.c.l.b16 %v489
      %v513 = vunpack.c.l.b16 %v490
      %v514 = vunpack.c.l.b16 %v491
      %v515 = vpack.c.b16 %v508, %v507
      %v516 = vpack.c.b16 %v510, %v509
      %v517 = vpack.c.b16 %v512, %v511
      %v518 = vpack.c.b16 %v514, %v513
      %523 = vmatprep.subr.bf16.mxu0 0
      %524 = vmatpush1.bf16.msra.mxu0 %v515
      %525 = vmatprep.subr.bf16.mxu0 0
      %526 = vmatpush1.bf16.msra.mxu0 %v516
      %527 = vmatprep.subr.bf16.mxu0 0
      %528 = vmatpush1.bf16.msra.mxu0 %v517
      %529 = vmatprep.subr.bf16.mxu0 0
      %530 = vmatpush1.bf16.msra.mxu0 %v518
      %531 = vmatprep.subr.bf16.mxu0 0
      %532 = vmatpush1.bf16.msra.mxu0 0
      %533 = vmatprep.subr.bf16.mxu0 0
      %534 = vmatpush1.bf16.msra.mxu0 0
      %535 = vmatprep.subr.bf16.mxu0 0
      %536 = vmatpush1.bf16.msra.mxu0 0
      %537 = vmatprep.subr.bf16.mxu0 0
      %538 = vmatpush1.bf16.msra.mxu0 0
      %539 = vmatprep.subr.bf16.mxu0 0
      %540 = vmatpush1.bf16.msra.mxu0 0
      %541 = vmatprep.subr.bf16.mxu0 0
      %542 = vmatpush1.bf16.msra.mxu0 0
      %543 = vmatprep.subr.bf16.mxu0 0
      %544 = vmatpush1.bf16.msra.mxu0 0
      %545 = vmatprep.subr.bf16.mxu0 0
      %546 = vmatpush1.bf16.msra.mxu0 0
      %547 = vmatprep.subr.bf16.mxu0 0
      %548 = vmatpush1.bf16.msra.mxu0 0
      %549 = vmatprep.subr.bf16.mxu0 0
      %550 = vmatpush1.bf16.msra.mxu0 0
      %551 = vmatprep.subr.bf16.mxu0 0
      %552 = vmatpush1.bf16.msra.mxu0 0
      %553 = vmatprep.subr.bf16.mxu0 0
      %554 = vmatpush1.bf16.msra.mxu0 0
      %555 = vmatprep.mubr.bf16.mxu0 0
      %556 = vmatmul.mubr.bf16.gmra.mrb[0].mxu0 %v439
      %v557 = vpop.f32.mrb[0].mxu0
      %v558 = vadd.f32 %v497, %v557
      %v559 = vpop.f32.mrb[0].mxu0
      %v560 = vpop.f32.mrb[0].mxu0
      %v561 = vpop.f32.mrb[0].mxu0
      %562 = vdwg.mxu0
      %v563 = vpack.c.bf16 %v558, %v558
      %564 = vst.msk [vmem:[%s388] sm:$0xf] %vm482, %v563
      %v565 = vld [vmem:[%s3] sm:$0xf]
      %v566 = vld [vmem:[%s3 + $0x4] sm:$0xf]
      %v567 = vld [vmem:[%s3 + $0x8] sm:$0xf]
      %v568 = vld [vmem:[%s3 + $0xc] sm:$0xf]
      %v569 = vld [vmem:[%s3 + $0x10] sm:$0xf]
      %v570 = vld [vmem:[%s3 + $0x14] sm:$0xf]
      %v571 = vld [vmem:[%s3 + $0x18] sm:$0xf]
      %v572 = vld [vmem:[%s3 + $0x1c] sm:$0xf]
      %v573 = vld [vmem:[%s6] sm:$0x1]
      %v575 = vlaneseq
      %v576 = vshrl.u32 %v575, 7
      %v577 = vsub.s32 0, %v576
      %v578 = vrot.slane %v573, %v577
      %v588 = vunpack.c.l.b16 %v565
      %v589 = vunpack.c.l.b16 %v566
      %v590 = vunpack.c.l.b16 %v567
      %v591 = vunpack.c.l.b16 %v568
      %v592 = vunpack.c.l.b16 %v569
      %v593 = vunpack.c.l.b16 %v570
      %v594 = vunpack.c.l.b16 %v571
      %v595 = vunpack.c.l.b16 %v572
      %v596 = vpack.c.b16 %v589, %v588
      %v597 = vpack.c.b16 %v591, %v590
      %v598 = vpack.c.b16 %v593, %v592
      %v599 = vpack.c.b16 %v595, %v594
      %604 = vmatprep.subr.bf16.mxu0 0
      %605 = vmatpush1.bf16.msra.mxu0 %v596
      %606 = vmatprep.subr.bf16.mxu0 0
      %607 = vmatpush1.bf16.msra.mxu0 %v597
      %608 = vmatprep.subr.bf16.mxu0 0
      %609 = vmatpush1.bf16.msra.mxu0 %v598
      %610 = vmatprep.subr.bf16.mxu0 0
      %611 = vmatpush1.bf16.msra.mxu0 %v599
      %612 = vmatprep.subr.bf16.mxu0 0
      %613 = vmatpush1.bf16.msra.mxu0 0
      %614 = vmatprep.subr.bf16.mxu0 0
      %615 = vmatpush1.bf16.msra.mxu0 0
      %616 = vmatprep.subr.bf16.mxu0 0
      %617 = vmatpush1.bf16.msra.mxu0 0
      %618 = vmatprep.subr.bf16.mxu0 0
      %619 = vmatpush1.bf16.msra.mxu0 0
      %620 = vmatprep.subr.bf16.mxu0 0
      %621 = vmatpush1.bf16.msra.mxu0 0
      %622 = vmatprep.subr.bf16.mxu0 0
      %623 = vmatpush1.bf16.msra.mxu0 0
      %624 = vmatprep.subr.bf16.mxu0 0
      %625 = vmatpush1.bf16.msra.mxu0 0
      %626 = vmatprep.subr.bf16.mxu0 0
      %627 = vmatpush1.bf16.msra.mxu0 0
      %628 = vmatprep.subr.bf16.mxu0 0
      %629 = vmatpush1.bf16.msra.mxu0 0
      %630 = vmatprep.subr.bf16.mxu0 0
      %631 = vmatpush1.bf16.msra.mxu0 0
      %632 = vmatprep.subr.bf16.mxu0 0
      %633 = vmatpush1.bf16.msra.mxu0 0
      %634 = vmatprep.subr.bf16.mxu0 0
      %635 = vmatpush1.bf16.msra.mxu0 0
      %636 = vmatprep.mubr.bf16.mxu0 0
      %637 = vmatmul.mubr.bf16.gmra.mrb[0].mxu0 %v439
      %v638 = vpop.f32.mrb[0].mxu0
      %v639 = vadd.f32 %v578, %v638
      %v640 = vpop.f32.mrb[0].mxu0
      %v641 = vpop.f32.mrb[0].mxu0
      %v642 = vpop.f32.mrb[0].mxu0
      %643 = vdwg.mxu0
      %v644 = vpack.c.bf16 %v639, %v639
      %645 = vst.msk [vmem:[%s395] sm:$0xf] %vm482, %v644
      %p646 = scmp.lt.s32.totalorder %s25, 1
      %s647 = scalar_select %p646, %s25, 1
      %p648 = scmp.lt.s32.totalorder %s26, 0
      %s649 = scalar_select %p648, %s26, 0
      %s650 = sadd.s32 %s649, %s647
      %s651 = smul.addr %s650, 4
      %s652 = scalar_lea.vmem %s7, %s651
      %p653 = scmp.lt.s32.totalorder %s25, 1
      %s654 = scalar_select %p653, %s25, 1
      %p655 = scmp.lt.s32.totalorder %s26, 0
      %s656 = scalar_select %p655, %s26, 0
      %s657 = sadd.s32 %s656, %s654
      %s658 = smul.addr %s657, 4
      %s659 = scalar_lea.vmem %s8, %s658
      %p660 = scmp.lt.s32.totalorder %s25, 1
      %s661 = scalar_select %p660, %s25, 1
      %p662 = scmp.lt.s32.totalorder %s26, 0
      %s663 = scalar_select %p662, %s26, 0
      %s664 = sadd.s32 %s663, %s661
      %s665 = smul.addr %s664, 4
      %s666 = scalar_lea.vmem %s9, %s665
      // Predicated region
      $region49: #{encoder_forward.58} parent=47 // pred_check
        %p667 = pneg %p207
      $region50: #{encoder_forward.58} parent=47 // pred_check_branch
        %669 = sbr.rel (%p667) target = $region52
      $region51: #{encoder_forward.58} parent=47 // pred_region
        _
      $region52: #{encoder_forward.58} parent=47 // pred_fallthru
        _
      // Predicated region
      $region53: #{encoder_forward.58} parent=47 // pred_check
        %p670 = pneg %p235
      $region54: #{encoder_forward.58} parent=47 // pred_check_branch
        %672 = sbr.rel (%p670) target = $region56
      $region55: #{encoder_forward.58} parent=47 // pred_region
        _
      $region56: #{encoder_forward.58} parent=47 // pred_fallthru
        _
      // Predicated region
      $region57: #{encoder_forward.58} parent=47 // pred_check
        %p673 = pneg %p263
      $region58: #{encoder_forward.58} parent=47 // pred_check_branch
        %675 = sbr.rel (%p673) target = $region60
      $region59: #{encoder_forward.58} parent=47 // pred_region
        _
      $region60: #{encoder_forward.58} parent=47 // pred_fallthru
        _
    $region48: #{encoder_forward.58} parent=5 // pred_fallthru
      _
    %p676 = scmp.le.s32.totalorder 2, %s16
    // Predicated region
    $region61: #{encoder_forward.58} parent=5 // pred_check
      %p677 = pneg %p676
    $region62: #{encoder_forward.58} parent=5 // pred_check_branch
      %679 = sbr.rel (%p677) target = $region64
    $region63: #{encoder_forward.58} parent=5 // pred_region
      %s680 = ssub.s32 %s16, 2
      // Predicated region
      $region65: #{encoder_forward.58} parent=63 // pred_check
        %p681 = pneg %p213
      $region66: #{encoder_forward.58} parent=63 // pred_check_branch
        %683 = sbr.rel (%p681) target = $region68
      $region67: #{encoder_forward.58} parent=63 // pred_region
        %p684 = scmp.lt.s32.totalorder %s27, 1
        %s685 = scalar_select %p684, %s27, 1
        %p686 = scmp.lt.s32.totalorder %s28, 0
        %s687 = scalar_select %p686, %s28, 0
        %s688 = sadd.s32 %s687, %s685
        %s689 = smul.addr %s688, 4
        %s690 = scalar_lea.vmem %s7, %s689
      $region68: #{encoder_forward.58} parent=63 // pred_fallthru
        _
      // Predicated region
      $region69: #{encoder_forward.58} parent=63 // pred_check
        %p691 = pneg %p241
      $region70: #{encoder_forward.58} parent=63 // pred_check_branch
        %693 = sbr.rel (%p691) target = $region72
      $region71: #{encoder_forward.58} parent=63 // pred_region
        %p694 = scmp.lt.s32.totalorder %s27, 1
        %s695 = scalar_select %p694, %s27, 1
        %p696 = scmp.lt.s32.totalorder %s28, 0
        %s697 = scalar_select %p696, %s28, 0
        %s698 = sadd.s32 %s697, %s695
        %s699 = smul.addr %s698, 4
        %s700 = scalar_lea.vmem %s8, %s699
      $region72: #{encoder_forward.58} parent=63 // pred_fallthru
        _
      // Predicated region
      $region73: #{encoder_forward.58} parent=63 // pred_check
        %p701 = pneg %p269
      $region74: #{encoder_forward.58} parent=63 // pred_check_branch
        %703 = sbr.rel (%p701) target = $region76
      $region75: #{encoder_forward.58} parent=63 // pred_region
        %p704 = scmp.lt.s32.totalorder %s27, 1
        %s705 = scalar_select %p704, %s27, 1
        %p706 = scmp.lt.s32.totalorder %s28, 0
        %s707 = scalar_select %p706, %s28, 0
        %s708 = sadd.s32 %s707, %s705
        %s709 = smul.addr %s708, 4
        %s710 = scalar_lea.vmem %s9, %s709
      $region76: #{encoder_forward.58} parent=63 // pred_fallthru
        _
    $region64: #{encoder_forward.58} parent=5 // pred_fallthru
      _
  $region6: #{encoder_forward.58} parent=0 // loop_footer
    %s20 = sadd.s32 1, %s16
  $region7: #{encoder_forward.58} parent=0 // loop_footer_branch
    %15 = sbr.rel target = $region3
  $region8: #{encoder_forward.58} parent=0 // loop_exit
    _

// kernel: encoder_forward.59
$region0: #{encoder_forward.59}
  #allocation0 [shape = 'u32[]', space=smem, size = 0x4, offset = 0x4, fixed_abs, tag = 'smem constant byte address 0x4 - core index']
  #allocation1 [shape = 'u32[144,128]{1,0:T(1,128)}', space=vmem, size = 0x12000, scoped, tag = 'internal scratch']
  #allocation2 [shape = 'f32[8,1]{1,0:T(8,128)}', space=vmem, size = 0x1000, scoped, tag = 'scratch operand']
  #allocation3 [shape = 'f32[8,1]{1,0:T(8,128)}', space=vmem, size = 0x1000, scoped, tag = 'scratch operand']
  #allocation4 [shape = 'f32[8,64]{1,0:T(8,128)}', space=vmem, size = 0x1000, scoped, tag = 'scratch operand']
  %s0 = inlined_call_operand.vmem [shape: bf16[2,8,64], index: 0, kind: input, shape index: {}]
  %s1 = inlined_call_operand.vmem [shape: bf16[2,8,64], index: 1, kind: input, shape index: {}]
  %s2 = inlined_call_operand.vmem [shape: bf16[2,8,64], index: 2, kind: input, shape index: {}]
  %s3 = inlined_call_operand.vmem [shape: bf16[2,8,64], index: 3, kind: output, shape index: {}]
  %s4 = sld [smem:[#allocation0]]
  $region53: #{encoder_forward.59} parent=0
    _
  %s6 = ssub.s32 1, %s4
  %s7 = scalar_select 0, %s6, %s4
  loop: start=0, step=1, limit=4
  $region2: #{encoder_forward.59} parent=0 // loop_pre_header
    _
  $region3: #{encoder_forward.59} parent=0 // loop_header
    %s9 = sphi 0, %s13
    %p10 = scmp.ge.s32.totalorder %s9, 4
    %s16 = sphi 0, %s35
    %s17 = sphi 0, %s31
    %s18 = sphi 0, %s27
    %s19 = sphi 0, %s16
    %s20 = sphi 0, %s17
    %s21 = sphi 0, %s18
    %s22 = sphi 0, %s19
    %s23 = sphi 0, %s20
    %s24 = sphi 0, %s21
    %s40 = sphi 0, %s42
    %s43 = sphi 0, %s40
    %s44 = sphi 0, %s43
    %s60 = sphi 0, %s44
    %s68 = sphi 0, %s70
    %s71 = sphi 0, %s68
    %s72 = sphi 0, %s71
    %s88 = sphi 0, %s72
    %s96 = sphi 0, %s98
    %s99 = sphi 0, %s96
    %s100 = sphi 0, %s99
    %s116 = sphi 0, %s100
    %s124 = sphi 0, %s126
    %s127 = sphi 0, %s124
    %s128 = sphi 0, %s127
    %s144 = sphi 0, %s128
  $region4: #{encoder_forward.59} parent=0 // loop_header_branch
    %12 = sbr.rel (%p10) target = $region8
  $region5: #{encoder_forward.59} parent=0 // loop_body
    %s14 = ssub.s32 %s9, 1
    %s15 = ssub.s32 %s9, 2
    %s25 = sadd.s32 1, %s18
    %p26 = scmp.ge.s32.totalorder %s25, 1
    %s27 = scalar_select %p26, 0, %s25
    %s28 = sadd.s32 1, %s17
    %s29 = scalar_select %p26, %s28, %s17
    %p30 = scmp.ge.s32.totalorder %s29, 1
    %s31 = scalar_select %p30, 0, %s29
    %s32 = sadd.s32 1, %s16
    %s33 = scalar_select %p30, %s32, %s16
    %p34 = scmp.ge.s32.totalorder %s33, 2
    %s35 = scalar_select %p34, 0, %s33
    %s36 = ssub.s32 %s16, %s35
    %s37 = ssub.s32 %s17, %s31
    %s38 = sor.u32 %s36, %s37
    %p39 = scmp.eq.s32.totalorder %s38, 0
    %s41 = sadd.s32 %s40, 1
    %s42 = scalar_select %p39, %s40, %s41
    %p45 = pneg %p39
    %p46 = scmp.eq.s32.totalorder %s9, 1
    %p47 = por %p45, %p46
    %p48 = scmp.ne.s32.totalorder %s40, %s43
    %p49 = scmp.eq.s32.totalorder %s9, 0
    %p50 = por %p48, %p49
    %p51 = scmp.ne.s32.totalorder %s40, %s43
    %p52 = scmp.eq.s32.totalorder %s14, 1
    %p53 = por %p51, %p52
    %p54 = scmp.ne.s32.totalorder %s43, %s44
    %p55 = scmp.eq.s32.totalorder %s14, 0
    %p56 = por %p54, %p55
    %p57 = scmp.ne.s32.totalorder %s43, %s44
    %p58 = scmp.eq.s32.totalorder %s15, 1
    %p59 = por %p57, %p58
    %p61 = scmp.ne.s32.totalorder %s44, %s60
    %p62 = scmp.eq.s32.totalorder %s15, 0
    %p63 = por %p61, %p62
    %s64 = ssub.s32 %s16, %s35
    %s65 = ssub.s32 %s18, %s27
    %s66 = sor.u32 %s64, %s65
    %p67 = scmp.eq.s32.totalorder %s66, 0
    %s69 = sadd.s32 %s68, 1
    %s70 = scalar_select %p67, %s68, %s69
    %p73 = pneg %p67
    %p74 = scmp.eq.s32.totalorder %s9, 1
    %p75 = por %p73, %p74
    %p76 = scmp.ne.s32.totalorder %s68, %s71
    %p77 = scmp.eq.s32.totalorder %s9, 0
    %p78 = por %p76, %p77
    %p79 = scmp.ne.s32.totalorder %s68, %s71
    %p80 = scmp.eq.s32.totalorder %s14, 1
    %p81 = por %p79, %p80
    %p82 = scmp.ne.s32.totalorder %s71, %s72
    %p83 = scmp.eq.s32.totalorder %s14, 0
    %p84 = por %p82, %p83
    %p85 = scmp.ne.s32.totalorder %s71, %s72
    %p86 = scmp.eq.s32.totalorder %s15, 1
    %p87 = por %p85, %p86
    %p89 = scmp.ne.s32.totalorder %s72, %s88
    %p90 = scmp.eq.s32.totalorder %s15, 0
    %p91 = por %p89, %p90
    %s92 = ssub.s32 %s16, %s35
    %s93 = ssub.s32 %s18, %s27
    %s94 = sor.u32 %s92, %s93
    %p95 = scmp.eq.s32.totalorder %s94, 0
    %s97 = sadd.s32 %s96, 1
    %s98 = scalar_select %p95, %s96, %s97
    %p101 = pneg %p95
    %p102 = scmp.eq.s32.totalorder %s9, 1
    %p103 = por %p101, %p102
    %p104 = scmp.ne.s32.totalorder %s96, %s99
    %p105 = scmp.eq.s32.totalorder %s9, 0
    %p106 = por %p104, %p105
    %p107 = scmp.ne.s32.totalorder %s96, %s99
    %p108 = scmp.eq.s32.totalorder %s14, 1
    %p109 = por %p107, %p108
    %p110 = scmp.ne.s32.totalorder %s99, %s100
    %p111 = scmp.eq.s32.totalorder %s14, 0
    %p112 = por %p110, %p111
    %p113 = scmp.ne.s32.totalorder %s99, %s100
    %p114 = scmp.eq.s32.totalorder %s15, 1
    %p115 = por %p113, %p114
    %p117 = scmp.ne.s32.totalorder %s100, %s116
    %p118 = scmp.eq.s32.totalorder %s15, 0
    %p119 = por %p117, %p118
    %s120 = ssub.s32 %s16, %s35
    %s121 = ssub.s32 %s17, %s31
    %s122 = sor.u32 %s120, %s121
    %p123 = scmp.eq.s32.totalorder %s122, 0
    %s125 = sadd.s32 %s124, 1
    %s126 = scalar_select %p123, %s124, %s125
    %p129 = pneg %p123
    %p130 = scmp.eq.s32.totalorder %s9, 1
    %p131 = por %p129, %p130
    %p132 = scmp.ne.s32.totalorder %s124, %s127
    %p133 = scmp.eq.s32.totalorder %s9, 0
    %p134 = por %p132, %p133
    %p135 = scmp.ne.s32.totalorder %s124, %s127
    %p136 = scmp.eq.s32.totalorder %s14, 1
    %p137 = por %p135, %p136
    %p138 = scmp.ne.s32.totalorder %s127, %s128
    %p139 = scmp.eq.s32.totalorder %s14, 0
    %p140 = por %p138, %p139
    %p141 = scmp.ne.s32.totalorder %s127, %s128
    %p142 = scmp.eq.s32.totalorder %s15, 1
    %p143 = por %p141, %p142
    %p145 = scmp.ne.s32.totalorder %s128, %s144
    %p146 = scmp.eq.s32.totalorder %s15, 0
    %p147 = por %p145, %p146
    %p148 = scmp.le.s32.totalorder 1, %s9
    %p149 = scmp.lt.s32.totalorder %s9, 3
    %p150 = pnand %p148, %p149
    %p151 = pneg %p150
    // Predicated region
    $region9: #{encoder_forward.59} parent=5 // pred_check
      _
    $region10: #{encoder_forward.59} parent=5 // pred_check_branch
      %153 = sbr.rel (%p150) target = $region12
    $region11: #{encoder_forward.59} parent=5 // pred_region
      %s154 = ssub.s32 %s9, 1
    $region12: #{encoder_forward.59} parent=5 // pred_fallthru
      _
    %p155 = scmp.lt.s32.totalorder %s9, 2
    // Predicated region
    $region13: #{encoder_forward.59} parent=5 // pred_check
      %p156 = pneg %p155
    $region14: #{encoder_forward.59} parent=5 // pred_check_branch
      %158 = sbr.rel (%p156) target = $region16
    $region15: #{encoder_forward.59} parent=5 // pred_region
      // Predicated region
      $region17: #{encoder_forward.59} parent=15 // pred_check
        %p159 = pneg %p50
      $region18: #{encoder_forward.59} parent=15 // pred_check_branch
        %161 = sbr.rel (%p159) target = $region20
      $region19: #{encoder_forward.59} parent=15 // pred_region
        %p162 = scmp.lt.s32.totalorder %s16, 1
        %s163 = scalar_select %p162, %s16, 1
        %p164 = scmp.lt.s32.totalorder %s17, 0
        %s165 = scalar_select %p164, %s17, 0
        %s166 = sadd.s32 %s165, %s163
        %s167 = smul.addr %s166, 4
        %s168 = scalar_lea.vmem %s0, %s167
      $region20: #{encoder_forward.59} parent=15 // pred_fallthru
        _
      // Predicated region
      $region21: #{encoder_forward.59} parent=15 // pred_check
        %p169 = pneg %p78
      $region22: #{encoder_forward.59} parent=15 // pred_check_branch
        %171 = sbr.rel (%p169) target = $region24
      $region23: #{encoder_forward.59} parent=15 // pred_region
        %p172 = scmp.lt.s32.totalorder %s16, 1
        %s173 = scalar_select %p172, %s16, 1
        %p174 = scmp.lt.s32.totalorder %s18, 0
        %s175 = scalar_select %p174, %s18, 0
        %s176 = sadd.s32 %s175, %s173
        %s177 = smul.addr %s176, 4
        %s178 = scalar_lea.vmem %s1, %s177
      $region24: #{encoder_forward.59} parent=15 // pred_fallthru
        _
      // Predicated region
      $region25: #{encoder_forward.59} parent=15 // pred_check
        %p179 = pneg %p106
      $region26: #{encoder_forward.59} parent=15 // pred_check_branch
        %181 = sbr.rel (%p179) target = $region28
      $region27: #{encoder_forward.59} parent=15 // pred_region
        %p182 = scmp.lt.s32.totalorder %s16, 1
        %s183 = scalar_select %p182, %s16, 1
        %p184 = scmp.lt.s32.totalorder %s18, 0
        %s185 = scalar_select %p184, %s18, 0
        %s186 = sadd.s32 %s185, %s183
        %s187 = smul.addr %s186, 4
        %s188 = scalar_lea.vmem %s2, %s187
      $region28: #{encoder_forward.59} parent=15 // pred_fallthru
        _
    $region16: #{encoder_forward.59} parent=5 // pred_fallthru
      _
    %p189 = scmp.le.s32.totalorder 1, %s9
    %p190 = scmp.lt.s32.totalorder %s9, 3
    %p191 = pnand %p189, %p190
    %p192 = pneg %p191
    // Predicated region
    $region29: #{encoder_forward.59} parent=5 // pred_check
      _
    $region30: #{encoder_forward.59} parent=5 // pred_check_branch
      %194 = sbr.rel (%p191) target = $region32
    $region31: #{encoder_forward.59} parent=5 // pred_region
      %s195 = ssub.s32 %s9, 1
      %p196 = scmp.lt.s32.totalorder %s19, 1
      %s197 = scalar_select %p196, %s19, 1
      %p198 = scmp.lt.s32.totalorder %s20, 0
      %s199 = scalar_select %p198, %s20, 0
      %s200 = sadd.s32 %s199, %s197
      %s201 = smul.addr %s200, 4
      %s202 = scalar_lea.vmem %s0, %s201
      %p203 = pneg %p56
      %p204 = pneg %p53
      %p205 = scmp.lt.s32.totalorder %s19, 1
      %s206 = scalar_select %p205, %s19, 1
      %p207 = scmp.lt.s32.totalorder %s21, 0
      %s208 = scalar_select %p207, %s21, 0
      %s209 = sadd.s32 %s208, %s206
      %s210 = smul.addr %s209, 4
      %s211 = scalar_lea.vmem %s1, %s210
      %p212 = pneg %p84
      %p213 = pneg %p81
      %p214 = scmp.lt.s32.totalorder %s19, 1
      %s215 = scalar_select %p214, %s19, 1
      %p216 = scmp.lt.s32.totalorder %s21, 0
      %s217 = scalar_select %p216, %s21, 0
      %s218 = sadd.s32 %s217, %s215
      %s219 = smul.addr %s218, 4
      %s220 = scalar_lea.vmem %s2, %s219
      %p221 = pneg %p112
      %p222 = pneg %p109
      %p223 = pneg %p140
      %p224 = pneg %p137
      %p225 = scmp.lt.s32.totalorder %s19, 1
      %s226 = scalar_select %p225, %s19, 1
      %p227 = scmp.lt.s32.totalorder %s20, 0
      %s228 = scalar_select %p227, %s20, 0
      %s229 = sadd.s32 %s228, %s226
      %s230 = smul.addr %s229, 4
      %s231 = scalar_lea.vmem %s3, %s230
      %p232 = scmp.lt.s32.totalorder %s19, 1
      %s233 = scalar_select %p232, %s19, 1
      %p234 = scmp.lt.s32.totalorder %s20, 0
      %s235 = scalar_select %p234, %s20, 0
      %s236 = sadd.s32 %s235, %s233
      %s237 = smul.addr %s236, 4
      %s238 = scalar_lea.vmem %s0, %s237
      %p239 = scmp.lt.s32.totalorder %s19, 1
      %s240 = scalar_select %p239, %s19, 1
      %p241 = scmp.lt.s32.totalorder %s21, 0
      %s242 = scalar_select %p241, %s21, 0
      %s243 = sadd.s32 %s242, %s240
      %s244 = smul.addr %s243, 4
      %s245 = scalar_lea.vmem %s1, %s244
      %p246 = scmp.lt.s32.totalorder %s19, 1
      %s247 = scalar_select %p246, %s19, 1
      %p248 = scmp.lt.s32.totalorder %s21, 0
      %s249 = scalar_select %p248, %s21, 0
      %s250 = sadd.s32 %s249, %s247
      %s251 = smul.addr %s250, 4
      %s252 = scalar_lea.vmem %s2, %s251
      %p253 = scmp.lt.s32.totalorder %s19, 1
      %s254 = scalar_select %p253, %s19, 1
      %p255 = scmp.lt.s32.totalorder %s20, 0
      %s256 = scalar_select %p255, %s20, 0
      %s257 = sadd.s32 %s256, %s254
      %s258 = smul.addr %s257, 4
      %s259 = scalar_lea.vmem %s3, %s258
      %p261 = scmp.eq.s32.totalorder %s21, 0
      // Predicated region
      $region33: #{encoder_forward.59} parent=31 // pred_check
        %p262 = pneg %p261
      $region34: #{encoder_forward.59} parent=31 // pred_check_branch
        %264 = sbr.rel (%p262) target = $region36
      $region35: #{encoder_forward.59} parent=31 // pred_region
        %vm265 = vcmask 7168
        %266 = vst.msk [vmem:[#allocation2] sm:$0xff] %vm265, -inf
        %267 = vst.msk [vmem:[#allocation3] sm:$0xff] %vm265, 0.0
        %vm268 = vcmask 523264
        %269 = vst.msk [vmem:[#allocation4] sm:$0xff] %vm268, 0.0
      $region36: #{encoder_forward.59} parent=31 // pred_fallthru
        _
      %v270 = vld [vmem:[%s238] sm:$0xf]
      %v271 = vld [vmem:[%s245] sm:$0xf]
      %v272 = vld [vmem:[%s252] sm:$0xf]
      %vm273 = vcmask 523264
      %v275 = vsel %vm273, %v270, 0
      %v278 = vsel %vm273, %v271, 0
      %280 = vmatprep.subr.bf16.mxu0 0
      %281 = vmatpush1.bf16.xpose.msra.mxu0 %v278
      %282 = vmatprep.subr.bf16.mxu0 0
      %283 = vmatpush1.bf16.xpose.msra.mxu0 0
      %284 = vmatprep.subr.bf16.mxu0 0
      %285 = vmatpush1.bf16.xpose.msra.mxu0 0
      %286 = vmatprep.subr.bf16.mxu0 0
      %287 = vmatpush1.bf16.xpose.msra.mxu0 0
      %288 = vmatprep.subr.bf16.mxu0 0
      %289 = vmatpush1.bf16.xpose.msra.mxu0 0
      %290 = vmatprep.subr.bf16.mxu0 0
      %291 = vmatpush1.bf16.xpose.msra.mxu0 0
      %292 = vmatprep.subr.bf16.mxu0 0
      %293 = vmatpush1.bf16.xpose.msra.mxu0 0
      %294 = vmatprep.subr.bf16.mxu0 0
      %295 = vmatpush1.bf16.xpose.msra.mxu0 0
      %296 = vmatprep.subr.bf16.mxu0 0
      %297 = vmatpush1.bf16.xpose.msra.mxu0 0
      %298 = vmatprep.subr.bf16.mxu0 0
      %299 = vmatpush1.bf16.xpose.msra.mxu0 0
      %300 = vmatprep.subr.bf16.mxu0 0
      %301 = vmatpush1.bf16.xpose.msra.mxu0 0
      %302 = vmatprep.subr.bf16.mxu0 0
      %303 = vmatpush1.bf16.xpose.msra.mxu0 0
      %304 = vmatprep.subr.bf16.mxu0 0
      %305 = vmatpush1.bf16.xpose.msra.mxu0 0
      %306 = vmatprep.subr.bf16.mxu0 0
      %307 = vmatpush1.bf16.xpose.msra.mxu0 0
      %308 = vmatprep.subr.bf16.mxu0 0
      %309 = vmatpush1.bf16.xpose.msra.mxu0 0
      %310 = vmatprep.subr.bf16.mxu0 0
      %311 = vmatpush1.bf16.xpose.msra.mxu0 0
      %312 = vmatprep.mubr.bf16.mxu0 0
      %313 = vmatmul.mubr.bf16.gmra.mrb[0].mxu0 %v275
      %v314 = vpop.f32.mrb[0].mxu0
      %v315 = vadd.f32 0.0, %v314
      %v316 = vpop.f32.mrb[0].mxu0
      %v317 = vpop.f32.mrb[0].mxu0
      %v318 = vpop.f32.mrb[0].mxu0
      %319 = vdwg.mxu0
      %v320 = vld [vmem:[#allocation2] sm:$0xff]
      %vm321 = vcmask 64512
      %v322 = vsel %vm321, %v315, -inf
      %323 = vmax.xlane.f32.xlu0 %v322
      %v324 = vpop.xlane.xlu0 %323
      %v325 = vmax.f32 %v320, %v324
      %v326 = vsub.f32 %v320, %v325
      %v327 = vmul.f32 %v326, 1.442695
      %v328 = vpow.pop %v327
      %330 = vset.pattern.permute.xlu0 0
      %331 = vperm.xlu0 %330, %v325
      %v332 = vpop.permute.xlu0 %331
      %v334 = vsub.f32 %v315, %v332
      %v335 = vmul.f32 %v334, 1.442695
      %v336 = vpow.pop %v335
      %v337 = vld [vmem:[#allocation3] sm:$0xff]
      %v338 = vmul.f32 %v328, %v337
      %v339 = vsel %vm321, %v336, 0.0
      %340 = vadd.xlane.f32.xlu0 %v339
      %v341 = vpop.xlane.xlu0 %340
      %v342 = vadd.f32 %v338, %v341
      %vm343 = vcmask 7168
      %344 = vst.msk [vmem:[#allocation3] sm:$0xff] %vm343, %v342
      %v345 = vld [vmem:[#allocation4] sm:$0xff]
      %347 = vset.pattern.permute.xlu0 0
      %348 = vperm.xlu0 %347, %v328
      %v349 = vpop.permute.xlu0 %348
      %v351 = vmul.f32 %v349, %v345
      %v352 = vpack.c.bf16 %v336, %v336
      %v354 = vsel %vm321, %v352, 0
      %vm356 = vcmask 1043456
      %v358 = vsel %vm356, %v272, 0
      %360 = vmatprep.subr.bf16.mxu0 0
      %361 = vmatpush1.bf16.msra.mxu0 %v358
      %362 = vmatprep.subr.bf16.mxu0 0
      %363 = vmatpush1.bf16.msra.mxu0 0
      %364 = vmatprep.subr.bf16.mxu0 0
      %365 = vmatpush1.bf16.msra.mxu0 0
      %366 = vmatprep.subr.bf16.mxu0 0
      %367 = vmatpush1.bf16.msra.mxu0 0
      %368 = vmatprep.subr.bf16.mxu0 0
      %369 = vmatpush1.bf16.msra.mxu0 0
      %370 = vmatprep.subr.bf16.mxu0 0
      %371 = vmatpush1.bf16.msra.mxu0 0
      %372 = vmatprep.subr.bf16.mxu0 0
      %373 = vmatpush1.bf16.msra.mxu0 0
      %374 = vmatprep.subr.bf16.mxu0 0
      %375 = vmatpush1.bf16.msra.mxu0 0
      %376 = vmatprep.subr.bf16.mxu0 0
      %377 = vmatpush1.bf16.msra.mxu0 0
      %378 = vmatprep.subr.bf16.mxu0 0
      %379 = vmatpush1.bf16.msra.mxu0 0
      %380 = vmatprep.subr.bf16.mxu0 0
      %381 = vmatpush1.bf16.msra.mxu0 0
      %382 = vmatprep.subr.bf16.mxu0 0
      %383 = vmatpush1.bf16.msra.mxu0 0
      %384 = vmatprep.subr.bf16.mxu0 0
      %385 = vmatpush1.bf16.msra.mxu0 0
      %386 = vmatprep.subr.bf16.mxu0 0
      %387 = vmatpush1.bf16.msra.mxu0 0
      %388 = vmatprep.subr.bf16.mxu0 0
      %389 = vmatpush1.bf16.msra.mxu0 0
      %390 = vmatprep.subr.bf16.mxu0 0
      %391 = vmatpush1.bf16.msra.mxu0 0
      %392 = vmatprep.mubr.bf16.mxu0 0
      %393 = vmatmul.mubr.bf16.gmra.mrb[0].mxu0 %v354
      %v394 = vpop.f32.mrb[0].mxu0
      %v395 = vadd.f32 0.0, %v394
      %v396 = vpop.f32.mrb[0].mxu0
      %v397 = vpop.f32.mrb[0].mxu0
      %v398 = vpop.f32.mrb[0].mxu0
      %399 = vdwg.mxu0
      %v400 = vadd.f32 %v351, %v395
      %401 = vst.msk [vmem:[#allocation4] sm:$0xff] %vm273, %v400
      %402 = vst.msk [vmem:[#allocation2] sm:$0xff] %vm343, %v325
      // Predicated region
      $region37: #{encoder_forward.59} parent=31 // pred_check
        %p403 = pneg %p261
      $region38: #{encoder_forward.59} parent=31 // pred_check_branch
        %405 = sbr.rel (%p403) target = $region40
      $region39: #{encoder_forward.59} parent=31 // pred_region
        %v406 = vld [vmem:[#allocation4] sm:$0xff]
        %v407 = vld [vmem:[#allocation3] sm:$0xff]
        %v408 = vrcp.pop %v407
        %410 = vset.pattern.permute.xlu0 0
        %411 = vperm.xlu0 %410, %v408
        %v412 = vpop.permute.xlu0 %411
        %v414 = vmul.f32 %v406, %v412
        %v415 = vpack.c.bf16 %v414, %v414
        %vm416 = vcmask 519168
        %417 = vst.msk [vmem:[%s259] sm:$0xf] %vm416, %v415
      $region40: #{encoder_forward.59} parent=31 // pred_fallthru
        _
      %p418 = scmp.lt.s32.totalorder %s19, 1
      %s419 = scalar_select %p418, %s19, 1
      %p420 = scmp.lt.s32.totalorder %s20, 0
      %s421 = scalar_select %p420, %s20, 0
      %s422 = sadd.s32 %s421, %s419
      %s423 = smul.addr %s422, 4
      %s424 = scalar_lea.vmem %s3, %s423
      // Predicated region
      $region41: #{encoder_forward.59} parent=31 // pred_check
        %p425 = pneg %p137
      $region42: #{encoder_forward.59} parent=31 // pred_check_branch
        %427 = sbr.rel (%p425) target = $region44
      $region43: #{encoder_forward.59} parent=31 // pred_region
        _
      $region44: #{encoder_forward.59} parent=31 // pred_fallthru
        _
    $region32: #{encoder_forward.59} parent=5 // pred_fallthru
      _
    %p428 = scmp.le.s32.totalorder 2, %s9
    // Predicated region
    $region45: #{encoder_forward.59} parent=5 // pred_check
      %p429 = pneg %p428
    $region46: #{encoder_forward.59} parent=5 // pred_check_branch
      %431 = sbr.rel (%p429) target = $region48
    $region47: #{encoder_forward.59} parent=5 // pred_region
      %s432 = ssub.s32 %s9, 2
      // Predicated region
      $region49: #{encoder_forward.59} parent=47 // pred_check
        %p433 = pneg %p143
      $region50: #{encoder_forward.59} parent=47 // pred_check_branch
        %435 = sbr.rel (%p433) target = $region52
      $region51: #{encoder_forward.59} parent=47 // pred_region
        %p436 = scmp.lt.s32.totalorder %s22, 1
        %s437 = scalar_select %p436, %s22, 1
        %p438 = scmp.lt.s32.totalorder %s23, 0
        %s439 = scalar_select %p438, %s23, 0
        %s440 = sadd.s32 %s439, %s437
        %s441 = smul.addr %s440, 4
        %s442 = scalar_lea.vmem %s3, %s441
      $region52: #{encoder_forward.59} parent=47 // pred_fallthru
        _
    $region48: #{encoder_forward.59} parent=5 // pred_fallthru
      _
  $region6: #{encoder_forward.59} parent=0 // loop_footer
    %s13 = sadd.s32 1, %s9
  $region7: #{encoder_forward.59} parent=0 // loop_footer_branch
    %8 = sbr.rel target = $region3
  $region8: #{encoder_forward.59} parent=0 // loop_exit
    _

// kernel: encoder_forward.60
$region0: #{encoder_forward.60}
  #allocation0 [shape = 'u32[]', space=smem, size = 0x4, offset = 0x4, fixed_abs, tag = 'smem constant byte address 0x4 - core index']
  #allocation1 [shape = 'u32[144,128]{1,0:T(1,128)}', space=vmem, size = 0x12000, scoped, tag = 'internal scratch']
  %s0 = inlined_call_operand.vmem [shape: bf16[2,8,64], index: 0, kind: input, shape index: {}]
  %s1 = inlined_call_operand.vmem [shape: bf16[64,64], index: 1, kind: input, shape index: {}]
  %s2 = inlined_call_operand.vmem [shape: f32[1,64], index: 2, kind: input, shape index: {}]
  %s3 = inlined_call_operand.vmem [shape: bf16[2,8,64], index: 3, kind: input, shape index: {}]
  %s4 = inlined_call_operand.vmem [shape: bf16[2,8,64], index: 4, kind: output, shape index: {}]
  %s5 = sld [smem:[#allocation0]]
  $region49: #{encoder_forward.60} parent=0
    _
  %s7 = ssub.s32 1, %s5
  %s8 = scalar_select 0, %s7, %s5
  loop: start=0, step=1, limit=4
  $region2: #{encoder_forward.60} parent=0 // loop_pre_header
    _
  $region3: #{encoder_forward.60} parent=0 // loop_header
    %s10 = sphi 0, %s14
    %p11 = scmp.ge.s32.totalorder %s10, 4
    %s17 = sphi 0, %s29
    %s18 = sphi 0, %s25
    %s19 = sphi 0, %s17
    %s20 = sphi 0, %s18
    %s21 = sphi 0, %s19
    %s22 = sphi 0, %s20
    %s34 = sphi 0, %s36
    %s37 = sphi 0, %s34
    %s38 = sphi 0, %s37
    %s54 = sphi 0, %s38
    %s58 = sphi 0, %s58
    %s60 = sphi 0, %s58
    %s61 = sphi 0, %s60
    %s75 = sphi 0, %s61
    %s79 = sphi 0, %s79
    %s81 = sphi 0, %s79
    %s82 = sphi 0, %s81
    %s96 = sphi 0, %s82
    %s104 = sphi 0, %s106
    %s107 = sphi 0, %s104
    %s108 = sphi 0, %s107
    %s124 = sphi 0, %s108
    %s132 = sphi 0, %s134
    %s135 = sphi 0, %s132
    %s136 = sphi 0, %s135
    %s152 = sphi 0, %s136
  $region4: #{encoder_forward.60} parent=0 // loop_header_branch
    %13 = sbr.rel (%p11) target = $region8
  $region5: #{encoder_forward.60} parent=0 // loop_body
    %s15 = ssub.s32 %s10, 1
    %s16 = ssub.s32 %s10, 2
    %s23 = sadd.s32 1, %s18
    %p24 = scmp.ge.s32.totalorder %s23, 1
    %s25 = scalar_select %p24, 0, %s23
    %s26 = sadd.s32 1, %s17
    %s27 = scalar_select %p24, %s26, %s17
    %p28 = scmp.ge.s32.totalorder %s27, 2
    %s29 = scalar_select %p28, 0, %s27
    %s30 = ssub.s32 %s17, %s29
    %s31 = ssub.s32 %s18, %s25
    %s32 = sor.u32 %s30, %s31
    %p33 = scmp.eq.s32.totalorder %s32, 0
    %s35 = sadd.s32 %s34, 1
    %s36 = scalar_select %p33, %s34, %s35
    %p39 = pneg %p33
    %p40 = scmp.eq.s32.totalorder %s10, 1
    %p41 = por %p39, %p40
    %p42 = scmp.ne.s32.totalorder %s34, %s37
    %p43 = scmp.eq.s32.totalorder %s10, 0
    %p44 = por %p42, %p43
    %p45 = scmp.ne.s32.totalorder %s34, %s37
    %p46 = scmp.eq.s32.totalorder %s15, 1
    %p47 = por %p45, %p46
    %p48 = scmp.ne.s32.totalorder %s37, %s38
    %p49 = scmp.eq.s32.totalorder %s15, 0
    %p50 = por %p48, %p49
    %p51 = scmp.ne.s32.totalorder %s37, %s38
    %p52 = scmp.eq.s32.totalorder %s16, 1
    %p53 = por %p51, %p52
    %p55 = scmp.ne.s32.totalorder %s38, %s54
    %p56 = scmp.eq.s32.totalorder %s16, 0
    %p57 = por %p55, %p56
    %s59 = sadd.s32 %s58, 1
    %p62 = scmp.eq.s32.totalorder %s10, 1
    %p63 = scmp.ne.s32.totalorder %s58, %s60
    %p64 = scmp.eq.s32.totalorder %s10, 0
    %p65 = por %p63, %p64
    %p66 = scmp.ne.s32.totalorder %s58, %s60
    %p67 = scmp.eq.s32.totalorder %s15, 1
    %p68 = por %p66, %p67
    %p69 = scmp.ne.s32.totalorder %s60, %s61
    %p70 = scmp.eq.s32.totalorder %s15, 0
    %p71 = por %p69, %p70
    %p72 = scmp.ne.s32.totalorder %s60, %s61
    %p73 = scmp.eq.s32.totalorder %s16, 1
    %p74 = por %p72, %p73
    %p76 = scmp.ne.s32.totalorder %s61, %s75
    %p77 = scmp.eq.s32.totalorder %s16, 0
    %p78 = por %p76, %p77
    %s80 = sadd.s32 %s79, 1
    %p83 = scmp.eq.s32.totalorder %s10, 1
    %p84 = scmp.ne.s32.totalorder %s79, %s81
    %p85 = scmp.eq.s32.totalorder %s10, 0
    %p86 = por %p84, %p85
    %p87 = scmp.ne.s32.totalorder %s79, %s81
    %p88 = scmp.eq.s32.totalorder %s15, 1
    %p89 = por %p87, %p88
    %p90 = scmp.ne.s32.totalorder %s81, %s82
    %p91 = scmp.eq.s32.totalorder %s15, 0
    %p92 = por %p90, %p91
    %p93 = scmp.ne.s32.totalorder %s81, %s82
    %p94 = scmp.eq.s32.totalorder %s16, 1
    %p95 = por %p93, %p94
    %p97 = scmp.ne.s32.totalorder %s82, %s96
    %p98 = scmp.eq.s32.totalorder %s16, 0
    %p99 = por %p97, %p98
    %s100 = ssub.s32 %s17, %s29
    %s101 = ssub.s32 %s18, %s25
    %s102 = sor.u32 %s100, %s101
    %p103 = scmp.eq.s32.totalorder %s102, 0
    %s105 = sadd.s32 %s104, 1
    %s106 = scalar_select %p103, %s104, %s105
    %p109 = pneg %p103
    %p110 = scmp.eq.s32.totalorder %s10, 1
    %p111 = por %p109, %p110
    %p112 = scmp.ne.s32.totalorder %s104, %s107
    %p113 = scmp.eq.s32.totalorder %s10, 0
    %p114 = por %p112, %p113
    %p115 = scmp.ne.s32.totalorder %s104, %s107
    %p116 = scmp.eq.s32.totalorder %s15, 1
    %p117 = por %p115, %p116
    %p118 = scmp.ne.s32.totalorder %s107, %s108
    %p119 = scmp.eq.s32.totalorder %s15, 0
    %p120 = por %p118, %p119
    %p121 = scmp.ne.s32.totalorder %s107, %s108
    %p122 = scmp.eq.s32.totalorder %s16, 1
    %p123 = por %p121, %p122
    %p125 = scmp.ne.s32.totalorder %s108, %s124
    %p126 = scmp.eq.s32.totalorder %s16, 0
    %p127 = por %p125, %p126
    %s128 = ssub.s32 %s17, %s29
    %s129 = ssub.s32 %s18, %s25
    %s130 = sor.u32 %s128, %s129
    %p131 = scmp.eq.s32.totalorder %s130, 0
    %s133 = sadd.s32 %s132, 1
    %s134 = scalar_select %p131, %s132, %s133
    %p137 = pneg %p131
    %p138 = scmp.eq.s32.totalorder %s10, 1
    %p139 = por %p137, %p138
    %p140 = scmp.ne.s32.totalorder %s132, %s135
    %p141 = scmp.eq.s32.totalorder %s10, 0
    %p142 = por %p140, %p141
    %p143 = scmp.ne.s32.totalorder %s132, %s135
    %p144 = scmp.eq.s32.totalorder %s15, 1
    %p145 = por %p143, %p144
    %p146 = scmp.ne.s32.totalorder %s135, %s136
    %p147 = scmp.eq.s32.totalorder %s15, 0
    %p148 = por %p146, %p147
    %p149 = scmp.ne.s32.totalorder %s135, %s136
    %p150 = scmp.eq.s32.totalorder %s16, 1
    %p151 = por %p149, %p150
    %p153 = scmp.ne.s32.totalorder %s136, %s152
    %p154 = scmp.eq.s32.totalorder %s16, 0
    %p155 = por %p153, %p154
    %p156 = scmp.le.s32.totalorder 1, %s10
    %p157 = scmp.lt.s32.totalorder %s10, 3
    %p158 = pnand %p156, %p157
    %p159 = pneg %p158
    // Predicated region
    $region9: #{encoder_forward.60} parent=5 // pred_check
      _
    $region10: #{encoder_forward.60} parent=5 // pred_check_branch
      %161 = sbr.rel (%p158) target = $region12
    $region11: #{encoder_forward.60} parent=5 // pred_region
      %s162 = ssub.s32 %s10, 1
      // Predicated region
      $region13: #{encoder_forward.60} parent=11 // pred_check
        %p163 = pneg %p71
      $region14: #{encoder_forward.60} parent=11 // pred_check_branch
        %165 = sbr.rel (%p163) target = $region16
      $region15: #{encoder_forward.60} parent=11 // pred_region
        _
      $region16: #{encoder_forward.60} parent=11 // pred_fallthru
        _
      // Predicated region
      $region17: #{encoder_forward.60} parent=11 // pred_check
        %p166 = pneg %p92
      $region18: #{encoder_forward.60} parent=11 // pred_check_branch
        %168 = sbr.rel (%p166) target = $region20
      $region19: #{encoder_forward.60} parent=11 // pred_region
        _
      $region20: #{encoder_forward.60} parent=11 // pred_fallthru
        _
    $region12: #{encoder_forward.60} parent=5 // pred_fallthru
      _
    %p169 = scmp.lt.s32.totalorder %s10, 2
    // Predicated region
    $region21: #{encoder_forward.60} parent=5 // pred_check
      %p170 = pneg %p169
    $region22: #{encoder_forward.60} parent=5 // pred_check_branch
      %172 = sbr.rel (%p170) target = $region24
    $region23: #{encoder_forward.60} parent=5 // pred_region
      // Predicated region
      $region25: #{encoder_forward.60} parent=23 // pred_check
        %p173 = pneg %p44
      $region26: #{encoder_forward.60} parent=23 // pred_check_branch
        %175 = sbr.rel (%p173) target = $region28
      $region27: #{encoder_forward.60} parent=23 // pred_region
        %p176 = scmp.lt.s32.totalorder %s17, 1
        %s177 = scalar_select %p176, %s17, 1
        %p178 = scmp.lt.s32.totalorder %s18, 0
        %s179 = scalar_select %p178, %s18, 0
        %s180 = sadd.s32 %s179, %s177
        %s181 = smul.addr %s180, 4
        %s182 = scalar_lea.vmem %s0, %s181
      $region28: #{encoder_forward.60} parent=23 // pred_fallthru
        _
      // Predicated region
      $region29: #{encoder_forward.60} parent=23 // pred_check
        %p183 = pneg %p114
      $region30: #{encoder_forward.60} parent=23 // pred_check_branch
        %185 = sbr.rel (%p183) target = $region32
      $region31: #{encoder_forward.60} parent=23 // pred_region
        %p186 = scmp.lt.s32.totalorder %s17, 1
        %s187 = scalar_select %p186, %s17, 1
        %p188 = scmp.lt.s32.totalorder %s18, 0
        %s189 = scalar_select %p188, %s18, 0
        %s190 = sadd.s32 %s189, %s187
        %s191 = smul.addr %s190, 4
        %s192 = scalar_lea.vmem %s3, %s191
      $region32: #{encoder_forward.60} parent=23 // pred_fallthru
        _
    $region24: #{encoder_forward.60} parent=5 // pred_fallthru
      _
    %p193 = scmp.le.s32.totalorder 1, %s10
    %p194 = scmp.lt.s32.totalorder %s10, 3
    %p195 = pnand %p193, %p194
    %p196 = pneg %p195
    // Predicated region
    $region33: #{encoder_forward.60} parent=5 // pred_check
      _
    $region34: #{encoder_forward.60} parent=5 // pred_check_branch
      %198 = sbr.rel (%p195) target = $region36
    $region35: #{encoder_forward.60} parent=5 // pred_region
      %s199 = ssub.s32 %s10, 1
      %p200 = scmp.lt.s32.totalorder %s19, 1
      %s201 = scalar_select %p200, %s19, 1
      %p202 = scmp.lt.s32.totalorder %s20, 0
      %s203 = scalar_select %p202, %s20, 0
      %s204 = sadd.s32 %s203, %s201
      %s205 = smul.addr %s204, 4
      %s206 = scalar_lea.vmem %s0, %s205
      %p207 = pneg %p50
      %p208 = pneg %p47
      %p209 = pneg %p71
      %p210 = pneg %p68
      %p211 = pneg %p92
      %p212 = pneg %p89
      %p213 = scmp.lt.s32.totalorder %s19, 1
      %s214 = scalar_select %p213, %s19, 1
      %p215 = scmp.lt.s32.totalorder %s20, 0
      %s216 = scalar_select %p215, %s20, 0
      %s217 = sadd.s32 %s216, %s214
      %s218 = smul.addr %s217, 4
      %s219 = scalar_lea.vmem %s3, %s218
      %p220 = pneg %p120
      %p221 = pneg %p117
      %p222 = pneg %p148
      %p223 = pneg %p145
      %p224 = scmp.lt.s32.totalorder %s19, 1
      %s225 = scalar_select %p224, %s19, 1
      %p226 = scmp.lt.s32.totalorder %s20, 0
      %s227 = scalar_select %p226, %s20, 0
      %s228 = sadd.s32 %s227, %s225
      %s229 = smul.addr %s228, 4
      %s230 = scalar_lea.vmem %s4, %s229
      %p231 = scmp.lt.s32.totalorder %s19, 1
      %s232 = scalar_select %p231, %s19, 1
      %p233 = scmp.lt.s32.totalorder %s20, 0
      %s234 = scalar_select %p233, %s20, 0
      %s235 = sadd.s32 %s234, %s232
      %s236 = smul.addr %s235, 4
      %s237 = scalar_lea.vmem %s0, %s236
      %p238 = scmp.lt.s32.totalorder %s19, 1
      %s239 = scalar_select %p238, %s19, 1
      %p240 = scmp.lt.s32.totalorder %s20, 0
      %s241 = scalar_select %p240, %s20, 0
      %s242 = sadd.s32 %s241, %s239
      %s243 = smul.addr %s242, 4
      %s244 = scalar_lea.vmem %s3, %s243
      %p245 = scmp.lt.s32.totalorder %s19, 1
      %s246 = scalar_select %p245, %s19, 1
      %p247 = scmp.lt.s32.totalorder %s20, 0
      %s248 = scalar_select %p247, %s20, 0
      %s249 = sadd.s32 %s248, %s246
      %s250 = smul.addr %s249, 4
      %s251 = scalar_lea.vmem %s4, %s250
      %v253 = vld [vmem:[%s237] sm:$0xf]
      %v254 = vld [vmem:[%s1] sm:$0xf]
      %v255 = vld [vmem:[%s1 + $0x4] sm:$0xf]
      %v256 = vld [vmem:[%s1 + $0x8] sm:$0xf]
      %v257 = vld [vmem:[%s1 + $0xc] sm:$0xf]
      %v258 = vld [vmem:[%s1 + $0x10] sm:$0xf]
      %v259 = vld [vmem:[%s1 + $0x14] sm:$0xf]
      %v260 = vld [vmem:[%s1 + $0x18] sm:$0xf]
      %v261 = vld [vmem:[%s1 + $0x1c] sm:$0xf]
      %v262 = vld [vmem:[%s2] sm:$0x1]
      %v264 = vlaneseq
      %v265 = vshrl.u32 %v264, 7
      %v266 = vsub.s32 0, %v265
      %v267 = vrot.slane %v262, %v266
      %v277 = vunpack.c.l.b16 %v254
      %v278 = vunpack.c.l.b16 %v255
      %v279 = vunpack.c.l.b16 %v256
      %v280 = vunpack.c.l.b16 %v257
      %v281 = vunpack.c.l.b16 %v258
      %v282 = vunpack.c.l.b16 %v259
      %v283 = vunpack.c.l.b16 %v260
      %v284 = vunpack.c.l.b16 %v261
      %v285 = vpack.c.b16 %v278, %v277
      %v286 = vpack.c.b16 %v280, %v279
      %v287 = vpack.c.b16 %v282, %v281
      %v288 = vpack.c.b16 %v284, %v283
      %vm293 = vcmask 523264
      %v295 = vsel %vm293, %v253, 0
      %297 = vmatprep.subr.bf16.mxu0 0
      %298 = vmatpush1.bf16.msra.mxu0 %v285
      %299 = vmatprep.subr.bf16.mxu0 0
      %300 = vmatpush1.bf16.msra.mxu0 %v286
      %301 = vmatprep.subr.bf16.mxu0 0
      %302 = vmatpush1.bf16.msra.mxu0 %v287
      %303 = vmatprep.subr.bf16.mxu0 0
      %304 = vmatpush1.bf16.msra.mxu0 %v288
      %305 = vmatprep.subr.bf16.mxu0 0
      %306 = vmatpush1.bf16.msra.mxu0 0
      %307 = vmatprep.subr.bf16.mxu0 0
      %308 = vmatpush1.bf16.msra.mxu0 0
      %309 = vmatprep.subr.bf16.mxu0 0
      %310 = vmatpush1.bf16.msra.mxu0 0
      %311 = vmatprep.subr.bf16.mxu0 0
      %312 = vmatpush1.bf16.msra.mxu0 0
      %313 = vmatprep.subr.bf16.mxu0 0
      %314 = vmatpush1.bf16.msra.mxu0 0
      %315 = vmatprep.subr.bf16.mxu0 0
      %316 = vmatpush1.bf16.msra.mxu0 0
      %317 = vmatprep.subr.bf16.mxu0 0
      %318 = vmatpush1.bf16.msra.mxu0 0
      %319 = vmatprep.subr.bf16.mxu0 0
      %320 = vmatpush1.bf16.msra.mxu0 0
      %321 = vmatprep.subr.bf16.mxu0 0
      %322 = vmatpush1.bf16.msra.mxu0 0
      %323 = vmatprep.subr.bf16.mxu0 0
      %324 = vmatpush1.bf16.msra.mxu0 0
      %325 = vmatprep.subr.bf16.mxu0 0
      %326 = vmatpush1.bf16.msra.mxu0 0
      %327 = vmatprep.subr.bf16.mxu0 0
      %328 = vmatpush1.bf16.msra.mxu0 0
      %329 = vmatprep.mubr.bf16.mxu0 0
      %330 = vmatmul.mubr.bf16.gmra.mrb[0].mxu0 %v295
      %v331 = vpop.f32.mrb[0].mxu0
      %v332 = vadd.f32 %v267, %v331
      %v333 = vpop.f32.mrb[0].mxu0
      %v334 = vpop.f32.mrb[0].mxu0
      %v335 = vpop.f32.mrb[0].mxu0
      %336 = vdwg.mxu0
      %v337 = vld [vmem:[%s244] sm:$0xf]
      %v338 = vunpack.c.l.bf16 %v337
      %v339 = vadd.f32 %v332, %v338
      %v340 = vpack.c.bf16 %v339, %v339
      %vm341 = vcmask 519168
      %342 = vst.msk [vmem:[%s251] sm:$0xf] %vm341, %v340
      %p343 = scmp.lt.s32.totalorder %s19, 1
      %s344 = scalar_select %p343, %s19, 1
      %p345 = scmp.lt.s32.totalorder %s20, 0
      %s346 = scalar_select %p345, %s20, 0
      %s347 = sadd.s32 %s346, %s344
      %s348 = smul.addr %s347, 4
      %s349 = scalar_lea.vmem %s4, %s348
      // Predicated region
      $region37: #{encoder_forward.60} parent=35 // pred_check
        %p350 = pneg %p145
      $region38: #{encoder_forward.60} parent=35 // pred_check_branch
        %352 = sbr.rel (%p350) target = $region40
      $region39: #{encoder_forward.60} parent=35 // pred_region
        _
      $region40: #{encoder_forward.60} parent=35 // pred_fallthru
        _
    $region36: #{encoder_forward.60} parent=5 // pred_fallthru
      _
    %p353 = scmp.le.s32.totalorder 2, %s10
    // Predicated region
    $region41: #{encoder_forward.60} parent=5 // pred_check
      %p354 = pneg %p353
    $region42: #{encoder_forward.60} parent=5 // pred_check_branch
      %356 = sbr.rel (%p354) target = $region44
    $region43: #{encoder_forward.60} parent=5 // pred_region
      %s357 = ssub.s32 %s10, 2
      // Predicated region
      $region45: #{encoder_forward.60} parent=43 // pred_check
        %p358 = pneg %p151
      $region46: #{encoder_forward.60} parent=43 // pred_check_branch
        %360 = sbr.rel (%p358) target = $region48
      $region47: #{encoder_forward.60} parent=43 // pred_region
        %p361 = scmp.lt.s32.totalorder %s21, 1
        %s362 = scalar_select %p361, %s21, 1
        %p363 = scmp.lt.s32.totalorder %s22, 0
        %s364 = scalar_select %p363, %s22, 0
        %s365 = sadd.s32 %s364, %s362
        %s366 = smul.addr %s365, 4
        %s367 = scalar_lea.vmem %s4, %s366
      $region48: #{encoder_forward.60} parent=43 // pred_fallthru
        _
    $region44: #{encoder_forward.60} parent=5 // pred_fallthru
      _
  $region6: #{encoder_forward.60} parent=0 // loop_footer
    %s14 = sadd.s32 1, %s10
  $region7: #{encoder_forward.60} parent=0 // loop_footer_branch
    %9 = sbr.rel target = $region3
  $region8: #{encoder_forward.60} parent=0 // loop_exit
    _

// kernel: encoder_forward.69
$region0: #{encoder_forward.69}
  #allocation0 [shape = 'u32[]', space=smem, size = 0x4, offset = 0x4, fixed_abs, tag = 'smem constant byte address 0x4 - core index']
  #allocation1 [shape = 'u32[144,128]{1,0:T(1,128)}', space=vmem, size = 0x12000, scoped, tag = 'internal scratch']
  %s0 = inlined_call_operand.vmem [shape: bf16[2,8,64], index: 0, kind: input, shape index: {}]
  %s1 = inlined_call_operand.vmem [shape: bf16[3,64,8], index: 1, kind: input, shape index: {}]
  %s2 = inlined_call_operand.vmem [shape: f32[1,8], index: 2, kind: input, shape index: {}]
  %s3 = inlined_call_operand.vmem [shape: bf16[2,8,8], index: 3, kind: output, shape index: {}]
  %s4 = sld [smem:[#allocation0]]
  $region45: #{encoder_forward.69} parent=0
    _
  %s6 = ssub.s32 1, %s4
  %s7 = scalar_select 0, %s6, %s4
  loop: start=0, step=1, limit=4
  $region2: #{encoder_forward.69} parent=0 // loop_pre_header
    _
  $region3: #{encoder_forward.69} parent=0 // loop_header
    %s9 = sphi 0, %s13
    %p10 = scmp.ge.s32.totalorder %s9, 4
    %s16 = sphi 0, %s28
    %s17 = sphi 0, %s24
    %s18 = sphi 0, %s16
    %s19 = sphi 0, %s17
    %s20 = sphi 0, %s18
    %s21 = sphi 0, %s19
    %s33 = sphi 0, %s35
    %s36 = sphi 0, %s33
    %s37 = sphi 0, %s36
    %s53 = sphi 0, %s37
    %s57 = sphi 0, %s57
    %s59 = sphi 0, %s57
    %s60 = sphi 0, %s59
    %s74 = sphi 0, %s60
    %s78 = sphi 0, %s78
    %s80 = sphi 0, %s78
    %s81 = sphi 0, %s80
    %s95 = sphi 0, %s81
    %s103 = sphi 0, %s105
    %s106 = sphi 0, %s103
    %s107 = sphi 0, %s106
    %s123 = sphi 0, %s107
  $region4: #{encoder_forward.69} parent=0 // loop_header_branch
    %12 = sbr.rel (%p10) target = $region8
  $region5: #{encoder_forward.69} parent=0 // loop_body
    %s14 = ssub.s32 %s9, 1
    %s15 = ssub.s32 %s9, 2
    %s22 = sadd.s32 1, %s17
    %p23 = scmp.ge.s32.totalorder %s22, 1
    %s24 = scalar_select %p23, 0, %s22
    %s25 = sadd.s32 1, %s16
    %s26 = scalar_select %p23, %s25, %s16
    %p27 = scmp.ge.s32.totalorder %s26, 2
    %s28 = scalar_select %p27, 0, %s26
    %s29 = ssub.s32 %s16, %s28
    %s30 = ssub.s32 %s17, %s24
    %s31 = sor.u32 %s29, %s30
    %p32 = scmp.eq.s32.totalorder %s31, 0
    %s34 = sadd.s32 %s33, 1
    %s35 = scalar_select %p32, %s33, %s34
    %p38 = pneg %p32
    %p39 = scmp.eq.s32.totalorder %s9, 1
    %p40 = por %p38, %p39
    %p41 = scmp.ne.s32.totalorder %s33, %s36
    %p42 = scmp.eq.s32.totalorder %s9, 0
    %p43 = por %p41, %p42
    %p44 = scmp.ne.s32.totalorder %s33, %s36
    %p45 = scmp.eq.s32.totalorder %s14, 1
    %p46 = por %p44, %p45
    %p47 = scmp.ne.s32.totalorder %s36, %s37
    %p48 = scmp.eq.s32.totalorder %s14, 0
    %p49 = por %p47, %p48
    %p50 = scmp.ne.s32.totalorder %s36, %s37
    %p51 = scmp.eq.s32.totalorder %s15, 1
    %p52 = por %p50, %p51
    %p54 = scmp.ne.s32.totalorder %s37, %s53
    %p55 = scmp.eq.s32.totalorder %s15, 0
    %p56 = por %p54, %p55
    %s58 = sadd.s32 %s57, 1
    %p61 = scmp.eq.s32.totalorder %s9, 1
    %p62 = scmp.ne.s32.totalorder %s57, %s59
    %p63 = scmp.eq.s32.totalorder %s9, 0
    %p64 = por %p62, %p63
    %p65 = scmp.ne.s32.totalorder %s57, %s59
    %p66 = scmp.eq.s32.totalorder %s14, 1
    %p67 = por %p65, %p66
    %p68 = scmp.ne.s32.totalorder %s59, %s60
    %p69 = scmp.eq.s32.totalorder %s14, 0
    %p70 = por %p68, %p69
    %p71 = scmp.ne.s32.totalorder %s59, %s60
    %p72 = scmp.eq.s32.totalorder %s15, 1
    %p73 = por %p71, %p72
    %p75 = scmp.ne.s32.totalorder %s60, %s74
    %p76 = scmp.eq.s32.totalorder %s15, 0
    %p77 = por %p75, %p76
    %s79 = sadd.s32 %s78, 1
    %p82 = scmp.eq.s32.totalorder %s9, 1
    %p83 = scmp.ne.s32.totalorder %s78, %s80
    %p84 = scmp.eq.s32.totalorder %s9, 0
    %p85 = por %p83, %p84
    %p86 = scmp.ne.s32.totalorder %s78, %s80
    %p87 = scmp.eq.s32.totalorder %s14, 1
    %p88 = por %p86, %p87
    %p89 = scmp.ne.s32.totalorder %s80, %s81
    %p90 = scmp.eq.s32.totalorder %s14, 0
    %p91 = por %p89, %p90
    %p92 = scmp.ne.s32.totalorder %s80, %s81
    %p93 = scmp.eq.s32.totalorder %s15, 1
    %p94 = por %p92, %p93
    %p96 = scmp.ne.s32.totalorder %s81, %s95
    %p97 = scmp.eq.s32.totalorder %s15, 0
    %p98 = por %p96, %p97
    %s99 = ssub.s32 %s16, %s28
    %s100 = ssub.s32 %s17, %s24
    %s101 = sor.u32 %s99, %s100
    %p102 = scmp.eq.s32.totalorder %s101, 0
    %s104 = sadd.s32 %s103, 1
    %s105 = scalar_select %p102, %s103, %s104
    %p108 = pneg %p102
    %p109 = scmp.eq.s32.totalorder %s9, 1
    %p110 = por %p108, %p109
    %p111 = scmp.ne.s32.totalorder %s103, %s106
    %p112 = scmp.eq.s32.totalorder %s9, 0
    %p113 = por %p111, %p112
    %p114 = scmp.ne.s32.totalorder %s103, %s106
    %p115 = scmp.eq.s32.totalorder %s14, 1
    %p116 = por %p114, %p115
    %p117 = scmp.ne.s32.totalorder %s106, %s107
    %p118 = scmp.eq.s32.totalorder %s14, 0
    %p119 = por %p117, %p118
    %p120 = scmp.ne.s32.totalorder %s106, %s107
    %p121 = scmp.eq.s32.totalorder %s15, 1
    %p122 = por %p120, %p121
    %p124 = scmp.ne.s32.totalorder %s107, %s123
    %p125 = scmp.eq.s32.totalorder %s15, 0
    %p126 = por %p124, %p125
    %p127 = scmp.le.s32.totalorder 1, %s9
    %p128 = scmp.lt.s32.totalorder %s9, 3
    %p129 = pnand %p127, %p128
    %p130 = pneg %p129
    // Predicated region
    $region9: #{encoder_forward.69} parent=5 // pred_check
      _
    $region10: #{encoder_forward.69} parent=5 // pred_check_branch
      %132 = sbr.rel (%p129) target = $region12
    $region11: #{encoder_forward.69} parent=5 // pred_region
      %s133 = ssub.s32 %s9, 1
      // Predicated region
      $region13: #{encoder_forward.69} parent=11 // pred_check
        %p134 = pneg %p70
      $region14: #{encoder_forward.69} parent=11 // pred_check_branch
        %136 = sbr.rel (%p134) target = $region16
      $region15: #{encoder_forward.69} parent=11 // pred_region
        _
      $region16: #{encoder_forward.69} parent=11 // pred_fallthru
        _
      // Predicated region
      $region17: #{encoder_forward.69} parent=11 // pred_check
        %p137 = pneg %p91
      $region18: #{encoder_forward.69} parent=11 // pred_check_branch
        %139 = sbr.rel (%p137) target = $region20
      $region19: #{encoder_forward.69} parent=11 // pred_region
        _
      $region20: #{encoder_forward.69} parent=11 // pred_fallthru
        _
    $region12: #{encoder_forward.69} parent=5 // pred_fallthru
      _
    %p140 = scmp.lt.s32.totalorder %s9, 2
    // Predicated region
    $region21: #{encoder_forward.69} parent=5 // pred_check
      %p141 = pneg %p140
    $region22: #{encoder_forward.69} parent=5 // pred_check_branch
      %143 = sbr.rel (%p141) target = $region24
    $region23: #{encoder_forward.69} parent=5 // pred_region
      // Predicated region
      $region25: #{encoder_forward.69} parent=23 // pred_check
        %p144 = pneg %p43
      $region26: #{encoder_forward.69} parent=23 // pred_check_branch
        %146 = sbr.rel (%p144) target = $region28
      $region27: #{encoder_forward.69} parent=23 // pred_region
        %p147 = scmp.lt.s32.totalorder %s16, 1
        %s148 = scalar_select %p147, %s16, 1
        %p149 = scmp.lt.s32.totalorder %s17, 0
        %s150 = scalar_select %p149, %s17, 0
        %s151 = sadd.s32 %s150, %s148
        %s152 = smul.addr %s151, 4
        %s153 = scalar_lea.vmem %s0, %s152
      $region28: #{encoder_forward.69} parent=23 // pred_fallthru
        _
    $region24: #{encoder_forward.69} parent=5 // pred_fallthru
      _
    %p154 = scmp.le.s32.totalorder 1, %s9
    %p155 = scmp.lt.s32.totalorder %s9, 3
    %p156 = pnand %p154, %p155
    %p157 = pneg %p156
    // Predicated region
    $region29: #{encoder_forward.69} parent=5 // pred_check
      _
    $region30: #{encoder_forward.69} parent=5 // pred_check_branch
      %159 = sbr.rel (%p156) target = $region32
    $region31: #{encoder_forward.69} parent=5 // pred_region
      %s160 = ssub.s32 %s9, 1
      %p161 = scmp.lt.s32.totalorder %s18, 1
      %s162 = scalar_select %p161, %s18, 1
      %p163 = scmp.lt.s32.totalorder %s19, 0
      %s164 = scalar_select %p163, %s19, 0
      %s165 = sadd.s32 %s164, %s162
      %s166 = smul.addr %s165, 4
      %s167 = scalar_lea.vmem %s0, %s166
      %p168 = pneg %p49
      %p169 = pneg %p46
      %p170 = pneg %p70
      %p171 = pneg %p67
      %p172 = pneg %p91
      %p173 = pneg %p88
      %p174 = pneg %p119
      %p175 = pneg %p116
      %p176 = scmp.lt.s32.totalorder %s18, 1
      %s177 = scalar_select %p176, %s18, 1
      %p178 = scmp.lt.s32.totalorder %s19, 0
      %s179 = scalar_select %p178, %s19, 0
      %s180 = sadd.s32 %s179, %s177
      %s181 = smul.addr %s180, 4
      %s182 = scalar_lea.vmem %s3, %s181
      %p183 = scmp.lt.s32.totalorder %s18, 1
      %s184 = scalar_select %p183, %s18, 1
      %p185 = scmp.lt.s32.totalorder %s19, 0
      %s186 = scalar_select %p185, %s19, 0
      %s187 = sadd.s32 %s186, %s184
      %s188 = smul.addr %s187, 4
      %s189 = scalar_lea.vmem %s0, %s188
      %p190 = scmp.lt.s32.totalorder %s18, 1
      %s191 = scalar_select %p190, %s18, 1
      %p192 = scmp.lt.s32.totalorder %s19, 0
      %s193 = scalar_select %p192, %s19, 0
      %s194 = sadd.s32 %s193, %s191
      %s195 = smul.addr %s194, 4
      %s196 = scalar_lea.vmem %s3, %s195
      %v198 = vld [vmem:[%s189] sm:$0xf]
      %v200 = vunpack.c.l.b16 %v198
      %v201 = vpack.c.b16 %v200, %v200
      %v203 = vshrl.u32 %v201, 16
      %v205 = vrot.slane %v203, 7
      %v206 = vshll.u32 %v201, 16
      %v208 = vor.u32 %v205, %v206
      %vm210 = vcmask 1040384
      %vm211 = vsmask.f32 256
      %vm212 = vmand %vm210, %vm211
      %v213 = vsel %vm212, 0, %v208
      %v214 = vrot.slane %v206, 1
      %v215 = vor.u32 %v203, %v214
      %vm217 = vcmask 1043456
      %vm218 = vsmask.f32 3328
      %vm219 = vmand %vm217, %vm218
      %v220 = vsel %vm219, %v215, 0
      %s221 = scalar_lea.vmem %s1, 32
      %v222 = vld [vmem:[%s221] sm:$0xf]
      %v223 = vld [vmem:[%s221 + $0x4] sm:$0xf]
      %v224 = vld [vmem:[%s221 + $0x8] sm:$0xf]
      %v225 = vld [vmem:[%s221 + $0xc] sm:$0xf]
      %v226 = vld [vmem:[%s221 + $0x10] sm:$0xf]
      %v227 = vld [vmem:[%s221 + $0x14] sm:$0xf]
      %v228 = vld [vmem:[%s221 + $0x18] sm:$0xf]
      %v229 = vld [vmem:[%s221 + $0x1c] sm:$0xf]
      %v230 = vld [vmem:[%s1] sm:$0xf]
      %v231 = vld [vmem:[%s1 + $0x4] sm:$0xf]
      %v232 = vld [vmem:[%s1 + $0x8] sm:$0xf]
      %v233 = vld [vmem:[%s1 + $0xc] sm:$0xf]
      %v234 = vld [vmem:[%s1 + $0x10] sm:$0xf]
      %v235 = vld [vmem:[%s1 + $0x14] sm:$0xf]
      %v236 = vld [vmem:[%s1 + $0x18] sm:$0xf]
      %v237 = vld [vmem:[%s1 + $0x1c] sm:$0xf]
      %v246 = vunpack.c.l.b16 %v230
      %v247 = vunpack.c.l.b16 %v231
      %v248 = vunpack.c.l.b16 %v232
      %v249 = vunpack.c.l.b16 %v233
      %v250 = vunpack.c.l.b16 %v234
      %v251 = vunpack.c.l.b16 %v235
      %v252 = vunpack.c.l.b16 %v236
      %v253 = vunpack.c.l.b16 %v237
      %v254 = vpack.c.b16 %v247, %v246
      %v255 = vpack.c.b16 %v249, %v248
      %v256 = vpack.c.b16 %v251, %v250
      %v257 = vpack.c.b16 %v253, %v252
      %vm262 = vcmask 523264
      %v264 = vsel %vm262, %v213, 0
      %266 = vmatprep.subr.bf16.mxu0 0
      %267 = vmatpush1.bf16.msra.mxu0 %v254
      %268 = vmatprep.subr.bf16.mxu0 0
      %269 = vmatpush1.bf16.msra.mxu0 %v255
      %270 = vmatprep.subr.bf16.mxu0 0
      %271 = vmatpush1.bf16.msra.mxu0 %v256
      %272 = vmatprep.subr.bf16.mxu0 0
      %273 = vmatpush1.bf16.msra.mxu0 %v257
      %274 = vmatprep.subr.bf16.mxu0 0
      %275 = vmatpush1.bf16.msra.mxu0 0
      %276 = vmatprep.subr.bf16.mxu0 0
      %277 = vmatpush1.bf16.msra.mxu0 0
      %278 = vmatprep.subr.bf16.mxu0 0
      %279 = vmatpush1.bf16.msra.mxu0 0
      %280 = vmatprep.subr.bf16.mxu0 0
      %281 = vmatpush1.bf16.msra.mxu0 0
      %282 = vmatprep.subr.bf16.mxu0 0
      %283 = vmatpush1.bf16.msra.mxu0 0
      %284 = vmatprep.subr.bf16.mxu0 0
      %285 = vmatpush1.bf16.msra.mxu0 0
      %286 = vmatprep.subr.bf16.mxu0 0
      %287 = vmatpush1.bf16.msra.mxu0 0
      %288 = vmatprep.subr.bf16.mxu0 0
      %289 = vmatpush1.bf16.msra.mxu0 0
      %290 = vmatprep.subr.bf16.mxu0 0
      %291 = vmatpush1.bf16.msra.mxu0 0
      %292 = vmatprep.subr.bf16.mxu0 0
      %293 = vmatpush1.bf16.msra.mxu0 0
      %294 = vmatprep.subr.bf16.mxu0 0
      %295 = vmatpush1.bf16.msra.mxu0 0
      %296 = vmatprep.subr.bf16.mxu0 0
      %297 = vmatpush1.bf16.msra.mxu0 0
      %298 = vmatprep.mubr.bf16.mxu0 0
      %299 = vmatmul.mubr.bf16.gmra.mrb[0].mxu0 %v264
      %v300 = vpop.f32.mrb[0].mxu0
      %v301 = vadd.f32 0.0, %v300
      %v302 = vpop.f32.mrb[0].mxu0
      %v303 = vpop.f32.mrb[0].mxu0
      %v304 = vpop.f32.mrb[0].mxu0
      %305 = vdwg.mxu0
      %v314 = vunpack.c.l.b16 %v222
      %v315 = vunpack.c.l.b16 %v223
      %v316 = vunpack.c.l.b16 %v224
      %v317 = vunpack.c.l.b16 %v225
      %v318 = vunpack.c.l.b16 %v226
      %v319 = vunpack.c.l.b16 %v227
      %v320 = vunpack.c.l.b16 %v228
      %v321 = vunpack.c.l.b16 %v229
      %v322 = vpack.c.b16 %v315, %v314
      %v323 = vpack.c.b16 %v317, %v316
      %v324 = vpack.c.b16 %v319, %v318
      %v325 = vpack.c.b16 %v321, %v320
      %v331 = vsel %vm262, %v198, 0
      %333 = vmatprep.subr.bf16.mxu0 0
      %334 = vmatpush1.bf16.msra.mxu0 %v322
      %335 = vmatprep.subr.bf16.mxu0 0
      %336 = vmatpush1.bf16.msra.mxu0 %v323
      %337 = vmatprep.subr.bf16.mxu0 0
      %338 = vmatpush1.bf16.msra.mxu0 %v324
      %339 = vmatprep.subr.bf16.mxu0 0
      %340 = vmatpush1.bf16.msra.mxu0 %v325
      %341 = vmatprep.subr.bf16.mxu0 0
      %342 = vmatpush1.bf16.msra.mxu0 0
      %343 = vmatprep.subr.bf16.mxu0 0
      %344 = vmatpush1.bf16.msra.mxu0 0
      %345 = vmatprep.subr.bf16.mxu0 0
      %346 = vmatpush1.bf16.msra.mxu0 0
      %347 = vmatprep.subr.bf16.mxu0 0
      %348 = vmatpush1.bf16.msra.mxu0 0
      %349 = vmatprep.subr.bf16.mxu0 0
      %350 = vmatpush1.bf16.msra.mxu0 0
      %351 = vmatprep.subr.bf16.mxu0 0
      %352 = vmatpush1.bf16.msra.mxu0 0
      %353 = vmatprep.subr.bf16.mxu0 0
      %354 = vmatpush1.bf16.msra.mxu0 0
      %355 = vmatprep.subr.bf16.mxu0 0
      %356 = vmatpush1.bf16.msra.mxu0 0
      %357 = vmatprep.subr.bf16.mxu0 0
      %358 = vmatpush1.bf16.msra.mxu0 0
      %359 = vmatprep.subr.bf16.mxu0 0
      %360 = vmatpush1.bf16.msra.mxu0 0
      %361 = vmatprep.subr.bf16.mxu0 0
      %362 = vmatpush1.bf16.msra.mxu0 0
      %363 = vmatprep.subr.bf16.mxu0 0
      %364 = vmatpush1.bf16.msra.mxu0 0
      %365 = vmatprep.mubr.bf16.mxu0 0
      %366 = vmatmul.mubr.bf16.gmra.mrb[0].mxu0 %v331
      %v367 = vpop.f32.mrb[0].mxu0
      %v368 = vadd.f32 %v301, %v367
      %v369 = vpop.f32.mrb[0].mxu0
      %v370 = vpop.f32.mrb[0].mxu0
      %v371 = vpop.f32.mrb[0].mxu0
      %372 = vdwg.mxu0
      %s373 = scalar_lea.vmem %s1, 64
      %v374 = vld [vmem:[%s373] sm:$0xf]
      %v375 = vld [vmem:[%s373 + $0x4] sm:$0xf]
      %v376 = vld [vmem:[%s373 + $0x8] sm:$0xf]
      %v377 = vld [vmem:[%s373 + $0xc] sm:$0xf]
      %v378 = vld [vmem:[%s373 + $0x10] sm:$0xf]
      %v379 = vld [vmem:[%s373 + $0x14] sm:$0xf]
      %v380 = vld [vmem:[%s373 + $0x18] sm:$0xf]
      %v381 = vld [vmem:[%s373 + $0x1c] sm:$0xf]
      %v390 = vunpack.c.l.b16 %v374
      %v391 = vunpack.c.l.b16 %v375
      %v392 = vunpack.c.l.b16 %v376
      %v393 = vunpack.c.l.b16 %v377
      %v394 = vunpack.c.l.b16 %v378
      %v395 = vunpack.c.l.b16 %v379
      %v396 = vunpack.c.l.b16 %v380
      %v397 = vunpack.c.l.b16 %v381
      %v398 = vpack.c.b16 %v391, %v390
      %v399 = vpack.c.b16 %v393, %v392
      %v400 = vpack.c.b16 %v395, %v394
      %v401 = vpack.c.b16 %v397, %v396
      %v407 = vsel %vm262, %v220, 0
      %409 = vmatprep.subr.bf16.mxu0 0
      %410 = vmatpush1.bf16.msra.mxu0 %v398
      %411 = vmatprep.subr.bf16.mxu0 0
      %412 = vmatpush1.bf16.msra.mxu0 %v399
      %413 = vmatprep.subr.bf16.mxu0 0
      %414 = vmatpush1.bf16.msra.mxu0 %v400
      %415 = vmatprep.subr.bf16.mxu0 0
      %416 = vmatpush1.bf16.msra.mxu0 %v401
      %417 = vmatprep.subr.bf16.mxu0 0
      %418 = vmatpush1.bf16.msra.mxu0 0
      %419 = vmatprep.subr.bf16.mxu0 0
      %420 = vmatpush1.bf16.msra.mxu0 0
      %421 = vmatprep.subr.bf16.mxu0 0
      %422 = vmatpush1.bf16.msra.mxu0 0
      %423 = vmatprep.subr.bf16.mxu0 0
      %424 = vmatpush1.bf16.msra.mxu0 0
      %425 = vmatprep.subr.bf16.mxu0 0
      %426 = vmatpush1.bf16.msra.mxu0 0
      %427 = vmatprep.subr.bf16.mxu0 0
      %428 = vmatpush1.bf16.msra.mxu0 0
      %429 = vmatprep.subr.bf16.mxu0 0
      %430 = vmatpush1.bf16.msra.mxu0 0
      %431 = vmatprep.subr.bf16.mxu0 0
      %432 = vmatpush1.bf16.msra.mxu0 0
      %433 = vmatprep.subr.bf16.mxu0 0
      %434 = vmatpush1.bf16.msra.mxu0 0
      %435 = vmatprep.subr.bf16.mxu0 0
      %436 = vmatpush1.bf16.msra.mxu0 0
      %437 = vmatprep.subr.bf16.mxu0 0
      %438 = vmatpush1.bf16.msra.mxu0 0
      %439 = vmatprep.subr.bf16.mxu0 0
      %440 = vmatpush1.bf16.msra.mxu0 0
      %441 = vmatprep.mubr.bf16.mxu0 0
      %442 = vmatmul.mubr.bf16.gmra.mrb[0].mxu0 %v407
      %v443 = vpop.f32.mrb[0].mxu0
      %v444 = vadd.f32 0.0, %v443
      %v445 = vpop.f32.mrb[0].mxu0
      %v446 = vpop.f32.mrb[0].mxu0
      %v447 = vpop.f32.mrb[0].mxu0
      %448 = vdwg.mxu0
      %v449 = vadd.f32 %v368, %v444
      %v450 = vld [vmem:[%s2] sm:$0x1]
      %v452 = vlaneseq
      %v453 = vshrl.u32 %v452, 7
      %v454 = vsub.s32 0, %v453
      %v455 = vrot.slane %v450, %v454
      %v457 = vadd.f32 %v449, %v455
      %v458 = vpack.c.bf16 %v457, %v457
      %vm459 = vcmask 60416
      %460 = vst.msk [vmem:[%s196] sm:$0xf] %vm459, %v458
      %p461 = scmp.lt.s32.totalorder %s18, 1
      %s462 = scalar_select %p461, %s18, 1
      %p463 = scmp.lt.s32.totalorder %s19, 0
      %s464 = scalar_select %p463, %s19, 0
      %s465 = sadd.s32 %s464, %s462
      %s466 = smul.addr %s465, 4
      %s467 = scalar_lea.vmem %s3, %s466
      // Predicated region
      $region33: #{encoder_forward.69} parent=31 // pred_check
        %p468 = pneg %p116
      $region34: #{encoder_forward.69} parent=31 // pred_check_branch
        %470 = sbr.rel (%p468) target = $region36
      $region35: #{encoder_forward.69} parent=31 // pred_region
        _
      $region36: #{encoder_forward.69} parent=31 // pred_fallthru
        _
    $region32: #{encoder_forward.69} parent=5 // pred_fallthru
      _
    %p471 = scmp.le.s32.totalorder 2, %s9
    // Predicated region
    $region37: #{encoder_forward.69} parent=5 // pred_check
      %p472 = pneg %p471
    $region38: #{encoder_forward.69} parent=5 // pred_check_branch
      %474 = sbr.rel (%p472) target = $region40
    $region39: #{encoder_forward.69} parent=5 // pred_region
      %s475 = ssub.s32 %s9, 2
      // Predicated region
      $region41: #{encoder_forward.69} parent=39 // pred_check
        %p476 = pneg %p122
      $region42: #{encoder_forward.69} parent=39 // pred_check_branch
        %478 = sbr.rel (%p476) target = $region44
      $region43: #{encoder_forward.69} parent=39 // pred_region
        %p479 = scmp.lt.s32.totalorder %s20, 1
        %s480 = scalar_select %p479, %s20, 1
        %p481 = scmp.lt.s32.totalorder %s21, 0
        %s482 = scalar_select %p481, %s21, 0
        %s483 = sadd.s32 %s482, %s480
        %s484 = smul.addr %s483, 4
        %s485 = scalar_lea.vmem %s3, %s484
      $region44: #{encoder_forward.69} parent=39 // pred_fallthru
        _
    $region40: #{encoder_forward.69} parent=5 // pred_fallthru
      _
  $region6: #{encoder_forward.69} parent=0 // loop_footer
    %s13 = sadd.s32 1, %s9
  $region7: #{encoder_forward.69} parent=0 // loop_footer_branch
    %8 = sbr.rel target = $region3
  $region8: #{encoder_forward.69} parent=0 // loop_exit
    _

</llo_original>
